<compile_context>
chip_gen: v7x
topology: tpu7x:2x2x1
jax: 0.10.0
libtpu: 0.0.40
codegen_flags: <defaults>
</compile_context>

<pallas_src>
import functools

import jax
import jax.numpy as jnp
import numpy as np
from jax import lax
from jax.experimental import pallas as pl
from jax.experimental.pallas import tpu as pltpu

BN_EPS = 1e-3
LANE = 128


# ----------------------------------------------------------------------------
# helpers
# ----------------------------------------------------------------------------
def _round_up(n, m):
    return ((n + m - 1) // m) * m


def _bn_fold(bn):
    gamma, beta, mean, var = bn
    scale = gamma / jnp.sqrt(var + BN_EPS)
    bias = beta - mean * scale
    return scale, bias


def _matmul_tn_default():
    """256-wide N tiles on v6e/v7x (2x256^2 MXU); 128 on v5e and older."""
    try:
        kind = jax.devices()[0].device_kind.lower()
        if any(v in kind for v in ("v2", "v3", "v4", "v5")):
            return LANE
        return 2 * LANE
    except Exception:
        return LANE


# ----------------------------------------------------------------------------
# Kernel 1: single-K-step matmul + bias + ReLU (all 1x1 convs; K = 192)
# ----------------------------------------------------------------------------
def _mm_bias_relu_kernel(x_ref, w_ref, b_ref, o_ref):
    # No VMEM accumulator round-trip: the f32 MXU result gets bias+ReLU and is
    # stored once (K fits one tile for every 1x1 in this block).
    acc = jnp.dot(x_ref[...], w_ref[...], preferred_element_type=jnp.float32)
    o_ref[...] = jnp.maximum(acc + b_ref[...], 0.0).astype(o_ref.dtype)


def matmul_bias_relu(x, w, bias, *, tm_cap=512, out_dtype=jnp.bfloat16):
    """x:[M,K] bf16, w:[K,Cout_p] bf16 (BN scale folded), bias:[1,Cout_p] f32."""
    M, K = x.shape
    Cout = w.shape[1]
    assert K <= 1024, "Mixed_3b 1x1 convs have K=192; no K tiling needed"
    tn = min(Cout, _matmul_tn_default())
    assert Cout % tn == 0
    tm = min(tm_cap, _round_up(M, 8))
    Mp = _round_up(M, tm)                    # robust: cdiv-style grid via pad
    xp = jnp.pad(x, ((0, Mp - M), (0, 0))) if Mp != M else x
    grid = (Mp // tm, Cout // tn)
    flops = 2 * Mp * K * Cout
    bytes_accessed = (Mp * K + K * Cout + Mp * Cout) * 2 + Cout * 4
    out = pl.pallas_call(
        _mm_bias_relu_kernel,
        out_shape=jax.ShapeDtypeStruct((Mp, Cout), out_dtype),
        grid=grid,
        in_specs=[
            pl.BlockSpec((tm, K), lambda i, j: (i, 0)),
            pl.BlockSpec((K, tn), lambda i, j: (0, j)),
            pl.BlockSpec((1, tn), lambda i, j: (0, j)),
        ],
        out_specs=pl.BlockSpec((tm, tn), lambda i, j: (i, j)),
        compiler_params=pltpu.CompilerParams(
            dimension_semantics=("parallel", "parallel")),
        cost_estimate=pl.CostEstimate(flops=flops, transcendentals=0,
                                      bytes_accessed=bytes_accessed),
    )(xp, w, bias)
    return out[:M] if Mp != M else out


def conv1x1_bn_relu(x2d, convs, *, out_dtype=jnp.bfloat16):
    """Fused 1x1 Conv3d+BN+ReLU over one shared input.

    x2d: [M, Cin] bf16.  convs: list of (w[Cout,Cin,1,1,1], bn) sharing Cin.
    Returns the lane-padded [M, round_up(sum(Cout_i), 128)] result; callers
    slice out the channel ranges they need.
    """
    Cin = x2d.shape[1]
    w_cols, b_cols = [], []
    for w, bn in convs:
        cout = w.shape[0]
        scale, bias = _bn_fold(bn)
        w2d = jnp.transpose(w.reshape(cout, Cin), (1, 0)) * scale[None, :]
        w_cols.append(w2d)
        b_cols.append(bias)
    wf = jnp.concatenate(w_cols, axis=1)
    bf = jnp.concatenate(b_cols, axis=0)
    Cout = wf.shape[1]
    Cout_p = _round_up(Cout, LANE)
    wf = jnp.pad(wf, ((0, 0), (0, Cout_p - Cout))).astype(jnp.bfloat16)
    bf = jnp.pad(bf, (0, Cout_p - Cout)).reshape(1, Cout_p).astype(jnp.float32)
    return matmul_bias_relu(x2d, wf, bf, out_dtype=out_dtype)


# ----------------------------------------------------------------------------
# Kernel 2: 3x3x3 conv + BN + ReLU (3 kd taps in-kernel, kh/kw folded outside)
# ----------------------------------------------------------------------------
def _conv3x3_kernel(x_ref, w_ref, b_ref, o_ref, acc_ref, *, D, HW):
    # x_ref: ((D+2)*HW, 9*Cin) -- kh/kw taps pre-folded into channels; rows are
    #   (d, h, w) row-major so each kd tap is a pure leading-dim slice.
    # w_ref: (3, 9*Cin, tn); b_ref: (1, tn); o_ref/acc_ref: (D*HW, tn)
    rows = D * HW
    for kd in range(3):
        x2 = x_ref[kd * HW:kd * HW + rows]
        contrib = jnp.dot(x2, w_ref[kd], preferred_element_type=jnp.float32)
        if kd == 0:
            acc_ref[...] = contrib          # first tap writes; no zero-init pass
        else:
            acc_ref[...] += contrib
    o_ref[...] = jnp.maximum(acc_ref[...] + b_ref[...], 0.0).astype(o_ref.dtype)


def conv3x3_bn_relu(x, w, bn, *, out_dtype=jnp.bfloat16, tn=LANE):
    """3x3x3 Conv3d (pad=1) + BN + ReLU.

    x: [N, D, H, W, Cin] bf16; w torch layout [Cout, Cin, 3, 3, 3].
    Returns [N, D*H*W, round_up(Cout, 128)] (lane-padded).
    """
    N, D, H, W, Cin = x.shape
    Cout = w.shape[0]
    Cout_p = _round_up(Cout, tn)
    scale, bias = _bn_fold(bn)

    # (Cout,Cin,kd,kh,kw) -> (kd,kh,kw,Cin,Cout) -> (3, 9*Cin, Cout); fold BN.
    w_r = jnp.transpose(w, (2, 3, 4, 1, 0)).reshape(3, 9 * Cin, Cout)
    w_r = w_r * scale[None, None, :]
    w_r = jnp.pad(w_r, ((0, 0), (0, 0), (0, Cout_p - Cout))).astype(jnp.bfloat16)
    b_r = jnp.pad(bias, (0, Cout_p - Cout)).reshape(1, Cout_p).astype(jnp.float32)

    # Partial im2col: fold kh and kw taps into channels (9x, only on the small
    # 96/16-ch intermediates); kd taps are accumulated in-kernel from VMEM.
    xp = jnp.pad(x, ((0, 0), (1, 1), (1, 1), (1, 1), (0, 0)))
    xcol = jnp.concatenate(
        [xp[:, :, kh:kh + H, kw:kw + W, :]
         for kh in range(3) for kw in range(3)],
        axis=-1)                                         # [N, D+2, H, W, 9*Cin]
    HW = H * W
    xcol = xcol.reshape(N, (D + 2) * HW, 9 * Cin)        # contiguous-dim reshape

    kern = functools.partial(_conv3x3_kernel, D=D, HW=HW)
    flops = 2 * N * D * HW * 27 * Cin * Cout_p
    bytes_accessed = xcol.size * 2 + w_r.size * 2 + N * D * HW * Cout_p * 2
    return pl.pallas_call(
        kern,
        out_shape=jax.ShapeDtypeStruct((N, D * HW, Cout_p), out_dtype),
        grid=(N, Cout_p // tn),
        in_specs=[
            pl.BlockSpec((None, (D + 2) * HW, 9 * Cin), lambda n, j: (n, 0, 0)),
            pl.BlockSpec((3, 9 * Cin, tn), lambda n, j: (0, 0, j)),
            pl.BlockSpec((1, tn), lambda n, j: (0, j)),
        ],
        out_specs=pl.BlockSpec((None, D * HW, tn), lambda n, j: (n, 0, j)),
        scratch_shapes=[pltpu.VMEM((D * HW, tn), jnp.float32)],
        compiler_params=pltpu.CompilerParams(
            dimension_semantics=("parallel", "parallel")),
        cost_estimate=pl.CostEstimate(flops=flops, transcendentals=0,
                                      bytes_accessed=bytes_accessed),
    )(xcol, w_r, b_r)


# ----------------------------------------------------------------------------
# Kernel 3: MaxPool3d(3,1,1) fused with the following 1x1 Conv3d+BN+ReLU
# ----------------------------------------------------------------------------
def _maxpool_conv1x1_kernel(x_ref, w_ref, b_ref, o_ref, *, D, H, W):
    # x_ref: (D+2, H+2, W+2, C) bf16, -inf padded.  w_ref: (C, tn); b: (1, tn)
    # o_ref: (D, H*W, tn).  One output d-plane at a time -> 3-plane working set
    # for the separable max; the pooled plane is fed straight to the MXU so the
    # pooled 192-ch tensor never leaves VMEM.
    for d in range(D):
        md = jnp.maximum(jnp.maximum(x_ref[d], x_ref[d + 1]), x_ref[d + 2])
        mh = jnp.maximum(jnp.maximum(md[0:H], md[1:H + 1]), md[2:H + 2])
        mw = jnp.maximum(jnp.maximum(mh[:, 0:W], mh[:, 1:W + 1]),
                         mh[:, 2:W + 2])                 # (H, W, C)
        y = jnp.dot(mw.reshape(H * W, mw.shape[-1]), w_ref[...],
                    preferred_element_type=jnp.float32) + b_ref[...]
        o_ref[d] = jnp.maximum(y, 0.0).astype(o_ref.dtype)


def maxpool_conv1x1_bn_relu(x, w, bn, *, out_dtype=jnp.bfloat16, tn=LANE):
    """MaxPool3d(3, stride=1, pad=1) + 1x1 Conv3d + BN + ReLU in one kernel.

    x: [N, D, H, W, C] bf16; w torch layout [Cout, C, 1, 1, 1].
    Returns [N, D*H*W, round_up(Cout, 128)] (lane-padded).
    """
    N, D, H, W, C = x.shape
    Cout = w.shape[0]
    Cout_p = _round_up(Cout, tn)
    scale, bias = _bn_fold(bn)
    w2d = jnp.transpose(w.reshape(Cout, C), (1, 0)) * scale[None, :]
    w2d = jnp.pad(w2d, ((0, 0), (0, Cout_p - Cout))).astype(jnp.bfloat16)
    b2d = jnp.pad(bias, (0, Cout_p - Cout)).reshape(1, Cout_p).astype(jnp.float32)

    xp = jnp.pad(x, ((0, 0), (1, 1), (1, 1), (1, 1), (0, 0)),
                 constant_values=-jnp.inf)               # -inf: border never wins
    kern = functools.partial(_maxpool_conv1x1_kernel, D=D, H=H, W=W)
    flops = 2 * N * D * H * W * C * Cout_p
    bytes_accessed = xp.size * 2 + w2d.size * 2 + N * D * H * W * Cout_p * 2
    out = pl.pallas_call(
        kern,
        out_shape=jax.ShapeDtypeStruct((N, D, H * W, Cout_p), out_dtype),
        grid=(N, Cout_p // tn),
        in_specs=[
            pl.BlockSpec((None, D + 2, H + 2, W + 2, C),
                         lambda n, j: (n, 0, 0, 0, 0)),
            pl.BlockSpec((C, tn), lambda n, j: (0, j)),
            pl.BlockSpec((1, tn), lambda n, j: (0, j)),
        ],
        out_specs=pl.BlockSpec((None, D, H * W, tn), lambda n, j: (n, 0, 0, j)),
        compiler_params=pltpu.CompilerParams(
            dimension_semantics=("parallel", "parallel")),
        cost_estimate=pl.CostEstimate(flops=flops, transcendentals=0,
                                      bytes_accessed=bytes_accessed),
    )(xp, w2d, b2d)
    return out.reshape(N, D * H * W, Cout_p)


# ----------------------------------------------------------------------------
# Mixed_3b forward
# ----------------------------------------------------------------------------
def mixed_3b(x_ncdhw, params):
    N, C, D, H, W = x_ncdhw.shape
    assert C == 192
    x = jnp.transpose(x_ncdhw, (0, 2, 3, 4, 1)).astype(jnp.bfloat16)  # NDHWC
    M = N * D * H * W
    x2d = x.reshape(M, C)

    # Fused 1x1s sharing the input: branch0(64) | branch1.0(96) | branch2.0(16)
    # -> one lane-dense (M, 256) matmul; column offsets 0 / 64 / 160.
    y = conv1x1_bn_relu(x2d, [params["b0_0"], params["b1_0"], params["b2_0"]])
    x0 = y[:, :64].reshape(N, D * H * W, 64)
    x1_in = y[:, 64:160].reshape(N, D, H, W, 96)
    x2_in = y[:, 160:176].reshape(N, D, H, W, 16)

    x1 = conv3x3_bn_relu(x1_in, *params["b1_1"])         # [N, DHW, 128]
    x2 = conv3x3_bn_relu(x2_in, *params["b2_1"])         # [N, DHW, 128] (32 valid)
    x3 = maxpool_conv1x1_bn_relu(x, *params["b3_1"])     # [N, DHW, 128] (32 valid)

    # TODO(synk): the 64/128/32/32 channel concat + NCDHW transpose + f32 cast
    # stay as XLA passes; a fused assembly kernel would need lane-unaligned
    # stores (offsets 64/192/224), not worth it at these sizes.
    out = jnp.concatenate([x0, x1, x2[..., :32], x3[..., :32]], axis=-1)
    out = out.reshape(N, D, H, W, 256).astype(jnp.float32)
    return jnp.transpose(out, (0, 4, 1, 2, 3))           # -> NCDHW


# ----------------------------------------------------------------------------
# Deterministic synthetic parameters (Mixed_3b sizes, in_channels = 192)
# ----------------------------------------------------------------------------
def _conv_w(key, cout, cin, k):
    return jax.random.normal(key, (cout, cin, k, k, k), jnp.float32) * 0.05


def _bn_p(key, c):
    k1, k2, k3, k4 = jax.random.split(key, 4)
    gamma = jax.random.uniform(k1, (c,), jnp.float32, 0.5, 1.5)
    beta = jax.random.normal(k2, (c,), jnp.float32) * 0.1
    mean = jax.random.normal(k3, (c,), jnp.float32) * 0.1
    var = jax.random.uniform(k4, (c,), jnp.float32, 0.5, 1.5)
    return (gamma, beta, mean, var)


def init_params(key):
    ks = jax.random.split(key, 12)
    return {
        "b0_0": (_conv_w(ks[0], 64, 192, 1), _bn_p(ks[1], 64)),
        "b1_0": (_conv_w(ks[2], 96, 192, 1), _bn_p(ks[3], 96)),
        "b1_1": (_conv_w(ks[4], 128, 96, 3), _bn_p(ks[5], 128)),
        "b2_0": (_conv_w(ks[6], 16, 192, 1), _bn_p(ks[7], 16)),
        "b2_1": (_conv_w(ks[8], 32, 16, 3), _bn_p(ks[9], 32)),
        "b3_1": (_conv_w(ks[10], 32, 192, 1), _bn_p(ks[11], 32)),
    }


# ----------------------------------------------------------------------------
# Pure-JAX reference (f32, HIGHEST precision)
# ----------------------------------------------------------------------------
def _ref_basic_conv(x, w, bn, pad):
    w_dhwio = jnp.transpose(w, (2, 3, 4, 1, 0))
    y = lax.conv_general_dilated(
        x, w_dhwio, window_strides=(1, 1, 1), padding=[(pad, pad)] * 3,
        dimension_numbers=("NDHWC", "DHWIO", "NDHWC"),
        precision=lax.Precision.HIGHEST)
    scale, bias = _bn_fold(bn)
    return jnp.maximum(y * scale + bias, 0.0)


def _ref_mixed_3b(x_ncdhw, params):
    x = jnp.transpose(x_ncdhw, (0, 2, 3, 4, 1))
    x0 = _ref_basic_conv(x, *params["b0_0"], pad=0)
    x1 = _ref_basic_conv(_ref_basic_conv(x, *params["b1_0"], pad=0),
                         *params["b1_1"], pad=1)
    x2 = _ref_basic_conv(_ref_basic_conv(x, *params["b2_0"], pad=0),
                         *params["b2_1"], pad=1)
    x3 = lax.reduce_window(x, -jnp.inf, lax.max, (1, 3, 3, 3, 1),
                           (1, 1, 1, 1, 1),
                           [(0, 0), (1, 1), (1, 1), (1, 1), (0, 0)])
    x3 = _ref_basic_conv(x3, *params["b3_1"], pad=0)
    out = jnp.concatenate([x0, x1, x2, x3], axis=-1)
    return jnp.transpose(out, (0, 4, 1, 2, 3))


# ----------------------------------------------------------------------------
if __name__ == "__main__":
    key = jax.random.PRNGKey(0)
    kx, kp = jax.random.split(key)

    # Small-but-consistent shapes: in_channels must be 192 (module hard-codes it).
    N, C, D, H, W = 2, 192, 4, 8, 8
    x = jax.random.normal(kx, (N, C, D, H, W), jnp.float32)   # NCDHW like PyTorch
    params = init_params(kp)

    fwd = jax.jit(mixed_3b)
    out = jax.block_until_ready(fwd(x, params))
    assert out.shape == (N, 64 + 128 + 32 + 32, D, H, W), out.shape

    ref = jax.block_until_ready(_ref_mixed_3b(x, params))
    np.testing.assert_allclose(np.asarray(out), np.asarray(ref),
                               rtol=5e-2, atol=5e-2)

    print("KERNEL_OK")
</pallas_src>

<mosaic_0001>
module attributes {stable_mosaic.version = 11 : i64} {
  func.func @_mm_bias_relu_kernel(%arg0: i32, %arg1: i32, %arg2: memref<512x192xbf16, #tpu.memory_space<vmem>>, %arg3: memref<192x256xbf16, #tpu.memory_space<vmem>>, %arg4: memref<1x256xf32, #tpu.memory_space<vmem>>, %arg5: memref<512x256xbf16, #tpu.memory_space<vmem>>) attributes {dimension_semantics = [#tpu.dimension_semantics<parallel>, #tpu.dimension_semantics<parallel>], iteration_bounds = array<i64: 1, 1>, scalar_prefetch = 0 : i64, scratch_operands = 0 : i64, tpu.core_type = #tpu.core_type<tc>, window_params = [{transform_indices = @transform_0, window_bounds = array<i64: 512, 192>}, {transform_indices = @transform_1, window_bounds = array<i64: 192, 256>}, {transform_indices = @transform_2, window_bounds = array<i64: 1, 256>}, {transform_indices = @transform_3, window_bounds = array<i64: 512, 256>}]} {
    %c0 = arith.constant 0 : index
    %c0_0 = arith.constant 0 : index
    %0 = vector.load %arg2[%c0, %c0_0] : memref<512x192xbf16, #tpu.memory_space<vmem>>, vector<512x192xbf16>
    %c0_1 = arith.constant 0 : index
    %c0_2 = arith.constant 0 : index
    %1 = vector.load %arg3[%c0_1, %c0_2] : memref<192x256xbf16, #tpu.memory_space<vmem>>, vector<192x256xbf16>
    %cst = arith.constant dense<0.000000e+00> : vector<512x256xf32>
    %2 = tpu.matmul %0, %1, %cst {dimension_numbers = #tpu.dot_dimension_numbers<[1], [0], [0], [1], [0, 0, 1, 1], [], []>} : vector<512x192xbf16>, vector<192x256xbf16>, vector<512x256xf32> -> vector<512x256xf32>
    %c0_3 = arith.constant 0 : index
    %c0_4 = arith.constant 0 : index
    %3 = vector.load %arg4[%c0_3, %c0_4] : memref<1x256xf32, #tpu.memory_space<vmem>>, vector<1x256xf32>
    %4 = vector.broadcast %3 : vector<1x256xf32> to vector<512x256xf32>
    %5 = arith.addf %2, %4 : vector<512x256xf32>
    %cst_5 = arith.constant 0.000000e+00 : f32
    %6 = vector.broadcast %cst_5 : f32 to vector<512x256xf32>
    %7 = arith.maximumf %5, %6 : vector<512x256xf32>
    %8 = arith.truncf %7 : vector<512x256xf32> to vector<512x256xbf16>
    %c0_6 = arith.constant 0 : index
    %c0_7 = arith.constant 0 : index
    %9 = vector.load %arg5[%c0_6, %c0_7] : memref<512x256xbf16, #tpu.memory_space<vmem>>, vector<512x256xbf16>
    tpu.vector_store %arg5[%c0_6, %c0_7], %8 {strides = array<i32>} : memref<512x256xbf16, #tpu.memory_space<vmem>>, vector<512x256xbf16>,
    return
  }
  func.func @transform_0(%arg0: i32, %arg1: i32) -> (i32, i32) {
    %c0_i32 = arith.constant 0 : i32
    %c0_i32_0 = arith.constant 0 : i32
    return %arg0, %c0_i32 : i32, i32
  }
  func.func @transform_1(%arg0: i32, %arg1: i32) -> (i32, i32) {
    %c0_i32 = arith.constant 0 : i32
    %c0_i32_0 = arith.constant 0 : i32
    return %c0_i32, %arg1 : i32, i32
  }
  func.func @transform_2(%arg0: i32, %arg1: i32) -> (i32, i32) {
    %c0_i32 = arith.constant 0 : i32
    %c0_i32_0 = arith.constant 0 : i32
    return %c0_i32, %arg1 : i32, i32
  }
  func.func @transform_3(%arg0: i32, %arg1: i32) -> (i32, i32) {
    %c0_i32 = arith.constant 0 : i32
    return %arg0, %arg1 : i32, i32
  }
}

module attributes {stable_mosaic.version = 11 : i64} {
  func.func @_conv3x3_kernel(%arg0: i32, %arg1: i32, %arg2: memref<1x384x864xbf16, #tpu.memory_space<vmem>>, %arg3: memref<3x864x128xbf16, #tpu.memory_space<vmem>>, %arg4: memref<1x128xf32, #tpu.memory_space<vmem>>, %arg5: memref<1x256x128xbf16, #tpu.memory_space<vmem>>, %arg6: memref<256x128xf32, #tpu.memory_space<vmem>>) attributes {dimension_semantics = [#tpu.dimension_semantics<parallel>, #tpu.dimension_semantics<parallel>], iteration_bounds = array<i64: 2, 1>, scalar_prefetch = 0 : i64, scratch_operands = 1 : i64, tpu.core_type = #tpu.core_type<tc>, window_params = [{transform_indices = @transform_0, window_bounds = array<i64: 1, 384, 864>}, {transform_indices = @transform_1, window_bounds = array<i64: 3, 864, 128>}, {transform_indices = @transform_2, window_bounds = array<i64: 1, 128>}, {transform_indices = @transform_3, window_bounds = array<i64: 1, 256, 128>}]} {
    %c0 = arith.constant 0 : index
    %c0_0 = arith.constant 0 : index
    %c0_1 = arith.constant 0 : index
    %0 = vector.load %arg2[%c0, %c0_0, %c0_1] : memref<1x384x864xbf16, #tpu.memory_space<vmem>>, vector<1x256x864xbf16>
    %1 = vector.shape_cast %0 : vector<1x256x864xbf16> to vector<256x864xbf16>
    %c0_2 = arith.constant 0 : index
    %c0_3 = arith.constant 0 : index
    %c0_4 = arith.constant 0 : index
    %2 = vector.load %arg3[%c0_2, %c0_3, %c0_4] : memref<3x864x128xbf16, #tpu.memory_space<vmem>>, vector<1x864x128xbf16>
    %3 = vector.shape_cast %2 : vector<1x864x128xbf16> to vector<864x128xbf16>
    %cst = arith.constant dense<0.000000e+00> : vector<256x128xf32>
    %4 = tpu.matmul %1, %3, %cst {dimension_numbers = #tpu.dot_dimension_numbers<[1], [0], [0], [1], [0, 0, 1, 1], [], []>} : vector<256x864xbf16>, vector<864x128xbf16>, vector<256x128xf32> -> vector<256x128xf32>
    %c0_5 = arith.constant 0 : index
    %c0_6 = arith.constant 0 : index
    %5 = vector.load %arg6[%c0_5, %c0_6] : memref<256x128xf32, #tpu.memory_space<vmem>>, vector<256x128xf32>
    tpu.vector_store %arg6[%c0_5, %c0_6], %4 {strides = array<i32>} : memref<256x128xf32, #tpu.memory_space<vmem>>, vector<256x128xf32>,
    %c0_7 = arith.constant 0 : index
    %c64 = arith.constant 64 : index
    %c0_8 = arith.constant 0 : index
    %6 = vector.load %arg2[%c0_7, %c64, %c0_8] : memref<1x384x864xbf16, #tpu.memory_space<vmem>>, vector<1x256x864xbf16>
    %7 = vector.shape_cast %6 : vector<1x256x864xbf16> to vector<256x864xbf16>
    %c1 = arith.constant 1 : index
    %c0_9 = arith.constant 0 : index
    %c0_10 = arith.constant 0 : index
    %8 = vector.load %arg3[%c1, %c0_9, %c0_10] : memref<3x864x128xbf16, #tpu.memory_space<vmem>>, vector<1x864x128xbf16>
    %9 = vector.shape_cast %8 : vector<1x864x128xbf16> to vector<864x128xbf16>
    %cst_11 = arith.constant dense<0.000000e+00> : vector<256x128xf32>
    %10 = tpu.matmul %7, %9, %cst_11 {dimension_numbers = #tpu.dot_dimension_numbers<[1], [0], [0], [1], [0, 0, 1, 1], [], []>} : vector<256x864xbf16>, vector<864x128xbf16>, vector<256x128xf32> -> vector<256x128xf32>
    %c0_12 = arith.constant 0 : index
    %c0_13 = arith.constant 0 : index
    %11 = vector.load %arg6[%c0_12, %c0_13] : memref<256x128xf32, #tpu.memory_space<vmem>>, vector<256x128xf32>
    %12 = arith.addf %11, %10 : vector<256x128xf32>
    %c0_14 = arith.constant 0 : index
    %c0_15 = arith.constant 0 : index
    %13 = vector.load %arg6[%c0_14, %c0_15] : memref<256x128xf32, #tpu.memory_space<vmem>>, vector<256x128xf32>
    tpu.vector_store %arg6[%c0_14, %c0_15], %12 {strides = array<i32>} : memref<256x128xf32, #tpu.memory_space<vmem>>, vector<256x128xf32>,
    %c0_16 = arith.constant 0 : index
    %c128 = arith.constant 128 : index
    %c0_17 = arith.constant 0 : index
    %14 = vector.load %arg2[%c0_16, %c128, %c0_17] : memref<1x384x864xbf16, #tpu.memory_space<vmem>>, vector<1x256x864xbf16>
    %15 = vector.shape_cast %14 : vector<1x256x864xbf16> to vector<256x864xbf16>
    %c2 = arith.constant 2 : index
    %c0_18 = arith.constant 0 : index
    %c0_19 = arith.constant 0 : index
    %16 = vector.load %arg3[%c2, %c0_18, %c0_19] : memref<3x864x128xbf16, #tpu.memory_space<vmem>>, vector<1x864x128xbf16>
    %17 = vector.shape_cast %16 : vector<1x864x128xbf16> to vector<864x128xbf16>
    %cst_20 = arith.constant dense<0.000000e+00> : vector<256x128xf32>
    %18 = tpu.matmul %15, %17, %cst_20 {dimension_numbers = #tpu.dot_dimension_numbers<[1], [0], [0], [1], [0, 0, 1, 1], [], []>} : vector<256x864xbf16>, vector<864x128xbf16>, vector<256x128xf32> -> vector<256x128xf32>
    %c0_21 = arith.constant 0 : index
    %c0_22 = arith.constant 0 : index
    %19 = vector.load %arg6[%c0_21, %c0_22] : memref<256x128xf32, #tpu.memory_space<vmem>>, vector<256x128xf32>
    %20 = arith.addf %19, %18 : vector<256x128xf32>
    %c0_23 = arith.constant 0 : index
    %c0_24 = arith.constant 0 : index
    %21 = vector.load %arg6[%c0_23, %c0_24] : memref<256x128xf32, #tpu.memory_space<vmem>>, vector<256x128xf32>
    tpu.vector_store %arg6[%c0_23, %c0_24], %20 {strides = array<i32>} : memref<256x128xf32, #tpu.memory_space<vmem>>, vector<256x128xf32>,
    %c0_25 = arith.constant 0 : index
    %c0_26 = arith.constant 0 : index
    %22 = vector.load %arg6[%c0_25, %c0_26] : memref<256x128xf32, #tpu.memory_space<vmem>>, vector<256x128xf32>
    %c0_27 = arith.constant 0 : index
    %c0_28 = arith.constant 0 : index
    %23 = vector.load %arg4[%c0_27, %c0_28] : memref<1x128xf32, #tpu.memory_space<vmem>>, vector<1x128xf32>
    %24 = vector.broadcast %23 : vector<1x128xf32> to vector<256x128xf32>
    %25 = arith.addf %22, %24 : vector<256x128xf32>
    %cst_29 = arith.constant 0.000000e+00 : f32
    %26 = vector.broadcast %cst_29 : f32 to vector<256x128xf32>
    %27 = arith.maximumf %25, %26 : vector<256x128xf32>
    %28 = arith.truncf %27 : vector<256x128xf32> to vector<256x128xbf16>
    %c0_30 = arith.constant 0 : index
    %c0_31 = arith.constant 0 : index
    %c0_32 = arith.constant 0 : index
    %29 = vector.load %arg5[%c0_30, %c0_31, %c0_32] : memref<1x256x128xbf16, #tpu.memory_space<vmem>>, vector<1x256x128xbf16>
    %30 = vector.shape_cast %29 : vector<1x256x128xbf16> to vector<256x128xbf16>
    %31 = vector.shape_cast %28 : vector<256x128xbf16> to vector<1x256x128xbf16>
    tpu.vector_store %arg5[%c0_30, %c0_31, %c0_32], %31 {strides = array<i32>} : memref<1x256x128xbf16, #tpu.memory_space<vmem>>, vector<1x256x128xbf16>,
    return
  }
  func.func @transform_0(%arg0: i32, %arg1: i32) -> (i32, i32, i32) {
    %c0_i32 = arith.constant 0 : i32
    %c0_i32_0 = arith.constant 0 : i32
    %c0_i32_1 = arith.constant 0 : i32
    return %arg0, %c0_i32, %c0_i32_0 : i32, i32, i32
  }
  func.func @transform_1(%arg0: i32, %arg1: i32) -> (i32, i32, i32) {
    %c0_i32 = arith.constant 0 : i32
    %c0_i32_0 = arith.constant 0 : i32
    %c0_i32_1 = arith.constant 0 : i32
    return %c0_i32, %c0_i32_0, %arg1 : i32, i32, i32
  }
  func.func @transform_2(%arg0: i32, %arg1: i32) -> (i32, i32) {
    %c0_i32 = arith.constant 0 : i32
    %c0_i32_0 = arith.constant 0 : i32
    return %c0_i32, %arg1 : i32, i32
  }
  func.func @transform_3(%arg0: i32, %arg1: i32) -> (i32, i32, i32) {
    %c0_i32 = arith.constant 0 : i32
    %c0_i32_0 = arith.constant 0 : i32
    return %arg0, %c0_i32, %arg1 : i32, i32, i32
  }
}

module attributes {stable_mosaic.version = 11 : i64} {
  func.func @_conv3x3_kernel(%arg0: i32, %arg1: i32, %arg2: memref<1x384x144xbf16, #tpu.memory_space<vmem>>, %arg3: memref<3x144x128xbf16, #tpu.memory_space<vmem>>, %arg4: memref<1x128xf32, #tpu.memory_space<vmem>>, %arg5: memref<1x256x128xbf16, #tpu.memory_space<vmem>>, %arg6: memref<256x128xf32, #tpu.memory_space<vmem>>) attributes {dimension_semantics = [#tpu.dimension_semantics<parallel>, #tpu.dimension_semantics<parallel>], iteration_bounds = array<i64: 2, 1>, scalar_prefetch = 0 : i64, scratch_operands = 1 : i64, tpu.core_type = #tpu.core_type<tc>, window_params = [{transform_indices = @transform_0, window_bounds = array<i64: 1, 384, 144>}, {transform_indices = @transform_1, window_bounds = array<i64: 3, 144, 128>}, {transform_indices = @transform_2, window_bounds = array<i64: 1, 128>}, {transform_indices = @transform_3, window_bounds = array<i64: 1, 256, 128>}]} {
    %c0 = arith.constant 0 : index
    %c0_0 = arith.constant 0 : index
    %c0_1 = arith.constant 0 : index
    %0 = vector.load %arg2[%c0, %c0_0, %c0_1] : memref<1x384x144xbf16, #tpu.memory_space<vmem>>, vector<1x256x144xbf16>
    %1 = vector.shape_cast %0 : vector<1x256x144xbf16> to vector<256x144xbf16>
    %c0_2 = arith.constant 0 : index
    %c0_3 = arith.constant 0 : index
    %c0_4 = arith.constant 0 : index
    %2 = vector.load %arg3[%c0_2, %c0_3, %c0_4] : memref<3x144x128xbf16, #tpu.memory_space<vmem>>, vector<1x144x128xbf16>
    %3 = vector.shape_cast %2 : vector<1x144x128xbf16> to vector<144x128xbf16>
    %cst = arith.constant dense<0.000000e+00> : vector<256x128xf32>
    %4 = tpu.matmul %1, %3, %cst {dimension_numbers = #tpu.dot_dimension_numbers<[1], [0], [0], [1], [0, 0, 1, 1], [], []>} : vector<256x144xbf16>, vector<144x128xbf16>, vector<256x128xf32> -> vector<256x128xf32>
    %c0_5 = arith.constant 0 : index
    %c0_6 = arith.constant 0 : index
    %5 = vector.load %arg6[%c0_5, %c0_6] : memref<256x128xf32, #tpu.memory_space<vmem>>, vector<256x128xf32>
    tpu.vector_store %arg6[%c0_5, %c0_6], %4 {strides = array<i32>} : memref<256x128xf32, #tpu.memory_space<vmem>>, vector<256x128xf32>,
    %c0_7 = arith.constant 0 : index
    %c64 = arith.constant 64 : index
    %c0_8 = arith.constant 0 : index
    %6 = vector.load %arg2[%c0_7, %c64, %c0_8] : memref<1x384x144xbf16, #tpu.memory_space<vmem>>, vector<1x256x144xbf16>
    %7 = vector.shape_cast %6 : vector<1x256x144xbf16> to vector<256x144xbf16>
    %c1 = arith.constant 1 : index
    %c0_9 = arith.constant 0 : index
    %c0_10 = arith.constant 0 : index
    %8 = vector.load %arg3[%c1, %c0_9, %c0_10] : memref<3x144x128xbf16, #tpu.memory_space<vmem>>, vector<1x144x128xbf16>
    %9 = vector.shape_cast %8 : vector<1x144x128xbf16> to vector<144x128xbf16>
    %cst_11 = arith.constant dense<0.000000e+00> : vector<256x128xf32>
    %10 = tpu.matmul %7, %9, %cst_11 {dimension_numbers = #tpu.dot_dimension_numbers<[1], [0], [0], [1], [0, 0, 1, 1], [], []>} : vector<256x144xbf16>, vector<144x128xbf16>, vector<256x128xf32> -> vector<256x128xf32>
    %c0_12 = arith.constant 0 : index
    %c0_13 = arith.constant 0 : index
    %11 = vector.load %arg6[%c0_12, %c0_13] : memref<256x128xf32, #tpu.memory_space<vmem>>, vector<256x128xf32>
    %12 = arith.addf %11, %10 : vector<256x128xf32>
    %c0_14 = arith.constant 0 : index
    %c0_15 = arith.constant 0 : index
    %13 = vector.load %arg6[%c0_14, %c0_15] : memref<256x128xf32, #tpu.memory_space<vmem>>, vector<256x128xf32>
    tpu.vector_store %arg6[%c0_14, %c0_15], %12 {strides = array<i32>} : memref<256x128xf32, #tpu.memory_space<vmem>>, vector<256x128xf32>,
    %c0_16 = arith.constant 0 : index
    %c128 = arith.constant 128 : index
    %c0_17 = arith.constant 0 : index
    %14 = vector.load %arg2[%c0_16, %c128, %c0_17] : memref<1x384x144xbf16, #tpu.memory_space<vmem>>, vector<1x256x144xbf16>
    %15 = vector.shape_cast %14 : vector<1x256x144xbf16> to vector<256x144xbf16>
    %c2 = arith.constant 2 : index
    %c0_18 = arith.constant 0 : index
    %c0_19 = arith.constant 0 : index
    %16 = vector.load %arg3[%c2, %c0_18, %c0_19] : memref<3x144x128xbf16, #tpu.memory_space<vmem>>, vector<1x144x128xbf16>
    %17 = vector.shape_cast %16 : vector<1x144x128xbf16> to vector<144x128xbf16>
    %cst_20 = arith.constant dense<0.000000e+00> : vector<256x128xf32>
    %18 = tpu.matmul %15, %17, %cst_20 {dimension_numbers = #tpu.dot_dimension_numbers<[1], [0], [0], [1], [0, 0, 1, 1], [], []>} : vector<256x144xbf16>, vector<144x128xbf16>, vector<256x128xf32> -> vector<256x128xf32>
    %c0_21 = arith.constant 0 : index
    %c0_22 = arith.constant 0 : index
    %19 = vector.load %arg6[%c0_21, %c0_22] : memref<256x128xf32, #tpu.memory_space<vmem>>, vector<256x128xf32>
    %20 = arith.addf %19, %18 : vector<256x128xf32>
    %c0_23 = arith.constant 0 : index
    %c0_24 = arith.constant 0 : index
    %21 = vector.load %arg6[%c0_23, %c0_24] : memref<256x128xf32, #tpu.memory_space<vmem>>, vector<256x128xf32>
    tpu.vector_store %arg6[%c0_23, %c0_24], %20 {strides = array<i32>} : memref<256x128xf32, #tpu.memory_space<vmem>>, vector<256x128xf32>,
    %c0_25 = arith.constant 0 : index
    %c0_26 = arith.constant 0 : index
    %22 = vector.load %arg6[%c0_25, %c0_26] : memref<256x128xf32, #tpu.memory_space<vmem>>, vector<256x128xf32>
    %c0_27 = arith.constant 0 : index
    %c0_28 = arith.constant 0 : index
    %23 = vector.load %arg4[%c0_27, %c0_28] : memref<1x128xf32, #tpu.memory_space<vmem>>, vector<1x128xf32>
    %24 = vector.broadcast %23 : vector<1x128xf32> to vector<256x128xf32>
    %25 = arith.addf %22, %24 : vector<256x128xf32>
    %cst_29 = arith.constant 0.000000e+00 : f32
    %26 = vector.broadcast %cst_29 : f32 to vector<256x128xf32>
    %27 = arith.maximumf %25, %26 : vector<256x128xf32>
    %28 = arith.truncf %27 : vector<256x128xf32> to vector<256x128xbf16>
    %c0_30 = arith.constant 0 : index
    %c0_31 = arith.constant 0 : index
    %c0_32 = arith.constant 0 : index
    %29 = vector.load %arg5[%c0_30, %c0_31, %c0_32] : memref<1x256x128xbf16, #tpu.memory_space<vmem>>, vector<1x256x128xbf16>
    %30 = vector.shape_cast %29 : vector<1x256x128xbf16> to vector<256x128xbf16>
    %31 = vector.shape_cast %28 : vector<256x128xbf16> to vector<1x256x128xbf16>
    tpu.vector_store %arg5[%c0_30, %c0_31, %c0_32], %31 {strides = array<i32>} : memref<1x256x128xbf16, #tpu.memory_space<vmem>>, vector<1x256x128xbf16>,
    return
  }
  func.func @transform_0(%arg0: i32, %arg1: i32) -> (i32, i32, i32) {
    %c0_i32 = arith.constant 0 : i32
    %c0_i32_0 = arith.constant 0 : i32
    %c0_i32_1 = arith.constant 0 : i32
    return %arg0, %c0_i32, %c0_i32_0 : i32, i32, i32
  }
  func.func @transform_1(%arg0: i32, %arg1: i32) -> (i32, i32, i32) {
    %c0_i32 = arith.constant 0 : i32
    %c0_i32_0 = arith.constant 0 : i32
    %c0_i32_1 = arith.constant 0 : i32
    return %c0_i32, %c0_i32_0, %arg1 : i32, i32, i32
  }
  func.func @transform_2(%arg0: i32, %arg1: i32) -> (i32, i32) {
    %c0_i32 = arith.constant 0 : i32
    %c0_i32_0 = arith.constant 0 : i32
    return %c0_i32, %arg1 : i32, i32
  }
  func.func @transform_3(%arg0: i32, %arg1: i32) -> (i32, i32, i32) {
    %c0_i32 = arith.constant 0 : i32
    %c0_i32_0 = arith.constant 0 : i32
    return %arg0, %c0_i32, %arg1 : i32, i32, i32
  }
}

module attributes {stable_mosaic.version = 11 : i64} {
  func.func @_maxpool_conv1x1_kernel(%arg0: i32, %arg1: i32, %arg2: memref<1x6x10x10x192xbf16, #tpu.memory_space<vmem>>, %arg3: memref<192x128xbf16, #tpu.memory_space<vmem>>, %arg4: memref<1x128xf32, #tpu.memory_space<vmem>>, %arg5: memref<1x4x64x128xbf16, #tpu.memory_space<vmem>>) attributes {dimension_semantics = [#tpu.dimension_semantics<parallel>, #tpu.dimension_semantics<parallel>], iteration_bounds = array<i64: 2, 1>, scalar_prefetch = 0 : i64, scratch_operands = 0 : i64, tpu.core_type = #tpu.core_type<tc>, window_params = [{transform_indices = @transform_0, window_bounds = array<i64: 1, 6, 10, 10, 192>}, {transform_indices = @transform_1, window_bounds = array<i64: 192, 128>}, {transform_indices = @transform_2, window_bounds = array<i64: 1, 128>}, {transform_indices = @transform_3, window_bounds = array<i64: 1, 4, 64, 128>}]} {
    %c0 = arith.constant 0 : index
    %c0_0 = arith.constant 0 : index
    %c0_1 = arith.constant 0 : index
    %c0_2 = arith.constant 0 : index
    %c0_3 = arith.constant 0 : index
    %0 = vector.load %arg2[%c0, %c0_0, %c0_1, %c0_2, %c0_3] : memref<1x6x10x10x192xbf16, #tpu.memory_space<vmem>>, vector<1x1x10x10x192xbf16>
    %1 = vector.shape_cast %0 : vector<1x1x10x10x192xbf16> to vector<10x10x192xbf16>
    %c0_4 = arith.constant 0 : index
    %c1 = arith.constant 1 : index
    %c0_5 = arith.constant 0 : index
    %c0_6 = arith.constant 0 : index
    %c0_7 = arith.constant 0 : index
    %2 = vector.load %arg2[%c0_4, %c1, %c0_5, %c0_6, %c0_7] : memref<1x6x10x10x192xbf16, #tpu.memory_space<vmem>>, vector<1x1x10x10x192xbf16>
    %3 = vector.shape_cast %2 : vector<1x1x10x10x192xbf16> to vector<10x10x192xbf16>
    %4 = arith.maximumf %1, %3 : vector<10x10x192xbf16>
    %c0_8 = arith.constant 0 : index
    %c2 = arith.constant 2 : index
    %c0_9 = arith.constant 0 : index
    %c0_10 = arith.constant 0 : index
    %c0_11 = arith.constant 0 : index
    %5 = vector.load %arg2[%c0_8, %c2, %c0_9, %c0_10, %c0_11] : memref<1x6x10x10x192xbf16, #tpu.memory_space<vmem>>, vector<1x1x10x10x192xbf16>
    %6 = vector.shape_cast %5 : vector<1x1x10x10x192xbf16> to vector<10x10x192xbf16>
    %7 = arith.maximumf %4, %6 : vector<10x10x192xbf16>
    %8 = vector.extract_strided_slice %7 {offsets = [0, 0, 0], sizes = [8, 10, 192], strides = [1, 1, 1]} : vector<10x10x192xbf16> to vector<8x10x192xbf16>
    %9 = vector.extract_strided_slice %7 {offsets = [1, 0, 0], sizes = [8, 10, 192], strides = [1, 1, 1]} : vector<10x10x192xbf16> to vector<8x10x192xbf16>
    %10 = arith.maximumf %8, %9 : vector<8x10x192xbf16>
    %11 = vector.extract_strided_slice %7 {offsets = [2, 0, 0], sizes = [8, 10, 192], strides = [1, 1, 1]} : vector<10x10x192xbf16> to vector<8x10x192xbf16>
    %12 = arith.maximumf %10, %11 : vector<8x10x192xbf16>
    %13 = vector.extract_strided_slice %12 {offsets = [0, 0, 0], sizes = [8, 8, 192], strides = [1, 1, 1]} : vector<8x10x192xbf16> to vector<8x8x192xbf16>
    %14 = vector.extract_strided_slice %12 {offsets = [0, 1, 0], sizes = [8, 8, 192], strides = [1, 1, 1]} : vector<8x10x192xbf16> to vector<8x8x192xbf16>
    %15 = arith.maximumf %13, %14 : vector<8x8x192xbf16>
    %16 = vector.extract_strided_slice %12 {offsets = [0, 2, 0], sizes = [8, 8, 192], strides = [1, 1, 1]} : vector<8x10x192xbf16> to vector<8x8x192xbf16>
    %17 = arith.maximumf %15, %16 : vector<8x8x192xbf16>
    %18 = vector.shape_cast %17 : vector<8x8x192xbf16> to vector<64x192xbf16>
    %c0_12 = arith.constant 0 : index
    %c0_13 = arith.constant 0 : index
    %19 = vector.load %arg3[%c0_12, %c0_13] : memref<192x128xbf16, #tpu.memory_space<vmem>>, vector<192x128xbf16>
    %cst = arith.constant dense<0.000000e+00> : vector<64x128xf32>
    %20 = tpu.matmul %18, %19, %cst {dimension_numbers = #tpu.dot_dimension_numbers<[1], [0], [0], [1], [0, 0, 1, 1], [], []>} : vector<64x192xbf16>, vector<192x128xbf16>, vector<64x128xf32> -> vector<64x128xf32>
    %c0_14 = arith.constant 0 : index
    %c0_15 = arith.constant 0 : index
    %21 = vector.load %arg4[%c0_14, %c0_15] : memref<1x128xf32, #tpu.memory_space<vmem>>, vector<1x128xf32>
    %22 = vector.broadcast %21 : vector<1x128xf32> to vector<64x128xf32>
    %23 = arith.addf %20, %22 : vector<64x128xf32>
    %cst_16 = arith.constant 0.000000e+00 : f32
    %24 = vector.broadcast %cst_16 : f32 to vector<64x128xf32>
    %25 = arith.maximumf %23, %24 : vector<64x128xf32>
    %26 = arith.truncf %25 : vector<64x128xf32> to vector<64x128xbf16>
    %c0_17 = arith.constant 0 : index
    %c0_18 = arith.constant 0 : index
    %c0_19 = arith.constant 0 : index
    %c0_20 = arith.constant 0 : index
    %27 = vector.load %arg5[%c0_17, %c0_18, %c0_19, %c0_20] : memref<1x4x64x128xbf16, #tpu.memory_space<vmem>>, vector<1x1x64x128xbf16>
    %28 = vector.shape_cast %27 : vector<1x1x64x128xbf16> to vector<64x128xbf16>
    %29 = vector.shape_cast %26 : vector<64x128xbf16> to vector<1x1x64x128xbf16>
    tpu.vector_store %arg5[%c0_17, %c0_18, %c0_19, %c0_20], %29 {strides = array<i32>} : memref<1x4x64x128xbf16, #tpu.memory_space<vmem>>, vector<1x1x64x128xbf16>,
    %c0_21 = arith.constant 0 : index
    %c1_22 = arith.constant 1 : index
    %c0_23 = arith.constant 0 : index
    %c0_24 = arith.constant 0 : index
    %c0_25 = arith.constant 0 : index
    %30 = vector.load %arg2[%c0_21, %c1_22, %c0_23, %c0_24, %c0_25] : memref<1x6x10x10x192xbf16, #tpu.memory_space<vmem>>, vector<1x1x10x10x192xbf16>
    %31 = vector.shape_cast %30 : vector<1x1x10x10x192xbf16> to vector<10x10x192xbf16>
    %c0_26 = arith.constant 0 : index
    %c2_27 = arith.constant 2 : index
    %c0_28 = arith.constant 0 : index
    %c0_29 = arith.constant 0 : index
    %c0_30 = arith.constant 0 : index
    %32 = vector.load %arg2[%c0_26, %c2_27, %c0_28, %c0_29, %c0_30] : memref<1x6x10x10x192xbf16, #tpu.memory_space<vmem>>, vector<1x1x10x10x192xbf16>
    %33 = vector.shape_cast %32 : vector<1x1x10x10x192xbf16> to vector<10x10x192xbf16>
    %34 = arith.maximumf %31, %33 : vector<10x10x192xbf16>
    %c0_31 = arith.constant 0 : index
    %c3 = arith.constant 3 : index
    %c0_32 = arith.constant 0 : index
    %c0_33 = arith.constant 0 : index
    %c0_34 = arith.constant 0 : index
    %35 = vector.load %arg2[%c0_31, %c3, %c0_32, %c0_33, %c0_34] : memref<1x6x10x10x192xbf16, #tpu.memory_space<vmem>>, vector<1x1x10x10x192xbf16>
    %36 = vector.shape_cast %35 : vector<1x1x10x10x192xbf16> to vector<10x10x192xbf16>
    %37 = arith.maximumf %34, %36 : vector<10x10x192xbf16>
    %38 = vector.extract_strided_slice %37 {offsets = [0, 0, 0], sizes = [8, 10, 192], strides = [1, 1, 1]} : vector<10x10x192xbf16> to vector<8x10x192xbf16>
    %39 = vector.extract_strided_slice %37 {offsets = [1, 0, 0], sizes = [8, 10, 192], strides = [1, 1, 1]} : vector<10x10x192xbf16> to vector<8x10x192xbf16>
    %40 = arith.maximumf %38, %39 : vector<8x10x192xbf16>
    %41 = vector.extract_strided_slice %37 {offsets = [2, 0, 0], sizes = [8, 10, 192], strides = [1, 1, 1]} : vector<10x10x192xbf16> to vector<8x10x192xbf16>
    %42 = arith.maximumf %40, %41 : vector<8x10x192xbf16>
    %43 = vector.extract_strided_slice %42 {offsets = [0, 0, 0], sizes = [8, 8, 192], strides = [1, 1, 1]} : vector<8x10x192xbf16> to vector<8x8x192xbf16>
    %44 = vector.extract_strided_slice %42 {offsets = [0, 1, 0], sizes = [8, 8, 192], strides = [1, 1, 1]} : vector<8x10x192xbf16> to vector<8x8x192xbf16>
    %45 = arith.maximumf %43, %44 : vector<8x8x192xbf16>
    %46 = vector.extract_strided_slice %42 {offsets = [0, 2, 0], sizes = [8, 8, 192], strides = [1, 1, 1]} : vector<8x10x192xbf16> to vector<8x8x192xbf16>
    %47 = arith.maximumf %45, %46 : vector<8x8x192xbf16>
    %48 = vector.shape_cast %47 : vector<8x8x192xbf16> to vector<64x192xbf16>
    %c0_35 = arith.constant 0 : index
    %c0_36 = arith.constant 0 : index
    %49 = vector.load %arg3[%c0_35, %c0_36] : memref<192x128xbf16, #tpu.memory_space<vmem>>, vector<192x128xbf16>
    %cst_37 = arith.constant dense<0.000000e+00> : vector<64x128xf32>
    %50 = tpu.matmul %48, %49, %cst_37 {dimension_numbers = #tpu.dot_dimension_numbers<[1], [0], [0], [1], [0, 0, 1, 1], [], []>} : vector<64x192xbf16>, vector<192x128xbf16>, vector<64x128xf32> -> vector<64x128xf32>
    %c0_38 = arith.constant 0 : index
    %c0_39 = arith.constant 0 : index
    %51 = vector.load %arg4[%c0_38, %c0_39] : memref<1x128xf32, #tpu.memory_space<vmem>>, vector<1x128xf32>
    %52 = vector.broadcast %51 : vector<1x128xf32> to vector<64x128xf32>
    %53 = arith.addf %50, %52 : vector<64x128xf32>
    %cst_40 = arith.constant 0.000000e+00 : f32
    %54 = vector.broadcast %cst_40 : f32 to vector<64x128xf32>
    %55 = arith.maximumf %53, %54 : vector<64x128xf32>
    %56 = arith.truncf %55 : vector<64x128xf32> to vector<64x128xbf16>
    %c0_41 = arith.constant 0 : index
    %c1_42 = arith.constant 1 : index
    %c0_43 = arith.constant 0 : index
    %c0_44 = arith.constant 0 : index
    %57 = vector.load %arg5[%c0_41, %c1_42, %c0_43, %c0_44] : memref<1x4x64x128xbf16, #tpu.memory_space<vmem>>, vector<1x1x64x128xbf16>
    %58 = vector.shape_cast %57 : vector<1x1x64x128xbf16> to vector<64x128xbf16>
    %59 = vector.shape_cast %56 : vector<64x128xbf16> to vector<1x1x64x128xbf16>
    tpu.vector_store %arg5[%c0_41, %c1_42, %c0_43, %c0_44], %59 {strides = array<i32>} : memref<1x4x64x128xbf16, #tpu.memory_space<vmem>>, vector<1x1x64x128xbf16>,
    %c0_45 = arith.constant 0 : index
    %c2_46 = arith.constant 2 : index
    %c0_47 = arith.constant 0 : index
    %c0_48 = arith.constant 0 : index
    %c0_49 = arith.constant 0 : index
    %60 = vector.load %arg2[%c0_45, %c2_46, %c0_47, %c0_48, %c0_49] : memref<1x6x10x10x192xbf16, #tpu.memory_space<vmem>>, vector<1x1x10x10x192xbf16>
    %61 = vector.shape_cast %60 : vector<1x1x10x10x192xbf16> to vector<10x10x192xbf16>
    %c0_50 = arith.constant 0 : index
    %c3_51 = arith.constant 3 : index
    %c0_52 = arith.constant 0 : index
    %c0_53 = arith.constant 0 : index
    %c0_54 = arith.constant 0 : index
    %62 = vector.load %arg2[%c0_50, %c3_51, %c0_52, %c0_53, %c0_54] : memref<1x6x10x10x192xbf16, #tpu.memory_space<vmem>>, vector<1x1x10x10x192xbf16>
    %63 = vector.shape_cast %62 : vector<1x1x10x10x192xbf16> to vector<10x10x192xbf16>
    %64 = arith.maximumf %61, %63 : vector<10x10x192xbf16>
    %c0_55 = arith.constant 0 : index
    %c4 = arith.constant 4 : index
    %c0_56 = arith.constant 0 : index
    %c0_57 = arith.constant 0 : index
    %c0_58 = arith.constant 0 : index
    %65 = vector.load %arg2[%c0_55, %c4, %c0_56, %c0_57, %c0_58] : memref<1x6x10x10x192xbf16, #tpu.memory_space<vmem>>, vector<1x1x10x10x192xbf16>
    %66 = vector.shape_cast %65 : vector<1x1x10x10x192xbf16> to vector<10x10x192xbf16>
    %67 = arith.maximumf %64, %66 : vector<10x10x192xbf16>
    %68 = vector.extract_strided_slice %67 {offsets = [0, 0, 0], sizes = [8, 10, 192], strides = [1, 1, 1]} : vector<10x10x192xbf16> to vector<8x10x192xbf16>
    %69 = vector.extract_strided_slice %67 {offsets = [1, 0, 0], sizes = [8, 10, 192], strides = [1, 1, 1]} : vector<10x10x192xbf16> to vector<8x10x192xbf16>
    %70 = arith.maximumf %68, %69 : vector<8x10x192xbf16>
    %71 = vector.extract_strided_slice %67 {offsets = [2, 0, 0], sizes = [8, 10, 192], strides = [1, 1, 1]} : vector<10x10x192xbf16> to vector<8x10x192xbf16>
    %72 = arith.maximumf %70, %71 : vector<8x10x192xbf16>
    %73 = vector.extract_strided_slice %72 {offsets = [0, 0, 0], sizes = [8, 8, 192], strides = [1, 1, 1]} : vector<8x10x192xbf16> to vector<8x8x192xbf16>
    %74 = vector.extract_strided_slice %72 {offsets = [0, 1, 0], sizes = [8, 8, 192], strides = [1, 1, 1]} : vector<8x10x192xbf16> to vector<8x8x192xbf16>
    %75 = arith.maximumf %73, %74 : vector<8x8x192xbf16>
    %76 = vector.extract_strided_slice %72 {offsets = [0, 2, 0], sizes = [8, 8, 192], strides = [1, 1, 1]} : vector<8x10x192xbf16> to vector<8x8x192xbf16>
    %77 = arith.maximumf %75, %76 : vector<8x8x192xbf16>
    %78 = vector.shape_cast %77 : vector<8x8x192xbf16> to vector<64x192xbf16>
    %c0_59 = arith.constant 0 : index
    %c0_60 = arith.constant 0 : index
    %79 = vector.load %arg3[%c0_59, %c0_60] : memref<192x128xbf16, #tpu.memory_space<vmem>>, vector<192x128xbf16>
    %cst_61 = arith.constant dense<0.000000e+00> : vector<64x128xf32>
    %80 = tpu.matmul %78, %79, %cst_61 {dimension_numbers = #tpu.dot_dimension_numbers<[1], [0], [0], [1], [0, 0, 1, 1], [], []>} : vector<64x192xbf16>, vector<192x128xbf16>, vector<64x128xf32> -> vector<64x128xf32>
    %c0_62 = arith.constant 0 : index
    %c0_63 = arith.constant 0 : index
    %81 = vector.load %arg4[%c0_62, %c0_63] : memref<1x128xf32, #tpu.memory_space<vmem>>, vector<1x128xf32>
    %82 = vector.broadcast %81 : vector<1x128xf32> to vector<64x128xf32>
    %83 = arith.addf %80, %82 : vector<64x128xf32>
    %cst_64 = arith.constant 0.000000e+00 : f32
    %84 = vector.broadcast %cst_64 : f32 to vector<64x128xf32>
    %85 = arith.maximumf %83, %84 : vector<64x128xf32>
    %86 = arith.truncf %85 : vector<64x128xf32> to vector<64x128xbf16>
    %c0_65 = arith.constant 0 : index
    %c2_66 = arith.constant 2 : index
    %c0_67 = arith.constant 0 : index
    %c0_68 = arith.constant 0 : index
    %87 = vector.load %arg5[%c0_65, %c2_66, %c0_67, %c0_68] : memref<1x4x64x128xbf16, #tpu.memory_space<vmem>>, vector<1x1x64x128xbf16>
    %88 = vector.shape_cast %87 : vector<1x1x64x128xbf16> to vector<64x128xbf16>
    %89 = vector.shape_cast %86 : vector<64x128xbf16> to vector<1x1x64x128xbf16>
    tpu.vector_store %arg5[%c0_65, %c2_66, %c0_67, %c0_68], %89 {strides = array<i32>} : memref<1x4x64x128xbf16, #tpu.memory_space<vmem>>, vector<1x1x64x128xbf16>,
    %c0_69 = arith.constant 0 : index
    %c3_70 = arith.constant 3 : index
    %c0_71 = arith.constant 0 : index
    %c0_72 = arith.constant 0 : index
    %c0_73 = arith.constant 0 : index
    %90 = vector.load %arg2[%c0_69, %c3_70, %c0_71, %c0_72, %c0_73] : memref<1x6x10x10x192xbf16, #tpu.memory_space<vmem>>, vector<1x1x10x10x192xbf16>
    %91 = vector.shape_cast %90 : vector<1x1x10x10x192xbf16> to vector<10x10x192xbf16>
    %c0_74 = arith.constant 0 : index
    %c4_75 = arith.constant 4 : index
    %c0_76 = arith.constant 0 : index
    %c0_77 = arith.constant 0 : index
    %c0_78 = arith.constant 0 : index
    %92 = vector.load %arg2[%c0_74, %c4_75, %c0_76, %c0_77, %c0_78] : memref<1x6x10x10x192xbf16, #tpu.memory_space<vmem>>, vector<1x1x10x10x192xbf16>
    %93 = vector.shape_cast %92 : vector<1x1x10x10x192xbf16> to vector<10x10x192xbf16>
    %94 = arith.maximumf %91, %93 : vector<10x10x192xbf16>
    %c0_79 = arith.constant 0 : index
    %c5 = arith.constant 5 : index
    %c0_80 = arith.constant 0 : index
    %c0_81 = arith.constant 0 : index
    %c0_82 = arith.constant 0 : index
    %95 = vector.load %arg2[%c0_79, %c5, %c0_80, %c0_81, %c0_82] : memref<1x6x10x10x192xbf16, #tpu.memory_space<vmem>>, vector<1x1x10x10x192xbf16>
    %96 = vector.shape_cast %95 : vector<1x1x10x10x192xbf16> to vector<10x10x192xbf16>
    %97 = arith.maximumf %94, %96 : vector<10x10x192xbf16>
    %98 = vector.extract_strided_slice %97 {offsets = [0, 0, 0], sizes = [8, 10, 192], strides = [1, 1, 1]} : vector<10x10x192xbf16> to vector<8x10x192xbf16>
    %99 = vector.extract_strided_slice %97 {offsets = [1, 0, 0], sizes = [8, 10, 192], strides = [1, 1, 1]} : vector<10x10x192xbf16> to vector<8x10x192xbf16>
    %100 = arith.maximumf %98, %99 : vector<8x10x192xbf16>
    %101 = vector.extract_strided_slice %97 {offsets = [2, 0, 0], sizes = [8, 10, 192], strides = [1, 1, 1]} : vector<10x10x192xbf16> to vector<8x10x192xbf16>
    %102 = arith.maximumf %100, %101 : vector<8x10x192xbf16>
    %103 = vector.extract_strided_slice %102 {offsets = [0, 0, 0], sizes = [8, 8, 192], strides = [1, 1, 1]} : vector<8x10x192xbf16> to vector<8x8x192xbf16>
    %104 = vector.extract_strided_slice %102 {offsets = [0, 1, 0], sizes = [8, 8, 192], strides = [1, 1, 1]} : vector<8x10x192xbf16> to vector<8x8x192xbf16>
    %105 = arith.maximumf %103, %104 : vector<8x8x192xbf16>
    %106 = vector.extract_strided_slice %102 {offsets = [0, 2, 0], sizes = [8, 8, 192], strides = [1, 1, 1]} : vector<8x10x192xbf16> to vector<8x8x192xbf16>
    %107 = arith.maximumf %105, %106 : vector<8x8x192xbf16>
    %108 = vector.shape_cast %107 : vector<8x8x192xbf16> to vector<64x192xbf16>
    %c0_83 = arith.constant 0 : index
    %c0_84 = arith.constant 0 : index
    %109 = vector.load %arg3[%c0_83, %c0_84] : memref<192x128xbf16, #tpu.memory_space<vmem>>, vector<192x128xbf16>
    %cst_85 = arith.constant dense<0.000000e+00> : vector<64x128xf32>
    %110 = tpu.matmul %108, %109, %cst_85 {dimension_numbers = #tpu.dot_dimension_numbers<[1], [0], [0], [1], [0, 0, 1, 1], [], []>} : vector<64x192xbf16>, vector<192x128xbf16>, vector<64x128xf32> -> vector<64x128xf32>
    %c0_86 = arith.constant 0 : index
    %c0_87 = arith.constant 0 : index
    %111 = vector.load %arg4[%c0_86, %c0_87] : memref<1x128xf32, #tpu.memory_space<vmem>>, vector<1x128xf32>
    %112 = vector.broadcast %111 : vector<1x128xf32> to vector<64x128xf32>
    %113 = arith.addf %110, %112 : vector<64x128xf32>
    %cst_88 = arith.constant 0.000000e+00 : f32
    %114 = vector.broadcast %cst_88 : f32 to vector<64x128xf32>
    %115 = arith.maximumf %113, %114 : vector<64x128xf32>
    %116 = arith.truncf %115 : vector<64x128xf32> to vector<64x128xbf16>
    %c0_89 = arith.constant 0 : index
    %c3_90 = arith.constant 3 : index
    %c0_91 = arith.constant 0 : index
    %c0_92 = arith.constant 0 : index
    %117 = vector.load %arg5[%c0_89, %c3_90, %c0_91, %c0_92] : memref<1x4x64x128xbf16, #tpu.memory_space<vmem>>, vector<1x1x64x128xbf16>
    %118 = vector.shape_cast %117 : vector<1x1x64x128xbf16> to vector<64x128xbf16>
    %119 = vector.shape_cast %116 : vector<64x128xbf16> to vector<1x1x64x128xbf16>
    tpu.vector_store %arg5[%c0_89, %c3_90, %c0_91, %c0_92], %119 {strides = array<i32>} : memref<1x4x64x128xbf16, #tpu.memory_space<vmem>>, vector<1x1x64x128xbf16>,
    return
  }
  func.func @transform_0(%arg0: i32, %arg1: i32) -> (i32, i32, i32, i32, i32) {
    %c0_i32 = arith.constant 0 : i32
    %c0_i32_0 = arith.constant 0 : i32
    %c0_i32_1 = arith.constant 0 : i32
    %c0_i32_2 = arith.constant 0 : i32
    %c0_i32_3 = arith.constant 0 : i32
    return %arg0, %c0_i32, %c0_i32_0, %c0_i32_1, %c0_i32_2 : i32, i32, i32, i32, i32
  }
  func.func @transform_1(%arg0: i32, %arg1: i32) -> (i32, i32) {
    %c0_i32 = arith.constant 0 : i32
    %c0_i32_0 = arith.constant 0 : i32
    return %c0_i32, %arg1 : i32, i32
  }
  func.func @transform_2(%arg0: i32, %arg1: i32) -> (i32, i32) {
    %c0_i32 = arith.constant 0 : i32
    %c0_i32_0 = arith.constant 0 : i32
    return %c0_i32, %arg1 : i32, i32
  }
  func.func @transform_3(%arg0: i32, %arg1: i32) -> (i32, i32, i32, i32) {
    %c0_i32 = arith.constant 0 : i32
    %c0_i32_0 = arith.constant 0 : i32
    %c0_i32_1 = arith.constant 0 : i32
    return %arg0, %c0_i32, %c0_i32_0, %arg1 : i32, i32, i32, i32
  }
}

</mosaic_0001>

<llo_original>
// kernel: mixed_3b.4
$region0: #{mixed_3b.4}
  #allocation0 [shape = 'u32[]', space=smem, size = 0x4, offset = 0x4, fixed_abs, tag = 'smem constant byte address 0x4 - core index']
  #allocation1 [shape = 'u32[144,128]{1,0:T(1,128)}', space=vmem, size = 0x12000, scoped, tag = 'internal scratch']
  %s0 = inlined_call_operand.vmem [shape: bf16[512,192], index: 0, kind: input, shape index: {}]
  %s1 = inlined_call_operand.vmem [shape: bf16[192,256], index: 1, kind: input, shape index: {}]
  %s2 = inlined_call_operand.vmem [shape: f32[1,256], index: 2, kind: input, shape index: {}]
  %s3 = inlined_call_operand.vmem [shape: bf16[512,256], index: 3, kind: output, shape index: {}]
  %s4 = sld [smem:[#allocation0]]
  $region22: #{mixed_3b.4} parent=0
    _
  %s6 = ssub.s32 1, %s4
  %s7 = scalar_select 0, %s6, %s4
  // Predicated region
  $region2: #{mixed_3b.4} parent=0 // pred_check
    _
  $region3: #{mixed_3b.4} parent=0 // pred_check_branch
    %9 = sbr.rel (0) target = $region5
  $region4: #{mixed_3b.4} parent=0 // pred_region
    _
  $region5: #{mixed_3b.4} parent=0 // pred_fallthru
    _
  // Predicated region
  $region6: #{mixed_3b.4} parent=0 // pred_check
    _
  $region7: #{mixed_3b.4} parent=0 // pred_check_branch
    %11 = sbr.rel (0) target = $region9
  $region8: #{mixed_3b.4} parent=0 // pred_region
    _
  $region9: #{mixed_3b.4} parent=0 // pred_fallthru
    _
  // Predicated region
  $region10: #{mixed_3b.4} parent=0 // pred_check
    _
  $region11: #{mixed_3b.4} parent=0 // pred_check_branch
    %13 = sbr.rel (0) target = $region13
  $region12: #{mixed_3b.4} parent=0 // pred_region
    _
  $region13: #{mixed_3b.4} parent=0 // pred_fallthru
    _
  %v15 = vld [vmem:[%s0] sm:$0xff]
  %v16 = vld [vmem:[%s0 + $0x8] sm:$0xff]
  %v17 = vld [vmem:[%s0 + $0x10] sm:$0xff]
  %v18 = vld [vmem:[%s0 + $0x18] sm:$0xff]
  %v19 = vld [vmem:[%s0 + $0x20] sm:$0xff]
  %v20 = vld [vmem:[%s0 + $0x28] sm:$0xff]
  %v21 = vld [vmem:[%s0 + $0x30] sm:$0xff]
  %v22 = vld [vmem:[%s0 + $0x38] sm:$0xff]
  %v23 = vld [vmem:[%s0 + $0x40] sm:$0xff]
  %v24 = vld [vmem:[%s0 + $0x48] sm:$0xff]
  %v25 = vld [vmem:[%s0 + $0x50] sm:$0xff]
  %v26 = vld [vmem:[%s0 + $0x58] sm:$0xff]
  %v27 = vld [vmem:[%s0 + $0x60] sm:$0xff]
  %v28 = vld [vmem:[%s0 + $0x68] sm:$0xff]
  %v29 = vld [vmem:[%s0 + $0x70] sm:$0xff]
  %v30 = vld [vmem:[%s0 + $0x78] sm:$0xff]
  %v31 = vld [vmem:[%s0 + $0x80] sm:$0xff]
  %v32 = vld [vmem:[%s0 + $0x88] sm:$0xff]
  %v33 = vld [vmem:[%s0 + $0x90] sm:$0xff]
  %v34 = vld [vmem:[%s0 + $0x98] sm:$0xff]
  %v35 = vld [vmem:[%s0 + $0xa0] sm:$0xff]
  %v36 = vld [vmem:[%s0 + $0xa8] sm:$0xff]
  %v37 = vld [vmem:[%s0 + $0xb0] sm:$0xff]
  %v38 = vld [vmem:[%s0 + $0xb8] sm:$0xff]
  %v39 = vld [vmem:[%s0 + $0xc0] sm:$0xff]
  %v40 = vld [vmem:[%s0 + $0xc8] sm:$0xff]
  %v41 = vld [vmem:[%s0 + $0xd0] sm:$0xff]
  %v42 = vld [vmem:[%s0 + $0xd8] sm:$0xff]
  %v43 = vld [vmem:[%s0 + $0xe0] sm:$0xff]
  %v44 = vld [vmem:[%s0 + $0xe8] sm:$0xff]
  %v45 = vld [vmem:[%s0 + $0xf0] sm:$0xff]
  %v46 = vld [vmem:[%s0 + $0xf8] sm:$0xff]
  %v47 = vld [vmem:[%s0 + $0x100] sm:$0xff]
  %v48 = vld [vmem:[%s0 + $0x108] sm:$0xff]
  %v49 = vld [vmem:[%s0 + $0x110] sm:$0xff]
  %v50 = vld [vmem:[%s0 + $0x118] sm:$0xff]
  %v51 = vld [vmem:[%s0 + $0x120] sm:$0xff]
  %v52 = vld [vmem:[%s0 + $0x128] sm:$0xff]
  %v53 = vld [vmem:[%s0 + $0x130] sm:$0xff]
  %v54 = vld [vmem:[%s0 + $0x138] sm:$0xff]
  %v55 = vld [vmem:[%s0 + $0x140] sm:$0xff]
  %v56 = vld [vmem:[%s0 + $0x148] sm:$0xff]
  %v57 = vld [vmem:[%s0 + $0x150] sm:$0xff]
  %v58 = vld [vmem:[%s0 + $0x158] sm:$0xff]
  %v59 = vld [vmem:[%s0 + $0x160] sm:$0xff]
  %v60 = vld [vmem:[%s0 + $0x168] sm:$0xff]
  %v61 = vld [vmem:[%s0 + $0x170] sm:$0xff]
  %v62 = vld [vmem:[%s0 + $0x178] sm:$0xff]
  %v63 = vld [vmem:[%s0 + $0x180] sm:$0xff]
  %v64 = vld [vmem:[%s0 + $0x188] sm:$0xff]
  %v65 = vld [vmem:[%s0 + $0x190] sm:$0xff]
  %v66 = vld [vmem:[%s0 + $0x198] sm:$0xff]
  %v67 = vld [vmem:[%s0 + $0x1a0] sm:$0xff]
  %v68 = vld [vmem:[%s0 + $0x1a8] sm:$0xff]
  %v69 = vld [vmem:[%s0 + $0x1b0] sm:$0xff]
  %v70 = vld [vmem:[%s0 + $0x1b8] sm:$0xff]
  %v71 = vld [vmem:[%s0 + $0x1c0] sm:$0xff]
  %v72 = vld [vmem:[%s0 + $0x1c8] sm:$0xff]
  %v73 = vld [vmem:[%s0 + $0x1d0] sm:$0xff]
  %v74 = vld [vmem:[%s0 + $0x1d8] sm:$0xff]
  %v75 = vld [vmem:[%s0 + $0x1e0] sm:$0xff]
  %v76 = vld [vmem:[%s0 + $0x1e8] sm:$0xff]
  %v77 = vld [vmem:[%s0 + $0x1f0] sm:$0xff]
  %v78 = vld [vmem:[%s0 + $0x1f8] sm:$0xff]
  %v79 = vld [vmem:[%s1] sm:$0xff]
  %v80 = vld [vmem:[%s1 + $0x8] sm:$0xff]
  %v81 = vld [vmem:[%s1 + $0x10] sm:$0xff]
  %v82 = vld [vmem:[%s1 + $0x18] sm:$0xff]
  %v83 = vld [vmem:[%s1 + $0x20] sm:$0xff]
  %v84 = vld [vmem:[%s1 + $0x28] sm:$0xff]
  %v85 = vld [vmem:[%s1 + $0x30] sm:$0xff]
  %v86 = vld [vmem:[%s1 + $0x38] sm:$0xff]
  %v87 = vld [vmem:[%s1 + $0x40] sm:$0xff]
  %v88 = vld [vmem:[%s1 + $0x48] sm:$0xff]
  %v89 = vld [vmem:[%s1 + $0x50] sm:$0xff]
  %v90 = vld [vmem:[%s1 + $0x58] sm:$0xff]
  %v91 = vld [vmem:[%s1 + $0x60] sm:$0xff]
  %v92 = vld [vmem:[%s1 + $0x68] sm:$0xff]
  %v93 = vld [vmem:[%s1 + $0x70] sm:$0xff]
  %v94 = vld [vmem:[%s1 + $0x78] sm:$0xff]
  %v95 = vld [vmem:[%s1 + $0x80] sm:$0xff]
  %v96 = vld [vmem:[%s1 + $0x88] sm:$0xff]
  %v97 = vld [vmem:[%s1 + $0x90] sm:$0xff]
  %v98 = vld [vmem:[%s1 + $0x98] sm:$0xff]
  %v99 = vld [vmem:[%s1 + $0xa0] sm:$0xff]
  %v100 = vld [vmem:[%s1 + $0xa8] sm:$0xff]
  %v101 = vld [vmem:[%s1 + $0xb0] sm:$0xff]
  %v102 = vld [vmem:[%s1 + $0xb8] sm:$0xff]
  %v103 = vld [vmem:[%s2] sm:$0x3]
  %v105 = vlaneseq
  %v106 = vshrl.u32 %v105, 7
  %v107 = vsub.s32 0, %v106
  %v108 = vrot.slane %v103, %v107
  %v109 = vlaneseq
  %v110 = vshrl.u32 %v109, 7
  %v111 = vsub.s32 1, %v110
  %v112 = vrot.slane %v103, %v111
  %v179 = vunpack.c.l.b16 %v15
  %v180 = vunpack.c.h.b16 %v15
  %v181 = vunpack.c.l.b16 %v16
  %v182 = vunpack.c.h.b16 %v16
  %v183 = vunpack.c.l.b16 %v17
  %v184 = vunpack.c.h.b16 %v17
  %v185 = vunpack.c.l.b16 %v18
  %v186 = vunpack.c.h.b16 %v18
  %v187 = vunpack.c.l.b16 %v19
  %v188 = vunpack.c.h.b16 %v19
  %v189 = vunpack.c.l.b16 %v20
  %v190 = vunpack.c.h.b16 %v20
  %v191 = vunpack.c.l.b16 %v21
  %v192 = vunpack.c.h.b16 %v21
  %v193 = vunpack.c.l.b16 %v22
  %v194 = vunpack.c.h.b16 %v22
  %v195 = vunpack.c.l.b16 %v23
  %v196 = vunpack.c.h.b16 %v23
  %v197 = vunpack.c.l.b16 %v24
  %v198 = vunpack.c.h.b16 %v24
  %v199 = vunpack.c.l.b16 %v25
  %v200 = vunpack.c.h.b16 %v25
  %v201 = vunpack.c.l.b16 %v26
  %v202 = vunpack.c.h.b16 %v26
  %v203 = vunpack.c.l.b16 %v27
  %v204 = vunpack.c.h.b16 %v27
  %v205 = vunpack.c.l.b16 %v28
  %v206 = vunpack.c.h.b16 %v28
  %v207 = vunpack.c.l.b16 %v29
  %v208 = vunpack.c.h.b16 %v29
  %v209 = vunpack.c.l.b16 %v30
  %v210 = vunpack.c.h.b16 %v30
  %v211 = vunpack.c.l.b16 %v31
  %v212 = vunpack.c.h.b16 %v31
  %v213 = vunpack.c.l.b16 %v32
  %v214 = vunpack.c.h.b16 %v32
  %v215 = vunpack.c.l.b16 %v33
  %v216 = vunpack.c.h.b16 %v33
  %v217 = vunpack.c.l.b16 %v34
  %v218 = vunpack.c.h.b16 %v34
  %v219 = vunpack.c.l.b16 %v35
  %v220 = vunpack.c.h.b16 %v35
  %v221 = vunpack.c.l.b16 %v36
  %v222 = vunpack.c.h.b16 %v36
  %v223 = vunpack.c.l.b16 %v37
  %v224 = vunpack.c.h.b16 %v37
  %v225 = vunpack.c.l.b16 %v38
  %v226 = vunpack.c.h.b16 %v38
  %v227 = vunpack.c.l.b16 %v39
  %v228 = vunpack.c.h.b16 %v39
  %v229 = vunpack.c.l.b16 %v40
  %v230 = vunpack.c.h.b16 %v40
  %v231 = vunpack.c.l.b16 %v41
  %v232 = vunpack.c.h.b16 %v41
  %v233 = vunpack.c.l.b16 %v42
  %v234 = vunpack.c.h.b16 %v42
  %v235 = vunpack.c.l.b16 %v43
  %v236 = vunpack.c.h.b16 %v43
  %v237 = vunpack.c.l.b16 %v44
  %v238 = vunpack.c.h.b16 %v44
  %v239 = vunpack.c.l.b16 %v45
  %v240 = vunpack.c.h.b16 %v45
  %v241 = vunpack.c.l.b16 %v46
  %v242 = vunpack.c.h.b16 %v46
  %v243 = vunpack.c.l.b16 %v47
  %v244 = vunpack.c.h.b16 %v47
  %v245 = vunpack.c.l.b16 %v48
  %v246 = vunpack.c.h.b16 %v48
  %v247 = vunpack.c.l.b16 %v49
  %v248 = vunpack.c.h.b16 %v49
  %v249 = vunpack.c.l.b16 %v50
  %v250 = vunpack.c.h.b16 %v50
  %v251 = vunpack.c.l.b16 %v51
  %v252 = vunpack.c.h.b16 %v51
  %v253 = vunpack.c.l.b16 %v52
  %v254 = vunpack.c.h.b16 %v52
  %v255 = vunpack.c.l.b16 %v53
  %v256 = vunpack.c.h.b16 %v53
  %v257 = vunpack.c.l.b16 %v54
  %v258 = vunpack.c.h.b16 %v54
  %v259 = vunpack.c.l.b16 %v55
  %v260 = vunpack.c.h.b16 %v55
  %v261 = vunpack.c.l.b16 %v56
  %v262 = vunpack.c.h.b16 %v56
  %v263 = vunpack.c.l.b16 %v57
  %v264 = vunpack.c.h.b16 %v57
  %v265 = vunpack.c.l.b16 %v58
  %v266 = vunpack.c.h.b16 %v58
  %v267 = vunpack.c.l.b16 %v59
  %v268 = vunpack.c.h.b16 %v59
  %v269 = vunpack.c.l.b16 %v60
  %v270 = vunpack.c.h.b16 %v60
  %v271 = vunpack.c.l.b16 %v61
  %v272 = vunpack.c.h.b16 %v61
  %v273 = vunpack.c.l.b16 %v62
  %v274 = vunpack.c.h.b16 %v62
  %v275 = vunpack.c.l.b16 %v63
  %v276 = vunpack.c.h.b16 %v63
  %v277 = vunpack.c.l.b16 %v64
  %v278 = vunpack.c.h.b16 %v64
  %v279 = vunpack.c.l.b16 %v65
  %v280 = vunpack.c.h.b16 %v65
  %v281 = vunpack.c.l.b16 %v66
  %v282 = vunpack.c.h.b16 %v66
  %v283 = vunpack.c.l.b16 %v67
  %v284 = vunpack.c.h.b16 %v67
  %v285 = vunpack.c.l.b16 %v68
  %v286 = vunpack.c.h.b16 %v68
  %v287 = vunpack.c.l.b16 %v69
  %v288 = vunpack.c.h.b16 %v69
  %v289 = vunpack.c.l.b16 %v70
  %v290 = vunpack.c.h.b16 %v70
  %v291 = vunpack.c.l.b16 %v71
  %v292 = vunpack.c.h.b16 %v71
  %v293 = vunpack.c.l.b16 %v72
  %v294 = vunpack.c.h.b16 %v72
  %v295 = vunpack.c.l.b16 %v73
  %v296 = vunpack.c.h.b16 %v73
  %v297 = vunpack.c.l.b16 %v74
  %v298 = vunpack.c.h.b16 %v74
  %v299 = vunpack.c.l.b16 %v75
  %v300 = vunpack.c.h.b16 %v75
  %v301 = vunpack.c.l.b16 %v76
  %v302 = vunpack.c.h.b16 %v76
  %v303 = vunpack.c.l.b16 %v77
  %v304 = vunpack.c.h.b16 %v77
  %v305 = vunpack.c.l.b16 %v78
  %v306 = vunpack.c.h.b16 %v78
  %v307 = vpack.c.b16 %v181, %v179
  %v308 = vpack.c.b16 %v182, %v180
  %v309 = vpack.c.b16 %v185, %v183
  %v310 = vpack.c.b16 %v186, %v184
  %v311 = vpack.c.b16 %v189, %v187
  %v312 = vpack.c.b16 %v190, %v188
  %v313 = vpack.c.b16 %v193, %v191
  %v314 = vpack.c.b16 %v194, %v192
  %v315 = vpack.c.b16 %v197, %v195
  %v316 = vpack.c.b16 %v198, %v196
  %v317 = vpack.c.b16 %v201, %v199
  %v318 = vpack.c.b16 %v202, %v200
  %v319 = vpack.c.b16 %v205, %v203
  %v320 = vpack.c.b16 %v206, %v204
  %v321 = vpack.c.b16 %v209, %v207
  %v322 = vpack.c.b16 %v210, %v208
  %v323 = vpack.c.b16 %v213, %v211
  %v324 = vpack.c.b16 %v214, %v212
  %v325 = vpack.c.b16 %v217, %v215
  %v326 = vpack.c.b16 %v218, %v216
  %v327 = vpack.c.b16 %v221, %v219
  %v328 = vpack.c.b16 %v222, %v220
  %v329 = vpack.c.b16 %v225, %v223
  %v330 = vpack.c.b16 %v226, %v224
  %v331 = vpack.c.b16 %v229, %v227
  %v332 = vpack.c.b16 %v230, %v228
  %v333 = vpack.c.b16 %v233, %v231
  %v334 = vpack.c.b16 %v234, %v232
  %v335 = vpack.c.b16 %v237, %v235
  %v336 = vpack.c.b16 %v238, %v236
  %v337 = vpack.c.b16 %v241, %v239
  %v338 = vpack.c.b16 %v242, %v240
  %v339 = vpack.c.b16 %v245, %v243
  %v340 = vpack.c.b16 %v246, %v244
  %v341 = vpack.c.b16 %v249, %v247
  %v342 = vpack.c.b16 %v250, %v248
  %v343 = vpack.c.b16 %v253, %v251
  %v344 = vpack.c.b16 %v254, %v252
  %v345 = vpack.c.b16 %v257, %v255
  %v346 = vpack.c.b16 %v258, %v256
  %v347 = vpack.c.b16 %v261, %v259
  %v348 = vpack.c.b16 %v262, %v260
  %v349 = vpack.c.b16 %v265, %v263
  %v350 = vpack.c.b16 %v266, %v264
  %v351 = vpack.c.b16 %v269, %v267
  %v352 = vpack.c.b16 %v270, %v268
  %v353 = vpack.c.b16 %v273, %v271
  %v354 = vpack.c.b16 %v274, %v272
  %v355 = vpack.c.b16 %v277, %v275
  %v356 = vpack.c.b16 %v278, %v276
  %v357 = vpack.c.b16 %v281, %v279
  %v358 = vpack.c.b16 %v282, %v280
  %v359 = vpack.c.b16 %v285, %v283
  %v360 = vpack.c.b16 %v286, %v284
  %v361 = vpack.c.b16 %v289, %v287
  %v362 = vpack.c.b16 %v290, %v288
  %v363 = vpack.c.b16 %v293, %v291
  %v364 = vpack.c.b16 %v294, %v292
  %v365 = vpack.c.b16 %v297, %v295
  %v366 = vpack.c.b16 %v298, %v296
  %v367 = vpack.c.b16 %v301, %v299
  %v368 = vpack.c.b16 %v302, %v300
  %v369 = vpack.c.b16 %v305, %v303
  %v370 = vpack.c.b16 %v306, %v304
  %v427 = vunpack.c.l.b16 %v79
  %v428 = vunpack.c.h.b16 %v79
  %v429 = vunpack.c.l.b16 %v80
  %v430 = vunpack.c.h.b16 %v80
  %v431 = vunpack.c.l.b16 %v81
  %v432 = vunpack.c.h.b16 %v81
  %v433 = vunpack.c.l.b16 %v82
  %v434 = vunpack.c.h.b16 %v82
  %v435 = vunpack.c.l.b16 %v83
  %v436 = vunpack.c.h.b16 %v83
  %v437 = vunpack.c.l.b16 %v84
  %v438 = vunpack.c.h.b16 %v84
  %v439 = vunpack.c.l.b16 %v85
  %v440 = vunpack.c.h.b16 %v85
  %v441 = vunpack.c.l.b16 %v86
  %v442 = vunpack.c.h.b16 %v86
  %v443 = vunpack.c.l.b16 %v87
  %v444 = vunpack.c.h.b16 %v87
  %v445 = vunpack.c.l.b16 %v88
  %v446 = vunpack.c.h.b16 %v88
  %v447 = vunpack.c.l.b16 %v89
  %v448 = vunpack.c.h.b16 %v89
  %v449 = vunpack.c.l.b16 %v90
  %v450 = vunpack.c.h.b16 %v90
  %v451 = vunpack.c.l.b16 %v91
  %v452 = vunpack.c.h.b16 %v91
  %v453 = vunpack.c.l.b16 %v92
  %v454 = vunpack.c.h.b16 %v92
  %v455 = vunpack.c.l.b16 %v93
  %v456 = vunpack.c.h.b16 %v93
  %v457 = vunpack.c.l.b16 %v94
  %v458 = vunpack.c.h.b16 %v94
  %v459 = vunpack.c.l.b16 %v95
  %v460 = vunpack.c.h.b16 %v95
  %v461 = vunpack.c.l.b16 %v96
  %v462 = vunpack.c.h.b16 %v96
  %v463 = vunpack.c.l.b16 %v97
  %v464 = vunpack.c.h.b16 %v97
  %v465 = vunpack.c.l.b16 %v98
  %v466 = vunpack.c.h.b16 %v98
  %v467 = vunpack.c.l.b16 %v99
  %v468 = vunpack.c.h.b16 %v99
  %v469 = vunpack.c.l.b16 %v100
  %v470 = vunpack.c.h.b16 %v100
  %v471 = vunpack.c.l.b16 %v101
  %v472 = vunpack.c.h.b16 %v101
  %v473 = vunpack.c.l.b16 %v102
  %v474 = vunpack.c.h.b16 %v102
  %v475 = vpack.c.b16 %v429, %v427
  %v476 = vpack.c.b16 %v430, %v428
  %v477 = vpack.c.b16 %v433, %v431
  %v478 = vpack.c.b16 %v434, %v432
  %v479 = vpack.c.b16 %v437, %v435
  %v480 = vpack.c.b16 %v438, %v436
  %v481 = vpack.c.b16 %v441, %v439
  %v482 = vpack.c.b16 %v442, %v440
  %v483 = vpack.c.b16 %v445, %v443
  %v484 = vpack.c.b16 %v446, %v444
  %v485 = vpack.c.b16 %v449, %v447
  %v486 = vpack.c.b16 %v450, %v448
  %v487 = vpack.c.b16 %v453, %v451
  %v488 = vpack.c.b16 %v454, %v452
  %v489 = vpack.c.b16 %v457, %v455
  %v490 = vpack.c.b16 %v458, %v456
  %v491 = vpack.c.b16 %v461, %v459
  %v492 = vpack.c.b16 %v462, %v460
  %v493 = vpack.c.b16 %v465, %v463
  %v494 = vpack.c.b16 %v466, %v464
  %v495 = vpack.c.b16 %v469, %v467
  %v496 = vpack.c.b16 %v470, %v468
  %v497 = vpack.c.b16 %v473, %v471
  %v498 = vpack.c.b16 %v474, %v472
  %vm523 = vcmask 523264
  %v525 = vsel %vm523, %v308, 0
  %v528 = vsel %vm523, %v310, 0
  %v531 = vsel %vm523, %v312, 0
  %v534 = vsel %vm523, %v314, 0
  %v537 = vsel %vm523, %v316, 0
  %v540 = vsel %vm523, %v318, 0
  %v543 = vsel %vm523, %v320, 0
  %v546 = vsel %vm523, %v322, 0
  %v549 = vsel %vm523, %v324, 0
  %v552 = vsel %vm523, %v326, 0
  %v555 = vsel %vm523, %v328, 0
  %v558 = vsel %vm523, %v330, 0
  %v561 = vsel %vm523, %v332, 0
  %v564 = vsel %vm523, %v334, 0
  %v567 = vsel %vm523, %v336, 0
  %v570 = vsel %vm523, %v338, 0
  %v573 = vsel %vm523, %v340, 0
  %v576 = vsel %vm523, %v342, 0
  %v579 = vsel %vm523, %v344, 0
  %v582 = vsel %vm523, %v346, 0
  %v585 = vsel %vm523, %v348, 0
  %v588 = vsel %vm523, %v350, 0
  %v591 = vsel %vm523, %v352, 0
  %v594 = vsel %vm523, %v354, 0
  %v597 = vsel %vm523, %v356, 0
  %v600 = vsel %vm523, %v358, 0
  %v603 = vsel %vm523, %v360, 0
  %v606 = vsel %vm523, %v362, 0
  %v609 = vsel %vm523, %v364, 0
  %v612 = vsel %vm523, %v366, 0
  %v615 = vsel %vm523, %v368, 0
  %v618 = vsel %vm523, %v370, 0
  %620 = vmatprep.subr.bf16.mxu0 %v476
  %621 = vmatpush1.bf16.msra.mxu0 %v475
  %622 = vmatprep.subr.bf16.mxu0 %v478
  %623 = vmatpush1.bf16.msra.mxu0 %v477
  %624 = vmatprep.subr.bf16.mxu0 %v480
  %625 = vmatpush1.bf16.msra.mxu0 %v479
  %626 = vmatprep.subr.bf16.mxu0 %v482
  %627 = vmatpush1.bf16.msra.mxu0 %v481
  %628 = vmatprep.subr.bf16.mxu0 %v484
  %629 = vmatpush1.bf16.msra.mxu0 %v483
  %630 = vmatprep.subr.bf16.mxu0 %v486
  %631 = vmatpush1.bf16.msra.mxu0 %v485
  %632 = vmatprep.subr.bf16.mxu0 %v488
  %633 = vmatpush1.bf16.msra.mxu0 %v487
  %634 = vmatprep.subr.bf16.mxu0 %v490
  %635 = vmatpush1.bf16.msra.mxu0 %v489
  %636 = vmatprep.subr.bf16.mxu0 %v492
  %637 = vmatpush1.bf16.msra.mxu0 %v491
  %638 = vmatprep.subr.bf16.mxu0 %v494
  %639 = vmatpush1.bf16.msra.mxu0 %v493
  %640 = vmatprep.subr.bf16.mxu0 %v496
  %641 = vmatpush1.bf16.msra.mxu0 %v495
  %642 = vmatprep.subr.bf16.mxu0 %v498
  %643 = vmatpush1.bf16.msra.mxu0 %v497
  %644 = vmatprep.subr.bf16.mxu0 0
  %645 = vmatpush1.bf16.msra.mxu0 0
  %646 = vmatprep.subr.bf16.mxu0 0
  %647 = vmatpush1.bf16.msra.mxu0 0
  %648 = vmatprep.subr.bf16.mxu0 0
  %649 = vmatpush1.bf16.msra.mxu0 0
  %650 = vmatprep.subr.bf16.mxu0 0
  %651 = vmatpush1.bf16.msra.mxu0 0
  %652 = vmatprep.mubr.bf16.mxu0 %v525
  %653 = vmatmul.mubr.bf16.gmra.mrb[0].mxu0 %v307
  %v654 = vpop.f32.mrb[0].mxu0
  %v655 = vadd.f32 %v108, %v654
  %v656 = vpop.f32.mrb[0].mxu0
  %v657 = vadd.f32 %v112, %v656
  %v658 = vpop.f32.mrb[0].mxu0
  %v659 = vadd.f32 %v108, %v658
  %v660 = vpop.f32.mrb[0].mxu0
  %v661 = vadd.f32 %v112, %v660
  %662 = vmatprep.mubr.bf16.mxu0 %v528
  %663 = vmatmul.mubr.bf16.gmra.mrb[0].mxu0 %v309
  %v664 = vpop.f32.mrb[0].mxu0
  %v665 = vadd.f32 %v108, %v664
  %v666 = vpop.f32.mrb[0].mxu0
  %v667 = vadd.f32 %v112, %v666
  %v668 = vpop.f32.mrb[0].mxu0
  %v669 = vadd.f32 %v108, %v668
  %v670 = vpop.f32.mrb[0].mxu0
  %v671 = vadd.f32 %v112, %v670
  %672 = vmatprep.mubr.bf16.mxu0 %v531
  %673 = vmatmul.mubr.bf16.gmra.mrb[0].mxu0 %v311
  %v674 = vpop.f32.mrb[0].mxu0
  %v675 = vadd.f32 %v108, %v674
  %v676 = vpop.f32.mrb[0].mxu0
  %v677 = vadd.f32 %v112, %v676
  %v678 = vpop.f32.mrb[0].mxu0
  %v679 = vadd.f32 %v108, %v678
  %v680 = vpop.f32.mrb[0].mxu0
  %v681 = vadd.f32 %v112, %v680
  %682 = vmatprep.mubr.bf16.mxu0 %v534
  %683 = vmatmul.mubr.bf16.gmra.mrb[0].mxu0 %v313
  %v684 = vpop.f32.mrb[0].mxu0
  %v685 = vadd.f32 %v108, %v684
  %v686 = vpop.f32.mrb[0].mxu0
  %v687 = vadd.f32 %v112, %v686
  %v688 = vpop.f32.mrb[0].mxu0
  %v689 = vadd.f32 %v108, %v688
  %v690 = vpop.f32.mrb[0].mxu0
  %v691 = vadd.f32 %v112, %v690
  %692 = vmatprep.mubr.bf16.mxu0 %v537
  %693 = vmatmul.mubr.bf16.gmra.mrb[0].mxu0 %v315
  %v694 = vpop.f32.mrb[0].mxu0
  %v695 = vadd.f32 %v108, %v694
  %v696 = vpop.f32.mrb[0].mxu0
  %v697 = vadd.f32 %v112, %v696
  %v698 = vpop.f32.mrb[0].mxu0
  %v699 = vadd.f32 %v108, %v698
  %v700 = vpop.f32.mrb[0].mxu0
  %v701 = vadd.f32 %v112, %v700
  %702 = vmatprep.mubr.bf16.mxu0 %v540
  %703 = vmatmul.mubr.bf16.gmra.mrb[0].mxu0 %v317
  %v704 = vpop.f32.mrb[0].mxu0
  %v705 = vadd.f32 %v108, %v704
  %v706 = vpop.f32.mrb[0].mxu0
  %v707 = vadd.f32 %v112, %v706
  %v708 = vpop.f32.mrb[0].mxu0
  %v709 = vadd.f32 %v108, %v708
  %v710 = vpop.f32.mrb[0].mxu0
  %v711 = vadd.f32 %v112, %v710
  %712 = vmatprep.mubr.bf16.mxu0 %v543
  %713 = vmatmul.mubr.bf16.gmra.mrb[0].mxu0 %v319
  %v714 = vpop.f32.mrb[0].mxu0
  %v715 = vadd.f32 %v108, %v714
  %v716 = vpop.f32.mrb[0].mxu0
  %v717 = vadd.f32 %v112, %v716
  %v718 = vpop.f32.mrb[0].mxu0
  %v719 = vadd.f32 %v108, %v718
  %v720 = vpop.f32.mrb[0].mxu0
  %v721 = vadd.f32 %v112, %v720
  %722 = vmatprep.mubr.bf16.mxu0 %v546
  %723 = vmatmul.mubr.bf16.gmra.mrb[0].mxu0 %v321
  %v724 = vpop.f32.mrb[0].mxu0
  %v725 = vadd.f32 %v108, %v724
  %v726 = vpop.f32.mrb[0].mxu0
  %v727 = vadd.f32 %v112, %v726
  %v728 = vpop.f32.mrb[0].mxu0
  %v729 = vadd.f32 %v108, %v728
  %v730 = vpop.f32.mrb[0].mxu0
  %v731 = vadd.f32 %v112, %v730
  %732 = vmatprep.mubr.bf16.mxu0 %v549
  %733 = vmatmul.mubr.bf16.gmra.mrb[0].mxu0 %v323
  %v734 = vpop.f32.mrb[0].mxu0
  %v735 = vadd.f32 %v108, %v734
  %v736 = vpop.f32.mrb[0].mxu0
  %v737 = vadd.f32 %v112, %v736
  %v738 = vpop.f32.mrb[0].mxu0
  %v739 = vadd.f32 %v108, %v738
  %v740 = vpop.f32.mrb[0].mxu0
  %v741 = vadd.f32 %v112, %v740
  %742 = vmatprep.mubr.bf16.mxu0 %v552
  %743 = vmatmul.mubr.bf16.gmra.mrb[0].mxu0 %v325
  %v744 = vpop.f32.mrb[0].mxu0
  %v745 = vadd.f32 %v108, %v744
  %v746 = vpop.f32.mrb[0].mxu0
  %v747 = vadd.f32 %v112, %v746
  %v748 = vpop.f32.mrb[0].mxu0
  %v749 = vadd.f32 %v108, %v748
  %v750 = vpop.f32.mrb[0].mxu0
  %v751 = vadd.f32 %v112, %v750
  %752 = vmatprep.mubr.bf16.mxu0 %v555
  %753 = vmatmul.mubr.bf16.gmra.mrb[0].mxu0 %v327
  %v754 = vpop.f32.mrb[0].mxu0
  %v755 = vadd.f32 %v108, %v754
  %v756 = vpop.f32.mrb[0].mxu0
  %v757 = vadd.f32 %v112, %v756
  %v758 = vpop.f32.mrb[0].mxu0
  %v759 = vadd.f32 %v108, %v758
  %v760 = vpop.f32.mrb[0].mxu0
  %v761 = vadd.f32 %v112, %v760
  %762 = vmatprep.mubr.bf16.mxu0 %v558
  %763 = vmatmul.mubr.bf16.gmra.mrb[0].mxu0 %v329
  %v764 = vpop.f32.mrb[0].mxu0
  %v765 = vadd.f32 %v108, %v764
  %v766 = vpop.f32.mrb[0].mxu0
  %v767 = vadd.f32 %v112, %v766
  %v768 = vpop.f32.mrb[0].mxu0
  %v769 = vadd.f32 %v108, %v768
  %v770 = vpop.f32.mrb[0].mxu0
  %v771 = vadd.f32 %v112, %v770
  %772 = vmatprep.mubr.bf16.mxu0 %v561
  %773 = vmatmul.mubr.bf16.gmra.mrb[0].mxu0 %v331
  %v774 = vpop.f32.mrb[0].mxu0
  %v775 = vadd.f32 %v108, %v774
  %v776 = vpop.f32.mrb[0].mxu0
  %v777 = vadd.f32 %v112, %v776
  %v778 = vpop.f32.mrb[0].mxu0
  %v779 = vadd.f32 %v108, %v778
  %v780 = vpop.f32.mrb[0].mxu0
  %v781 = vadd.f32 %v112, %v780
  %782 = vmatprep.mubr.bf16.mxu0 %v564
  %783 = vmatmul.mubr.bf16.gmra.mrb[0].mxu0 %v333
  %v784 = vpop.f32.mrb[0].mxu0
  %v785 = vadd.f32 %v108, %v784
  %v786 = vpop.f32.mrb[0].mxu0
  %v787 = vadd.f32 %v112, %v786
  %v788 = vpop.f32.mrb[0].mxu0
  %v789 = vadd.f32 %v108, %v788
  %v790 = vpop.f32.mrb[0].mxu0
  %v791 = vadd.f32 %v112, %v790
  %792 = vmatprep.mubr.bf16.mxu0 %v567
  %793 = vmatmul.mubr.bf16.gmra.mrb[0].mxu0 %v335
  %v794 = vpop.f32.mrb[0].mxu0
  %v795 = vadd.f32 %v108, %v794
  %v796 = vpop.f32.mrb[0].mxu0
  %v797 = vadd.f32 %v112, %v796
  %v798 = vpop.f32.mrb[0].mxu0
  %v799 = vadd.f32 %v108, %v798
  %v800 = vpop.f32.mrb[0].mxu0
  %v801 = vadd.f32 %v112, %v800
  %802 = vmatprep.mubr.bf16.mxu0 %v570
  %803 = vmatmul.mubr.bf16.gmra.mrb[0].mxu0 %v337
  %v804 = vpop.f32.mrb[0].mxu0
  %v805 = vadd.f32 %v108, %v804
  %v806 = vpop.f32.mrb[0].mxu0
  %v807 = vadd.f32 %v112, %v806
  %v808 = vpop.f32.mrb[0].mxu0
  %v809 = vadd.f32 %v108, %v808
  %v810 = vpop.f32.mrb[0].mxu0
  %v811 = vadd.f32 %v112, %v810
  %812 = vmatprep.mubr.bf16.mxu0 %v573
  %813 = vmatmul.mubr.bf16.gmra.mrb[0].mxu0 %v339
  %v814 = vpop.f32.mrb[0].mxu0
  %v815 = vadd.f32 %v108, %v814
  %v816 = vpop.f32.mrb[0].mxu0
  %v817 = vadd.f32 %v112, %v816
  %v818 = vpop.f32.mrb[0].mxu0
  %v819 = vadd.f32 %v108, %v818
  %v820 = vpop.f32.mrb[0].mxu0
  %v821 = vadd.f32 %v112, %v820
  %822 = vmatprep.mubr.bf16.mxu0 %v576
  %823 = vmatmul.mubr.bf16.gmra.mrb[0].mxu0 %v341
  %v824 = vpop.f32.mrb[0].mxu0
  %v825 = vadd.f32 %v108, %v824
  %v826 = vpop.f32.mrb[0].mxu0
  %v827 = vadd.f32 %v112, %v826
  %v828 = vpop.f32.mrb[0].mxu0
  %v829 = vadd.f32 %v108, %v828
  %v830 = vpop.f32.mrb[0].mxu0
  %v831 = vadd.f32 %v112, %v830
  %832 = vmatprep.mubr.bf16.mxu0 %v579
  %833 = vmatmul.mubr.bf16.gmra.mrb[0].mxu0 %v343
  %v834 = vpop.f32.mrb[0].mxu0
  %v835 = vadd.f32 %v108, %v834
  %v836 = vpop.f32.mrb[0].mxu0
  %v837 = vadd.f32 %v112, %v836
  %v838 = vpop.f32.mrb[0].mxu0
  %v839 = vadd.f32 %v108, %v838
  %v840 = vpop.f32.mrb[0].mxu0
  %v841 = vadd.f32 %v112, %v840
  %842 = vmatprep.mubr.bf16.mxu0 %v582
  %843 = vmatmul.mubr.bf16.gmra.mrb[0].mxu0 %v345
  %v844 = vpop.f32.mrb[0].mxu0
  %v845 = vadd.f32 %v108, %v844
  %v846 = vpop.f32.mrb[0].mxu0
  %v847 = vadd.f32 %v112, %v846
  %v848 = vpop.f32.mrb[0].mxu0
  %v849 = vadd.f32 %v108, %v848
  %v850 = vpop.f32.mrb[0].mxu0
  %v851 = vadd.f32 %v112, %v850
  %852 = vmatprep.mubr.bf16.mxu0 %v585
  %853 = vmatmul.mubr.bf16.gmra.mrb[0].mxu0 %v347
  %v854 = vpop.f32.mrb[0].mxu0
  %v855 = vadd.f32 %v108, %v854
  %v856 = vpop.f32.mrb[0].mxu0
  %v857 = vadd.f32 %v112, %v856
  %v858 = vpop.f32.mrb[0].mxu0
  %v859 = vadd.f32 %v108, %v858
  %v860 = vpop.f32.mrb[0].mxu0
  %v861 = vadd.f32 %v112, %v860
  %862 = vmatprep.mubr.bf16.mxu0 %v588
  %863 = vmatmul.mubr.bf16.gmra.mrb[0].mxu0 %v349
  %v864 = vpop.f32.mrb[0].mxu0
  %v865 = vadd.f32 %v108, %v864
  %v866 = vpop.f32.mrb[0].mxu0
  %v867 = vadd.f32 %v112, %v866
  %v868 = vpop.f32.mrb[0].mxu0
  %v869 = vadd.f32 %v108, %v868
  %v870 = vpop.f32.mrb[0].mxu0
  %v871 = vadd.f32 %v112, %v870
  %872 = vmatprep.mubr.bf16.mxu0 %v591
  %873 = vmatmul.mubr.bf16.gmra.mrb[0].mxu0 %v351
  %v874 = vpop.f32.mrb[0].mxu0
  %v875 = vadd.f32 %v108, %v874
  %v876 = vpop.f32.mrb[0].mxu0
  %v877 = vadd.f32 %v112, %v876
  %v878 = vpop.f32.mrb[0].mxu0
  %v879 = vadd.f32 %v108, %v878
  %v880 = vpop.f32.mrb[0].mxu0
  %v881 = vadd.f32 %v112, %v880
  %882 = vmatprep.mubr.bf16.mxu0 %v594
  %883 = vmatmul.mubr.bf16.gmra.mrb[0].mxu0 %v353
  %v884 = vpop.f32.mrb[0].mxu0
  %v885 = vadd.f32 %v108, %v884
  %v886 = vpop.f32.mrb[0].mxu0
  %v887 = vadd.f32 %v112, %v886
  %v888 = vpop.f32.mrb[0].mxu0
  %v889 = vadd.f32 %v108, %v888
  %v890 = vpop.f32.mrb[0].mxu0
  %v891 = vadd.f32 %v112, %v890
  %892 = vmatprep.mubr.bf16.mxu0 %v597
  %893 = vmatmul.mubr.bf16.gmra.mrb[0].mxu0 %v355
  %v894 = vpop.f32.mrb[0].mxu0
  %v895 = vadd.f32 %v108, %v894
  %v896 = vpop.f32.mrb[0].mxu0
  %v897 = vadd.f32 %v112, %v896
  %v898 = vpop.f32.mrb[0].mxu0
  %v899 = vadd.f32 %v108, %v898
  %v900 = vpop.f32.mrb[0].mxu0
  %v901 = vadd.f32 %v112, %v900
  %902 = vmatprep.mubr.bf16.mxu0 %v600
  %903 = vmatmul.mubr.bf16.gmra.mrb[0].mxu0 %v357
  %v904 = vpop.f32.mrb[0].mxu0
  %v905 = vadd.f32 %v108, %v904
  %v906 = vpop.f32.mrb[0].mxu0
  %v907 = vadd.f32 %v112, %v906
  %v908 = vpop.f32.mrb[0].mxu0
  %v909 = vadd.f32 %v108, %v908
  %v910 = vpop.f32.mrb[0].mxu0
  %v911 = vadd.f32 %v112, %v910
  %912 = vmatprep.mubr.bf16.mxu0 %v603
  %913 = vmatmul.mubr.bf16.gmra.mrb[0].mxu0 %v359
  %v914 = vpop.f32.mrb[0].mxu0
  %v915 = vadd.f32 %v108, %v914
  %v916 = vpop.f32.mrb[0].mxu0
  %v917 = vadd.f32 %v112, %v916
  %v918 = vpop.f32.mrb[0].mxu0
  %v919 = vadd.f32 %v108, %v918
  %v920 = vpop.f32.mrb[0].mxu0
  %v921 = vadd.f32 %v112, %v920
  %922 = vmatprep.mubr.bf16.mxu0 %v606
  %923 = vmatmul.mubr.bf16.gmra.mrb[0].mxu0 %v361
  %v924 = vpop.f32.mrb[0].mxu0
  %v925 = vadd.f32 %v108, %v924
  %v926 = vpop.f32.mrb[0].mxu0
  %v927 = vadd.f32 %v112, %v926
  %v928 = vpop.f32.mrb[0].mxu0
  %v929 = vadd.f32 %v108, %v928
  %v930 = vpop.f32.mrb[0].mxu0
  %v931 = vadd.f32 %v112, %v930
  %932 = vmatprep.mubr.bf16.mxu0 %v609
  %933 = vmatmul.mubr.bf16.gmra.mrb[0].mxu0 %v363
  %v934 = vpop.f32.mrb[0].mxu0
  %v935 = vadd.f32 %v108, %v934
  %v936 = vpop.f32.mrb[0].mxu0
  %v937 = vadd.f32 %v112, %v936
  %v938 = vpop.f32.mrb[0].mxu0
  %v939 = vadd.f32 %v108, %v938
  %v940 = vpop.f32.mrb[0].mxu0
  %v941 = vadd.f32 %v112, %v940
  %942 = vmatprep.mubr.bf16.mxu0 %v612
  %943 = vmatmul.mubr.bf16.gmra.mrb[0].mxu0 %v365
  %v944 = vpop.f32.mrb[0].mxu0
  %v945 = vadd.f32 %v108, %v944
  %v946 = vpop.f32.mrb[0].mxu0
  %v947 = vadd.f32 %v112, %v946
  %v948 = vpop.f32.mrb[0].mxu0
  %v949 = vadd.f32 %v108, %v948
  %v950 = vpop.f32.mrb[0].mxu0
  %v951 = vadd.f32 %v112, %v950
  %952 = vmatprep.mubr.bf16.mxu0 %v615
  %953 = vmatmul.mubr.bf16.gmra.mrb[0].mxu0 %v367
  %v954 = vpop.f32.mrb[0].mxu0
  %v955 = vadd.f32 %v108, %v954
  %v956 = vpop.f32.mrb[0].mxu0
  %v957 = vadd.f32 %v112, %v956
  %v958 = vpop.f32.mrb[0].mxu0
  %v959 = vadd.f32 %v108, %v958
  %v960 = vpop.f32.mrb[0].mxu0
  %v961 = vadd.f32 %v112, %v960
  %962 = vmatprep.mubr.bf16.mxu0 %v618
  %963 = vmatmul.mubr.bf16.gmra.mrb[0].mxu0 %v369
  %v964 = vpop.f32.mrb[0].mxu0
  %v965 = vadd.f32 %v108, %v964
  %v966 = vpop.f32.mrb[0].mxu0
  %v967 = vadd.f32 %v112, %v966
  %v968 = vpop.f32.mrb[0].mxu0
  %v969 = vadd.f32 %v108, %v968
  %v970 = vpop.f32.mrb[0].mxu0
  %v971 = vadd.f32 %v112, %v970
  %972 = vdwg.mxu0
  %v973 = vmax.f32 %v655, 0.0
  %v974 = vmax.f32 %v657, 0.0
  %v975 = vmax.f32 %v659, 0.0
  %v976 = vmax.f32 %v661, 0.0
  %v977 = vmax.f32 %v665, 0.0
  %v978 = vmax.f32 %v667, 0.0
  %v979 = vmax.f32 %v669, 0.0
  %v980 = vmax.f32 %v671, 0.0
  %v981 = vmax.f32 %v675, 0.0
  %v982 = vmax.f32 %v677, 0.0
  %v983 = vmax.f32 %v679, 0.0
  %v984 = vmax.f32 %v681, 0.0
  %v985 = vmax.f32 %v685, 0.0
  %v986 = vmax.f32 %v687, 0.0
  %v987 = vmax.f32 %v689, 0.0
  %v988 = vmax.f32 %v691, 0.0
  %v989 = vmax.f32 %v695, 0.0
  %v990 = vmax.f32 %v697, 0.0
  %v991 = vmax.f32 %v699, 0.0
  %v992 = vmax.f32 %v701, 0.0
  %v993 = vmax.f32 %v705, 0.0
  %v994 = vmax.f32 %v707, 0.0
  %v995 = vmax.f32 %v709, 0.0
  %v996 = vmax.f32 %v711, 0.0
  %v997 = vmax.f32 %v715, 0.0
  %v998 = vmax.f32 %v717, 0.0
  %v999 = vmax.f32 %v719, 0.0
  %v1000 = vmax.f32 %v721, 0.0
  %v1001 = vmax.f32 %v725, 0.0
  %v1002 = vmax.f32 %v727, 0.0
  %v1003 = vmax.f32 %v729, 0.0
  %v1004 = vmax.f32 %v731, 0.0
  %v1005 = vmax.f32 %v735, 0.0
  %v1006 = vmax.f32 %v737, 0.0
  %v1007 = vmax.f32 %v739, 0.0
  %v1008 = vmax.f32 %v741, 0.0
  %v1009 = vmax.f32 %v745, 0.0
  %v1010 = vmax.f32 %v747, 0.0
  %v1011 = vmax.f32 %v749, 0.0
  %v1012 = vmax.f32 %v751, 0.0
  %v1013 = vmax.f32 %v755, 0.0
  %v1014 = vmax.f32 %v757, 0.0
  %v1015 = vmax.f32 %v759, 0.0
  %v1016 = vmax.f32 %v761, 0.0
  %v1017 = vmax.f32 %v765, 0.0
  %v1018 = vmax.f32 %v767, 0.0
  %v1019 = vmax.f32 %v769, 0.0
  %v1020 = vmax.f32 %v771, 0.0
  %v1021 = vmax.f32 %v775, 0.0
  %v1022 = vmax.f32 %v777, 0.0
  %v1023 = vmax.f32 %v779, 0.0
  %v1024 = vmax.f32 %v781, 0.0
  %v1025 = vmax.f32 %v785, 0.0
  %v1026 = vmax.f32 %v787, 0.0
  %v1027 = vmax.f32 %v789, 0.0
  %v1028 = vmax.f32 %v791, 0.0
  %v1029 = vmax.f32 %v795, 0.0
  %v1030 = vmax.f32 %v797, 0.0
  %v1031 = vmax.f32 %v799, 0.0
  %v1032 = vmax.f32 %v801, 0.0
  %v1033 = vmax.f32 %v805, 0.0
  %v1034 = vmax.f32 %v807, 0.0
  %v1035 = vmax.f32 %v809, 0.0
  %v1036 = vmax.f32 %v811, 0.0
  %v1037 = vmax.f32 %v815, 0.0
  %v1038 = vmax.f32 %v817, 0.0
  %v1039 = vmax.f32 %v819, 0.0
  %v1040 = vmax.f32 %v821, 0.0
  %v1041 = vmax.f32 %v825, 0.0
  %v1042 = vmax.f32 %v827, 0.0
  %v1043 = vmax.f32 %v829, 0.0
  %v1044 = vmax.f32 %v831, 0.0
  %v1045 = vmax.f32 %v835, 0.0
  %v1046 = vmax.f32 %v837, 0.0
  %v1047 = vmax.f32 %v839, 0.0
  %v1048 = vmax.f32 %v841, 0.0
  %v1049 = vmax.f32 %v845, 0.0
  %v1050 = vmax.f32 %v847, 0.0
  %v1051 = vmax.f32 %v849, 0.0
  %v1052 = vmax.f32 %v851, 0.0
  %v1053 = vmax.f32 %v855, 0.0
  %v1054 = vmax.f32 %v857, 0.0
  %v1055 = vmax.f32 %v859, 0.0
  %v1056 = vmax.f32 %v861, 0.0
  %v1057 = vmax.f32 %v865, 0.0
  %v1058 = vmax.f32 %v867, 0.0
  %v1059 = vmax.f32 %v869, 0.0
  %v1060 = vmax.f32 %v871, 0.0
  %v1061 = vmax.f32 %v875, 0.0
  %v1062 = vmax.f32 %v877, 0.0
  %v1063 = vmax.f32 %v879, 0.0
  %v1064 = vmax.f32 %v881, 0.0
  %v1065 = vmax.f32 %v885, 0.0
  %v1066 = vmax.f32 %v887, 0.0
  %v1067 = vmax.f32 %v889, 0.0
  %v1068 = vmax.f32 %v891, 0.0
  %v1069 = vmax.f32 %v895, 0.0
  %v1070 = vmax.f32 %v897, 0.0
  %v1071 = vmax.f32 %v899, 0.0
  %v1072 = vmax.f32 %v901, 0.0
  %v1073 = vmax.f32 %v905, 0.0
  %v1074 = vmax.f32 %v907, 0.0
  %v1075 = vmax.f32 %v909, 0.0
  %v1076 = vmax.f32 %v911, 0.0
  %v1077 = vmax.f32 %v915, 0.0
  %v1078 = vmax.f32 %v917, 0.0
  %v1079 = vmax.f32 %v919, 0.0
  %v1080 = vmax.f32 %v921, 0.0
  %v1081 = vmax.f32 %v925, 0.0
  %v1082 = vmax.f32 %v927, 0.0
  %v1083 = vmax.f32 %v929, 0.0
  %v1084 = vmax.f32 %v931, 0.0
  %v1085 = vmax.f32 %v935, 0.0
  %v1086 = vmax.f32 %v937, 0.0
  %v1087 = vmax.f32 %v939, 0.0
  %v1088 = vmax.f32 %v941, 0.0
  %v1089 = vmax.f32 %v945, 0.0
  %v1090 = vmax.f32 %v947, 0.0
  %v1091 = vmax.f32 %v949, 0.0
  %v1092 = vmax.f32 %v951, 0.0
  %v1093 = vmax.f32 %v955, 0.0
  %v1094 = vmax.f32 %v957, 0.0
  %v1095 = vmax.f32 %v959, 0.0
  %v1096 = vmax.f32 %v961, 0.0
  %v1097 = vmax.f32 %v965, 0.0
  %v1098 = vmax.f32 %v967, 0.0
  %v1099 = vmax.f32 %v969, 0.0
  %v1100 = vmax.f32 %v971, 0.0
  %v1101 = vpack.c.bf16 %v975, %v973
  %v1102 = vpack.c.bf16 %v976, %v974
  %v1103 = vpack.c.bf16 %v979, %v977
  %v1104 = vpack.c.bf16 %v980, %v978
  %v1105 = vpack.c.bf16 %v983, %v981
  %v1106 = vpack.c.bf16 %v984, %v982
  %v1107 = vpack.c.bf16 %v987, %v985
  %v1108 = vpack.c.bf16 %v988, %v986
  %v1109 = vpack.c.bf16 %v991, %v989
  %v1110 = vpack.c.bf16 %v992, %v990
  %v1111 = vpack.c.bf16 %v995, %v993
  %v1112 = vpack.c.bf16 %v996, %v994
  %v1113 = vpack.c.bf16 %v999, %v997
  %v1114 = vpack.c.bf16 %v1000, %v998
  %v1115 = vpack.c.bf16 %v1003, %v1001
  %v1116 = vpack.c.bf16 %v1004, %v1002
  %v1117 = vpack.c.bf16 %v1007, %v1005
  %v1118 = vpack.c.bf16 %v1008, %v1006
  %v1119 = vpack.c.bf16 %v1011, %v1009
  %v1120 = vpack.c.bf16 %v1012, %v1010
  %v1121 = vpack.c.bf16 %v1015, %v1013
  %v1122 = vpack.c.bf16 %v1016, %v1014
  %v1123 = vpack.c.bf16 %v1019, %v1017
  %v1124 = vpack.c.bf16 %v1020, %v1018
  %v1125 = vpack.c.bf16 %v1023, %v1021
  %v1126 = vpack.c.bf16 %v1024, %v1022
  %v1127 = vpack.c.bf16 %v1027, %v1025
  %v1128 = vpack.c.bf16 %v1028, %v1026
  %v1129 = vpack.c.bf16 %v1031, %v1029
  %v1130 = vpack.c.bf16 %v1032, %v1030
  %v1131 = vpack.c.bf16 %v1035, %v1033
  %v1132 = vpack.c.bf16 %v1036, %v1034
  %v1133 = vpack.c.bf16 %v1039, %v1037
  %v1134 = vpack.c.bf16 %v1040, %v1038
  %v1135 = vpack.c.bf16 %v1043, %v1041
  %v1136 = vpack.c.bf16 %v1044, %v1042
  %v1137 = vpack.c.bf16 %v1047, %v1045
  %v1138 = vpack.c.bf16 %v1048, %v1046
  %v1139 = vpack.c.bf16 %v1051, %v1049
  %v1140 = vpack.c.bf16 %v1052, %v1050
  %v1141 = vpack.c.bf16 %v1055, %v1053
  %v1142 = vpack.c.bf16 %v1056, %v1054
  %v1143 = vpack.c.bf16 %v1059, %v1057
  %v1144 = vpack.c.bf16 %v1060, %v1058
  %v1145 = vpack.c.bf16 %v1063, %v1061
  %v1146 = vpack.c.bf16 %v1064, %v1062
  %v1147 = vpack.c.bf16 %v1067, %v1065
  %v1148 = vpack.c.bf16 %v1068, %v1066
  %v1149 = vpack.c.bf16 %v1071, %v1069
  %v1150 = vpack.c.bf16 %v1072, %v1070
  %v1151 = vpack.c.bf16 %v1075, %v1073
  %v1152 = vpack.c.bf16 %v1076, %v1074
  %v1153 = vpack.c.bf16 %v1079, %v1077
  %v1154 = vpack.c.bf16 %v1080, %v1078
  %v1155 = vpack.c.bf16 %v1083, %v1081
  %v1156 = vpack.c.bf16 %v1084, %v1082
  %v1157 = vpack.c.bf16 %v1087, %v1085
  %v1158 = vpack.c.bf16 %v1088, %v1086
  %v1159 = vpack.c.bf16 %v1091, %v1089
  %v1160 = vpack.c.bf16 %v1092, %v1090
  %v1161 = vpack.c.bf16 %v1095, %v1093
  %v1162 = vpack.c.bf16 %v1096, %v1094
  %v1163 = vpack.c.bf16 %v1099, %v1097
  %v1164 = vpack.c.bf16 %v1100, %v1098
  %v1229 = vunpack.c.l.b16 %v1101
  %v1230 = vunpack.c.l.b16 %v1102
  %v1231 = vunpack.c.h.b16 %v1101
  %v1232 = vunpack.c.h.b16 %v1102
  %v1233 = vunpack.c.l.b16 %v1103
  %v1234 = vunpack.c.l.b16 %v1104
  %v1235 = vunpack.c.h.b16 %v1103
  %v1236 = vunpack.c.h.b16 %v1104
  %v1237 = vunpack.c.l.b16 %v1105
  %v1238 = vunpack.c.l.b16 %v1106
  %v1239 = vunpack.c.h.b16 %v1105
  %v1240 = vunpack.c.h.b16 %v1106
  %v1241 = vunpack.c.l.b16 %v1107
  %v1242 = vunpack.c.l.b16 %v1108
  %v1243 = vunpack.c.h.b16 %v1107
  %v1244 = vunpack.c.h.b16 %v1108
  %v1245 = vunpack.c.l.b16 %v1109
  %v1246 = vunpack.c.l.b16 %v1110
  %v1247 = vunpack.c.h.b16 %v1109
  %v1248 = vunpack.c.h.b16 %v1110
  %v1249 = vunpack.c.l.b16 %v1111
  %v1250 = vunpack.c.l.b16 %v1112
  %v1251 = vunpack.c.h.b16 %v1111
  %v1252 = vunpack.c.h.b16 %v1112
  %v1253 = vunpack.c.l.b16 %v1113
  %v1254 = vunpack.c.l.b16 %v1114
  %v1255 = vunpack.c.h.b16 %v1113
  %v1256 = vunpack.c.h.b16 %v1114
  %v1257 = vunpack.c.l.b16 %v1115
  %v1258 = vunpack.c.l.b16 %v1116
  %v1259 = vunpack.c.h.b16 %v1115
  %v1260 = vunpack.c.h.b16 %v1116
  %v1261 = vunpack.c.l.b16 %v1117
  %v1262 = vunpack.c.l.b16 %v1118
  %v1263 = vunpack.c.h.b16 %v1117
  %v1264 = vunpack.c.h.b16 %v1118
  %v1265 = vunpack.c.l.b16 %v1119
  %v1266 = vunpack.c.l.b16 %v1120
  %v1267 = vunpack.c.h.b16 %v1119
  %v1268 = vunpack.c.h.b16 %v1120
  %v1269 = vunpack.c.l.b16 %v1121
  %v1270 = vunpack.c.l.b16 %v1122
  %v1271 = vunpack.c.h.b16 %v1121
  %v1272 = vunpack.c.h.b16 %v1122
  %v1273 = vunpack.c.l.b16 %v1123
  %v1274 = vunpack.c.l.b16 %v1124
  %v1275 = vunpack.c.h.b16 %v1123
  %v1276 = vunpack.c.h.b16 %v1124
  %v1277 = vunpack.c.l.b16 %v1125
  %v1278 = vunpack.c.l.b16 %v1126
  %v1279 = vunpack.c.h.b16 %v1125
  %v1280 = vunpack.c.h.b16 %v1126
  %v1281 = vunpack.c.l.b16 %v1127
  %v1282 = vunpack.c.l.b16 %v1128
  %v1283 = vunpack.c.h.b16 %v1127
  %v1284 = vunpack.c.h.b16 %v1128
  %v1285 = vunpack.c.l.b16 %v1129
  %v1286 = vunpack.c.l.b16 %v1130
  %v1287 = vunpack.c.h.b16 %v1129
  %v1288 = vunpack.c.h.b16 %v1130
  %v1289 = vunpack.c.l.b16 %v1131
  %v1290 = vunpack.c.l.b16 %v1132
  %v1291 = vunpack.c.h.b16 %v1131
  %v1292 = vunpack.c.h.b16 %v1132
  %v1293 = vunpack.c.l.b16 %v1133
  %v1294 = vunpack.c.l.b16 %v1134
  %v1295 = vunpack.c.h.b16 %v1133
  %v1296 = vunpack.c.h.b16 %v1134
  %v1297 = vunpack.c.l.b16 %v1135
  %v1298 = vunpack.c.l.b16 %v1136
  %v1299 = vunpack.c.h.b16 %v1135
  %v1300 = vunpack.c.h.b16 %v1136
  %v1301 = vunpack.c.l.b16 %v1137
  %v1302 = vunpack.c.l.b16 %v1138
  %v1303 = vunpack.c.h.b16 %v1137
  %v1304 = vunpack.c.h.b16 %v1138
  %v1305 = vunpack.c.l.b16 %v1139
  %v1306 = vunpack.c.l.b16 %v1140
  %v1307 = vunpack.c.h.b16 %v1139
  %v1308 = vunpack.c.h.b16 %v1140
  %v1309 = vunpack.c.l.b16 %v1141
  %v1310 = vunpack.c.l.b16 %v1142
  %v1311 = vunpack.c.h.b16 %v1141
  %v1312 = vunpack.c.h.b16 %v1142
  %v1313 = vunpack.c.l.b16 %v1143
  %v1314 = vunpack.c.l.b16 %v1144
  %v1315 = vunpack.c.h.b16 %v1143
  %v1316 = vunpack.c.h.b16 %v1144
  %v1317 = vunpack.c.l.b16 %v1145
  %v1318 = vunpack.c.l.b16 %v1146
  %v1319 = vunpack.c.h.b16 %v1145
  %v1320 = vunpack.c.h.b16 %v1146
  %v1321 = vunpack.c.l.b16 %v1147
  %v1322 = vunpack.c.l.b16 %v1148
  %v1323 = vunpack.c.h.b16 %v1147
  %v1324 = vunpack.c.h.b16 %v1148
  %v1325 = vunpack.c.l.b16 %v1149
  %v1326 = vunpack.c.l.b16 %v1150
  %v1327 = vunpack.c.h.b16 %v1149
  %v1328 = vunpack.c.h.b16 %v1150
  %v1329 = vunpack.c.l.b16 %v1151
  %v1330 = vunpack.c.l.b16 %v1152
  %v1331 = vunpack.c.h.b16 %v1151
  %v1332 = vunpack.c.h.b16 %v1152
  %v1333 = vunpack.c.l.b16 %v1153
  %v1334 = vunpack.c.l.b16 %v1154
  %v1335 = vunpack.c.h.b16 %v1153
  %v1336 = vunpack.c.h.b16 %v1154
  %v1337 = vunpack.c.l.b16 %v1155
  %v1338 = vunpack.c.l.b16 %v1156
  %v1339 = vunpack.c.h.b16 %v1155
  %v1340 = vunpack.c.h.b16 %v1156
  %v1341 = vunpack.c.l.b16 %v1157
  %v1342 = vunpack.c.l.b16 %v1158
  %v1343 = vunpack.c.h.b16 %v1157
  %v1344 = vunpack.c.h.b16 %v1158
  %v1345 = vunpack.c.l.b16 %v1159
  %v1346 = vunpack.c.l.b16 %v1160
  %v1347 = vunpack.c.h.b16 %v1159
  %v1348 = vunpack.c.h.b16 %v1160
  %v1349 = vunpack.c.l.b16 %v1161
  %v1350 = vunpack.c.l.b16 %v1162
  %v1351 = vunpack.c.h.b16 %v1161
  %v1352 = vunpack.c.h.b16 %v1162
  %v1353 = vunpack.c.l.b16 %v1163
  %v1354 = vunpack.c.l.b16 %v1164
  %v1355 = vunpack.c.h.b16 %v1163
  %v1356 = vunpack.c.h.b16 %v1164
  %v1357 = vpack.c.b16 %v1230, %v1229
  %v1358 = vpack.c.b16 %v1232, %v1231
  %v1359 = vpack.c.b16 %v1234, %v1233
  %v1360 = vpack.c.b16 %v1236, %v1235
  %v1361 = vpack.c.b16 %v1238, %v1237
  %v1362 = vpack.c.b16 %v1240, %v1239
  %v1363 = vpack.c.b16 %v1242, %v1241
  %v1364 = vpack.c.b16 %v1244, %v1243
  %v1365 = vpack.c.b16 %v1246, %v1245
  %v1366 = vpack.c.b16 %v1248, %v1247
  %v1367 = vpack.c.b16 %v1250, %v1249
  %v1368 = vpack.c.b16 %v1252, %v1251
  %v1369 = vpack.c.b16 %v1254, %v1253
  %v1370 = vpack.c.b16 %v1256, %v1255
  %v1371 = vpack.c.b16 %v1258, %v1257
  %v1372 = vpack.c.b16 %v1260, %v1259
  %v1373 = vpack.c.b16 %v1262, %v1261
  %v1374 = vpack.c.b16 %v1264, %v1263
  %v1375 = vpack.c.b16 %v1266, %v1265
  %v1376 = vpack.c.b16 %v1268, %v1267
  %v1377 = vpack.c.b16 %v1270, %v1269
  %v1378 = vpack.c.b16 %v1272, %v1271
  %v1379 = vpack.c.b16 %v1274, %v1273
  %v1380 = vpack.c.b16 %v1276, %v1275
  %v1381 = vpack.c.b16 %v1278, %v1277
  %v1382 = vpack.c.b16 %v1280, %v1279
  %v1383 = vpack.c.b16 %v1282, %v1281
  %v1384 = vpack.c.b16 %v1284, %v1283
  %v1385 = vpack.c.b16 %v1286, %v1285
  %v1386 = vpack.c.b16 %v1288, %v1287
  %v1387 = vpack.c.b16 %v1290, %v1289
  %v1388 = vpack.c.b16 %v1292, %v1291
  %v1389 = vpack.c.b16 %v1294, %v1293
  %v1390 = vpack.c.b16 %v1296, %v1295
  %v1391 = vpack.c.b16 %v1298, %v1297
  %v1392 = vpack.c.b16 %v1300, %v1299
  %v1393 = vpack.c.b16 %v1302, %v1301
  %v1394 = vpack.c.b16 %v1304, %v1303
  %v1395 = vpack.c.b16 %v1306, %v1305
  %v1396 = vpack.c.b16 %v1308, %v1307
  %v1397 = vpack.c.b16 %v1310, %v1309
  %v1398 = vpack.c.b16 %v1312, %v1311
  %v1399 = vpack.c.b16 %v1314, %v1313
  %v1400 = vpack.c.b16 %v1316, %v1315
  %v1401 = vpack.c.b16 %v1318, %v1317
  %v1402 = vpack.c.b16 %v1320, %v1319
  %v1403 = vpack.c.b16 %v1322, %v1321
  %v1404 = vpack.c.b16 %v1324, %v1323
  %v1405 = vpack.c.b16 %v1326, %v1325
  %v1406 = vpack.c.b16 %v1328, %v1327
  %v1407 = vpack.c.b16 %v1330, %v1329
  %v1408 = vpack.c.b16 %v1332, %v1331
  %v1409 = vpack.c.b16 %v1334, %v1333
  %v1410 = vpack.c.b16 %v1336, %v1335
  %v1411 = vpack.c.b16 %v1338, %v1337
  %v1412 = vpack.c.b16 %v1340, %v1339
  %v1413 = vpack.c.b16 %v1342, %v1341
  %v1414 = vpack.c.b16 %v1344, %v1343
  %v1415 = vpack.c.b16 %v1346, %v1345
  %v1416 = vpack.c.b16 %v1348, %v1347
  %v1417 = vpack.c.b16 %v1350, %v1349
  %v1418 = vpack.c.b16 %v1352, %v1351
  %v1419 = vpack.c.b16 %v1354, %v1353
  %v1420 = vpack.c.b16 %v1356, %v1355
  %1485 = vst [vmem:[%s3] sm:$0xff] %v1357
  %1486 = vst [vmem:[%s3 + $0x8] sm:$0xff] %v1358
  %1487 = vst [vmem:[%s3 + $0x10] sm:$0xff] %v1359
  %1488 = vst [vmem:[%s3 + $0x18] sm:$0xff] %v1360
  %1489 = vst [vmem:[%s3 + $0x20] sm:$0xff] %v1361
  %1490 = vst [vmem:[%s3 + $0x28] sm:$0xff] %v1362
  %1491 = vst [vmem:[%s3 + $0x30] sm:$0xff] %v1363
  %1492 = vst [vmem:[%s3 + $0x38] sm:$0xff] %v1364
  %1493 = vst [vmem:[%s3 + $0x40] sm:$0xff] %v1365
  %1494 = vst [vmem:[%s3 + $0x48] sm:$0xff] %v1366
  %1495 = vst [vmem:[%s3 + $0x50] sm:$0xff] %v1367
  %1496 = vst [vmem:[%s3 + $0x58] sm:$0xff] %v1368
  %1497 = vst [vmem:[%s3 + $0x60] sm:$0xff] %v1369
  %1498 = vst [vmem:[%s3 + $0x68] sm:$0xff] %v1370
  %1499 = vst [vmem:[%s3 + $0x70] sm:$0xff] %v1371
  %1500 = vst [vmem:[%s3 + $0x78] sm:$0xff] %v1372
  %1501 = vst [vmem:[%s3 + $0x80] sm:$0xff] %v1373
  %1502 = vst [vmem:[%s3 + $0x88] sm:$0xff] %v1374
  %1503 = vst [vmem:[%s3 + $0x90] sm:$0xff] %v1375
  %1504 = vst [vmem:[%s3 + $0x98] sm:$0xff] %v1376
  %1505 = vst [vmem:[%s3 + $0xa0] sm:$0xff] %v1377
  %1506 = vst [vmem:[%s3 + $0xa8] sm:$0xff] %v1378
  %1507 = vst [vmem:[%s3 + $0xb0] sm:$0xff] %v1379
  %1508 = vst [vmem:[%s3 + $0xb8] sm:$0xff] %v1380
  %1509 = vst [vmem:[%s3 + $0xc0] sm:$0xff] %v1381
  %1510 = vst [vmem:[%s3 + $0xc8] sm:$0xff] %v1382
  %1511 = vst [vmem:[%s3 + $0xd0] sm:$0xff] %v1383
  %1512 = vst [vmem:[%s3 + $0xd8] sm:$0xff] %v1384
  %1513 = vst [vmem:[%s3 + $0xe0] sm:$0xff] %v1385
  %1514 = vst [vmem:[%s3 + $0xe8] sm:$0xff] %v1386
  %1515 = vst [vmem:[%s3 + $0xf0] sm:$0xff] %v1387
  %1516 = vst [vmem:[%s3 + $0xf8] sm:$0xff] %v1388
  %1517 = vst [vmem:[%s3 + $0x100] sm:$0xff] %v1389
  %1518 = vst [vmem:[%s3 + $0x108] sm:$0xff] %v1390
  %1519 = vst [vmem:[%s3 + $0x110] sm:$0xff] %v1391
  %1520 = vst [vmem:[%s3 + $0x118] sm:$0xff] %v1392
  %1521 = vst [vmem:[%s3 + $0x120] sm:$0xff] %v1393
  %1522 = vst [vmem:[%s3 + $0x128] sm:$0xff] %v1394
  %1523 = vst [vmem:[%s3 + $0x130] sm:$0xff] %v1395
  %1524 = vst [vmem:[%s3 + $0x138] sm:$0xff] %v1396
  %1525 = vst [vmem:[%s3 + $0x140] sm:$0xff] %v1397
  %1526 = vst [vmem:[%s3 + $0x148] sm:$0xff] %v1398
  %1527 = vst [vmem:[%s3 + $0x150] sm:$0xff] %v1399
  %1528 = vst [vmem:[%s3 + $0x158] sm:$0xff] %v1400
  %1529 = vst [vmem:[%s3 + $0x160] sm:$0xff] %v1401
  %1530 = vst [vmem:[%s3 + $0x168] sm:$0xff] %v1402
  %1531 = vst [vmem:[%s3 + $0x170] sm:$0xff] %v1403
  %1532 = vst [vmem:[%s3 + $0x178] sm:$0xff] %v1404
  %1533 = vst [vmem:[%s3 + $0x180] sm:$0xff] %v1405
  %1534 = vst [vmem:[%s3 + $0x188] sm:$0xff] %v1406
  %1535 = vst [vmem:[%s3 + $0x190] sm:$0xff] %v1407
  %1536 = vst [vmem:[%s3 + $0x198] sm:$0xff] %v1408
  %1537 = vst [vmem:[%s3 + $0x1a0] sm:$0xff] %v1409
  %1538 = vst [vmem:[%s3 + $0x1a8] sm:$0xff] %v1410
  %1539 = vst [vmem:[%s3 + $0x1b0] sm:$0xff] %v1411
  %1540 = vst [vmem:[%s3 + $0x1b8] sm:$0xff] %v1412
  %1541 = vst [vmem:[%s3 + $0x1c0] sm:$0xff] %v1413
  %1542 = vst [vmem:[%s3 + $0x1c8] sm:$0xff] %v1414
  %1543 = vst [vmem:[%s3 + $0x1d0] sm:$0xff] %v1415
  %1544 = vst [vmem:[%s3 + $0x1d8] sm:$0xff] %v1416
  %1545 = vst [vmem:[%s3 + $0x1e0] sm:$0xff] %v1417
  %1546 = vst [vmem:[%s3 + $0x1e8] sm:$0xff] %v1418
  %1547 = vst [vmem:[%s3 + $0x1f0] sm:$0xff] %v1419
  %1548 = vst [vmem:[%s3 + $0x1f8] sm:$0xff] %v1420
  // Predicated region
  $region14: #{mixed_3b.4} parent=0 // pred_check
    _
  $region15: #{mixed_3b.4} parent=0 // pred_check_branch
    %1550 = sbr.rel (0) target = $region17
  $region16: #{mixed_3b.4} parent=0 // pred_region
    _
  $region17: #{mixed_3b.4} parent=0 // pred_fallthru
    _
  // Predicated region
  $region18: #{mixed_3b.4} parent=0 // pred_check
    _
  $region19: #{mixed_3b.4} parent=0 // pred_check_branch
    %1552 = sbr.rel (0) target = $region21
  $region20: #{mixed_3b.4} parent=0 // pred_region
    _
  $region21: #{mixed_3b.4} parent=0 // pred_fallthru
    _

// kernel: mixed_3b.6
$region0: #{mixed_3b.6}
  #allocation0 [shape = 'u32[]', space=smem, size = 0x4, offset = 0x4, fixed_abs, tag = 'smem constant byte address 0x4 - core index']
  #allocation1 [shape = 'u32[144,128]{1,0:T(1,128)}', space=vmem, size = 0x12000, scoped, tag = 'internal scratch']
  #allocation2 [shape = 'f32[256,128]{1,0:T(8,128)}', space=vmem, size = 0x20000, scoped, tag = 'scratch operand']
  %s0 = inlined_call_operand.vmem [shape: bf16[2,384,144], index: 0, kind: input, shape index: {}]
  %s1 = inlined_call_operand.vmem [shape: bf16[3,144,128], index: 1, kind: input, shape index: {}]
  %s2 = inlined_call_operand.vmem [shape: f32[1,128], index: 2, kind: input, shape index: {}]
  %s3 = inlined_call_operand.vmem [shape: bf16[2,256,128], index: 3, kind: output, shape index: {}]
  %s4 = sld [smem:[#allocation0]]
  $region45: #{mixed_3b.6} parent=0
    _
  %s6 = ssub.s32 1, %s4
  %s7 = scalar_select 0, %s6, %s4
  loop: start=0, step=1, limit=4
  $region2: #{mixed_3b.6} parent=0 // loop_pre_header
    _
  $region3: #{mixed_3b.6} parent=0 // loop_header
    %s9 = sphi 0, %s13
    %p10 = scmp.ge.s32.totalorder %s9, 4
    %s16 = sphi 0, %s28
    %s17 = sphi 0, %s24
    %s18 = sphi 0, %s16
    %s19 = sphi 0, %s17
    %s20 = sphi 0, %s18
    %s21 = sphi 0, %s19
    %s31 = sphi 0, %s33
    %s34 = sphi 0, %s31
    %s35 = sphi 0, %s34
    %s51 = sphi 0, %s35
    %s57 = sphi 0, %s59
    %s60 = sphi 0, %s57
    %s61 = sphi 0, %s60
    %s77 = sphi 0, %s61
    %s83 = sphi 0, %s85
    %s86 = sphi 0, %s83
    %s87 = sphi 0, %s86
    %s103 = sphi 0, %s87
    %s111 = sphi 0, %s113
    %s114 = sphi 0, %s111
    %s115 = sphi 0, %s114
    %s131 = sphi 0, %s115
  $region4: #{mixed_3b.6} parent=0 // loop_header_branch
    %12 = sbr.rel (%p10) target = $region8
  $region5: #{mixed_3b.6} parent=0 // loop_body
    %s14 = ssub.s32 %s9, 1
    %s15 = ssub.s32 %s9, 2
    %s22 = sadd.s32 1, %s17
    %p23 = scmp.ge.s32.totalorder %s22, 1
    %s24 = scalar_select %p23, 0, %s22
    %s25 = sadd.s32 1, %s16
    %s26 = scalar_select %p23, %s25, %s16
    %p27 = scmp.ge.s32.totalorder %s26, 2
    %s28 = scalar_select %p27, 0, %s26
    %s29 = ssub.s32 %s16, %s28
    %p30 = scmp.eq.s32.totalorder %s29, 0
    %s32 = sadd.s32 %s31, 1
    %s33 = scalar_select %p30, %s31, %s32
    %p36 = pneg %p30
    %p37 = scmp.eq.s32.totalorder %s9, 1
    %p38 = por %p36, %p37
    %p39 = scmp.ne.s32.totalorder %s31, %s34
    %p40 = scmp.eq.s32.totalorder %s9, 0
    %p41 = por %p39, %p40
    %p42 = scmp.ne.s32.totalorder %s31, %s34
    %p43 = scmp.eq.s32.totalorder %s14, 1
    %p44 = por %p42, %p43
    %p45 = scmp.ne.s32.totalorder %s34, %s35
    %p46 = scmp.eq.s32.totalorder %s14, 0
    %p47 = por %p45, %p46
    %p48 = scmp.ne.s32.totalorder %s34, %s35
    %p49 = scmp.eq.s32.totalorder %s15, 1
    %p50 = por %p48, %p49
    %p52 = scmp.ne.s32.totalorder %s35, %s51
    %p53 = scmp.eq.s32.totalorder %s15, 0
    %p54 = por %p52, %p53
    %s55 = ssub.s32 %s17, %s24
    %p56 = scmp.eq.s32.totalorder %s55, 0
    %s58 = sadd.s32 %s57, 1
    %s59 = scalar_select %p56, %s57, %s58
    %p62 = pneg %p56
    %p63 = scmp.eq.s32.totalorder %s9, 1
    %p64 = por %p62, %p63
    %p65 = scmp.ne.s32.totalorder %s57, %s60
    %p66 = scmp.eq.s32.totalorder %s9, 0
    %p67 = por %p65, %p66
    %p68 = scmp.ne.s32.totalorder %s57, %s60
    %p69 = scmp.eq.s32.totalorder %s14, 1
    %p70 = por %p68, %p69
    %p71 = scmp.ne.s32.totalorder %s60, %s61
    %p72 = scmp.eq.s32.totalorder %s14, 0
    %p73 = por %p71, %p72
    %p74 = scmp.ne.s32.totalorder %s60, %s61
    %p75 = scmp.eq.s32.totalorder %s15, 1
    %p76 = por %p74, %p75
    %p78 = scmp.ne.s32.totalorder %s61, %s77
    %p79 = scmp.eq.s32.totalorder %s15, 0
    %p80 = por %p78, %p79
    %s81 = ssub.s32 %s17, %s24
    %p82 = scmp.eq.s32.totalorder %s81, 0
    %s84 = sadd.s32 %s83, 1
    %s85 = scalar_select %p82, %s83, %s84
    %p88 = pneg %p82
    %p89 = scmp.eq.s32.totalorder %s9, 1
    %p90 = por %p88, %p89
    %p91 = scmp.ne.s32.totalorder %s83, %s86
    %p92 = scmp.eq.s32.totalorder %s9, 0
    %p93 = por %p91, %p92
    %p94 = scmp.ne.s32.totalorder %s83, %s86
    %p95 = scmp.eq.s32.totalorder %s14, 1
    %p96 = por %p94, %p95
    %p97 = scmp.ne.s32.totalorder %s86, %s87
    %p98 = scmp.eq.s32.totalorder %s14, 0
    %p99 = por %p97, %p98
    %p100 = scmp.ne.s32.totalorder %s86, %s87
    %p101 = scmp.eq.s32.totalorder %s15, 1
    %p102 = por %p100, %p101
    %p104 = scmp.ne.s32.totalorder %s87, %s103
    %p105 = scmp.eq.s32.totalorder %s15, 0
    %p106 = por %p104, %p105
    %s107 = ssub.s32 %s16, %s28
    %s108 = ssub.s32 %s17, %s24
    %s109 = sor.u32 %s107, %s108
    %p110 = scmp.eq.s32.totalorder %s109, 0
    %s112 = sadd.s32 %s111, 1
    %s113 = scalar_select %p110, %s111, %s112
    %p116 = pneg %p110
    %p117 = scmp.eq.s32.totalorder %s9, 1
    %p118 = por %p116, %p117
    %p119 = scmp.ne.s32.totalorder %s111, %s114
    %p120 = scmp.eq.s32.totalorder %s9, 0
    %p121 = por %p119, %p120
    %p122 = scmp.ne.s32.totalorder %s111, %s114
    %p123 = scmp.eq.s32.totalorder %s14, 1
    %p124 = por %p122, %p123
    %p125 = scmp.ne.s32.totalorder %s114, %s115
    %p126 = scmp.eq.s32.totalorder %s14, 0
    %p127 = por %p125, %p126
    %p128 = scmp.ne.s32.totalorder %s114, %s115
    %p129 = scmp.eq.s32.totalorder %s15, 1
    %p130 = por %p128, %p129
    %p132 = scmp.ne.s32.totalorder %s115, %s131
    %p133 = scmp.eq.s32.totalorder %s15, 0
    %p134 = por %p132, %p133
    %p135 = scmp.le.s32.totalorder 1, %s9
    %p136 = scmp.lt.s32.totalorder %s9, 3
    %p137 = pnand %p135, %p136
    %p138 = pneg %p137
    // Predicated region
    $region9: #{mixed_3b.6} parent=5 // pred_check
      _
    $region10: #{mixed_3b.6} parent=5 // pred_check_branch
      %140 = sbr.rel (%p137) target = $region12
    $region11: #{mixed_3b.6} parent=5 // pred_region
      %s141 = ssub.s32 %s9, 1
      // Predicated region
      $region13: #{mixed_3b.6} parent=11 // pred_check
        %p142 = pneg %p73
      $region14: #{mixed_3b.6} parent=11 // pred_check_branch
        %144 = sbr.rel (%p142) target = $region16
      $region15: #{mixed_3b.6} parent=11 // pred_region
        %p145 = scmp.lt.s32.totalorder %s19, 0
        %s146 = scalar_select %p145, %s19, 0
        %s147 = smul.addr %s146, 4
        %s148 = scalar_lea.vmem %s1, %s147
      $region16: #{mixed_3b.6} parent=11 // pred_fallthru
        _
      // Predicated region
      $region17: #{mixed_3b.6} parent=11 // pred_check
        %p149 = pneg %p99
      $region18: #{mixed_3b.6} parent=11 // pred_check_branch
        %151 = sbr.rel (%p149) target = $region20
      $region19: #{mixed_3b.6} parent=11 // pred_region
        %p152 = scmp.lt.s32.totalorder %s19, 0
        %s153 = scalar_select %p152, %s19, 0
        %s154 = scalar_lea.vmem %s2, %s153
      $region20: #{mixed_3b.6} parent=11 // pred_fallthru
        _
    $region12: #{mixed_3b.6} parent=5 // pred_fallthru
      _
    %p155 = scmp.lt.s32.totalorder %s9, 2
    // Predicated region
    $region21: #{mixed_3b.6} parent=5 // pred_check
      %p156 = pneg %p155
    $region22: #{mixed_3b.6} parent=5 // pred_check_branch
      %158 = sbr.rel (%p156) target = $region24
    $region23: #{mixed_3b.6} parent=5 // pred_region
      // Predicated region
      $region25: #{mixed_3b.6} parent=23 // pred_check
        %p159 = pneg %p41
      $region26: #{mixed_3b.6} parent=23 // pred_check_branch
        %161 = sbr.rel (%p159) target = $region28
      $region27: #{mixed_3b.6} parent=23 // pred_region
        %p162 = scmp.lt.s32.totalorder %s16, 1
        %s163 = scalar_select %p162, %s16, 1
        %s164 = smul.addr %s163, 96
        %s165 = smul.addr %s164, 4
        %s166 = scalar_lea.vmem %s0, %s165
      $region28: #{mixed_3b.6} parent=23 // pred_fallthru
        _
    $region24: #{mixed_3b.6} parent=5 // pred_fallthru
      _
    %p167 = scmp.le.s32.totalorder 1, %s9
    %p168 = scmp.lt.s32.totalorder %s9, 3
    %p169 = pnand %p167, %p168
    %p170 = pneg %p169
    // Predicated region
    $region29: #{mixed_3b.6} parent=5 // pred_check
      _
    $region30: #{mixed_3b.6} parent=5 // pred_check_branch
      %172 = sbr.rel (%p169) target = $region32
    $region31: #{mixed_3b.6} parent=5 // pred_region
      %s173 = ssub.s32 %s9, 1
      %p174 = scmp.lt.s32.totalorder %s18, 1
      %s175 = scalar_select %p174, %s18, 1
      %s176 = smul.addr %s175, 96
      %s177 = smul.addr %s176, 4
      %s178 = scalar_lea.vmem %s0, %s177
      %p179 = pneg %p47
      %p180 = pneg %p44
      %p181 = scmp.lt.s32.totalorder %s19, 0
      %s182 = scalar_select %p181, %s19, 0
      %s183 = smul.addr %s182, 4
      %s184 = scalar_lea.vmem %s1, %s183
      %p185 = pneg %p73
      %p186 = pneg %p70
      %p187 = scmp.lt.s32.totalorder %s19, 0
      %s188 = scalar_select %p187, %s19, 0
      %s189 = scalar_lea.vmem %s2, %s188
      %p190 = pneg %p99
      %p191 = pneg %p96
      %p192 = pneg %p127
      %p193 = pneg %p124
      %p194 = scmp.lt.s32.totalorder %s18, 1
      %s195 = scalar_select %p194, %s18, 1
      %p196 = scmp.lt.s32.totalorder %s19, 0
      %s197 = scalar_select %p196, %s19, 0
      %s198 = smul.addr %s195, 32
      %s199 = sadd.s32 %s197, %s198
      %s200 = smul.addr %s199, 4
      %s201 = scalar_lea.vmem %s3, %s200
      %p202 = scmp.lt.s32.totalorder %s18, 1
      %s203 = scalar_select %p202, %s18, 1
      %s204 = smul.addr %s203, 96
      %s205 = smul.addr %s204, 4
      %s206 = scalar_lea.vmem %s0, %s205
      %p207 = scmp.lt.s32.totalorder %s19, 0
      %s208 = scalar_select %p207, %s19, 0
      %s209 = smul.addr %s208, 4
      %s210 = scalar_lea.vmem %s1, %s209
      %p211 = scmp.lt.s32.totalorder %s19, 0
      %s212 = scalar_select %p211, %s19, 0
      %s213 = scalar_lea.vmem %s2, %s212
      %p214 = scmp.lt.s32.totalorder %s18, 1
      %s215 = scalar_select %p214, %s18, 1
      %p216 = scmp.lt.s32.totalorder %s19, 0
      %s217 = scalar_select %p216, %s19, 0
      %s218 = smul.addr %s215, 32
      %s219 = sadd.s32 %s217, %s218
      %s220 = smul.addr %s219, 4
      %s221 = scalar_lea.vmem %s3, %s220
      %v223 = vld [vmem:[%s206] sm:$0xff]
      %v224 = vld [vmem:[%s206 + $0x8] sm:$0xff]
      %v225 = vld [vmem:[%s206 + $0x10] sm:$0xff]
      %v226 = vld [vmem:[%s206 + $0x18] sm:$0xff]
      %v227 = vld [vmem:[%s206 + $0x20] sm:$0xff]
      %v228 = vld [vmem:[%s206 + $0x28] sm:$0xff]
      %v229 = vld [vmem:[%s206 + $0x30] sm:$0xff]
      %v230 = vld [vmem:[%s206 + $0x38] sm:$0xff]
      %v231 = vld [vmem:[%s206 + $0x40] sm:$0xff]
      %v232 = vld [vmem:[%s206 + $0x48] sm:$0xff]
      %v233 = vld [vmem:[%s206 + $0x50] sm:$0xff]
      %v234 = vld [vmem:[%s206 + $0x58] sm:$0xff]
      %v235 = vld [vmem:[%s206 + $0x60] sm:$0xff]
      %v236 = vld [vmem:[%s206 + $0x68] sm:$0xff]
      %v237 = vld [vmem:[%s206 + $0x70] sm:$0xff]
      %v238 = vld [vmem:[%s206 + $0x78] sm:$0xff]
      %v239 = vld [vmem:[%s206 + $0x80] sm:$0xff]
      %v240 = vld [vmem:[%s206 + $0x88] sm:$0xff]
      %v241 = vld [vmem:[%s206 + $0x90] sm:$0xff]
      %v242 = vld [vmem:[%s206 + $0x98] sm:$0xff]
      %v243 = vld [vmem:[%s206 + $0xa0] sm:$0xff]
      %v244 = vld [vmem:[%s206 + $0xa8] sm:$0xff]
      %v245 = vld [vmem:[%s206 + $0xb0] sm:$0xff]
      %v246 = vld [vmem:[%s206 + $0xb8] sm:$0xff]
      %v247 = vld [vmem:[%s206 + $0xc0] sm:$0xff]
      %v248 = vld [vmem:[%s206 + $0xc8] sm:$0xff]
      %v249 = vld [vmem:[%s206 + $0xd0] sm:$0xff]
      %v250 = vld [vmem:[%s206 + $0xd8] sm:$0xff]
      %v251 = vld [vmem:[%s206 + $0xe0] sm:$0xff]
      %v252 = vld [vmem:[%s206 + $0xe8] sm:$0xff]
      %v253 = vld [vmem:[%s206 + $0xf0] sm:$0xff]
      %v254 = vld [vmem:[%s206 + $0xf8] sm:$0xff]
      %v255 = vld [vmem:[%s210] sm:$0xf]
      %v256 = vld [vmem:[%s210 + $0x4] sm:$0xf]
      %v257 = vld [vmem:[%s210 + $0x8] sm:$0xf]
      %v258 = vld [vmem:[%s210 + $0xc] sm:$0xf]
      %v259 = vld [vmem:[%s210 + $0x10] sm:$0xf]
      %v260 = vld [vmem:[%s210 + $0x14] sm:$0xf]
      %v261 = vld [vmem:[%s210 + $0x18] sm:$0xf]
      %v262 = vld [vmem:[%s210 + $0x1c] sm:$0xf]
      %v263 = vld [vmem:[%s210 + $0x20] sm:$0xf]
      %v264 = vld [vmem:[%s210 + $0x24] sm:$0xf]
      %v265 = vld [vmem:[%s210 + $0x28] sm:$0xf]
      %v266 = vld [vmem:[%s210 + $0x2c] sm:$0xf]
      %v267 = vld [vmem:[%s210 + $0x30] sm:$0xf]
      %v268 = vld [vmem:[%s210 + $0x34] sm:$0xf]
      %v269 = vld [vmem:[%s210 + $0x38] sm:$0xf]
      %v270 = vld [vmem:[%s210 + $0x3c] sm:$0xf]
      %v271 = vld [vmem:[%s210 + $0x40] sm:$0xf]
      %v272 = vld [vmem:[%s210 + $0x44] sm:$0xf]
      %v305 = vunpack.c.l.b16 %v223
      %v306 = vunpack.c.h.b16 %v223
      %v307 = vunpack.c.l.b16 %v224
      %v308 = vunpack.c.h.b16 %v224
      %v309 = vunpack.c.l.b16 %v225
      %v310 = vunpack.c.h.b16 %v225
      %v311 = vunpack.c.l.b16 %v226
      %v312 = vunpack.c.h.b16 %v226
      %v313 = vunpack.c.l.b16 %v227
      %v314 = vunpack.c.h.b16 %v227
      %v315 = vunpack.c.l.b16 %v228
      %v316 = vunpack.c.h.b16 %v228
      %v317 = vunpack.c.l.b16 %v229
      %v318 = vunpack.c.h.b16 %v229
      %v319 = vunpack.c.l.b16 %v230
      %v320 = vunpack.c.h.b16 %v230
      %v321 = vunpack.c.l.b16 %v231
      %v322 = vunpack.c.h.b16 %v231
      %v323 = vunpack.c.l.b16 %v232
      %v324 = vunpack.c.h.b16 %v232
      %v325 = vunpack.c.l.b16 %v233
      %v326 = vunpack.c.h.b16 %v233
      %v327 = vunpack.c.l.b16 %v234
      %v328 = vunpack.c.h.b16 %v234
      %v329 = vunpack.c.l.b16 %v235
      %v330 = vunpack.c.h.b16 %v235
      %v331 = vunpack.c.l.b16 %v236
      %v332 = vunpack.c.h.b16 %v236
      %v333 = vunpack.c.l.b16 %v237
      %v334 = vunpack.c.h.b16 %v237
      %v335 = vunpack.c.l.b16 %v238
      %v336 = vunpack.c.h.b16 %v238
      %v337 = vunpack.c.l.b16 %v239
      %v338 = vunpack.c.h.b16 %v239
      %v339 = vunpack.c.l.b16 %v240
      %v340 = vunpack.c.h.b16 %v240
      %v341 = vunpack.c.l.b16 %v241
      %v342 = vunpack.c.h.b16 %v241
      %v343 = vunpack.c.l.b16 %v242
      %v344 = vunpack.c.h.b16 %v242
      %v345 = vunpack.c.l.b16 %v243
      %v346 = vunpack.c.h.b16 %v243
      %v347 = vunpack.c.l.b16 %v244
      %v348 = vunpack.c.h.b16 %v244
      %v349 = vunpack.c.l.b16 %v245
      %v350 = vunpack.c.h.b16 %v245
      %v351 = vunpack.c.l.b16 %v246
      %v352 = vunpack.c.h.b16 %v246
      %v353 = vunpack.c.l.b16 %v247
      %v354 = vunpack.c.h.b16 %v247
      %v355 = vunpack.c.l.b16 %v248
      %v356 = vunpack.c.h.b16 %v248
      %v357 = vunpack.c.l.b16 %v249
      %v358 = vunpack.c.h.b16 %v249
      %v359 = vunpack.c.l.b16 %v250
      %v360 = vunpack.c.h.b16 %v250
      %v361 = vunpack.c.l.b16 %v251
      %v362 = vunpack.c.h.b16 %v251
      %v363 = vunpack.c.l.b16 %v252
      %v364 = vunpack.c.h.b16 %v252
      %v365 = vunpack.c.l.b16 %v253
      %v366 = vunpack.c.h.b16 %v253
      %v367 = vunpack.c.l.b16 %v254
      %v368 = vunpack.c.h.b16 %v254
      %v369 = vpack.c.b16 %v307, %v305
      %v370 = vpack.c.b16 %v308, %v306
      %v371 = vpack.c.b16 %v311, %v309
      %v372 = vpack.c.b16 %v312, %v310
      %v373 = vpack.c.b16 %v315, %v313
      %v374 = vpack.c.b16 %v316, %v314
      %v375 = vpack.c.b16 %v319, %v317
      %v376 = vpack.c.b16 %v320, %v318
      %v377 = vpack.c.b16 %v323, %v321
      %v378 = vpack.c.b16 %v324, %v322
      %v379 = vpack.c.b16 %v327, %v325
      %v380 = vpack.c.b16 %v328, %v326
      %v381 = vpack.c.b16 %v331, %v329
      %v382 = vpack.c.b16 %v332, %v330
      %v383 = vpack.c.b16 %v335, %v333
      %v384 = vpack.c.b16 %v336, %v334
      %v385 = vpack.c.b16 %v339, %v337
      %v386 = vpack.c.b16 %v340, %v338
      %v387 = vpack.c.b16 %v343, %v341
      %v388 = vpack.c.b16 %v344, %v342
      %v389 = vpack.c.b16 %v347, %v345
      %v390 = vpack.c.b16 %v348, %v346
      %v391 = vpack.c.b16 %v351, %v349
      %v392 = vpack.c.b16 %v352, %v350
      %v393 = vpack.c.b16 %v355, %v353
      %v394 = vpack.c.b16 %v356, %v354
      %v395 = vpack.c.b16 %v359, %v357
      %v396 = vpack.c.b16 %v360, %v358
      %v397 = vpack.c.b16 %v363, %v361
      %v398 = vpack.c.b16 %v364, %v362
      %v399 = vpack.c.b16 %v367, %v365
      %v400 = vpack.c.b16 %v368, %v366
      %v435 = vunpack.c.l.b16 %v255
      %v436 = vunpack.c.l.b16 %v256
      %v437 = vunpack.c.l.b16 %v257
      %v438 = vunpack.c.l.b16 %v258
      %v439 = vunpack.c.l.b16 %v259
      %v440 = vunpack.c.l.b16 %v260
      %v441 = vunpack.c.l.b16 %v261
      %v442 = vunpack.c.l.b16 %v262
      %v443 = vunpack.c.l.b16 %v263
      %v444 = vunpack.c.l.b16 %v264
      %v445 = vunpack.c.l.b16 %v265
      %v446 = vunpack.c.l.b16 %v266
      %v447 = vunpack.c.l.b16 %v267
      %v448 = vunpack.c.l.b16 %v268
      %v449 = vunpack.c.l.b16 %v269
      %v450 = vunpack.c.l.b16 %v270
      %v451 = vunpack.c.l.b16 %v271
      %v452 = vunpack.c.l.b16 %v272
      %v453 = vpack.c.b16 %v436, %v435
      %v454 = vpack.c.b16 %v438, %v437
      %v455 = vpack.c.b16 %v440, %v439
      %v456 = vpack.c.b16 %v442, %v441
      %v457 = vpack.c.b16 %v444, %v443
      %v458 = vpack.c.b16 %v446, %v445
      %v459 = vpack.c.b16 %v448, %v447
      %v460 = vpack.c.b16 %v450, %v449
      %v461 = vpack.c.b16 %v452, %v451
      %vm471 = vcmask 130048
      %v473 = vsel %vm471, %v370, 0
      %v476 = vsel %vm471, %v372, 0
      %v479 = vsel %vm471, %v374, 0
      %v482 = vsel %vm471, %v376, 0
      %v485 = vsel %vm471, %v378, 0
      %v488 = vsel %vm471, %v380, 0
      %v491 = vsel %vm471, %v382, 0
      %v494 = vsel %vm471, %v384, 0
      %v497 = vsel %vm471, %v386, 0
      %v500 = vsel %vm471, %v388, 0
      %v503 = vsel %vm471, %v390, 0
      %v506 = vsel %vm471, %v392, 0
      %v509 = vsel %vm471, %v394, 0
      %v512 = vsel %vm471, %v396, 0
      %v515 = vsel %vm471, %v398, 0
      %v518 = vsel %vm471, %v400, 0
      %520 = vmatprep.subr.bf16.mxu0 0
      %521 = vmatpush1.bf16.msra.mxu0 %v453
      %522 = vmatprep.subr.bf16.mxu0 0
      %523 = vmatpush1.bf16.msra.mxu0 %v454
      %524 = vmatprep.subr.bf16.mxu0 0
      %525 = vmatpush1.bf16.msra.mxu0 %v455
      %526 = vmatprep.subr.bf16.mxu0 0
      %527 = vmatpush1.bf16.msra.mxu0 %v456
      %528 = vmatprep.subr.bf16.mxu0 0
      %529 = vmatpush1.bf16.msra.mxu0 %v457
      %530 = vmatprep.subr.bf16.mxu0 0
      %531 = vmatpush1.bf16.msra.mxu0 %v458
      %532 = vmatprep.subr.bf16.mxu0 0
      %533 = vmatpush1.bf16.msra.mxu0 %v459
      %534 = vmatprep.subr.bf16.mxu0 0
      %535 = vmatpush1.bf16.msra.mxu0 %v460
      %536 = vmatprep.subr.bf16.mxu0 0
      %537 = vmatpush1.bf16.msra.mxu0 %v461
      %538 = vmatprep.subr.bf16.mxu0 0
      %539 = vmatpush1.bf16.msra.mxu0 0
      %540 = vmatprep.subr.bf16.mxu0 0
      %541 = vmatpush1.bf16.msra.mxu0 0
      %542 = vmatprep.subr.bf16.mxu0 0
      %543 = vmatpush1.bf16.msra.mxu0 0
      %544 = vmatprep.subr.bf16.mxu0 0
      %545 = vmatpush1.bf16.msra.mxu0 0
      %546 = vmatprep.subr.bf16.mxu0 0
      %547 = vmatpush1.bf16.msra.mxu0 0
      %548 = vmatprep.subr.bf16.mxu0 0
      %549 = vmatpush1.bf16.msra.mxu0 0
      %550 = vmatprep.subr.bf16.mxu0 0
      %551 = vmatpush1.bf16.msra.mxu0 0
      %552 = vmatprep.mubr.bf16.mxu0 %v473
      %553 = vmatmul.mubr.bf16.gmra.mrb[0].mxu0 %v369
      %v554 = vpop.f32.mrb[0].mxu0
      %v555 = vadd.f32 0.0, %v554
      %v556 = vpop.f32.mrb[0].mxu0
      %v557 = vpop.f32.mrb[0].mxu0
      %v558 = vadd.f32 0.0, %v557
      %v559 = vpop.f32.mrb[0].mxu0
      %560 = vmatprep.mubr.bf16.mxu0 %v476
      %561 = vmatmul.mubr.bf16.gmra.mrb[0].mxu0 %v371
      %v562 = vpop.f32.mrb[0].mxu0
      %v563 = vadd.f32 0.0, %v562
      %v564 = vpop.f32.mrb[0].mxu0
      %v565 = vpop.f32.mrb[0].mxu0
      %v566 = vadd.f32 0.0, %v565
      %v567 = vpop.f32.mrb[0].mxu0
      %568 = vmatprep.mubr.bf16.mxu0 %v479
      %569 = vmatmul.mubr.bf16.gmra.mrb[0].mxu0 %v373
      %v570 = vpop.f32.mrb[0].mxu0
      %v571 = vadd.f32 0.0, %v570
      %v572 = vpop.f32.mrb[0].mxu0
      %v573 = vpop.f32.mrb[0].mxu0
      %v574 = vadd.f32 0.0, %v573
      %v575 = vpop.f32.mrb[0].mxu0
      %576 = vmatprep.mubr.bf16.mxu0 %v482
      %577 = vmatmul.mubr.bf16.gmra.mrb[0].mxu0 %v375
      %v578 = vpop.f32.mrb[0].mxu0
      %v579 = vadd.f32 0.0, %v578
      %v580 = vpop.f32.mrb[0].mxu0
      %v581 = vpop.f32.mrb[0].mxu0
      %v582 = vadd.f32 0.0, %v581
      %v583 = vpop.f32.mrb[0].mxu0
      %584 = vmatprep.mubr.bf16.mxu0 %v485
      %585 = vmatmul.mubr.bf16.gmra.mrb[0].mxu0 %v377
      %v586 = vpop.f32.mrb[0].mxu0
      %v587 = vadd.f32 0.0, %v586
      %v588 = vpop.f32.mrb[0].mxu0
      %v589 = vpop.f32.mrb[0].mxu0
      %v590 = vadd.f32 0.0, %v589
      %v591 = vpop.f32.mrb[0].mxu0
      %592 = vmatprep.mubr.bf16.mxu0 %v488
      %593 = vmatmul.mubr.bf16.gmra.mrb[0].mxu0 %v379
      %v594 = vpop.f32.mrb[0].mxu0
      %v595 = vadd.f32 0.0, %v594
      %v596 = vpop.f32.mrb[0].mxu0
      %v597 = vpop.f32.mrb[0].mxu0
      %v598 = vadd.f32 0.0, %v597
      %v599 = vpop.f32.mrb[0].mxu0
      %600 = vmatprep.mubr.bf16.mxu0 %v491
      %601 = vmatmul.mubr.bf16.gmra.mrb[0].mxu0 %v381
      %v602 = vpop.f32.mrb[0].mxu0
      %v603 = vadd.f32 0.0, %v602
      %v604 = vpop.f32.mrb[0].mxu0
      %v605 = vpop.f32.mrb[0].mxu0
      %v606 = vadd.f32 0.0, %v605
      %v607 = vpop.f32.mrb[0].mxu0
      %608 = vmatprep.mubr.bf16.mxu0 %v494
      %609 = vmatmul.mubr.bf16.gmra.mrb[0].mxu0 %v383
      %v610 = vpop.f32.mrb[0].mxu0
      %v611 = vadd.f32 0.0, %v610
      %v612 = vpop.f32.mrb[0].mxu0
      %v613 = vpop.f32.mrb[0].mxu0
      %v614 = vadd.f32 0.0, %v613
      %v615 = vpop.f32.mrb[0].mxu0
      %616 = vmatprep.mubr.bf16.mxu0 %v497
      %617 = vmatmul.mubr.bf16.gmra.mrb[0].mxu0 %v385
      %v618 = vpop.f32.mrb[0].mxu0
      %v619 = vadd.f32 0.0, %v618
      %v620 = vpop.f32.mrb[0].mxu0
      %v621 = vpop.f32.mrb[0].mxu0
      %v622 = vadd.f32 0.0, %v621
      %v623 = vpop.f32.mrb[0].mxu0
      %624 = vmatprep.mubr.bf16.mxu0 %v500
      %625 = vmatmul.mubr.bf16.gmra.mrb[0].mxu0 %v387
      %v626 = vpop.f32.mrb[0].mxu0
      %v627 = vadd.f32 0.0, %v626
      %v628 = vpop.f32.mrb[0].mxu0
      %v629 = vpop.f32.mrb[0].mxu0
      %v630 = vadd.f32 0.0, %v629
      %v631 = vpop.f32.mrb[0].mxu0
      %632 = vmatprep.mubr.bf16.mxu0 %v503
      %633 = vmatmul.mubr.bf16.gmra.mrb[0].mxu0 %v389
      %v634 = vpop.f32.mrb[0].mxu0
      %v635 = vadd.f32 0.0, %v634
      %v636 = vpop.f32.mrb[0].mxu0
      %v637 = vpop.f32.mrb[0].mxu0
      %v638 = vadd.f32 0.0, %v637
      %v639 = vpop.f32.mrb[0].mxu0
      %640 = vmatprep.mubr.bf16.mxu0 %v506
      %641 = vmatmul.mubr.bf16.gmra.mrb[0].mxu0 %v391
      %v642 = vpop.f32.mrb[0].mxu0
      %v643 = vadd.f32 0.0, %v642
      %v644 = vpop.f32.mrb[0].mxu0
      %v645 = vpop.f32.mrb[0].mxu0
      %v646 = vadd.f32 0.0, %v645
      %v647 = vpop.f32.mrb[0].mxu0
      %648 = vmatprep.mubr.bf16.mxu0 %v509
      %649 = vmatmul.mubr.bf16.gmra.mrb[0].mxu0 %v393
      %v650 = vpop.f32.mrb[0].mxu0
      %v651 = vadd.f32 0.0, %v650
      %v652 = vpop.f32.mrb[0].mxu0
      %v653 = vpop.f32.mrb[0].mxu0
      %v654 = vadd.f32 0.0, %v653
      %v655 = vpop.f32.mrb[0].mxu0
      %656 = vmatprep.mubr.bf16.mxu0 %v512
      %657 = vmatmul.mubr.bf16.gmra.mrb[0].mxu0 %v395
      %v658 = vpop.f32.mrb[0].mxu0
      %v659 = vadd.f32 0.0, %v658
      %v660 = vpop.f32.mrb[0].mxu0
      %v661 = vpop.f32.mrb[0].mxu0
      %v662 = vadd.f32 0.0, %v661
      %v663 = vpop.f32.mrb[0].mxu0
      %664 = vmatprep.mubr.bf16.mxu0 %v515
      %665 = vmatmul.mubr.bf16.gmra.mrb[0].mxu0 %v397
      %v666 = vpop.f32.mrb[0].mxu0
      %v667 = vadd.f32 0.0, %v666
      %v668 = vpop.f32.mrb[0].mxu0
      %v669 = vpop.f32.mrb[0].mxu0
      %v670 = vadd.f32 0.0, %v669
      %v671 = vpop.f32.mrb[0].mxu0
      %672 = vmatprep.mubr.bf16.mxu0 %v518
      %673 = vmatmul.mubr.bf16.gmra.mrb[0].mxu0 %v399
      %v674 = vpop.f32.mrb[0].mxu0
      %v675 = vadd.f32 0.0, %v674
      %v676 = vpop.f32.mrb[0].mxu0
      %v677 = vpop.f32.mrb[0].mxu0
      %v678 = vadd.f32 0.0, %v677
      %v679 = vpop.f32.mrb[0].mxu0
      %680 = vdwg.mxu0
      %681 = vst [vmem:[#allocation2] sm:$0xff] %v555
      %682 = vst [vmem:[#allocation2 + $0x8] sm:$0xff] %v558
      %683 = vst [vmem:[#allocation2 + $0x10] sm:$0xff] %v563
      %684 = vst [vmem:[#allocation2 + $0x18] sm:$0xff] %v566
      %685 = vst [vmem:[#allocation2 + $0x20] sm:$0xff] %v571
      %686 = vst [vmem:[#allocation2 + $0x28] sm:$0xff] %v574
      %687 = vst [vmem:[#allocation2 + $0x30] sm:$0xff] %v579
      %688 = vst [vmem:[#allocation2 + $0x38] sm:$0xff] %v582
      %689 = vst [vmem:[#allocation2 + $0x40] sm:$0xff] %v587
      %690 = vst [vmem:[#allocation2 + $0x48] sm:$0xff] %v590
      %691 = vst [vmem:[#allocation2 + $0x50] sm:$0xff] %v595
      %692 = vst [vmem:[#allocation2 + $0x58] sm:$0xff] %v598
      %693 = vst [vmem:[#allocation2 + $0x60] sm:$0xff] %v603
      %694 = vst [vmem:[#allocation2 + $0x68] sm:$0xff] %v606
      %695 = vst [vmem:[#allocation2 + $0x70] sm:$0xff] %v611
      %696 = vst [vmem:[#allocation2 + $0x78] sm:$0xff] %v614
      %697 = vst [vmem:[#allocation2 + $0x80] sm:$0xff] %v619
      %698 = vst [vmem:[#allocation2 + $0x88] sm:$0xff] %v622
      %699 = vst [vmem:[#allocation2 + $0x90] sm:$0xff] %v627
      %700 = vst [vmem:[#allocation2 + $0x98] sm:$0xff] %v630
      %701 = vst [vmem:[#allocation2 + $0xa0] sm:$0xff] %v635
      %702 = vst [vmem:[#allocation2 + $0xa8] sm:$0xff] %v638
      %703 = vst [vmem:[#allocation2 + $0xb0] sm:$0xff] %v643
      %704 = vst [vmem:[#allocation2 + $0xb8] sm:$0xff] %v646
      %705 = vst [vmem:[#allocation2 + $0xc0] sm:$0xff] %v651
      %706 = vst [vmem:[#allocation2 + $0xc8] sm:$0xff] %v654
      %707 = vst [vmem:[#allocation2 + $0xd0] sm:$0xff] %v659
      %708 = vst [vmem:[#allocation2 + $0xd8] sm:$0xff] %v662
      %709 = vst [vmem:[#allocation2 + $0xe0] sm:$0xff] %v667
      %710 = vst [vmem:[#allocation2 + $0xe8] sm:$0xff] %v670
      %711 = vst [vmem:[#allocation2 + $0xf0] sm:$0xff] %v675
      %712 = vst [vmem:[#allocation2 + $0xf8] sm:$0xff] %v678
      %v713 = vld [vmem:[%s206 + $0x40] sm:$0xff]
      %v714 = vld [vmem:[%s206 + $0x48] sm:$0xff]
      %v715 = vld [vmem:[%s206 + $0x50] sm:$0xff]
      %v716 = vld [vmem:[%s206 + $0x58] sm:$0xff]
      %v717 = vld [vmem:[%s206 + $0x60] sm:$0xff]
      %v718 = vld [vmem:[%s206 + $0x68] sm:$0xff]
      %v719 = vld [vmem:[%s206 + $0x70] sm:$0xff]
      %v720 = vld [vmem:[%s206 + $0x78] sm:$0xff]
      %v721 = vld [vmem:[%s206 + $0x80] sm:$0xff]
      %v722 = vld [vmem:[%s206 + $0x88] sm:$0xff]
      %v723 = vld [vmem:[%s206 + $0x90] sm:$0xff]
      %v724 = vld [vmem:[%s206 + $0x98] sm:$0xff]
      %v725 = vld [vmem:[%s206 + $0xa0] sm:$0xff]
      %v726 = vld [vmem:[%s206 + $0xa8] sm:$0xff]
      %v727 = vld [vmem:[%s206 + $0xb0] sm:$0xff]
      %v728 = vld [vmem:[%s206 + $0xb8] sm:$0xff]
      %v729 = vld [vmem:[%s206 + $0xc0] sm:$0xff]
      %v730 = vld [vmem:[%s206 + $0xc8] sm:$0xff]
      %v731 = vld [vmem:[%s206 + $0xd0] sm:$0xff]
      %v732 = vld [vmem:[%s206 + $0xd8] sm:$0xff]
      %v733 = vld [vmem:[%s206 + $0xe0] sm:$0xff]
      %v734 = vld [vmem:[%s206 + $0xe8] sm:$0xff]
      %v735 = vld [vmem:[%s206 + $0xf0] sm:$0xff]
      %v736 = vld [vmem:[%s206 + $0xf8] sm:$0xff]
      %v737 = vld [vmem:[%s206 + $0x100] sm:$0xff]
      %v738 = vld [vmem:[%s206 + $0x108] sm:$0xff]
      %v739 = vld [vmem:[%s206 + $0x110] sm:$0xff]
      %v740 = vld [vmem:[%s206 + $0x118] sm:$0xff]
      %v741 = vld [vmem:[%s206 + $0x120] sm:$0xff]
      %v742 = vld [vmem:[%s206 + $0x128] sm:$0xff]
      %v743 = vld [vmem:[%s206 + $0x130] sm:$0xff]
      %v744 = vld [vmem:[%s206 + $0x138] sm:$0xff]
      %s745 = scalar_lea.vmem %s210, 72
      %v746 = vld [vmem:[%s745] sm:$0xf]
      %v747 = vld [vmem:[%s745 + $0x4] sm:$0xf]
      %v748 = vld [vmem:[%s745 + $0x8] sm:$0xf]
      %v749 = vld [vmem:[%s745 + $0xc] sm:$0xf]
      %v750 = vld [vmem:[%s745 + $0x10] sm:$0xf]
      %v751 = vld [vmem:[%s745 + $0x14] sm:$0xf]
      %v752 = vld [vmem:[%s745 + $0x18] sm:$0xf]
      %v753 = vld [vmem:[%s745 + $0x1c] sm:$0xf]
      %v754 = vld [vmem:[%s745 + $0x20] sm:$0xf]
      %v755 = vld [vmem:[%s745 + $0x24] sm:$0xf]
      %v756 = vld [vmem:[%s745 + $0x28] sm:$0xf]
      %v757 = vld [vmem:[%s745 + $0x2c] sm:$0xf]
      %v758 = vld [vmem:[%s745 + $0x30] sm:$0xf]
      %v759 = vld [vmem:[%s745 + $0x34] sm:$0xf]
      %v760 = vld [vmem:[%s745 + $0x38] sm:$0xf]
      %v761 = vld [vmem:[%s745 + $0x3c] sm:$0xf]
      %v762 = vld [vmem:[%s745 + $0x40] sm:$0xf]
      %v763 = vld [vmem:[%s745 + $0x44] sm:$0xf]
      %v796 = vunpack.c.l.b16 %v713
      %v797 = vunpack.c.h.b16 %v713
      %v798 = vunpack.c.l.b16 %v714
      %v799 = vunpack.c.h.b16 %v714
      %v800 = vunpack.c.l.b16 %v715
      %v801 = vunpack.c.h.b16 %v715
      %v802 = vunpack.c.l.b16 %v716
      %v803 = vunpack.c.h.b16 %v716
      %v804 = vunpack.c.l.b16 %v717
      %v805 = vunpack.c.h.b16 %v717
      %v806 = vunpack.c.l.b16 %v718
      %v807 = vunpack.c.h.b16 %v718
      %v808 = vunpack.c.l.b16 %v719
      %v809 = vunpack.c.h.b16 %v719
      %v810 = vunpack.c.l.b16 %v720
      %v811 = vunpack.c.h.b16 %v720
      %v812 = vunpack.c.l.b16 %v721
      %v813 = vunpack.c.h.b16 %v721
      %v814 = vunpack.c.l.b16 %v722
      %v815 = vunpack.c.h.b16 %v722
      %v816 = vunpack.c.l.b16 %v723
      %v817 = vunpack.c.h.b16 %v723
      %v818 = vunpack.c.l.b16 %v724
      %v819 = vunpack.c.h.b16 %v724
      %v820 = vunpack.c.l.b16 %v725
      %v821 = vunpack.c.h.b16 %v725
      %v822 = vunpack.c.l.b16 %v726
      %v823 = vunpack.c.h.b16 %v726
      %v824 = vunpack.c.l.b16 %v727
      %v825 = vunpack.c.h.b16 %v727
      %v826 = vunpack.c.l.b16 %v728
      %v827 = vunpack.c.h.b16 %v728
      %v828 = vunpack.c.l.b16 %v729
      %v829 = vunpack.c.h.b16 %v729
      %v830 = vunpack.c.l.b16 %v730
      %v831 = vunpack.c.h.b16 %v730
      %v832 = vunpack.c.l.b16 %v731
      %v833 = vunpack.c.h.b16 %v731
      %v834 = vunpack.c.l.b16 %v732
      %v835 = vunpack.c.h.b16 %v732
      %v836 = vunpack.c.l.b16 %v733
      %v837 = vunpack.c.h.b16 %v733
      %v838 = vunpack.c.l.b16 %v734
      %v839 = vunpack.c.h.b16 %v734
      %v840 = vunpack.c.l.b16 %v735
      %v841 = vunpack.c.h.b16 %v735
      %v842 = vunpack.c.l.b16 %v736
      %v843 = vunpack.c.h.b16 %v736
      %v844 = vunpack.c.l.b16 %v737
      %v845 = vunpack.c.h.b16 %v737
      %v846 = vunpack.c.l.b16 %v738
      %v847 = vunpack.c.h.b16 %v738
      %v848 = vunpack.c.l.b16 %v739
      %v849 = vunpack.c.h.b16 %v739
      %v850 = vunpack.c.l.b16 %v740
      %v851 = vunpack.c.h.b16 %v740
      %v852 = vunpack.c.l.b16 %v741
      %v853 = vunpack.c.h.b16 %v741
      %v854 = vunpack.c.l.b16 %v742
      %v855 = vunpack.c.h.b16 %v742
      %v856 = vunpack.c.l.b16 %v743
      %v857 = vunpack.c.h.b16 %v743
      %v858 = vunpack.c.l.b16 %v744
      %v859 = vunpack.c.h.b16 %v744
      %v860 = vpack.c.b16 %v798, %v796
      %v861 = vpack.c.b16 %v799, %v797
      %v862 = vpack.c.b16 %v802, %v800
      %v863 = vpack.c.b16 %v803, %v801
      %v864 = vpack.c.b16 %v806, %v804
      %v865 = vpack.c.b16 %v807, %v805
      %v866 = vpack.c.b16 %v810, %v808
      %v867 = vpack.c.b16 %v811, %v809
      %v868 = vpack.c.b16 %v814, %v812
      %v869 = vpack.c.b16 %v815, %v813
      %v870 = vpack.c.b16 %v818, %v816
      %v871 = vpack.c.b16 %v819, %v817
      %v872 = vpack.c.b16 %v822, %v820
      %v873 = vpack.c.b16 %v823, %v821
      %v874 = vpack.c.b16 %v826, %v824
      %v875 = vpack.c.b16 %v827, %v825
      %v876 = vpack.c.b16 %v830, %v828
      %v877 = vpack.c.b16 %v831, %v829
      %v878 = vpack.c.b16 %v834, %v832
      %v879 = vpack.c.b16 %v835, %v833
      %v880 = vpack.c.b16 %v838, %v836
      %v881 = vpack.c.b16 %v839, %v837
      %v882 = vpack.c.b16 %v842, %v840
      %v883 = vpack.c.b16 %v843, %v841
      %v884 = vpack.c.b16 %v846, %v844
      %v885 = vpack.c.b16 %v847, %v845
      %v886 = vpack.c.b16 %v850, %v848
      %v887 = vpack.c.b16 %v851, %v849
      %v888 = vpack.c.b16 %v854, %v852
      %v889 = vpack.c.b16 %v855, %v853
      %v890 = vpack.c.b16 %v858, %v856
      %v891 = vpack.c.b16 %v859, %v857
      %v926 = vunpack.c.l.b16 %v746
      %v927 = vunpack.c.l.b16 %v747
      %v928 = vunpack.c.l.b16 %v748
      %v929 = vunpack.c.l.b16 %v749
      %v930 = vunpack.c.l.b16 %v750
      %v931 = vunpack.c.l.b16 %v751
      %v932 = vunpack.c.l.b16 %v752
      %v933 = vunpack.c.l.b16 %v753
      %v934 = vunpack.c.l.b16 %v754
      %v935 = vunpack.c.l.b16 %v755
      %v936 = vunpack.c.l.b16 %v756
      %v937 = vunpack.c.l.b16 %v757
      %v938 = vunpack.c.l.b16 %v758
      %v939 = vunpack.c.l.b16 %v759
      %v940 = vunpack.c.l.b16 %v760
      %v941 = vunpack.c.l.b16 %v761
      %v942 = vunpack.c.l.b16 %v762
      %v943 = vunpack.c.l.b16 %v763
      %v944 = vpack.c.b16 %v927, %v926
      %v945 = vpack.c.b16 %v929, %v928
      %v946 = vpack.c.b16 %v931, %v930
      %v947 = vpack.c.b16 %v933, %v932
      %v948 = vpack.c.b16 %v935, %v934
      %v949 = vpack.c.b16 %v937, %v936
      %v950 = vpack.c.b16 %v939, %v938
      %v951 = vpack.c.b16 %v941, %v940
      %v952 = vpack.c.b16 %v943, %v942
      %v963 = vsel %vm471, %v861, 0
      %v966 = vsel %vm471, %v863, 0
      %v969 = vsel %vm471, %v865, 0
      %v972 = vsel %vm471, %v867, 0
      %v975 = vsel %vm471, %v869, 0
      %v978 = vsel %vm471, %v871, 0
      %v981 = vsel %vm471, %v873, 0
      %v984 = vsel %vm471, %v875, 0
      %v987 = vsel %vm471, %v877, 0
      %v990 = vsel %vm471, %v879, 0
      %v993 = vsel %vm471, %v881, 0
      %v996 = vsel %vm471, %v883, 0
      %v999 = vsel %vm471, %v885, 0
      %v1002 = vsel %vm471, %v887, 0
      %v1005 = vsel %vm471, %v889, 0
      %v1008 = vsel %vm471, %v891, 0
      %1010 = vmatprep.subr.bf16.mxu0 0
      %1011 = vmatpush1.bf16.msra.mxu0 %v944
      %1012 = vmatprep.subr.bf16.mxu0 0
      %1013 = vmatpush1.bf16.msra.mxu0 %v945
      %1014 = vmatprep.subr.bf16.mxu0 0
      %1015 = vmatpush1.bf16.msra.mxu0 %v946
      %1016 = vmatprep.subr.bf16.mxu0 0
      %1017 = vmatpush1.bf16.msra.mxu0 %v947
      %1018 = vmatprep.subr.bf16.mxu0 0
      %1019 = vmatpush1.bf16.msra.mxu0 %v948
      %1020 = vmatprep.subr.bf16.mxu0 0
      %1021 = vmatpush1.bf16.msra.mxu0 %v949
      %1022 = vmatprep.subr.bf16.mxu0 0
      %1023 = vmatpush1.bf16.msra.mxu0 %v950
      %1024 = vmatprep.subr.bf16.mxu0 0
      %1025 = vmatpush1.bf16.msra.mxu0 %v951
      %1026 = vmatprep.subr.bf16.mxu0 0
      %1027 = vmatpush1.bf16.msra.mxu0 %v952
      %1028 = vmatprep.subr.bf16.mxu0 0
      %1029 = vmatpush1.bf16.msra.mxu0 0
      %1030 = vmatprep.subr.bf16.mxu0 0
      %1031 = vmatpush1.bf16.msra.mxu0 0
      %1032 = vmatprep.subr.bf16.mxu0 0
      %1033 = vmatpush1.bf16.msra.mxu0 0
      %1034 = vmatprep.subr.bf16.mxu0 0
      %1035 = vmatpush1.bf16.msra.mxu0 0
      %1036 = vmatprep.subr.bf16.mxu0 0
      %1037 = vmatpush1.bf16.msra.mxu0 0
      %1038 = vmatprep.subr.bf16.mxu0 0
      %1039 = vmatpush1.bf16.msra.mxu0 0
      %1040 = vmatprep.subr.bf16.mxu0 0
      %1041 = vmatpush1.bf16.msra.mxu0 0
      %1042 = vmatprep.mubr.bf16.mxu0 %v963
      %1043 = vmatmul.mubr.bf16.gmra.mrb[0].mxu0 %v860
      %v1044 = vpop.f32.mrb[0].mxu0
      %v1045 = vadd.f32 0.0, %v1044
      %v1046 = vpop.f32.mrb[0].mxu0
      %v1047 = vpop.f32.mrb[0].mxu0
      %v1048 = vadd.f32 0.0, %v1047
      %v1049 = vpop.f32.mrb[0].mxu0
      %1050 = vmatprep.mubr.bf16.mxu0 %v966
      %1051 = vmatmul.mubr.bf16.gmra.mrb[0].mxu0 %v862
      %v1052 = vpop.f32.mrb[0].mxu0
      %v1053 = vadd.f32 0.0, %v1052
      %v1054 = vpop.f32.mrb[0].mxu0
      %v1055 = vpop.f32.mrb[0].mxu0
      %v1056 = vadd.f32 0.0, %v1055
      %v1057 = vpop.f32.mrb[0].mxu0
      %1058 = vmatprep.mubr.bf16.mxu0 %v969
      %1059 = vmatmul.mubr.bf16.gmra.mrb[0].mxu0 %v864
      %v1060 = vpop.f32.mrb[0].mxu0
      %v1061 = vadd.f32 0.0, %v1060
      %v1062 = vpop.f32.mrb[0].mxu0
      %v1063 = vpop.f32.mrb[0].mxu0
      %v1064 = vadd.f32 0.0, %v1063
      %v1065 = vpop.f32.mrb[0].mxu0
      %1066 = vmatprep.mubr.bf16.mxu0 %v972
      %1067 = vmatmul.mubr.bf16.gmra.mrb[0].mxu0 %v866
      %v1068 = vpop.f32.mrb[0].mxu0
      %v1069 = vadd.f32 0.0, %v1068
      %v1070 = vpop.f32.mrb[0].mxu0
      %v1071 = vpop.f32.mrb[0].mxu0
      %v1072 = vadd.f32 0.0, %v1071
      %v1073 = vpop.f32.mrb[0].mxu0
      %1074 = vmatprep.mubr.bf16.mxu0 %v975
      %1075 = vmatmul.mubr.bf16.gmra.mrb[0].mxu0 %v868
      %v1076 = vpop.f32.mrb[0].mxu0
      %v1077 = vadd.f32 0.0, %v1076
      %v1078 = vpop.f32.mrb[0].mxu0
      %v1079 = vpop.f32.mrb[0].mxu0
      %v1080 = vadd.f32 0.0, %v1079
      %v1081 = vpop.f32.mrb[0].mxu0
      %1082 = vmatprep.mubr.bf16.mxu0 %v978
      %1083 = vmatmul.mubr.bf16.gmra.mrb[0].mxu0 %v870
      %v1084 = vpop.f32.mrb[0].mxu0
      %v1085 = vadd.f32 0.0, %v1084
      %v1086 = vpop.f32.mrb[0].mxu0
      %v1087 = vpop.f32.mrb[0].mxu0
      %v1088 = vadd.f32 0.0, %v1087
      %v1089 = vpop.f32.mrb[0].mxu0
      %1090 = vmatprep.mubr.bf16.mxu0 %v981
      %1091 = vmatmul.mubr.bf16.gmra.mrb[0].mxu0 %v872
      %v1092 = vpop.f32.mrb[0].mxu0
      %v1093 = vadd.f32 0.0, %v1092
      %v1094 = vpop.f32.mrb[0].mxu0
      %v1095 = vpop.f32.mrb[0].mxu0
      %v1096 = vadd.f32 0.0, %v1095
      %v1097 = vpop.f32.mrb[0].mxu0
      %1098 = vmatprep.mubr.bf16.mxu0 %v984
      %1099 = vmatmul.mubr.bf16.gmra.mrb[0].mxu0 %v874
      %v1100 = vpop.f32.mrb[0].mxu0
      %v1101 = vadd.f32 0.0, %v1100
      %v1102 = vpop.f32.mrb[0].mxu0
      %v1103 = vpop.f32.mrb[0].mxu0
      %v1104 = vadd.f32 0.0, %v1103
      %v1105 = vpop.f32.mrb[0].mxu0
      %1106 = vmatprep.mubr.bf16.mxu0 %v987
      %1107 = vmatmul.mubr.bf16.gmra.mrb[0].mxu0 %v876
      %v1108 = vpop.f32.mrb[0].mxu0
      %v1109 = vadd.f32 0.0, %v1108
      %v1110 = vpop.f32.mrb[0].mxu0
      %v1111 = vpop.f32.mrb[0].mxu0
      %v1112 = vadd.f32 0.0, %v1111
      %v1113 = vpop.f32.mrb[0].mxu0
      %1114 = vmatprep.mubr.bf16.mxu0 %v990
      %1115 = vmatmul.mubr.bf16.gmra.mrb[0].mxu0 %v878
      %v1116 = vpop.f32.mrb[0].mxu0
      %v1117 = vadd.f32 0.0, %v1116
      %v1118 = vpop.f32.mrb[0].mxu0
      %v1119 = vpop.f32.mrb[0].mxu0
      %v1120 = vadd.f32 0.0, %v1119
      %v1121 = vpop.f32.mrb[0].mxu0
      %1122 = vmatprep.mubr.bf16.mxu0 %v993
      %1123 = vmatmul.mubr.bf16.gmra.mrb[0].mxu0 %v880
      %v1124 = vpop.f32.mrb[0].mxu0
      %v1125 = vadd.f32 0.0, %v1124
      %v1126 = vpop.f32.mrb[0].mxu0
      %v1127 = vpop.f32.mrb[0].mxu0
      %v1128 = vadd.f32 0.0, %v1127
      %v1129 = vpop.f32.mrb[0].mxu0
      %1130 = vmatprep.mubr.bf16.mxu0 %v996
      %1131 = vmatmul.mubr.bf16.gmra.mrb[0].mxu0 %v882
      %v1132 = vpop.f32.mrb[0].mxu0
      %v1133 = vadd.f32 0.0, %v1132
      %v1134 = vpop.f32.mrb[0].mxu0
      %v1135 = vpop.f32.mrb[0].mxu0
      %v1136 = vadd.f32 0.0, %v1135
      %v1137 = vpop.f32.mrb[0].mxu0
      %1138 = vmatprep.mubr.bf16.mxu0 %v999
      %1139 = vmatmul.mubr.bf16.gmra.mrb[0].mxu0 %v884
      %v1140 = vpop.f32.mrb[0].mxu0
      %v1141 = vadd.f32 0.0, %v1140
      %v1142 = vpop.f32.mrb[0].mxu0
      %v1143 = vpop.f32.mrb[0].mxu0
      %v1144 = vadd.f32 0.0, %v1143
      %v1145 = vpop.f32.mrb[0].mxu0
      %1146 = vmatprep.mubr.bf16.mxu0 %v1002
      %1147 = vmatmul.mubr.bf16.gmra.mrb[0].mxu0 %v886
      %v1148 = vpop.f32.mrb[0].mxu0
      %v1149 = vadd.f32 0.0, %v1148
      %v1150 = vpop.f32.mrb[0].mxu0
      %v1151 = vpop.f32.mrb[0].mxu0
      %v1152 = vadd.f32 0.0, %v1151
      %v1153 = vpop.f32.mrb[0].mxu0
      %1154 = vmatprep.mubr.bf16.mxu0 %v1005
      %1155 = vmatmul.mubr.bf16.gmra.mrb[0].mxu0 %v888
      %v1156 = vpop.f32.mrb[0].mxu0
      %v1157 = vadd.f32 0.0, %v1156
      %v1158 = vpop.f32.mrb[0].mxu0
      %v1159 = vpop.f32.mrb[0].mxu0
      %v1160 = vadd.f32 0.0, %v1159
      %v1161 = vpop.f32.mrb[0].mxu0
      %1162 = vmatprep.mubr.bf16.mxu0 %v1008
      %1163 = vmatmul.mubr.bf16.gmra.mrb[0].mxu0 %v890
      %v1164 = vpop.f32.mrb[0].mxu0
      %v1165 = vadd.f32 0.0, %v1164
      %v1166 = vpop.f32.mrb[0].mxu0
      %v1167 = vpop.f32.mrb[0].mxu0
      %v1168 = vadd.f32 0.0, %v1167
      %v1169 = vpop.f32.mrb[0].mxu0
      %1170 = vdwg.mxu0
      %v1171 = vld [vmem:[#allocation2] sm:$0xff]
      %v1172 = vld [vmem:[#allocation2 + $0x8] sm:$0xff]
      %v1173 = vld [vmem:[#allocation2 + $0x10] sm:$0xff]
      %v1174 = vld [vmem:[#allocation2 + $0x18] sm:$0xff]
      %v1175 = vld [vmem:[#allocation2 + $0x20] sm:$0xff]
      %v1176 = vld [vmem:[#allocation2 + $0x28] sm:$0xff]
      %v1177 = vld [vmem:[#allocation2 + $0x30] sm:$0xff]
      %v1178 = vld [vmem:[#allocation2 + $0x38] sm:$0xff]
      %v1179 = vld [vmem:[#allocation2 + $0x40] sm:$0xff]
      %v1180 = vld [vmem:[#allocation2 + $0x48] sm:$0xff]
      %v1181 = vld [vmem:[#allocation2 + $0x50] sm:$0xff]
      %v1182 = vld [vmem:[#allocation2 + $0x58] sm:$0xff]
      %v1183 = vld [vmem:[#allocation2 + $0x60] sm:$0xff]
      %v1184 = vld [vmem:[#allocation2 + $0x68] sm:$0xff]
      %v1185 = vld [vmem:[#allocation2 + $0x70] sm:$0xff]
      %v1186 = vld [vmem:[#allocation2 + $0x78] sm:$0xff]
      %v1187 = vld [vmem:[#allocation2 + $0x80] sm:$0xff]
      %v1188 = vld [vmem:[#allocation2 + $0x88] sm:$0xff]
      %v1189 = vld [vmem:[#allocation2 + $0x90] sm:$0xff]
      %v1190 = vld [vmem:[#allocation2 + $0x98] sm:$0xff]
      %v1191 = vld [vmem:[#allocation2 + $0xa0] sm:$0xff]
      %v1192 = vld [vmem:[#allocation2 + $0xa8] sm:$0xff]
      %v1193 = vld [vmem:[#allocation2 + $0xb0] sm:$0xff]
      %v1194 = vld [vmem:[#allocation2 + $0xb8] sm:$0xff]
      %v1195 = vld [vmem:[#allocation2 + $0xc0] sm:$0xff]
      %v1196 = vld [vmem:[#allocation2 + $0xc8] sm:$0xff]
      %v1197 = vld [vmem:[#allocation2 + $0xd0] sm:$0xff]
      %v1198 = vld [vmem:[#allocation2 + $0xd8] sm:$0xff]
      %v1199 = vld [vmem:[#allocation2 + $0xe0] sm:$0xff]
      %v1200 = vld [vmem:[#allocation2 + $0xe8] sm:$0xff]
      %v1201 = vld [vmem:[#allocation2 + $0xf0] sm:$0xff]
      %v1202 = vld [vmem:[#allocation2 + $0xf8] sm:$0xff]
      %v1203 = vadd.f32 %v1171, %v1045
      %v1204 = vadd.f32 %v1172, %v1048
      %v1205 = vadd.f32 %v1173, %v1053
      %v1206 = vadd.f32 %v1174, %v1056
      %v1207 = vadd.f32 %v1175, %v1061
      %v1208 = vadd.f32 %v1176, %v1064
      %v1209 = vadd.f32 %v1177, %v1069
      %v1210 = vadd.f32 %v1178, %v1072
      %v1211 = vadd.f32 %v1179, %v1077
      %v1212 = vadd.f32 %v1180, %v1080
      %v1213 = vadd.f32 %v1181, %v1085
      %v1214 = vadd.f32 %v1182, %v1088
      %v1215 = vadd.f32 %v1183, %v1093
      %v1216 = vadd.f32 %v1184, %v1096
      %v1217 = vadd.f32 %v1185, %v1101
      %v1218 = vadd.f32 %v1186, %v1104
      %v1219 = vadd.f32 %v1187, %v1109
      %v1220 = vadd.f32 %v1188, %v1112
      %v1221 = vadd.f32 %v1189, %v1117
      %v1222 = vadd.f32 %v1190, %v1120
      %v1223 = vadd.f32 %v1191, %v1125
      %v1224 = vadd.f32 %v1192, %v1128
      %v1225 = vadd.f32 %v1193, %v1133
      %v1226 = vadd.f32 %v1194, %v1136
      %v1227 = vadd.f32 %v1195, %v1141
      %v1228 = vadd.f32 %v1196, %v1144
      %v1229 = vadd.f32 %v1197, %v1149
      %v1230 = vadd.f32 %v1198, %v1152
      %v1231 = vadd.f32 %v1199, %v1157
      %v1232 = vadd.f32 %v1200, %v1160
      %v1233 = vadd.f32 %v1201, %v1165
      %v1234 = vadd.f32 %v1202, %v1168
      %1235 = vst [vmem:[#allocation2] sm:$0xff] %v1203
      %1236 = vst [vmem:[#allocation2 + $0x8] sm:$0xff] %v1204
      %1237 = vst [vmem:[#allocation2 + $0x10] sm:$0xff] %v1205
      %1238 = vst [vmem:[#allocation2 + $0x18] sm:$0xff] %v1206
      %1239 = vst [vmem:[#allocation2 + $0x20] sm:$0xff] %v1207
      %1240 = vst [vmem:[#allocation2 + $0x28] sm:$0xff] %v1208
      %1241 = vst [vmem:[#allocation2 + $0x30] sm:$0xff] %v1209
      %1242 = vst [vmem:[#allocation2 + $0x38] sm:$0xff] %v1210
      %1243 = vst [vmem:[#allocation2 + $0x40] sm:$0xff] %v1211
      %1244 = vst [vmem:[#allocation2 + $0x48] sm:$0xff] %v1212
      %1245 = vst [vmem:[#allocation2 + $0x50] sm:$0xff] %v1213
      %1246 = vst [vmem:[#allocation2 + $0x58] sm:$0xff] %v1214
      %1247 = vst [vmem:[#allocation2 + $0x60] sm:$0xff] %v1215
      %1248 = vst [vmem:[#allocation2 + $0x68] sm:$0xff] %v1216
      %1249 = vst [vmem:[#allocation2 + $0x70] sm:$0xff] %v1217
      %1250 = vst [vmem:[#allocation2 + $0x78] sm:$0xff] %v1218
      %1251 = vst [vmem:[#allocation2 + $0x80] sm:$0xff] %v1219
      %1252 = vst [vmem:[#allocation2 + $0x88] sm:$0xff] %v1220
      %1253 = vst [vmem:[#allocation2 + $0x90] sm:$0xff] %v1221
      %1254 = vst [vmem:[#allocation2 + $0x98] sm:$0xff] %v1222
      %1255 = vst [vmem:[#allocation2 + $0xa0] sm:$0xff] %v1223
      %1256 = vst [vmem:[#allocation2 + $0xa8] sm:$0xff] %v1224
      %1257 = vst [vmem:[#allocation2 + $0xb0] sm:$0xff] %v1225
      %1258 = vst [vmem:[#allocation2 + $0xb8] sm:$0xff] %v1226
      %1259 = vst [vmem:[#allocation2 + $0xc0] sm:$0xff] %v1227
      %1260 = vst [vmem:[#allocation2 + $0xc8] sm:$0xff] %v1228
      %1261 = vst [vmem:[#allocation2 + $0xd0] sm:$0xff] %v1229
      %1262 = vst [vmem:[#allocation2 + $0xd8] sm:$0xff] %v1230
      %1263 = vst [vmem:[#allocation2 + $0xe0] sm:$0xff] %v1231
      %1264 = vst [vmem:[#allocation2 + $0xe8] sm:$0xff] %v1232
      %1265 = vst [vmem:[#allocation2 + $0xf0] sm:$0xff] %v1233
      %1266 = vst [vmem:[#allocation2 + $0xf8] sm:$0xff] %v1234
      %v1267 = vld [vmem:[%s206 + $0x80] sm:$0xff]
      %v1268 = vld [vmem:[%s206 + $0x88] sm:$0xff]
      %v1269 = vld [vmem:[%s206 + $0x90] sm:$0xff]
      %v1270 = vld [vmem:[%s206 + $0x98] sm:$0xff]
      %v1271 = vld [vmem:[%s206 + $0xa0] sm:$0xff]
      %v1272 = vld [vmem:[%s206 + $0xa8] sm:$0xff]
      %v1273 = vld [vmem:[%s206 + $0xb0] sm:$0xff]
      %v1274 = vld [vmem:[%s206 + $0xb8] sm:$0xff]
      %v1275 = vld [vmem:[%s206 + $0xc0] sm:$0xff]
      %v1276 = vld [vmem:[%s206 + $0xc8] sm:$0xff]
      %v1277 = vld [vmem:[%s206 + $0xd0] sm:$0xff]
      %v1278 = vld [vmem:[%s206 + $0xd8] sm:$0xff]
      %v1279 = vld [vmem:[%s206 + $0xe0] sm:$0xff]
      %v1280 = vld [vmem:[%s206 + $0xe8] sm:$0xff]
      %v1281 = vld [vmem:[%s206 + $0xf0] sm:$0xff]
      %v1282 = vld [vmem:[%s206 + $0xf8] sm:$0xff]
      %v1283 = vld [vmem:[%s206 + $0x100] sm:$0xff]
      %v1284 = vld [vmem:[%s206 + $0x108] sm:$0xff]
      %v1285 = vld [vmem:[%s206 + $0x110] sm:$0xff]
      %v1286 = vld [vmem:[%s206 + $0x118] sm:$0xff]
      %v1287 = vld [vmem:[%s206 + $0x120] sm:$0xff]
      %v1288 = vld [vmem:[%s206 + $0x128] sm:$0xff]
      %v1289 = vld [vmem:[%s206 + $0x130] sm:$0xff]
      %v1290 = vld [vmem:[%s206 + $0x138] sm:$0xff]
      %v1291 = vld [vmem:[%s206 + $0x140] sm:$0xff]
      %v1292 = vld [vmem:[%s206 + $0x148] sm:$0xff]
      %v1293 = vld [vmem:[%s206 + $0x150] sm:$0xff]
      %v1294 = vld [vmem:[%s206 + $0x158] sm:$0xff]
      %v1295 = vld [vmem:[%s206 + $0x160] sm:$0xff]
      %v1296 = vld [vmem:[%s206 + $0x168] sm:$0xff]
      %v1297 = vld [vmem:[%s206 + $0x170] sm:$0xff]
      %v1298 = vld [vmem:[%s206 + $0x178] sm:$0xff]
      %s1299 = scalar_lea.vmem %s210, 144
      %v1300 = vld [vmem:[%s1299] sm:$0xf]
      %v1301 = vld [vmem:[%s1299 + $0x4] sm:$0xf]
      %v1302 = vld [vmem:[%s1299 + $0x8] sm:$0xf]
      %v1303 = vld [vmem:[%s1299 + $0xc] sm:$0xf]
      %v1304 = vld [vmem:[%s1299 + $0x10] sm:$0xf]
      %v1305 = vld [vmem:[%s1299 + $0x14] sm:$0xf]
      %v1306 = vld [vmem:[%s1299 + $0x18] sm:$0xf]
      %v1307 = vld [vmem:[%s1299 + $0x1c] sm:$0xf]
      %v1308 = vld [vmem:[%s1299 + $0x20] sm:$0xf]
      %v1309 = vld [vmem:[%s1299 + $0x24] sm:$0xf]
      %v1310 = vld [vmem:[%s1299 + $0x28] sm:$0xf]
      %v1311 = vld [vmem:[%s1299 + $0x2c] sm:$0xf]
      %v1312 = vld [vmem:[%s1299 + $0x30] sm:$0xf]
      %v1313 = vld [vmem:[%s1299 + $0x34] sm:$0xf]
      %v1314 = vld [vmem:[%s1299 + $0x38] sm:$0xf]
      %v1315 = vld [vmem:[%s1299 + $0x3c] sm:$0xf]
      %v1316 = vld [vmem:[%s1299 + $0x40] sm:$0xf]
      %v1317 = vld [vmem:[%s1299 + $0x44] sm:$0xf]
      %v1350 = vunpack.c.l.b16 %v1267
      %v1351 = vunpack.c.h.b16 %v1267
      %v1352 = vunpack.c.l.b16 %v1268
      %v1353 = vunpack.c.h.b16 %v1268
      %v1354 = vunpack.c.l.b16 %v1269
      %v1355 = vunpack.c.h.b16 %v1269
      %v1356 = vunpack.c.l.b16 %v1270
      %v1357 = vunpack.c.h.b16 %v1270
      %v1358 = vunpack.c.l.b16 %v1271
      %v1359 = vunpack.c.h.b16 %v1271
      %v1360 = vunpack.c.l.b16 %v1272
      %v1361 = vunpack.c.h.b16 %v1272
      %v1362 = vunpack.c.l.b16 %v1273
      %v1363 = vunpack.c.h.b16 %v1273
      %v1364 = vunpack.c.l.b16 %v1274
      %v1365 = vunpack.c.h.b16 %v1274
      %v1366 = vunpack.c.l.b16 %v1275
      %v1367 = vunpack.c.h.b16 %v1275
      %v1368 = vunpack.c.l.b16 %v1276
      %v1369 = vunpack.c.h.b16 %v1276
      %v1370 = vunpack.c.l.b16 %v1277
      %v1371 = vunpack.c.h.b16 %v1277
      %v1372 = vunpack.c.l.b16 %v1278
      %v1373 = vunpack.c.h.b16 %v1278
      %v1374 = vunpack.c.l.b16 %v1279
      %v1375 = vunpack.c.h.b16 %v1279
      %v1376 = vunpack.c.l.b16 %v1280
      %v1377 = vunpack.c.h.b16 %v1280
      %v1378 = vunpack.c.l.b16 %v1281
      %v1379 = vunpack.c.h.b16 %v1281
      %v1380 = vunpack.c.l.b16 %v1282
      %v1381 = vunpack.c.h.b16 %v1282
      %v1382 = vunpack.c.l.b16 %v1283
      %v1383 = vunpack.c.h.b16 %v1283
      %v1384 = vunpack.c.l.b16 %v1284
      %v1385 = vunpack.c.h.b16 %v1284
      %v1386 = vunpack.c.l.b16 %v1285
      %v1387 = vunpack.c.h.b16 %v1285
      %v1388 = vunpack.c.l.b16 %v1286
      %v1389 = vunpack.c.h.b16 %v1286
      %v1390 = vunpack.c.l.b16 %v1287
      %v1391 = vunpack.c.h.b16 %v1287
      %v1392 = vunpack.c.l.b16 %v1288
      %v1393 = vunpack.c.h.b16 %v1288
      %v1394 = vunpack.c.l.b16 %v1289
      %v1395 = vunpack.c.h.b16 %v1289
      %v1396 = vunpack.c.l.b16 %v1290
      %v1397 = vunpack.c.h.b16 %v1290
      %v1398 = vunpack.c.l.b16 %v1291
      %v1399 = vunpack.c.h.b16 %v1291
      %v1400 = vunpack.c.l.b16 %v1292
      %v1401 = vunpack.c.h.b16 %v1292
      %v1402 = vunpack.c.l.b16 %v1293
      %v1403 = vunpack.c.h.b16 %v1293
      %v1404 = vunpack.c.l.b16 %v1294
      %v1405 = vunpack.c.h.b16 %v1294
      %v1406 = vunpack.c.l.b16 %v1295
      %v1407 = vunpack.c.h.b16 %v1295
      %v1408 = vunpack.c.l.b16 %v1296
      %v1409 = vunpack.c.h.b16 %v1296
      %v1410 = vunpack.c.l.b16 %v1297
      %v1411 = vunpack.c.h.b16 %v1297
      %v1412 = vunpack.c.l.b16 %v1298
      %v1413 = vunpack.c.h.b16 %v1298
      %v1414 = vpack.c.b16 %v1352, %v1350
      %v1415 = vpack.c.b16 %v1353, %v1351
      %v1416 = vpack.c.b16 %v1356, %v1354
      %v1417 = vpack.c.b16 %v1357, %v1355
      %v1418 = vpack.c.b16 %v1360, %v1358
      %v1419 = vpack.c.b16 %v1361, %v1359
      %v1420 = vpack.c.b16 %v1364, %v1362
      %v1421 = vpack.c.b16 %v1365, %v1363
      %v1422 = vpack.c.b16 %v1368, %v1366
      %v1423 = vpack.c.b16 %v1369, %v1367
      %v1424 = vpack.c.b16 %v1372, %v1370
      %v1425 = vpack.c.b16 %v1373, %v1371
      %v1426 = vpack.c.b16 %v1376, %v1374
      %v1427 = vpack.c.b16 %v1377, %v1375
      %v1428 = vpack.c.b16 %v1380, %v1378
      %v1429 = vpack.c.b16 %v1381, %v1379
      %v1430 = vpack.c.b16 %v1384, %v1382
      %v1431 = vpack.c.b16 %v1385, %v1383
      %v1432 = vpack.c.b16 %v1388, %v1386
      %v1433 = vpack.c.b16 %v1389, %v1387
      %v1434 = vpack.c.b16 %v1392, %v1390
      %v1435 = vpack.c.b16 %v1393, %v1391
      %v1436 = vpack.c.b16 %v1396, %v1394
      %v1437 = vpack.c.b16 %v1397, %v1395
      %v1438 = vpack.c.b16 %v1400, %v1398
      %v1439 = vpack.c.b16 %v1401, %v1399
      %v1440 = vpack.c.b16 %v1404, %v1402
      %v1441 = vpack.c.b16 %v1405, %v1403
      %v1442 = vpack.c.b16 %v1408, %v1406
      %v1443 = vpack.c.b16 %v1409, %v1407
      %v1444 = vpack.c.b16 %v1412, %v1410
      %v1445 = vpack.c.b16 %v1413, %v1411
      %v1480 = vunpack.c.l.b16 %v1300
      %v1481 = vunpack.c.l.b16 %v1301
      %v1482 = vunpack.c.l.b16 %v1302
      %v1483 = vunpack.c.l.b16 %v1303
      %v1484 = vunpack.c.l.b16 %v1304
      %v1485 = vunpack.c.l.b16 %v1305
      %v1486 = vunpack.c.l.b16 %v1306
      %v1487 = vunpack.c.l.b16 %v1307
      %v1488 = vunpack.c.l.b16 %v1308
      %v1489 = vunpack.c.l.b16 %v1309
      %v1490 = vunpack.c.l.b16 %v1310
      %v1491 = vunpack.c.l.b16 %v1311
      %v1492 = vunpack.c.l.b16 %v1312
      %v1493 = vunpack.c.l.b16 %v1313
      %v1494 = vunpack.c.l.b16 %v1314
      %v1495 = vunpack.c.l.b16 %v1315
      %v1496 = vunpack.c.l.b16 %v1316
      %v1497 = vunpack.c.l.b16 %v1317
      %v1498 = vpack.c.b16 %v1481, %v1480
      %v1499 = vpack.c.b16 %v1483, %v1482
      %v1500 = vpack.c.b16 %v1485, %v1484
      %v1501 = vpack.c.b16 %v1487, %v1486
      %v1502 = vpack.c.b16 %v1489, %v1488
      %v1503 = vpack.c.b16 %v1491, %v1490
      %v1504 = vpack.c.b16 %v1493, %v1492
      %v1505 = vpack.c.b16 %v1495, %v1494
      %v1506 = vpack.c.b16 %v1497, %v1496
      %v1517 = vsel %vm471, %v1415, 0
      %v1520 = vsel %vm471, %v1417, 0
      %v1523 = vsel %vm471, %v1419, 0
      %v1526 = vsel %vm471, %v1421, 0
      %v1529 = vsel %vm471, %v1423, 0
      %v1532 = vsel %vm471, %v1425, 0
      %v1535 = vsel %vm471, %v1427, 0
      %v1538 = vsel %vm471, %v1429, 0
      %v1541 = vsel %vm471, %v1431, 0
      %v1544 = vsel %vm471, %v1433, 0
      %v1547 = vsel %vm471, %v1435, 0
      %v1550 = vsel %vm471, %v1437, 0
      %v1553 = vsel %vm471, %v1439, 0
      %v1556 = vsel %vm471, %v1441, 0
      %v1559 = vsel %vm471, %v1443, 0
      %v1562 = vsel %vm471, %v1445, 0
      %1564 = vmatprep.subr.bf16.mxu0 0
      %1565 = vmatpush1.bf16.msra.mxu0 %v1498
      %1566 = vmatprep.subr.bf16.mxu0 0
      %1567 = vmatpush1.bf16.msra.mxu0 %v1499
      %1568 = vmatprep.subr.bf16.mxu0 0
      %1569 = vmatpush1.bf16.msra.mxu0 %v1500
      %1570 = vmatprep.subr.bf16.mxu0 0
      %1571 = vmatpush1.bf16.msra.mxu0 %v1501
      %1572 = vmatprep.subr.bf16.mxu0 0
      %1573 = vmatpush1.bf16.msra.mxu0 %v1502
      %1574 = vmatprep.subr.bf16.mxu0 0
      %1575 = vmatpush1.bf16.msra.mxu0 %v1503
      %1576 = vmatprep.subr.bf16.mxu0 0
      %1577 = vmatpush1.bf16.msra.mxu0 %v1504
      %1578 = vmatprep.subr.bf16.mxu0 0
      %1579 = vmatpush1.bf16.msra.mxu0 %v1505
      %1580 = vmatprep.subr.bf16.mxu0 0
      %1581 = vmatpush1.bf16.msra.mxu0 %v1506
      %1582 = vmatprep.subr.bf16.mxu0 0
      %1583 = vmatpush1.bf16.msra.mxu0 0
      %1584 = vmatprep.subr.bf16.mxu0 0
      %1585 = vmatpush1.bf16.msra.mxu0 0
      %1586 = vmatprep.subr.bf16.mxu0 0
      %1587 = vmatpush1.bf16.msra.mxu0 0
      %1588 = vmatprep.subr.bf16.mxu0 0
      %1589 = vmatpush1.bf16.msra.mxu0 0
      %1590 = vmatprep.subr.bf16.mxu0 0
      %1591 = vmatpush1.bf16.msra.mxu0 0
      %1592 = vmatprep.subr.bf16.mxu0 0
      %1593 = vmatpush1.bf16.msra.mxu0 0
      %1594 = vmatprep.subr.bf16.mxu0 0
      %1595 = vmatpush1.bf16.msra.mxu0 0
      %1596 = vmatprep.mubr.bf16.mxu0 %v1517
      %1597 = vmatmul.mubr.bf16.gmra.mrb[0].mxu0 %v1414
      %v1598 = vpop.f32.mrb[0].mxu0
      %v1599 = vadd.f32 0.0, %v1598
      %v1600 = vpop.f32.mrb[0].mxu0
      %v1601 = vpop.f32.mrb[0].mxu0
      %v1602 = vadd.f32 0.0, %v1601
      %v1603 = vpop.f32.mrb[0].mxu0
      %1604 = vmatprep.mubr.bf16.mxu0 %v1520
      %1605 = vmatmul.mubr.bf16.gmra.mrb[0].mxu0 %v1416
      %v1606 = vpop.f32.mrb[0].mxu0
      %v1607 = vadd.f32 0.0, %v1606
      %v1608 = vpop.f32.mrb[0].mxu0
      %v1609 = vpop.f32.mrb[0].mxu0
      %v1610 = vadd.f32 0.0, %v1609
      %v1611 = vpop.f32.mrb[0].mxu0
      %1612 = vmatprep.mubr.bf16.mxu0 %v1523
      %1613 = vmatmul.mubr.bf16.gmra.mrb[0].mxu0 %v1418
      %v1614 = vpop.f32.mrb[0].mxu0
      %v1615 = vadd.f32 0.0, %v1614
      %v1616 = vpop.f32.mrb[0].mxu0
      %v1617 = vpop.f32.mrb[0].mxu0
      %v1618 = vadd.f32 0.0, %v1617
      %v1619 = vpop.f32.mrb[0].mxu0
      %1620 = vmatprep.mubr.bf16.mxu0 %v1526
      %1621 = vmatmul.mubr.bf16.gmra.mrb[0].mxu0 %v1420
      %v1622 = vpop.f32.mrb[0].mxu0
      %v1623 = vadd.f32 0.0, %v1622
      %v1624 = vpop.f32.mrb[0].mxu0
      %v1625 = vpop.f32.mrb[0].mxu0
      %v1626 = vadd.f32 0.0, %v1625
      %v1627 = vpop.f32.mrb[0].mxu0
      %1628 = vmatprep.mubr.bf16.mxu0 %v1529
      %1629 = vmatmul.mubr.bf16.gmra.mrb[0].mxu0 %v1422
      %v1630 = vpop.f32.mrb[0].mxu0
      %v1631 = vadd.f32 0.0, %v1630
      %v1632 = vpop.f32.mrb[0].mxu0
      %v1633 = vpop.f32.mrb[0].mxu0
      %v1634 = vadd.f32 0.0, %v1633
      %v1635 = vpop.f32.mrb[0].mxu0
      %1636 = vmatprep.mubr.bf16.mxu0 %v1532
      %1637 = vmatmul.mubr.bf16.gmra.mrb[0].mxu0 %v1424
      %v1638 = vpop.f32.mrb[0].mxu0
      %v1639 = vadd.f32 0.0, %v1638
      %v1640 = vpop.f32.mrb[0].mxu0
      %v1641 = vpop.f32.mrb[0].mxu0
      %v1642 = vadd.f32 0.0, %v1641
      %v1643 = vpop.f32.mrb[0].mxu0
      %1644 = vmatprep.mubr.bf16.mxu0 %v1535
      %1645 = vmatmul.mubr.bf16.gmra.mrb[0].mxu0 %v1426
      %v1646 = vpop.f32.mrb[0].mxu0
      %v1647 = vadd.f32 0.0, %v1646
      %v1648 = vpop.f32.mrb[0].mxu0
      %v1649 = vpop.f32.mrb[0].mxu0
      %v1650 = vadd.f32 0.0, %v1649
      %v1651 = vpop.f32.mrb[0].mxu0
      %1652 = vmatprep.mubr.bf16.mxu0 %v1538
      %1653 = vmatmul.mubr.bf16.gmra.mrb[0].mxu0 %v1428
      %v1654 = vpop.f32.mrb[0].mxu0
      %v1655 = vadd.f32 0.0, %v1654
      %v1656 = vpop.f32.mrb[0].mxu0
      %v1657 = vpop.f32.mrb[0].mxu0
      %v1658 = vadd.f32 0.0, %v1657
      %v1659 = vpop.f32.mrb[0].mxu0
      %1660 = vmatprep.mubr.bf16.mxu0 %v1541
      %1661 = vmatmul.mubr.bf16.gmra.mrb[0].mxu0 %v1430
      %v1662 = vpop.f32.mrb[0].mxu0
      %v1663 = vadd.f32 0.0, %v1662
      %v1664 = vpop.f32.mrb[0].mxu0
      %v1665 = vpop.f32.mrb[0].mxu0
      %v1666 = vadd.f32 0.0, %v1665
      %v1667 = vpop.f32.mrb[0].mxu0
      %1668 = vmatprep.mubr.bf16.mxu0 %v1544
      %1669 = vmatmul.mubr.bf16.gmra.mrb[0].mxu0 %v1432
      %v1670 = vpop.f32.mrb[0].mxu0
      %v1671 = vadd.f32 0.0, %v1670
      %v1672 = vpop.f32.mrb[0].mxu0
      %v1673 = vpop.f32.mrb[0].mxu0
      %v1674 = vadd.f32 0.0, %v1673
      %v1675 = vpop.f32.mrb[0].mxu0
      %1676 = vmatprep.mubr.bf16.mxu0 %v1547
      %1677 = vmatmul.mubr.bf16.gmra.mrb[0].mxu0 %v1434
      %v1678 = vpop.f32.mrb[0].mxu0
      %v1679 = vadd.f32 0.0, %v1678
      %v1680 = vpop.f32.mrb[0].mxu0
      %v1681 = vpop.f32.mrb[0].mxu0
      %v1682 = vadd.f32 0.0, %v1681
      %v1683 = vpop.f32.mrb[0].mxu0
      %1684 = vmatprep.mubr.bf16.mxu0 %v1550
      %1685 = vmatmul.mubr.bf16.gmra.mrb[0].mxu0 %v1436
      %v1686 = vpop.f32.mrb[0].mxu0
      %v1687 = vadd.f32 0.0, %v1686
      %v1688 = vpop.f32.mrb[0].mxu0
      %v1689 = vpop.f32.mrb[0].mxu0
      %v1690 = vadd.f32 0.0, %v1689
      %v1691 = vpop.f32.mrb[0].mxu0
      %1692 = vmatprep.mubr.bf16.mxu0 %v1553
      %1693 = vmatmul.mubr.bf16.gmra.mrb[0].mxu0 %v1438
      %v1694 = vpop.f32.mrb[0].mxu0
      %v1695 = vadd.f32 0.0, %v1694
      %v1696 = vpop.f32.mrb[0].mxu0
      %v1697 = vpop.f32.mrb[0].mxu0
      %v1698 = vadd.f32 0.0, %v1697
      %v1699 = vpop.f32.mrb[0].mxu0
      %1700 = vmatprep.mubr.bf16.mxu0 %v1556
      %1701 = vmatmul.mubr.bf16.gmra.mrb[0].mxu0 %v1440
      %v1702 = vpop.f32.mrb[0].mxu0
      %v1703 = vadd.f32 0.0, %v1702
      %v1704 = vpop.f32.mrb[0].mxu0
      %v1705 = vpop.f32.mrb[0].mxu0
      %v1706 = vadd.f32 0.0, %v1705
      %v1707 = vpop.f32.mrb[0].mxu0
      %1708 = vmatprep.mubr.bf16.mxu0 %v1559
      %1709 = vmatmul.mubr.bf16.gmra.mrb[0].mxu0 %v1442
      %v1710 = vpop.f32.mrb[0].mxu0
      %v1711 = vadd.f32 0.0, %v1710
      %v1712 = vpop.f32.mrb[0].mxu0
      %v1713 = vpop.f32.mrb[0].mxu0
      %v1714 = vadd.f32 0.0, %v1713
      %v1715 = vpop.f32.mrb[0].mxu0
      %1716 = vmatprep.mubr.bf16.mxu0 %v1562
      %1717 = vmatmul.mubr.bf16.gmra.mrb[0].mxu0 %v1444
      %v1718 = vpop.f32.mrb[0].mxu0
      %v1719 = vadd.f32 0.0, %v1718
      %v1720 = vpop.f32.mrb[0].mxu0
      %v1721 = vpop.f32.mrb[0].mxu0
      %v1722 = vadd.f32 0.0, %v1721
      %v1723 = vpop.f32.mrb[0].mxu0
      %1724 = vdwg.mxu0
      %v1725 = vld [vmem:[#allocation2] sm:$0xff]
      %v1726 = vld [vmem:[#allocation2 + $0x8] sm:$0xff]
      %v1727 = vld [vmem:[#allocation2 + $0x10] sm:$0xff]
      %v1728 = vld [vmem:[#allocation2 + $0x18] sm:$0xff]
      %v1729 = vld [vmem:[#allocation2 + $0x20] sm:$0xff]
      %v1730 = vld [vmem:[#allocation2 + $0x28] sm:$0xff]
      %v1731 = vld [vmem:[#allocation2 + $0x30] sm:$0xff]
      %v1732 = vld [vmem:[#allocation2 + $0x38] sm:$0xff]
      %v1733 = vld [vmem:[#allocation2 + $0x40] sm:$0xff]
      %v1734 = vld [vmem:[#allocation2 + $0x48] sm:$0xff]
      %v1735 = vld [vmem:[#allocation2 + $0x50] sm:$0xff]
      %v1736 = vld [vmem:[#allocation2 + $0x58] sm:$0xff]
      %v1737 = vld [vmem:[#allocation2 + $0x60] sm:$0xff]
      %v1738 = vld [vmem:[#allocation2 + $0x68] sm:$0xff]
      %v1739 = vld [vmem:[#allocation2 + $0x70] sm:$0xff]
      %v1740 = vld [vmem:[#allocation2 + $0x78] sm:$0xff]
      %v1741 = vld [vmem:[#allocation2 + $0x80] sm:$0xff]
      %v1742 = vld [vmem:[#allocation2 + $0x88] sm:$0xff]
      %v1743 = vld [vmem:[#allocation2 + $0x90] sm:$0xff]
      %v1744 = vld [vmem:[#allocation2 + $0x98] sm:$0xff]
      %v1745 = vld [vmem:[#allocation2 + $0xa0] sm:$0xff]
      %v1746 = vld [vmem:[#allocation2 + $0xa8] sm:$0xff]
      %v1747 = vld [vmem:[#allocation2 + $0xb0] sm:$0xff]
      %v1748 = vld [vmem:[#allocation2 + $0xb8] sm:$0xff]
      %v1749 = vld [vmem:[#allocation2 + $0xc0] sm:$0xff]
      %v1750 = vld [vmem:[#allocation2 + $0xc8] sm:$0xff]
      %v1751 = vld [vmem:[#allocation2 + $0xd0] sm:$0xff]
      %v1752 = vld [vmem:[#allocation2 + $0xd8] sm:$0xff]
      %v1753 = vld [vmem:[#allocation2 + $0xe0] sm:$0xff]
      %v1754 = vld [vmem:[#allocation2 + $0xe8] sm:$0xff]
      %v1755 = vld [vmem:[#allocation2 + $0xf0] sm:$0xff]
      %v1756 = vld [vmem:[#allocation2 + $0xf8] sm:$0xff]
      %v1757 = vadd.f32 %v1725, %v1599
      %v1758 = vadd.f32 %v1726, %v1602
      %v1759 = vadd.f32 %v1727, %v1607
      %v1760 = vadd.f32 %v1728, %v1610
      %v1761 = vadd.f32 %v1729, %v1615
      %v1762 = vadd.f32 %v1730, %v1618
      %v1763 = vadd.f32 %v1731, %v1623
      %v1764 = vadd.f32 %v1732, %v1626
      %v1765 = vadd.f32 %v1733, %v1631
      %v1766 = vadd.f32 %v1734, %v1634
      %v1767 = vadd.f32 %v1735, %v1639
      %v1768 = vadd.f32 %v1736, %v1642
      %v1769 = vadd.f32 %v1737, %v1647
      %v1770 = vadd.f32 %v1738, %v1650
      %v1771 = vadd.f32 %v1739, %v1655
      %v1772 = vadd.f32 %v1740, %v1658
      %v1773 = vadd.f32 %v1741, %v1663
      %v1774 = vadd.f32 %v1742, %v1666
      %v1775 = vadd.f32 %v1743, %v1671
      %v1776 = vadd.f32 %v1744, %v1674
      %v1777 = vadd.f32 %v1745, %v1679
      %v1778 = vadd.f32 %v1746, %v1682
      %v1779 = vadd.f32 %v1747, %v1687
      %v1780 = vadd.f32 %v1748, %v1690
      %v1781 = vadd.f32 %v1749, %v1695
      %v1782 = vadd.f32 %v1750, %v1698
      %v1783 = vadd.f32 %v1751, %v1703
      %v1784 = vadd.f32 %v1752, %v1706
      %v1785 = vadd.f32 %v1753, %v1711
      %v1786 = vadd.f32 %v1754, %v1714
      %v1787 = vadd.f32 %v1755, %v1719
      %v1788 = vadd.f32 %v1756, %v1722
      %1789 = vst [vmem:[#allocation2] sm:$0xff] %v1757
      %1790 = vst [vmem:[#allocation2 + $0x8] sm:$0xff] %v1758
      %1791 = vst [vmem:[#allocation2 + $0x10] sm:$0xff] %v1759
      %1792 = vst [vmem:[#allocation2 + $0x18] sm:$0xff] %v1760
      %1793 = vst [vmem:[#allocation2 + $0x20] sm:$0xff] %v1761
      %1794 = vst [vmem:[#allocation2 + $0x28] sm:$0xff] %v1762
      %1795 = vst [vmem:[#allocation2 + $0x30] sm:$0xff] %v1763
      %1796 = vst [vmem:[#allocation2 + $0x38] sm:$0xff] %v1764
      %1797 = vst [vmem:[#allocation2 + $0x40] sm:$0xff] %v1765
      %1798 = vst [vmem:[#allocation2 + $0x48] sm:$0xff] %v1766
      %1799 = vst [vmem:[#allocation2 + $0x50] sm:$0xff] %v1767
      %1800 = vst [vmem:[#allocation2 + $0x58] sm:$0xff] %v1768
      %1801 = vst [vmem:[#allocation2 + $0x60] sm:$0xff] %v1769
      %1802 = vst [vmem:[#allocation2 + $0x68] sm:$0xff] %v1770
      %1803 = vst [vmem:[#allocation2 + $0x70] sm:$0xff] %v1771
      %1804 = vst [vmem:[#allocation2 + $0x78] sm:$0xff] %v1772
      %1805 = vst [vmem:[#allocation2 + $0x80] sm:$0xff] %v1773
      %1806 = vst [vmem:[#allocation2 + $0x88] sm:$0xff] %v1774
      %1807 = vst [vmem:[#allocation2 + $0x90] sm:$0xff] %v1775
      %1808 = vst [vmem:[#allocation2 + $0x98] sm:$0xff] %v1776
      %1809 = vst [vmem:[#allocation2 + $0xa0] sm:$0xff] %v1777
      %1810 = vst [vmem:[#allocation2 + $0xa8] sm:$0xff] %v1778
      %1811 = vst [vmem:[#allocation2 + $0xb0] sm:$0xff] %v1779
      %1812 = vst [vmem:[#allocation2 + $0xb8] sm:$0xff] %v1780
      %1813 = vst [vmem:[#allocation2 + $0xc0] sm:$0xff] %v1781
      %1814 = vst [vmem:[#allocation2 + $0xc8] sm:$0xff] %v1782
      %1815 = vst [vmem:[#allocation2 + $0xd0] sm:$0xff] %v1783
      %1816 = vst [vmem:[#allocation2 + $0xd8] sm:$0xff] %v1784
      %1817 = vst [vmem:[#allocation2 + $0xe0] sm:$0xff] %v1785
      %1818 = vst [vmem:[#allocation2 + $0xe8] sm:$0xff] %v1786
      %1819 = vst [vmem:[#allocation2 + $0xf0] sm:$0xff] %v1787
      %1820 = vst [vmem:[#allocation2 + $0xf8] sm:$0xff] %v1788
      %v1821 = vld [vmem:[#allocation2] sm:$0xff]
      %v1822 = vld [vmem:[#allocation2 + $0x8] sm:$0xff]
      %v1823 = vld [vmem:[#allocation2 + $0x10] sm:$0xff]
      %v1824 = vld [vmem:[#allocation2 + $0x18] sm:$0xff]
      %v1825 = vld [vmem:[#allocation2 + $0x20] sm:$0xff]
      %v1826 = vld [vmem:[#allocation2 + $0x28] sm:$0xff]
      %v1827 = vld [vmem:[#allocation2 + $0x30] sm:$0xff]
      %v1828 = vld [vmem:[#allocation2 + $0x38] sm:$0xff]
      %v1829 = vld [vmem:[#allocation2 + $0x40] sm:$0xff]
      %v1830 = vld [vmem:[#allocation2 + $0x48] sm:$0xff]
      %v1831 = vld [vmem:[#allocation2 + $0x50] sm:$0xff]
      %v1832 = vld [vmem:[#allocation2 + $0x58] sm:$0xff]
      %v1833 = vld [vmem:[#allocation2 + $0x60] sm:$0xff]
      %v1834 = vld [vmem:[#allocation2 + $0x68] sm:$0xff]
      %v1835 = vld [vmem:[#allocation2 + $0x70] sm:$0xff]
      %v1836 = vld [vmem:[#allocation2 + $0x78] sm:$0xff]
      %v1837 = vld [vmem:[#allocation2 + $0x80] sm:$0xff]
      %v1838 = vld [vmem:[#allocation2 + $0x88] sm:$0xff]
      %v1839 = vld [vmem:[#allocation2 + $0x90] sm:$0xff]
      %v1840 = vld [vmem:[#allocation2 + $0x98] sm:$0xff]
      %v1841 = vld [vmem:[#allocation2 + $0xa0] sm:$0xff]
      %v1842 = vld [vmem:[#allocation2 + $0xa8] sm:$0xff]
      %v1843 = vld [vmem:[#allocation2 + $0xb0] sm:$0xff]
      %v1844 = vld [vmem:[#allocation2 + $0xb8] sm:$0xff]
      %v1845 = vld [vmem:[#allocation2 + $0xc0] sm:$0xff]
      %v1846 = vld [vmem:[#allocation2 + $0xc8] sm:$0xff]
      %v1847 = vld [vmem:[#allocation2 + $0xd0] sm:$0xff]
      %v1848 = vld [vmem:[#allocation2 + $0xd8] sm:$0xff]
      %v1849 = vld [vmem:[#allocation2 + $0xe0] sm:$0xff]
      %v1850 = vld [vmem:[#allocation2 + $0xe8] sm:$0xff]
      %v1851 = vld [vmem:[#allocation2 + $0xf0] sm:$0xff]
      %v1852 = vld [vmem:[#allocation2 + $0xf8] sm:$0xff]
      %v1853 = vld [vmem:[%s213] sm:$0x1]
      %v1855 = vlaneseq
      %v1856 = vshrl.u32 %v1855, 7
      %v1857 = vsub.s32 0, %v1856
      %v1858 = vrot.slane %v1853, %v1857
      %v1860 = vadd.f32 %v1821, %v1858
      %v1861 = vadd.f32 %v1822, %v1858
      %v1862 = vadd.f32 %v1823, %v1858
      %v1863 = vadd.f32 %v1824, %v1858
      %v1864 = vadd.f32 %v1825, %v1858
      %v1865 = vadd.f32 %v1826, %v1858
      %v1866 = vadd.f32 %v1827, %v1858
      %v1867 = vadd.f32 %v1828, %v1858
      %v1868 = vadd.f32 %v1829, %v1858
      %v1869 = vadd.f32 %v1830, %v1858
      %v1870 = vadd.f32 %v1831, %v1858
      %v1871 = vadd.f32 %v1832, %v1858
      %v1872 = vadd.f32 %v1833, %v1858
      %v1873 = vadd.f32 %v1834, %v1858
      %v1874 = vadd.f32 %v1835, %v1858
      %v1875 = vadd.f32 %v1836, %v1858
      %v1876 = vadd.f32 %v1837, %v1858
      %v1877 = vadd.f32 %v1838, %v1858
      %v1878 = vadd.f32 %v1839, %v1858
      %v1879 = vadd.f32 %v1840, %v1858
      %v1880 = vadd.f32 %v1841, %v1858
      %v1881 = vadd.f32 %v1842, %v1858
      %v1882 = vadd.f32 %v1843, %v1858
      %v1883 = vadd.f32 %v1844, %v1858
      %v1884 = vadd.f32 %v1845, %v1858
      %v1885 = vadd.f32 %v1846, %v1858
      %v1886 = vadd.f32 %v1847, %v1858
      %v1887 = vadd.f32 %v1848, %v1858
      %v1888 = vadd.f32 %v1849, %v1858
      %v1889 = vadd.f32 %v1850, %v1858
      %v1890 = vadd.f32 %v1851, %v1858
      %v1891 = vadd.f32 %v1852, %v1858
      %v1892 = vmax.f32 %v1860, 0.0
      %v1893 = vmax.f32 %v1861, 0.0
      %v1894 = vmax.f32 %v1862, 0.0
      %v1895 = vmax.f32 %v1863, 0.0
      %v1896 = vmax.f32 %v1864, 0.0
      %v1897 = vmax.f32 %v1865, 0.0
      %v1898 = vmax.f32 %v1866, 0.0
      %v1899 = vmax.f32 %v1867, 0.0
      %v1900 = vmax.f32 %v1868, 0.0
      %v1901 = vmax.f32 %v1869, 0.0
      %v1902 = vmax.f32 %v1870, 0.0
      %v1903 = vmax.f32 %v1871, 0.0
      %v1904 = vmax.f32 %v1872, 0.0
      %v1905 = vmax.f32 %v1873, 0.0
      %v1906 = vmax.f32 %v1874, 0.0
      %v1907 = vmax.f32 %v1875, 0.0
      %v1908 = vmax.f32 %v1876, 0.0
      %v1909 = vmax.f32 %v1877, 0.0
      %v1910 = vmax.f32 %v1878, 0.0
      %v1911 = vmax.f32 %v1879, 0.0
      %v1912 = vmax.f32 %v1880, 0.0
      %v1913 = vmax.f32 %v1881, 0.0
      %v1914 = vmax.f32 %v1882, 0.0
      %v1915 = vmax.f32 %v1883, 0.0
      %v1916 = vmax.f32 %v1884, 0.0
      %v1917 = vmax.f32 %v1885, 0.0
      %v1918 = vmax.f32 %v1886, 0.0
      %v1919 = vmax.f32 %v1887, 0.0
      %v1920 = vmax.f32 %v1888, 0.0
      %v1921 = vmax.f32 %v1889, 0.0
      %v1922 = vmax.f32 %v1890, 0.0
      %v1923 = vmax.f32 %v1891, 0.0
      %v1924 = vpack.c.bf16 %v1893, %v1892
      %v1925 = vpack.c.bf16 %v1895, %v1894
      %v1926 = vpack.c.bf16 %v1897, %v1896
      %v1927 = vpack.c.bf16 %v1899, %v1898
      %v1928 = vpack.c.bf16 %v1901, %v1900
      %v1929 = vpack.c.bf16 %v1903, %v1902
      %v1930 = vpack.c.bf16 %v1905, %v1904
      %v1931 = vpack.c.bf16 %v1907, %v1906
      %v1932 = vpack.c.bf16 %v1909, %v1908
      %v1933 = vpack.c.bf16 %v1911, %v1910
      %v1934 = vpack.c.bf16 %v1913, %v1912
      %v1935 = vpack.c.bf16 %v1915, %v1914
      %v1936 = vpack.c.bf16 %v1917, %v1916
      %v1937 = vpack.c.bf16 %v1919, %v1918
      %v1938 = vpack.c.bf16 %v1921, %v1920
      %v1939 = vpack.c.bf16 %v1923, %v1922
      %v1956 = vunpack.c.l.b16 %v1924
      %v1957 = vunpack.c.h.b16 %v1924
      %v1958 = vunpack.c.l.b16 %v1925
      %v1959 = vunpack.c.h.b16 %v1925
      %v1960 = vunpack.c.l.b16 %v1926
      %v1961 = vunpack.c.h.b16 %v1926
      %v1962 = vunpack.c.l.b16 %v1927
      %v1963 = vunpack.c.h.b16 %v1927
      %v1964 = vunpack.c.l.b16 %v1928
      %v1965 = vunpack.c.h.b16 %v1928
      %v1966 = vunpack.c.l.b16 %v1929
      %v1967 = vunpack.c.h.b16 %v1929
      %v1968 = vunpack.c.l.b16 %v1930
      %v1969 = vunpack.c.h.b16 %v1930
      %v1970 = vunpack.c.l.b16 %v1931
      %v1971 = vunpack.c.h.b16 %v1931
      %v1972 = vunpack.c.l.b16 %v1932
      %v1973 = vunpack.c.h.b16 %v1932
      %v1974 = vunpack.c.l.b16 %v1933
      %v1975 = vunpack.c.h.b16 %v1933
      %v1976 = vunpack.c.l.b16 %v1934
      %v1977 = vunpack.c.h.b16 %v1934
      %v1978 = vunpack.c.l.b16 %v1935
      %v1979 = vunpack.c.h.b16 %v1935
      %v1980 = vunpack.c.l.b16 %v1936
      %v1981 = vunpack.c.h.b16 %v1936
      %v1982 = vunpack.c.l.b16 %v1937
      %v1983 = vunpack.c.h.b16 %v1937
      %v1984 = vunpack.c.l.b16 %v1938
      %v1985 = vunpack.c.h.b16 %v1938
      %v1986 = vunpack.c.l.b16 %v1939
      %v1987 = vunpack.c.h.b16 %v1939
      %v1988 = vpack.c.b16 %v1956, %v1956
      %v1989 = vpack.c.b16 %v1957, %v1957
      %v1990 = vpack.c.b16 %v1958, %v1958
      %v1991 = vpack.c.b16 %v1959, %v1959
      %v1992 = vpack.c.b16 %v1960, %v1960
      %v1993 = vpack.c.b16 %v1961, %v1961
      %v1994 = vpack.c.b16 %v1962, %v1962
      %v1995 = vpack.c.b16 %v1963, %v1963
      %v1996 = vpack.c.b16 %v1964, %v1964
      %v1997 = vpack.c.b16 %v1965, %v1965
      %v1998 = vpack.c.b16 %v1966, %v1966
      %v1999 = vpack.c.b16 %v1967, %v1967
      %v2000 = vpack.c.b16 %v1968, %v1968
      %v2001 = vpack.c.b16 %v1969, %v1969
      %v2002 = vpack.c.b16 %v1970, %v1970
      %v2003 = vpack.c.b16 %v1971, %v1971
      %v2004 = vpack.c.b16 %v1972, %v1972
      %v2005 = vpack.c.b16 %v1973, %v1973
      %v2006 = vpack.c.b16 %v1974, %v1974
      %v2007 = vpack.c.b16 %v1975, %v1975
      %v2008 = vpack.c.b16 %v1976, %v1976
      %v2009 = vpack.c.b16 %v1977, %v1977
      %v2010 = vpack.c.b16 %v1978, %v1978
      %v2011 = vpack.c.b16 %v1979, %v1979
      %v2012 = vpack.c.b16 %v1980, %v1980
      %v2013 = vpack.c.b16 %v1981, %v1981
      %v2014 = vpack.c.b16 %v1982, %v1982
      %v2015 = vpack.c.b16 %v1983, %v1983
      %v2016 = vpack.c.b16 %v1984, %v1984
      %v2017 = vpack.c.b16 %v1985, %v1985
      %v2018 = vpack.c.b16 %v1986, %v1986
      %v2019 = vpack.c.b16 %v1987, %v1987
      %2052 = vst [vmem:[%s221] sm:$0xf] %v1988
      %2053 = vst [vmem:[%s221 + $0x4] sm:$0xf] %v1989
      %2054 = vst [vmem:[%s221 + $0x8] sm:$0xf] %v1990
      %2055 = vst [vmem:[%s221 + $0xc] sm:$0xf] %v1991
      %2056 = vst [vmem:[%s221 + $0x10] sm:$0xf] %v1992
      %2057 = vst [vmem:[%s221 + $0x14] sm:$0xf] %v1993
      %2058 = vst [vmem:[%s221 + $0x18] sm:$0xf] %v1994
      %2059 = vst [vmem:[%s221 + $0x1c] sm:$0xf] %v1995
      %2060 = vst [vmem:[%s221 + $0x20] sm:$0xf] %v1996
      %2061 = vst [vmem:[%s221 + $0x24] sm:$0xf] %v1997
      %2062 = vst [vmem:[%s221 + $0x28] sm:$0xf] %v1998
      %2063 = vst [vmem:[%s221 + $0x2c] sm:$0xf] %v1999
      %2064 = vst [vmem:[%s221 + $0x30] sm:$0xf] %v2000
      %2065 = vst [vmem:[%s221 + $0x34] sm:$0xf] %v2001
      %2066 = vst [vmem:[%s221 + $0x38] sm:$0xf] %v2002
      %2067 = vst [vmem:[%s221 + $0x3c] sm:$0xf] %v2003
      %2068 = vst [vmem:[%s221 + $0x40] sm:$0xf] %v2004
      %2069 = vst [vmem:[%s221 + $0x44] sm:$0xf] %v2005
      %2070 = vst [vmem:[%s221 + $0x48] sm:$0xf] %v2006
      %2071 = vst [vmem:[%s221 + $0x4c] sm:$0xf] %v2007
      %2072 = vst [vmem:[%s221 + $0x50] sm:$0xf] %v2008
      %2073 = vst [vmem:[%s221 + $0x54] sm:$0xf] %v2009
      %2074 = vst [vmem:[%s221 + $0x58] sm:$0xf] %v2010
      %2075 = vst [vmem:[%s221 + $0x5c] sm:$0xf] %v2011
      %2076 = vst [vmem:[%s221 + $0x60] sm:$0xf] %v2012
      %2077 = vst [vmem:[%s221 + $0x64] sm:$0xf] %v2013
      %2078 = vst [vmem:[%s221 + $0x68] sm:$0xf] %v2014
      %2079 = vst [vmem:[%s221 + $0x6c] sm:$0xf] %v2015
      %2080 = vst [vmem:[%s221 + $0x70] sm:$0xf] %v2016
      %2081 = vst [vmem:[%s221 + $0x74] sm:$0xf] %v2017
      %2082 = vst [vmem:[%s221 + $0x78] sm:$0xf] %v2018
      %2083 = vst [vmem:[%s221 + $0x7c] sm:$0xf] %v2019
      %p2084 = scmp.lt.s32.totalorder %s18, 1
      %s2085 = scalar_select %p2084, %s18, 1
      %p2086 = scmp.lt.s32.totalorder %s19, 0
      %s2087 = scalar_select %p2086, %s19, 0
      %s2088 = smul.addr %s2085, 32
      %s2089 = sadd.s32 %s2087, %s2088
      %s2090 = smul.addr %s2089, 4
      %s2091 = scalar_lea.vmem %s3, %s2090
      // Predicated region
      $region33: #{mixed_3b.6} parent=31 // pred_check
        %p2092 = pneg %p124
      $region34: #{mixed_3b.6} parent=31 // pred_check_branch
        %2094 = sbr.rel (%p2092) target = $region36
      $region35: #{mixed_3b.6} parent=31 // pred_region
        _
      $region36: #{mixed_3b.6} parent=31 // pred_fallthru
        _
    $region32: #{mixed_3b.6} parent=5 // pred_fallthru
      _
    %p2095 = scmp.le.s32.totalorder 2, %s9
    // Predicated region
    $region37: #{mixed_3b.6} parent=5 // pred_check
      %p2096 = pneg %p2095
    $region38: #{mixed_3b.6} parent=5 // pred_check_branch
      %2098 = sbr.rel (%p2096) target = $region40
    $region39: #{mixed_3b.6} parent=5 // pred_region
      %s2099 = ssub.s32 %s9, 2
      // Predicated region
      $region41: #{mixed_3b.6} parent=39 // pred_check
        %p2100 = pneg %p130
      $region42: #{mixed_3b.6} parent=39 // pred_check_branch
        %2102 = sbr.rel (%p2100) target = $region44
      $region43: #{mixed_3b.6} parent=39 // pred_region
        %p2103 = scmp.lt.s32.totalorder %s20, 1
        %s2104 = scalar_select %p2103, %s20, 1
        %p2105 = scmp.lt.s32.totalorder %s21, 0
        %s2106 = scalar_select %p2105, %s21, 0
        %s2107 = smul.addr %s2104, 32
        %s2108 = sadd.s32 %s2106, %s2107
        %s2109 = smul.addr %s2108, 4
        %s2110 = scalar_lea.vmem %s3, %s2109
      $region44: #{mixed_3b.6} parent=39 // pred_fallthru
        _
    $region40: #{mixed_3b.6} parent=5 // pred_fallthru
      _
  $region6: #{mixed_3b.6} parent=0 // loop_footer
    %s13 = sadd.s32 1, %s9
  $region7: #{mixed_3b.6} parent=0 // loop_footer_branch
    %8 = sbr.rel target = $region3
  $region8: #{mixed_3b.6} parent=0 // loop_exit
    _

// kernel: mixed_3b.5
$region0: #{mixed_3b.5}
  #allocation0 [shape = 'u32[]', space=smem, size = 0x4, offset = 0x4, fixed_abs, tag = 'smem constant byte address 0x4 - core index']
  #allocation1 [shape = 'u32[144,128]{1,0:T(1,128)}', space=vmem, size = 0x12000, scoped, tag = 'internal scratch']
  #allocation2 [shape = 'f32[256,128]{1,0:T(8,128)}', space=vmem, size = 0x20000, scoped, tag = 'scratch operand']
  %s0 = inlined_call_operand.vmem [shape: bf16[2,384,864], index: 0, kind: input, shape index: {}]
  %s1 = inlined_call_operand.vmem [shape: bf16[3,864,128], index: 1, kind: input, shape index: {}]
  %s2 = inlined_call_operand.vmem [shape: f32[1,128], index: 2, kind: input, shape index: {}]
  %s3 = inlined_call_operand.vmem [shape: bf16[2,256,128], index: 3, kind: output, shape index: {}]
  %s4 = sld [smem:[#allocation0]]
  $region45: #{mixed_3b.5} parent=0
    _
  %s6 = ssub.s32 1, %s4
  %s7 = scalar_select 0, %s6, %s4
  loop: start=0, step=1, limit=4
  $region2: #{mixed_3b.5} parent=0 // loop_pre_header
    _
  $region3: #{mixed_3b.5} parent=0 // loop_header
    %s9 = sphi 0, %s13
    %p10 = scmp.ge.s32.totalorder %s9, 4
    %s16 = sphi 0, %s28
    %s17 = sphi 0, %s24
    %s18 = sphi 0, %s16
    %s19 = sphi 0, %s17
    %s20 = sphi 0, %s18
    %s21 = sphi 0, %s19
    %s31 = sphi 0, %s33
    %s34 = sphi 0, %s31
    %s35 = sphi 0, %s34
    %s51 = sphi 0, %s35
    %s57 = sphi 0, %s59
    %s60 = sphi 0, %s57
    %s61 = sphi 0, %s60
    %s77 = sphi 0, %s61
    %s83 = sphi 0, %s85
    %s86 = sphi 0, %s83
    %s87 = sphi 0, %s86
    %s103 = sphi 0, %s87
    %s111 = sphi 0, %s113
    %s114 = sphi 0, %s111
    %s115 = sphi 0, %s114
    %s131 = sphi 0, %s115
  $region4: #{mixed_3b.5} parent=0 // loop_header_branch
    %12 = sbr.rel (%p10) target = $region8
  $region5: #{mixed_3b.5} parent=0 // loop_body
    %s14 = ssub.s32 %s9, 1
    %s15 = ssub.s32 %s9, 2
    %s22 = sadd.s32 1, %s17
    %p23 = scmp.ge.s32.totalorder %s22, 1
    %s24 = scalar_select %p23, 0, %s22
    %s25 = sadd.s32 1, %s16
    %s26 = scalar_select %p23, %s25, %s16
    %p27 = scmp.ge.s32.totalorder %s26, 2
    %s28 = scalar_select %p27, 0, %s26
    %s29 = ssub.s32 %s16, %s28
    %p30 = scmp.eq.s32.totalorder %s29, 0
    %s32 = sadd.s32 %s31, 1
    %s33 = scalar_select %p30, %s31, %s32
    %p36 = pneg %p30
    %p37 = scmp.eq.s32.totalorder %s9, 1
    %p38 = por %p36, %p37
    %p39 = scmp.ne.s32.totalorder %s31, %s34
    %p40 = scmp.eq.s32.totalorder %s9, 0
    %p41 = por %p39, %p40
    %p42 = scmp.ne.s32.totalorder %s31, %s34
    %p43 = scmp.eq.s32.totalorder %s14, 1
    %p44 = por %p42, %p43
    %p45 = scmp.ne.s32.totalorder %s34, %s35
    %p46 = scmp.eq.s32.totalorder %s14, 0
    %p47 = por %p45, %p46
    %p48 = scmp.ne.s32.totalorder %s34, %s35
    %p49 = scmp.eq.s32.totalorder %s15, 1
    %p50 = por %p48, %p49
    %p52 = scmp.ne.s32.totalorder %s35, %s51
    %p53 = scmp.eq.s32.totalorder %s15, 0
    %p54 = por %p52, %p53
    %s55 = ssub.s32 %s17, %s24
    %p56 = scmp.eq.s32.totalorder %s55, 0
    %s58 = sadd.s32 %s57, 1
    %s59 = scalar_select %p56, %s57, %s58
    %p62 = pneg %p56
    %p63 = scmp.eq.s32.totalorder %s9, 1
    %p64 = por %p62, %p63
    %p65 = scmp.ne.s32.totalorder %s57, %s60
    %p66 = scmp.eq.s32.totalorder %s9, 0
    %p67 = por %p65, %p66
    %p68 = scmp.ne.s32.totalorder %s57, %s60
    %p69 = scmp.eq.s32.totalorder %s14, 1
    %p70 = por %p68, %p69
    %p71 = scmp.ne.s32.totalorder %s60, %s61
    %p72 = scmp.eq.s32.totalorder %s14, 0
    %p73 = por %p71, %p72
    %p74 = scmp.ne.s32.totalorder %s60, %s61
    %p75 = scmp.eq.s32.totalorder %s15, 1
    %p76 = por %p74, %p75
    %p78 = scmp.ne.s32.totalorder %s61, %s77
    %p79 = scmp.eq.s32.totalorder %s15, 0
    %p80 = por %p78, %p79
    %s81 = ssub.s32 %s17, %s24
    %p82 = scmp.eq.s32.totalorder %s81, 0
    %s84 = sadd.s32 %s83, 1
    %s85 = scalar_select %p82, %s83, %s84
    %p88 = pneg %p82
    %p89 = scmp.eq.s32.totalorder %s9, 1
    %p90 = por %p88, %p89
    %p91 = scmp.ne.s32.totalorder %s83, %s86
    %p92 = scmp.eq.s32.totalorder %s9, 0
    %p93 = por %p91, %p92
    %p94 = scmp.ne.s32.totalorder %s83, %s86
    %p95 = scmp.eq.s32.totalorder %s14, 1
    %p96 = por %p94, %p95
    %p97 = scmp.ne.s32.totalorder %s86, %s87
    %p98 = scmp.eq.s32.totalorder %s14, 0
    %p99 = por %p97, %p98
    %p100 = scmp.ne.s32.totalorder %s86, %s87
    %p101 = scmp.eq.s32.totalorder %s15, 1
    %p102 = por %p100, %p101
    %p104 = scmp.ne.s32.totalorder %s87, %s103
    %p105 = scmp.eq.s32.totalorder %s15, 0
    %p106 = por %p104, %p105
    %s107 = ssub.s32 %s16, %s28
    %s108 = ssub.s32 %s17, %s24
    %s109 = sor.u32 %s107, %s108
    %p110 = scmp.eq.s32.totalorder %s109, 0
    %s112 = sadd.s32 %s111, 1
    %s113 = scalar_select %p110, %s111, %s112
    %p116 = pneg %p110
    %p117 = scmp.eq.s32.totalorder %s9, 1
    %p118 = por %p116, %p117
    %p119 = scmp.ne.s32.totalorder %s111, %s114
    %p120 = scmp.eq.s32.totalorder %s9, 0
    %p121 = por %p119, %p120
    %p122 = scmp.ne.s32.totalorder %s111, %s114
    %p123 = scmp.eq.s32.totalorder %s14, 1
    %p124 = por %p122, %p123
    %p125 = scmp.ne.s32.totalorder %s114, %s115
    %p126 = scmp.eq.s32.totalorder %s14, 0
    %p127 = por %p125, %p126
    %p128 = scmp.ne.s32.totalorder %s114, %s115
    %p129 = scmp.eq.s32.totalorder %s15, 1
    %p130 = por %p128, %p129
    %p132 = scmp.ne.s32.totalorder %s115, %s131
    %p133 = scmp.eq.s32.totalorder %s15, 0
    %p134 = por %p132, %p133
    %p135 = scmp.le.s32.totalorder 1, %s9
    %p136 = scmp.lt.s32.totalorder %s9, 3
    %p137 = pnand %p135, %p136
    %p138 = pneg %p137
    // Predicated region
    $region9: #{mixed_3b.5} parent=5 // pred_check
      _
    $region10: #{mixed_3b.5} parent=5 // pred_check_branch
      %140 = sbr.rel (%p137) target = $region12
    $region11: #{mixed_3b.5} parent=5 // pred_region
      %s141 = ssub.s32 %s9, 1
      // Predicated region
      $region13: #{mixed_3b.5} parent=11 // pred_check
        %p142 = pneg %p73
      $region14: #{mixed_3b.5} parent=11 // pred_check_branch
        %144 = sbr.rel (%p142) target = $region16
      $region15: #{mixed_3b.5} parent=11 // pred_region
        %p145 = scmp.lt.s32.totalorder %s19, 0
        %s146 = scalar_select %p145, %s19, 0
        %s147 = smul.addr %s146, 4
        %s148 = scalar_lea.vmem %s1, %s147
      $region16: #{mixed_3b.5} parent=11 // pred_fallthru
        _
      // Predicated region
      $region17: #{mixed_3b.5} parent=11 // pred_check
        %p149 = pneg %p99
      $region18: #{mixed_3b.5} parent=11 // pred_check_branch
        %151 = sbr.rel (%p149) target = $region20
      $region19: #{mixed_3b.5} parent=11 // pred_region
        %p152 = scmp.lt.s32.totalorder %s19, 0
        %s153 = scalar_select %p152, %s19, 0
        %s154 = scalar_lea.vmem %s2, %s153
      $region20: #{mixed_3b.5} parent=11 // pred_fallthru
        _
    $region12: #{mixed_3b.5} parent=5 // pred_fallthru
      _
    %p155 = scmp.lt.s32.totalorder %s9, 2
    // Predicated region
    $region21: #{mixed_3b.5} parent=5 // pred_check
      %p156 = pneg %p155
    $region22: #{mixed_3b.5} parent=5 // pred_check_branch
      %158 = sbr.rel (%p156) target = $region24
    $region23: #{mixed_3b.5} parent=5 // pred_region
      // Predicated region
      $region25: #{mixed_3b.5} parent=23 // pred_check
        %p159 = pneg %p41
      $region26: #{mixed_3b.5} parent=23 // pred_check_branch
        %161 = sbr.rel (%p159) target = $region28
      $region27: #{mixed_3b.5} parent=23 // pred_region
        %p162 = scmp.lt.s32.totalorder %s16, 1
        %s163 = scalar_select %p162, %s16, 1
        %s164 = smul.addr %s163, 336
        %s165 = smul.addr %s164, 4
        %s166 = scalar_lea.vmem %s0, %s165
      $region28: #{mixed_3b.5} parent=23 // pred_fallthru
        _
    $region24: #{mixed_3b.5} parent=5 // pred_fallthru
      _
    %p167 = scmp.le.s32.totalorder 1, %s9
    %p168 = scmp.lt.s32.totalorder %s9, 3
    %p169 = pnand %p167, %p168
    %p170 = pneg %p169
    // Predicated region
    $region29: #{mixed_3b.5} parent=5 // pred_check
      _
    $region30: #{mixed_3b.5} parent=5 // pred_check_branch
      %172 = sbr.rel (%p169) target = $region32
    $region31: #{mixed_3b.5} parent=5 // pred_region
      %s173 = ssub.s32 %s9, 1
      %p174 = scmp.lt.s32.totalorder %s18, 1
      %s175 = scalar_select %p174, %s18, 1
      %s176 = smul.addr %s175, 336
      %s177 = smul.addr %s176, 4
      %s178 = scalar_lea.vmem %s0, %s177
      %p179 = pneg %p47
      %p180 = pneg %p44
      %p181 = scmp.lt.s32.totalorder %s19, 0
      %s182 = scalar_select %p181, %s19, 0
      %s183 = smul.addr %s182, 4
      %s184 = scalar_lea.vmem %s1, %s183
      %p185 = pneg %p73
      %p186 = pneg %p70
      %p187 = scmp.lt.s32.totalorder %s19, 0
      %s188 = scalar_select %p187, %s19, 0
      %s189 = scalar_lea.vmem %s2, %s188
      %p190 = pneg %p99
      %p191 = pneg %p96
      %p192 = pneg %p127
      %p193 = pneg %p124
      %p194 = scmp.lt.s32.totalorder %s18, 1
      %s195 = scalar_select %p194, %s18, 1
      %p196 = scmp.lt.s32.totalorder %s19, 0
      %s197 = scalar_select %p196, %s19, 0
      %s198 = smul.addr %s195, 32
      %s199 = sadd.s32 %s197, %s198
      %s200 = smul.addr %s199, 4
      %s201 = scalar_lea.vmem %s3, %s200
      %p202 = scmp.lt.s32.totalorder %s18, 1
      %s203 = scalar_select %p202, %s18, 1
      %s204 = smul.addr %s203, 336
      %s205 = smul.addr %s204, 4
      %s206 = scalar_lea.vmem %s0, %s205
      %p207 = scmp.lt.s32.totalorder %s19, 0
      %s208 = scalar_select %p207, %s19, 0
      %s209 = smul.addr %s208, 4
      %s210 = scalar_lea.vmem %s1, %s209
      %p211 = scmp.lt.s32.totalorder %s19, 0
      %s212 = scalar_select %p211, %s19, 0
      %s213 = scalar_lea.vmem %s2, %s212
      %p214 = scmp.lt.s32.totalorder %s18, 1
      %s215 = scalar_select %p214, %s18, 1
      %p216 = scmp.lt.s32.totalorder %s19, 0
      %s217 = scalar_select %p216, %s19, 0
      %s218 = smul.addr %s215, 32
      %s219 = sadd.s32 %s217, %s218
      %s220 = smul.addr %s219, 4
      %s221 = scalar_lea.vmem %s3, %s220
      %v223 = vld [vmem:[%s206] sm:$0xff]
      %v224 = vld [vmem:[%s206 + $0x8] sm:$0xff]
      %v225 = vld [vmem:[%s206 + $0x10] sm:$0xff]
      %v226 = vld [vmem:[%s206 + $0x18] sm:$0xf]
      %v227 = vld [vmem:[%s206 + $0x1c] sm:$0xff]
      %v228 = vld [vmem:[%s206 + $0x24] sm:$0xff]
      %v229 = vld [vmem:[%s206 + $0x2c] sm:$0xff]
      %v230 = vld [vmem:[%s206 + $0x34] sm:$0xf]
      %v231 = vld [vmem:[%s206 + $0x38] sm:$0xff]
      %v232 = vld [vmem:[%s206 + $0x40] sm:$0xff]
      %v233 = vld [vmem:[%s206 + $0x48] sm:$0xff]
      %v234 = vld [vmem:[%s206 + $0x50] sm:$0xf]
      %v235 = vld [vmem:[%s206 + $0x54] sm:$0xff]
      %v236 = vld [vmem:[%s206 + $0x5c] sm:$0xff]
      %v237 = vld [vmem:[%s206 + $0x64] sm:$0xff]
      %v238 = vld [vmem:[%s206 + $0x6c] sm:$0xf]
      %v239 = vld [vmem:[%s206 + $0x70] sm:$0xff]
      %v240 = vld [vmem:[%s206 + $0x78] sm:$0xff]
      %v241 = vld [vmem:[%s206 + $0x80] sm:$0xff]
      %v242 = vld [vmem:[%s206 + $0x88] sm:$0xf]
      %v243 = vld [vmem:[%s206 + $0x8c] sm:$0xff]
      %v244 = vld [vmem:[%s206 + $0x94] sm:$0xff]
      %v245 = vld [vmem:[%s206 + $0x9c] sm:$0xff]
      %v246 = vld [vmem:[%s206 + $0xa4] sm:$0xf]
      %v247 = vld [vmem:[%s206 + $0xa8] sm:$0xff]
      %v248 = vld [vmem:[%s206 + $0xb0] sm:$0xff]
      %v249 = vld [vmem:[%s206 + $0xb8] sm:$0xff]
      %v250 = vld [vmem:[%s206 + $0xc0] sm:$0xf]
      %v251 = vld [vmem:[%s206 + $0xc4] sm:$0xff]
      %v252 = vld [vmem:[%s206 + $0xcc] sm:$0xff]
      %v253 = vld [vmem:[%s206 + $0xd4] sm:$0xff]
      %v254 = vld [vmem:[%s206 + $0xdc] sm:$0xf]
      %v255 = vld [vmem:[%s206 + $0xe0] sm:$0xff]
      %v256 = vld [vmem:[%s206 + $0xe8] sm:$0xff]
      %v257 = vld [vmem:[%s206 + $0xf0] sm:$0xff]
      %v258 = vld [vmem:[%s206 + $0xf8] sm:$0xf]
      %v259 = vld [vmem:[%s206 + $0xfc] sm:$0xff]
      %v260 = vld [vmem:[%s206 + $0x104] sm:$0xff]
      %v261 = vld [vmem:[%s206 + $0x10c] sm:$0xff]
      %v262 = vld [vmem:[%s206 + $0x114] sm:$0xf]
      %v263 = vld [vmem:[%s206 + $0x118] sm:$0xff]
      %v264 = vld [vmem:[%s206 + $0x120] sm:$0xff]
      %v265 = vld [vmem:[%s206 + $0x128] sm:$0xff]
      %v266 = vld [vmem:[%s206 + $0x130] sm:$0xf]
      %v267 = vld [vmem:[%s206 + $0x134] sm:$0xff]
      %v268 = vld [vmem:[%s206 + $0x13c] sm:$0xff]
      %v269 = vld [vmem:[%s206 + $0x144] sm:$0xff]
      %v270 = vld [vmem:[%s206 + $0x14c] sm:$0xf]
      %v271 = vld [vmem:[%s206 + $0x150] sm:$0xff]
      %v272 = vld [vmem:[%s206 + $0x158] sm:$0xff]
      %v273 = vld [vmem:[%s206 + $0x160] sm:$0xff]
      %v274 = vld [vmem:[%s206 + $0x168] sm:$0xf]
      %v275 = vld [vmem:[%s206 + $0x16c] sm:$0xff]
      %v276 = vld [vmem:[%s206 + $0x174] sm:$0xff]
      %v277 = vld [vmem:[%s206 + $0x17c] sm:$0xff]
      %v278 = vld [vmem:[%s206 + $0x184] sm:$0xf]
      %v279 = vld [vmem:[%s206 + $0x188] sm:$0xff]
      %v280 = vld [vmem:[%s206 + $0x190] sm:$0xff]
      %v281 = vld [vmem:[%s206 + $0x198] sm:$0xff]
      %v282 = vld [vmem:[%s206 + $0x1a0] sm:$0xf]
      %v283 = vld [vmem:[%s206 + $0x1a4] sm:$0xff]
      %v284 = vld [vmem:[%s206 + $0x1ac] sm:$0xff]
      %v285 = vld [vmem:[%s206 + $0x1b4] sm:$0xff]
      %v286 = vld [vmem:[%s206 + $0x1bc] sm:$0xf]
      %v287 = vld [vmem:[%s206 + $0x1c0] sm:$0xff]
      %v288 = vld [vmem:[%s206 + $0x1c8] sm:$0xff]
      %v289 = vld [vmem:[%s206 + $0x1d0] sm:$0xff]
      %v290 = vld [vmem:[%s206 + $0x1d8] sm:$0xf]
      %v291 = vld [vmem:[%s206 + $0x1dc] sm:$0xff]
      %v292 = vld [vmem:[%s206 + $0x1e4] sm:$0xff]
      %v293 = vld [vmem:[%s206 + $0x1ec] sm:$0xff]
      %v294 = vld [vmem:[%s206 + $0x1f4] sm:$0xf]
      %v295 = vld [vmem:[%s206 + $0x1f8] sm:$0xff]
      %v296 = vld [vmem:[%s206 + $0x200] sm:$0xff]
      %v297 = vld [vmem:[%s206 + $0x208] sm:$0xff]
      %v298 = vld [vmem:[%s206 + $0x210] sm:$0xf]
      %v299 = vld [vmem:[%s206 + $0x214] sm:$0xff]
      %v300 = vld [vmem:[%s206 + $0x21c] sm:$0xff]
      %v301 = vld [vmem:[%s206 + $0x224] sm:$0xff]
      %v302 = vld [vmem:[%s206 + $0x22c] sm:$0xf]
      %v303 = vld [vmem:[%s206 + $0x230] sm:$0xff]
      %v304 = vld [vmem:[%s206 + $0x238] sm:$0xff]
      %v305 = vld [vmem:[%s206 + $0x240] sm:$0xff]
      %v306 = vld [vmem:[%s206 + $0x248] sm:$0xf]
      %v307 = vld [vmem:[%s206 + $0x24c] sm:$0xff]
      %v308 = vld [vmem:[%s206 + $0x254] sm:$0xff]
      %v309 = vld [vmem:[%s206 + $0x25c] sm:$0xff]
      %v310 = vld [vmem:[%s206 + $0x264] sm:$0xf]
      %v311 = vld [vmem:[%s206 + $0x268] sm:$0xff]
      %v312 = vld [vmem:[%s206 + $0x270] sm:$0xff]
      %v313 = vld [vmem:[%s206 + $0x278] sm:$0xff]
      %v314 = vld [vmem:[%s206 + $0x280] sm:$0xf]
      %v315 = vld [vmem:[%s206 + $0x284] sm:$0xff]
      %v316 = vld [vmem:[%s206 + $0x28c] sm:$0xff]
      %v317 = vld [vmem:[%s206 + $0x294] sm:$0xff]
      %v318 = vld [vmem:[%s206 + $0x29c] sm:$0xf]
      %v319 = vld [vmem:[%s206 + $0x2a0] sm:$0xff]
      %v320 = vld [vmem:[%s206 + $0x2a8] sm:$0xff]
      %v321 = vld [vmem:[%s206 + $0x2b0] sm:$0xff]
      %v322 = vld [vmem:[%s206 + $0x2b8] sm:$0xf]
      %v323 = vld [vmem:[%s206 + $0x2bc] sm:$0xff]
      %v324 = vld [vmem:[%s206 + $0x2c4] sm:$0xff]
      %v325 = vld [vmem:[%s206 + $0x2cc] sm:$0xff]
      %v326 = vld [vmem:[%s206 + $0x2d4] sm:$0xf]
      %v327 = vld [vmem:[%s206 + $0x2d8] sm:$0xff]
      %v328 = vld [vmem:[%s206 + $0x2e0] sm:$0xff]
      %v329 = vld [vmem:[%s206 + $0x2e8] sm:$0xff]
      %v330 = vld [vmem:[%s206 + $0x2f0] sm:$0xf]
      %v331 = vld [vmem:[%s206 + $0x2f4] sm:$0xff]
      %v332 = vld [vmem:[%s206 + $0x2fc] sm:$0xff]
      %v333 = vld [vmem:[%s206 + $0x304] sm:$0xff]
      %v334 = vld [vmem:[%s206 + $0x30c] sm:$0xf]
      %v335 = vld [vmem:[%s206 + $0x310] sm:$0xff]
      %v336 = vld [vmem:[%s206 + $0x318] sm:$0xff]
      %v337 = vld [vmem:[%s206 + $0x320] sm:$0xff]
      %v338 = vld [vmem:[%s206 + $0x328] sm:$0xf]
      %v339 = vld [vmem:[%s206 + $0x32c] sm:$0xff]
      %v340 = vld [vmem:[%s206 + $0x334] sm:$0xff]
      %v341 = vld [vmem:[%s206 + $0x33c] sm:$0xff]
      %v342 = vld [vmem:[%s206 + $0x344] sm:$0xf]
      %v343 = vld [vmem:[%s206 + $0x348] sm:$0xff]
      %v344 = vld [vmem:[%s206 + $0x350] sm:$0xff]
      %v345 = vld [vmem:[%s206 + $0x358] sm:$0xff]
      %v346 = vld [vmem:[%s206 + $0x360] sm:$0xf]
      %v347 = vld [vmem:[%s206 + $0x364] sm:$0xff]
      %v348 = vld [vmem:[%s206 + $0x36c] sm:$0xff]
      %v349 = vld [vmem:[%s206 + $0x374] sm:$0xff]
      %v350 = vld [vmem:[%s206 + $0x37c] sm:$0xf]
      %v351 = vld [vmem:[%s210] sm:$0xf]
      %v352 = vld [vmem:[%s210 + $0x4] sm:$0xf]
      %v353 = vld [vmem:[%s210 + $0x8] sm:$0xf]
      %v354 = vld [vmem:[%s210 + $0xc] sm:$0xf]
      %v355 = vld [vmem:[%s210 + $0x10] sm:$0xf]
      %v356 = vld [vmem:[%s210 + $0x14] sm:$0xf]
      %v357 = vld [vmem:[%s210 + $0x18] sm:$0xf]
      %v358 = vld [vmem:[%s210 + $0x1c] sm:$0xf]
      %v359 = vld [vmem:[%s210 + $0x20] sm:$0xf]
      %v360 = vld [vmem:[%s210 + $0x24] sm:$0xf]
      %v361 = vld [vmem:[%s210 + $0x28] sm:$0xf]
      %v362 = vld [vmem:[%s210 + $0x2c] sm:$0xf]
      %v363 = vld [vmem:[%s210 + $0x30] sm:$0xf]
      %v364 = vld [vmem:[%s210 + $0x34] sm:$0xf]
      %v365 = vld [vmem:[%s210 + $0x38] sm:$0xf]
      %v366 = vld [vmem:[%s210 + $0x3c] sm:$0xf]
      %v367 = vld [vmem:[%s210 + $0x40] sm:$0xf]
      %v368 = vld [vmem:[%s210 + $0x44] sm:$0xf]
      %v369 = vld [vmem:[%s210 + $0x48] sm:$0xf]
      %v370 = vld [vmem:[%s210 + $0x4c] sm:$0xf]
      %v371 = vld [vmem:[%s210 + $0x50] sm:$0xf]
      %v372 = vld [vmem:[%s210 + $0x54] sm:$0xf]
      %v373 = vld [vmem:[%s210 + $0x58] sm:$0xf]
      %v374 = vld [vmem:[%s210 + $0x5c] sm:$0xf]
      %v375 = vld [vmem:[%s210 + $0x60] sm:$0xf]
      %v376 = vld [vmem:[%s210 + $0x64] sm:$0xf]
      %v377 = vld [vmem:[%s210 + $0x68] sm:$0xf]
      %v378 = vld [vmem:[%s210 + $0x6c] sm:$0xf]
      %v379 = vld [vmem:[%s210 + $0x70] sm:$0xf]
      %v380 = vld [vmem:[%s210 + $0x74] sm:$0xf]
      %v381 = vld [vmem:[%s210 + $0x78] sm:$0xf]
      %v382 = vld [vmem:[%s210 + $0x7c] sm:$0xf]
      %v383 = vld [vmem:[%s210 + $0x80] sm:$0xf]
      %v384 = vld [vmem:[%s210 + $0x84] sm:$0xf]
      %v385 = vld [vmem:[%s210 + $0x88] sm:$0xf]
      %v386 = vld [vmem:[%s210 + $0x8c] sm:$0xf]
      %v387 = vld [vmem:[%s210 + $0x90] sm:$0xf]
      %v388 = vld [vmem:[%s210 + $0x94] sm:$0xf]
      %v389 = vld [vmem:[%s210 + $0x98] sm:$0xf]
      %v390 = vld [vmem:[%s210 + $0x9c] sm:$0xf]
      %v391 = vld [vmem:[%s210 + $0xa0] sm:$0xf]
      %v392 = vld [vmem:[%s210 + $0xa4] sm:$0xf]
      %v393 = vld [vmem:[%s210 + $0xa8] sm:$0xf]
      %v394 = vld [vmem:[%s210 + $0xac] sm:$0xf]
      %v395 = vld [vmem:[%s210 + $0xb0] sm:$0xf]
      %v396 = vld [vmem:[%s210 + $0xb4] sm:$0xf]
      %v397 = vld [vmem:[%s210 + $0xb8] sm:$0xf]
      %v398 = vld [vmem:[%s210 + $0xbc] sm:$0xf]
      %v399 = vld [vmem:[%s210 + $0xc0] sm:$0xf]
      %v400 = vld [vmem:[%s210 + $0xc4] sm:$0xf]
      %v401 = vld [vmem:[%s210 + $0xc8] sm:$0xf]
      %v402 = vld [vmem:[%s210 + $0xcc] sm:$0xf]
      %v403 = vld [vmem:[%s210 + $0xd0] sm:$0xf]
      %v404 = vld [vmem:[%s210 + $0xd4] sm:$0xf]
      %v405 = vld [vmem:[%s210 + $0xd8] sm:$0xf]
      %v406 = vld [vmem:[%s210 + $0xdc] sm:$0xf]
      %v407 = vld [vmem:[%s210 + $0xe0] sm:$0xf]
      %v408 = vld [vmem:[%s210 + $0xe4] sm:$0xf]
      %v409 = vld [vmem:[%s210 + $0xe8] sm:$0xf]
      %v410 = vld [vmem:[%s210 + $0xec] sm:$0xf]
      %v411 = vld [vmem:[%s210 + $0xf0] sm:$0xf]
      %v412 = vld [vmem:[%s210 + $0xf4] sm:$0xf]
      %v413 = vld [vmem:[%s210 + $0xf8] sm:$0xf]
      %v414 = vld [vmem:[%s210 + $0xfc] sm:$0xf]
      %v415 = vld [vmem:[%s210 + $0x100] sm:$0xf]
      %v416 = vld [vmem:[%s210 + $0x104] sm:$0xf]
      %v417 = vld [vmem:[%s210 + $0x108] sm:$0xf]
      %v418 = vld [vmem:[%s210 + $0x10c] sm:$0xf]
      %v419 = vld [vmem:[%s210 + $0x110] sm:$0xf]
      %v420 = vld [vmem:[%s210 + $0x114] sm:$0xf]
      %v421 = vld [vmem:[%s210 + $0x118] sm:$0xf]
      %v422 = vld [vmem:[%s210 + $0x11c] sm:$0xf]
      %v423 = vld [vmem:[%s210 + $0x120] sm:$0xf]
      %v424 = vld [vmem:[%s210 + $0x124] sm:$0xf]
      %v425 = vld [vmem:[%s210 + $0x128] sm:$0xf]
      %v426 = vld [vmem:[%s210 + $0x12c] sm:$0xf]
      %v427 = vld [vmem:[%s210 + $0x130] sm:$0xf]
      %v428 = vld [vmem:[%s210 + $0x134] sm:$0xf]
      %v429 = vld [vmem:[%s210 + $0x138] sm:$0xf]
      %v430 = vld [vmem:[%s210 + $0x13c] sm:$0xf]
      %v431 = vld [vmem:[%s210 + $0x140] sm:$0xf]
      %v432 = vld [vmem:[%s210 + $0x144] sm:$0xf]
      %v433 = vld [vmem:[%s210 + $0x148] sm:$0xf]
      %v434 = vld [vmem:[%s210 + $0x14c] sm:$0xf]
      %v435 = vld [vmem:[%s210 + $0x150] sm:$0xf]
      %v436 = vld [vmem:[%s210 + $0x154] sm:$0xf]
      %v437 = vld [vmem:[%s210 + $0x158] sm:$0xf]
      %v438 = vld [vmem:[%s210 + $0x15c] sm:$0xf]
      %v439 = vld [vmem:[%s210 + $0x160] sm:$0xf]
      %v440 = vld [vmem:[%s210 + $0x164] sm:$0xf]
      %v441 = vld [vmem:[%s210 + $0x168] sm:$0xf]
      %v442 = vld [vmem:[%s210 + $0x16c] sm:$0xf]
      %v443 = vld [vmem:[%s210 + $0x170] sm:$0xf]
      %v444 = vld [vmem:[%s210 + $0x174] sm:$0xf]
      %v445 = vld [vmem:[%s210 + $0x178] sm:$0xf]
      %v446 = vld [vmem:[%s210 + $0x17c] sm:$0xf]
      %v447 = vld [vmem:[%s210 + $0x180] sm:$0xf]
      %v448 = vld [vmem:[%s210 + $0x184] sm:$0xf]
      %v449 = vld [vmem:[%s210 + $0x188] sm:$0xf]
      %v450 = vld [vmem:[%s210 + $0x18c] sm:$0xf]
      %v451 = vld [vmem:[%s210 + $0x190] sm:$0xf]
      %v452 = vld [vmem:[%s210 + $0x194] sm:$0xf]
      %v453 = vld [vmem:[%s210 + $0x198] sm:$0xf]
      %v454 = vld [vmem:[%s210 + $0x19c] sm:$0xf]
      %v455 = vld [vmem:[%s210 + $0x1a0] sm:$0xf]
      %v456 = vld [vmem:[%s210 + $0x1a4] sm:$0xf]
      %v457 = vld [vmem:[%s210 + $0x1a8] sm:$0xf]
      %v458 = vld [vmem:[%s210 + $0x1ac] sm:$0xf]
      %v587 = vunpack.c.l.b16 %v223
      %v588 = vunpack.c.h.b16 %v223
      %v589 = vunpack.c.l.b16 %v224
      %v590 = vunpack.c.h.b16 %v224
      %v591 = vunpack.c.l.b16 %v225
      %v592 = vunpack.c.h.b16 %v225
      %v593 = vunpack.c.l.b16 %v226
      %v594 = vunpack.c.l.b16 %v227
      %v595 = vunpack.c.h.b16 %v227
      %v596 = vunpack.c.l.b16 %v228
      %v597 = vunpack.c.h.b16 %v228
      %v598 = vunpack.c.l.b16 %v229
      %v599 = vunpack.c.h.b16 %v229
      %v600 = vunpack.c.l.b16 %v230
      %v601 = vunpack.c.l.b16 %v231
      %v602 = vunpack.c.h.b16 %v231
      %v603 = vunpack.c.l.b16 %v232
      %v604 = vunpack.c.h.b16 %v232
      %v605 = vunpack.c.l.b16 %v233
      %v606 = vunpack.c.h.b16 %v233
      %v607 = vunpack.c.l.b16 %v234
      %v608 = vunpack.c.l.b16 %v235
      %v609 = vunpack.c.h.b16 %v235
      %v610 = vunpack.c.l.b16 %v236
      %v611 = vunpack.c.h.b16 %v236
      %v612 = vunpack.c.l.b16 %v237
      %v613 = vunpack.c.h.b16 %v237
      %v614 = vunpack.c.l.b16 %v238
      %v615 = vunpack.c.l.b16 %v239
      %v616 = vunpack.c.h.b16 %v239
      %v617 = vunpack.c.l.b16 %v240
      %v618 = vunpack.c.h.b16 %v240
      %v619 = vunpack.c.l.b16 %v241
      %v620 = vunpack.c.h.b16 %v241
      %v621 = vunpack.c.l.b16 %v242
      %v622 = vunpack.c.l.b16 %v243
      %v623 = vunpack.c.h.b16 %v243
      %v624 = vunpack.c.l.b16 %v244
      %v625 = vunpack.c.h.b16 %v244
      %v626 = vunpack.c.l.b16 %v245
      %v627 = vunpack.c.h.b16 %v245
      %v628 = vunpack.c.l.b16 %v246
      %v629 = vunpack.c.l.b16 %v247
      %v630 = vunpack.c.h.b16 %v247
      %v631 = vunpack.c.l.b16 %v248
      %v632 = vunpack.c.h.b16 %v248
      %v633 = vunpack.c.l.b16 %v249
      %v634 = vunpack.c.h.b16 %v249
      %v635 = vunpack.c.l.b16 %v250
      %v636 = vunpack.c.l.b16 %v251
      %v637 = vunpack.c.h.b16 %v251
      %v638 = vunpack.c.l.b16 %v252
      %v639 = vunpack.c.h.b16 %v252
      %v640 = vunpack.c.l.b16 %v253
      %v641 = vunpack.c.h.b16 %v253
      %v642 = vunpack.c.l.b16 %v254
      %v643 = vunpack.c.l.b16 %v255
      %v644 = vunpack.c.h.b16 %v255
      %v645 = vunpack.c.l.b16 %v256
      %v646 = vunpack.c.h.b16 %v256
      %v647 = vunpack.c.l.b16 %v257
      %v648 = vunpack.c.h.b16 %v257
      %v649 = vunpack.c.l.b16 %v258
      %v650 = vunpack.c.l.b16 %v259
      %v651 = vunpack.c.h.b16 %v259
      %v652 = vunpack.c.l.b16 %v260
      %v653 = vunpack.c.h.b16 %v260
      %v654 = vunpack.c.l.b16 %v261
      %v655 = vunpack.c.h.b16 %v261
      %v656 = vunpack.c.l.b16 %v262
      %v657 = vunpack.c.l.b16 %v263
      %v658 = vunpack.c.h.b16 %v263
      %v659 = vunpack.c.l.b16 %v264
      %v660 = vunpack.c.h.b16 %v264
      %v661 = vunpack.c.l.b16 %v265
      %v662 = vunpack.c.h.b16 %v265
      %v663 = vunpack.c.l.b16 %v266
      %v664 = vunpack.c.l.b16 %v267
      %v665 = vunpack.c.h.b16 %v267
      %v666 = vunpack.c.l.b16 %v268
      %v667 = vunpack.c.h.b16 %v268
      %v668 = vunpack.c.l.b16 %v269
      %v669 = vunpack.c.h.b16 %v269
      %v670 = vunpack.c.l.b16 %v270
      %v671 = vunpack.c.l.b16 %v271
      %v672 = vunpack.c.h.b16 %v271
      %v673 = vunpack.c.l.b16 %v272
      %v674 = vunpack.c.h.b16 %v272
      %v675 = vunpack.c.l.b16 %v273
      %v676 = vunpack.c.h.b16 %v273
      %v677 = vunpack.c.l.b16 %v274
      %v678 = vunpack.c.l.b16 %v275
      %v679 = vunpack.c.h.b16 %v275
      %v680 = vunpack.c.l.b16 %v276
      %v681 = vunpack.c.h.b16 %v276
      %v682 = vunpack.c.l.b16 %v277
      %v683 = vunpack.c.h.b16 %v277
      %v684 = vunpack.c.l.b16 %v278
      %v685 = vunpack.c.l.b16 %v279
      %v686 = vunpack.c.h.b16 %v279
      %v687 = vunpack.c.l.b16 %v280
      %v688 = vunpack.c.h.b16 %v280
      %v689 = vunpack.c.l.b16 %v281
      %v690 = vunpack.c.h.b16 %v281
      %v691 = vunpack.c.l.b16 %v282
      %v692 = vunpack.c.l.b16 %v283
      %v693 = vunpack.c.h.b16 %v283
      %v694 = vunpack.c.l.b16 %v284
      %v695 = vunpack.c.h.b16 %v284
      %v696 = vunpack.c.l.b16 %v285
      %v697 = vunpack.c.h.b16 %v285
      %v698 = vunpack.c.l.b16 %v286
      %v699 = vunpack.c.l.b16 %v287
      %v700 = vunpack.c.h.b16 %v287
      %v701 = vunpack.c.l.b16 %v288
      %v702 = vunpack.c.h.b16 %v288
      %v703 = vunpack.c.l.b16 %v289
      %v704 = vunpack.c.h.b16 %v289
      %v705 = vunpack.c.l.b16 %v290
      %v706 = vunpack.c.l.b16 %v291
      %v707 = vunpack.c.h.b16 %v291
      %v708 = vunpack.c.l.b16 %v292
      %v709 = vunpack.c.h.b16 %v292
      %v710 = vunpack.c.l.b16 %v293
      %v711 = vunpack.c.h.b16 %v293
      %v712 = vunpack.c.l.b16 %v294
      %v713 = vunpack.c.l.b16 %v295
      %v714 = vunpack.c.h.b16 %v295
      %v715 = vunpack.c.l.b16 %v296
      %v716 = vunpack.c.h.b16 %v296
      %v717 = vunpack.c.l.b16 %v297
      %v718 = vunpack.c.h.b16 %v297
      %v719 = vunpack.c.l.b16 %v298
      %v720 = vunpack.c.l.b16 %v299
      %v721 = vunpack.c.h.b16 %v299
      %v722 = vunpack.c.l.b16 %v300
      %v723 = vunpack.c.h.b16 %v300
      %v724 = vunpack.c.l.b16 %v301
      %v725 = vunpack.c.h.b16 %v301
      %v726 = vunpack.c.l.b16 %v302
      %v727 = vunpack.c.l.b16 %v303
      %v728 = vunpack.c.h.b16 %v303
      %v729 = vunpack.c.l.b16 %v304
      %v730 = vunpack.c.h.b16 %v304
      %v731 = vunpack.c.l.b16 %v305
      %v732 = vunpack.c.h.b16 %v305
      %v733 = vunpack.c.l.b16 %v306
      %v734 = vunpack.c.l.b16 %v307
      %v735 = vunpack.c.h.b16 %v307
      %v736 = vunpack.c.l.b16 %v308
      %v737 = vunpack.c.h.b16 %v308
      %v738 = vunpack.c.l.b16 %v309
      %v739 = vunpack.c.h.b16 %v309
      %v740 = vunpack.c.l.b16 %v310
      %v741 = vunpack.c.l.b16 %v311
      %v742 = vunpack.c.h.b16 %v311
      %v743 = vunpack.c.l.b16 %v312
      %v744 = vunpack.c.h.b16 %v312
      %v745 = vunpack.c.l.b16 %v313
      %v746 = vunpack.c.h.b16 %v313
      %v747 = vunpack.c.l.b16 %v314
      %v748 = vunpack.c.l.b16 %v315
      %v749 = vunpack.c.h.b16 %v315
      %v750 = vunpack.c.l.b16 %v316
      %v751 = vunpack.c.h.b16 %v316
      %v752 = vunpack.c.l.b16 %v317
      %v753 = vunpack.c.h.b16 %v317
      %v754 = vunpack.c.l.b16 %v318
      %v755 = vunpack.c.l.b16 %v319
      %v756 = vunpack.c.h.b16 %v319
      %v757 = vunpack.c.l.b16 %v320
      %v758 = vunpack.c.h.b16 %v320
      %v759 = vunpack.c.l.b16 %v321
      %v760 = vunpack.c.h.b16 %v321
      %v761 = vunpack.c.l.b16 %v322
      %v762 = vunpack.c.l.b16 %v323
      %v763 = vunpack.c.h.b16 %v323
      %v764 = vunpack.c.l.b16 %v324
      %v765 = vunpack.c.h.b16 %v324
      %v766 = vunpack.c.l.b16 %v325
      %v767 = vunpack.c.h.b16 %v325
      %v768 = vunpack.c.l.b16 %v326
      %v769 = vunpack.c.l.b16 %v327
      %v770 = vunpack.c.h.b16 %v327
      %v771 = vunpack.c.l.b16 %v328
      %v772 = vunpack.c.h.b16 %v328
      %v773 = vunpack.c.l.b16 %v329
      %v774 = vunpack.c.h.b16 %v329
      %v775 = vunpack.c.l.b16 %v330
      %v776 = vunpack.c.l.b16 %v331
      %v777 = vunpack.c.h.b16 %v331
      %v778 = vunpack.c.l.b16 %v332
      %v779 = vunpack.c.h.b16 %v332
      %v780 = vunpack.c.l.b16 %v333
      %v781 = vunpack.c.h.b16 %v333
      %v782 = vunpack.c.l.b16 %v334
      %v783 = vunpack.c.l.b16 %v335
      %v784 = vunpack.c.h.b16 %v335
      %v785 = vunpack.c.l.b16 %v336
      %v786 = vunpack.c.h.b16 %v336
      %v787 = vunpack.c.l.b16 %v337
      %v788 = vunpack.c.h.b16 %v337
      %v789 = vunpack.c.l.b16 %v338
      %v790 = vunpack.c.l.b16 %v339
      %v791 = vunpack.c.h.b16 %v339
      %v792 = vunpack.c.l.b16 %v340
      %v793 = vunpack.c.h.b16 %v340
      %v794 = vunpack.c.l.b16 %v341
      %v795 = vunpack.c.h.b16 %v341
      %v796 = vunpack.c.l.b16 %v342
      %v797 = vunpack.c.l.b16 %v343
      %v798 = vunpack.c.h.b16 %v343
      %v799 = vunpack.c.l.b16 %v344
      %v800 = vunpack.c.h.b16 %v344
      %v801 = vunpack.c.l.b16 %v345
      %v802 = vunpack.c.h.b16 %v345
      %v803 = vunpack.c.l.b16 %v346
      %v804 = vunpack.c.l.b16 %v347
      %v805 = vunpack.c.h.b16 %v347
      %v806 = vunpack.c.l.b16 %v348
      %v807 = vunpack.c.h.b16 %v348
      %v808 = vunpack.c.l.b16 %v349
      %v809 = vunpack.c.h.b16 %v349
      %v810 = vunpack.c.l.b16 %v350
      %v811 = vpack.c.b16 %v594, %v587
      %v812 = vpack.c.b16 %v595, %v588
      %v813 = vpack.c.b16 %v596, %v589
      %v814 = vpack.c.b16 %v597, %v590
      %v815 = vpack.c.b16 %v598, %v591
      %v816 = vpack.c.b16 %v599, %v592
      %v817 = vpack.c.b16 %v600, %v593
      %v818 = vpack.c.b16 %v608, %v601
      %v819 = vpack.c.b16 %v609, %v602
      %v820 = vpack.c.b16 %v610, %v603
      %v821 = vpack.c.b16 %v611, %v604
      %v822 = vpack.c.b16 %v612, %v605
      %v823 = vpack.c.b16 %v613, %v606
      %v824 = vpack.c.b16 %v614, %v607
      %v825 = vpack.c.b16 %v622, %v615
      %v826 = vpack.c.b16 %v623, %v616
      %v827 = vpack.c.b16 %v624, %v617
      %v828 = vpack.c.b16 %v625, %v618
      %v829 = vpack.c.b16 %v626, %v619
      %v830 = vpack.c.b16 %v627, %v620
      %v831 = vpack.c.b16 %v628, %v621
      %v832 = vpack.c.b16 %v636, %v629
      %v833 = vpack.c.b16 %v637, %v630
      %v834 = vpack.c.b16 %v638, %v631
      %v835 = vpack.c.b16 %v639, %v632
      %v836 = vpack.c.b16 %v640, %v633
      %v837 = vpack.c.b16 %v641, %v634
      %v838 = vpack.c.b16 %v642, %v635
      %v839 = vpack.c.b16 %v650, %v643
      %v840 = vpack.c.b16 %v651, %v644
      %v841 = vpack.c.b16 %v652, %v645
      %v842 = vpack.c.b16 %v653, %v646
      %v843 = vpack.c.b16 %v654, %v647
      %v844 = vpack.c.b16 %v655, %v648
      %v845 = vpack.c.b16 %v656, %v649
      %v846 = vpack.c.b16 %v664, %v657
      %v847 = vpack.c.b16 %v665, %v658
      %v848 = vpack.c.b16 %v666, %v659
      %v849 = vpack.c.b16 %v667, %v660
      %v850 = vpack.c.b16 %v668, %v661
      %v851 = vpack.c.b16 %v669, %v662
      %v852 = vpack.c.b16 %v670, %v663
      %v853 = vpack.c.b16 %v678, %v671
      %v854 = vpack.c.b16 %v679, %v672
      %v855 = vpack.c.b16 %v680, %v673
      %v856 = vpack.c.b16 %v681, %v674
      %v857 = vpack.c.b16 %v682, %v675
      %v858 = vpack.c.b16 %v683, %v676
      %v859 = vpack.c.b16 %v684, %v677
      %v860 = vpack.c.b16 %v692, %v685
      %v861 = vpack.c.b16 %v693, %v686
      %v862 = vpack.c.b16 %v694, %v687
      %v863 = vpack.c.b16 %v695, %v688
      %v864 = vpack.c.b16 %v696, %v689
      %v865 = vpack.c.b16 %v697, %v690
      %v866 = vpack.c.b16 %v698, %v691
      %v867 = vpack.c.b16 %v706, %v699
      %v868 = vpack.c.b16 %v707, %v700
      %v869 = vpack.c.b16 %v708, %v701
      %v870 = vpack.c.b16 %v709, %v702
      %v871 = vpack.c.b16 %v710, %v703
      %v872 = vpack.c.b16 %v711, %v704
      %v873 = vpack.c.b16 %v712, %v705
      %v874 = vpack.c.b16 %v720, %v713
      %v875 = vpack.c.b16 %v721, %v714
      %v876 = vpack.c.b16 %v722, %v715
      %v877 = vpack.c.b16 %v723, %v716
      %v878 = vpack.c.b16 %v724, %v717
      %v879 = vpack.c.b16 %v725, %v718
      %v880 = vpack.c.b16 %v726, %v719
      %v881 = vpack.c.b16 %v734, %v727
      %v882 = vpack.c.b16 %v735, %v728
      %v883 = vpack.c.b16 %v736, %v729
      %v884 = vpack.c.b16 %v737, %v730
      %v885 = vpack.c.b16 %v738, %v731
      %v886 = vpack.c.b16 %v739, %v732
      %v887 = vpack.c.b16 %v740, %v733
      %v888 = vpack.c.b16 %v748, %v741
      %v889 = vpack.c.b16 %v749, %v742
      %v890 = vpack.c.b16 %v750, %v743
      %v891 = vpack.c.b16 %v751, %v744
      %v892 = vpack.c.b16 %v752, %v745
      %v893 = vpack.c.b16 %v753, %v746
      %v894 = vpack.c.b16 %v754, %v747
      %v895 = vpack.c.b16 %v762, %v755
      %v896 = vpack.c.b16 %v763, %v756
      %v897 = vpack.c.b16 %v764, %v757
      %v898 = vpack.c.b16 %v765, %v758
      %v899 = vpack.c.b16 %v766, %v759
      %v900 = vpack.c.b16 %v767, %v760
      %v901 = vpack.c.b16 %v768, %v761
      %v902 = vpack.c.b16 %v776, %v769
      %v903 = vpack.c.b16 %v777, %v770
      %v904 = vpack.c.b16 %v778, %v771
      %v905 = vpack.c.b16 %v779, %v772
      %v906 = vpack.c.b16 %v780, %v773
      %v907 = vpack.c.b16 %v781, %v774
      %v908 = vpack.c.b16 %v782, %v775
      %v909 = vpack.c.b16 %v790, %v783
      %v910 = vpack.c.b16 %v791, %v784
      %v911 = vpack.c.b16 %v792, %v785
      %v912 = vpack.c.b16 %v793, %v786
      %v913 = vpack.c.b16 %v794, %v787
      %v914 = vpack.c.b16 %v795, %v788
      %v915 = vpack.c.b16 %v796, %v789
      %v916 = vpack.c.b16 %v804, %v797
      %v917 = vpack.c.b16 %v805, %v798
      %v918 = vpack.c.b16 %v806, %v799
      %v919 = vpack.c.b16 %v807, %v800
      %v920 = vpack.c.b16 %v808, %v801
      %v921 = vpack.c.b16 %v809, %v802
      %v922 = vpack.c.b16 %v810, %v803
      %v1127 = vunpack.c.l.b16 %v351
      %v1128 = vunpack.c.l.b16 %v352
      %v1129 = vunpack.c.l.b16 %v353
      %v1130 = vunpack.c.l.b16 %v354
      %v1131 = vunpack.c.l.b16 %v355
      %v1132 = vunpack.c.l.b16 %v356
      %v1133 = vunpack.c.l.b16 %v357
      %v1134 = vunpack.c.l.b16 %v358
      %v1135 = vunpack.c.l.b16 %v359
      %v1136 = vunpack.c.l.b16 %v360
      %v1137 = vunpack.c.l.b16 %v361
      %v1138 = vunpack.c.l.b16 %v362
      %v1139 = vunpack.c.l.b16 %v363
      %v1140 = vunpack.c.l.b16 %v364
      %v1141 = vunpack.c.l.b16 %v365
      %v1142 = vunpack.c.l.b16 %v366
      %v1143 = vunpack.c.l.b16 %v367
      %v1144 = vunpack.c.l.b16 %v368
      %v1145 = vunpack.c.l.b16 %v369
      %v1146 = vunpack.c.l.b16 %v370
      %v1147 = vunpack.c.l.b16 %v371
      %v1148 = vunpack.c.l.b16 %v372
      %v1149 = vunpack.c.l.b16 %v373
      %v1150 = vunpack.c.l.b16 %v374
      %v1151 = vunpack.c.l.b16 %v375
      %v1152 = vunpack.c.l.b16 %v376
      %v1153 = vunpack.c.l.b16 %v377
      %v1154 = vunpack.c.l.b16 %v378
      %v1155 = vunpack.c.l.b16 %v379
      %v1156 = vunpack.c.l.b16 %v380
      %v1157 = vunpack.c.l.b16 %v381
      %v1158 = vunpack.c.l.b16 %v382
      %v1159 = vunpack.c.l.b16 %v383
      %v1160 = vunpack.c.l.b16 %v384
      %v1161 = vunpack.c.l.b16 %v385
      %v1162 = vunpack.c.l.b16 %v386
      %v1163 = vunpack.c.l.b16 %v387
      %v1164 = vunpack.c.l.b16 %v388
      %v1165 = vunpack.c.l.b16 %v389
      %v1166 = vunpack.c.l.b16 %v390
      %v1167 = vunpack.c.l.b16 %v391
      %v1168 = vunpack.c.l.b16 %v392
      %v1169 = vunpack.c.l.b16 %v393
      %v1170 = vunpack.c.l.b16 %v394
      %v1171 = vunpack.c.l.b16 %v395
      %v1172 = vunpack.c.l.b16 %v396
      %v1173 = vunpack.c.l.b16 %v397
      %v1174 = vunpack.c.l.b16 %v398
      %v1175 = vunpack.c.l.b16 %v399
      %v1176 = vunpack.c.l.b16 %v400
      %v1177 = vunpack.c.l.b16 %v401
      %v1178 = vunpack.c.l.b16 %v402
      %v1179 = vunpack.c.l.b16 %v403
      %v1180 = vunpack.c.l.b16 %v404
      %v1181 = vunpack.c.l.b16 %v405
      %v1182 = vunpack.c.l.b16 %v406
      %v1183 = vunpack.c.l.b16 %v407
      %v1184 = vunpack.c.l.b16 %v408
      %v1185 = vunpack.c.l.b16 %v409
      %v1186 = vunpack.c.l.b16 %v410
      %v1187 = vunpack.c.l.b16 %v411
      %v1188 = vunpack.c.l.b16 %v412
      %v1189 = vunpack.c.l.b16 %v413
      %v1190 = vunpack.c.l.b16 %v414
      %v1191 = vunpack.c.l.b16 %v415
      %v1192 = vunpack.c.l.b16 %v416
      %v1193 = vunpack.c.l.b16 %v417
      %v1194 = vunpack.c.l.b16 %v418
      %v1195 = vunpack.c.l.b16 %v419
      %v1196 = vunpack.c.l.b16 %v420
      %v1197 = vunpack.c.l.b16 %v421
      %v1198 = vunpack.c.l.b16 %v422
      %v1199 = vunpack.c.l.b16 %v423
      %v1200 = vunpack.c.l.b16 %v424
      %v1201 = vunpack.c.l.b16 %v425
      %v1202 = vunpack.c.l.b16 %v426
      %v1203 = vunpack.c.l.b16 %v427
      %v1204 = vunpack.c.l.b16 %v428
      %v1205 = vunpack.c.l.b16 %v429
      %v1206 = vunpack.c.l.b16 %v430
      %v1207 = vunpack.c.l.b16 %v431
      %v1208 = vunpack.c.l.b16 %v432
      %v1209 = vunpack.c.l.b16 %v433
      %v1210 = vunpack.c.l.b16 %v434
      %v1211 = vunpack.c.l.b16 %v435
      %v1212 = vunpack.c.l.b16 %v436
      %v1213 = vunpack.c.l.b16 %v437
      %v1214 = vunpack.c.l.b16 %v438
      %v1215 = vunpack.c.l.b16 %v439
      %v1216 = vunpack.c.l.b16 %v440
      %v1217 = vunpack.c.l.b16 %v441
      %v1218 = vunpack.c.l.b16 %v442
      %v1219 = vunpack.c.l.b16 %v443
      %v1220 = vunpack.c.l.b16 %v444
      %v1221 = vunpack.c.l.b16 %v445
      %v1222 = vunpack.c.l.b16 %v446
      %v1223 = vunpack.c.l.b16 %v447
      %v1224 = vunpack.c.l.b16 %v448
      %v1225 = vunpack.c.l.b16 %v449
      %v1226 = vunpack.c.l.b16 %v450
      %v1227 = vunpack.c.l.b16 %v451
      %v1228 = vunpack.c.l.b16 %v452
      %v1229 = vunpack.c.l.b16 %v453
      %v1230 = vunpack.c.l.b16 %v454
      %v1231 = vunpack.c.l.b16 %v455
      %v1232 = vunpack.c.l.b16 %v456
      %v1233 = vunpack.c.l.b16 %v457
      %v1234 = vunpack.c.l.b16 %v458
      %v1235 = vpack.c.b16 %v1128, %v1127
      %v1236 = vpack.c.b16 %v1130, %v1129
      %v1237 = vpack.c.b16 %v1132, %v1131
      %v1238 = vpack.c.b16 %v1134, %v1133
      %v1239 = vpack.c.b16 %v1136, %v1135
      %v1240 = vpack.c.b16 %v1138, %v1137
      %v1241 = vpack.c.b16 %v1140, %v1139
      %v1242 = vpack.c.b16 %v1142, %v1141
      %v1243 = vpack.c.b16 %v1144, %v1143
      %v1244 = vpack.c.b16 %v1146, %v1145
      %v1245 = vpack.c.b16 %v1148, %v1147
      %v1246 = vpack.c.b16 %v1150, %v1149
      %v1247 = vpack.c.b16 %v1152, %v1151
      %v1248 = vpack.c.b16 %v1154, %v1153
      %v1249 = vpack.c.b16 %v1156, %v1155
      %v1250 = vpack.c.b16 %v1158, %v1157
      %v1251 = vpack.c.b16 %v1160, %v1159
      %v1252 = vpack.c.b16 %v1162, %v1161
      %v1253 = vpack.c.b16 %v1164, %v1163
      %v1254 = vpack.c.b16 %v1166, %v1165
      %v1255 = vpack.c.b16 %v1168, %v1167
      %v1256 = vpack.c.b16 %v1170, %v1169
      %v1257 = vpack.c.b16 %v1172, %v1171
      %v1258 = vpack.c.b16 %v1174, %v1173
      %v1259 = vpack.c.b16 %v1176, %v1175
      %v1260 = vpack.c.b16 %v1178, %v1177
      %v1261 = vpack.c.b16 %v1180, %v1179
      %v1262 = vpack.c.b16 %v1182, %v1181
      %v1263 = vpack.c.b16 %v1184, %v1183
      %v1264 = vpack.c.b16 %v1186, %v1185
      %v1265 = vpack.c.b16 %v1188, %v1187
      %v1266 = vpack.c.b16 %v1190, %v1189
      %v1267 = vpack.c.b16 %v1192, %v1191
      %v1268 = vpack.c.b16 %v1194, %v1193
      %v1269 = vpack.c.b16 %v1196, %v1195
      %v1270 = vpack.c.b16 %v1198, %v1197
      %v1271 = vpack.c.b16 %v1200, %v1199
      %v1272 = vpack.c.b16 %v1202, %v1201
      %v1273 = vpack.c.b16 %v1204, %v1203
      %v1274 = vpack.c.b16 %v1206, %v1205
      %v1275 = vpack.c.b16 %v1208, %v1207
      %v1276 = vpack.c.b16 %v1210, %v1209
      %v1277 = vpack.c.b16 %v1212, %v1211
      %v1278 = vpack.c.b16 %v1214, %v1213
      %v1279 = vpack.c.b16 %v1216, %v1215
      %v1280 = vpack.c.b16 %v1218, %v1217
      %v1281 = vpack.c.b16 %v1220, %v1219
      %v1282 = vpack.c.b16 %v1222, %v1221
      %v1283 = vpack.c.b16 %v1224, %v1223
      %v1284 = vpack.c.b16 %v1226, %v1225
      %v1285 = vpack.c.b16 %v1228, %v1227
      %v1286 = vpack.c.b16 %v1230, %v1229
      %v1287 = vpack.c.b16 %v1232, %v1231
      %v1288 = vpack.c.b16 %v1234, %v1233
      %vm1343 = vcmask 785408
      %v1345 = vsel %vm1343, %v817, 0
      %v1348 = vsel %vm1343, %v824, 0
      %v1351 = vsel %vm1343, %v831, 0
      %v1354 = vsel %vm1343, %v838, 0
      %v1357 = vsel %vm1343, %v845, 0
      %v1360 = vsel %vm1343, %v852, 0
      %v1363 = vsel %vm1343, %v859, 0
      %v1366 = vsel %vm1343, %v866, 0
      %v1369 = vsel %vm1343, %v873, 0
      %v1372 = vsel %vm1343, %v880, 0
      %v1375 = vsel %vm1343, %v887, 0
      %v1378 = vsel %vm1343, %v894, 0
      %v1381 = vsel %vm1343, %v901, 0
      %v1384 = vsel %vm1343, %v908, 0
      %v1387 = vsel %vm1343, %v915, 0
      %v1390 = vsel %vm1343, %v922, 0
      %1392 = vmatprep.subr.bf16.mxu0 0
      %1393 = vmatpush1.bf16.msra.mxu0 %v1235
      %1394 = vmatprep.subr.bf16.mxu0 0
      %1395 = vmatpush1.bf16.msra.mxu0 %v1236
      %1396 = vmatprep.subr.bf16.mxu0 0
      %1397 = vmatpush1.bf16.msra.mxu0 %v1237
      %1398 = vmatprep.subr.bf16.mxu0 0
      %1399 = vmatpush1.bf16.msra.mxu0 %v1238
      %1400 = vmatprep.subr.bf16.mxu0 0
      %1401 = vmatpush1.bf16.msra.mxu0 %v1239
      %1402 = vmatprep.subr.bf16.mxu0 0
      %1403 = vmatpush1.bf16.msra.mxu0 %v1240
      %1404 = vmatprep.subr.bf16.mxu0 0
      %1405 = vmatpush1.bf16.msra.mxu0 %v1241
      %1406 = vmatprep.subr.bf16.mxu0 0
      %1407 = vmatpush1.bf16.msra.mxu0 %v1242
      %1408 = vmatprep.subr.bf16.mxu0 0
      %1409 = vmatpush1.bf16.msra.mxu0 %v1243
      %1410 = vmatprep.subr.bf16.mxu0 0
      %1411 = vmatpush1.bf16.msra.mxu0 %v1244
      %1412 = vmatprep.subr.bf16.mxu0 0
      %1413 = vmatpush1.bf16.msra.mxu0 %v1245
      %1414 = vmatprep.subr.bf16.mxu0 0
      %1415 = vmatpush1.bf16.msra.mxu0 %v1246
      %1416 = vmatprep.subr.bf16.mxu0 0
      %1417 = vmatpush1.bf16.msra.mxu0 %v1247
      %1418 = vmatprep.subr.bf16.mxu0 0
      %1419 = vmatpush1.bf16.msra.mxu0 %v1248
      %1420 = vmatprep.subr.bf16.mxu0 0
      %1421 = vmatpush1.bf16.msra.mxu0 %v1249
      %1422 = vmatprep.subr.bf16.mxu0 0
      %1423 = vmatpush1.bf16.msra.mxu0 %v1250
      %1424 = vmatprep.mubr.bf16.mxu0 %v812
      %1425 = vmatmul.mubr.bf16.gmra.mrb[0].mxu0 %v811
      %v1426 = vpop.f32.mrb[0].mxu0
      %v1427 = vadd.f32 0.0, %v1426
      %v1428 = vpop.f32.mrb[0].mxu0
      %v1429 = vpop.f32.mrb[0].mxu0
      %v1430 = vadd.f32 0.0, %v1429
      %v1431 = vpop.f32.mrb[0].mxu0
      %1432 = vmatprep.mubr.bf16.mxu0 %v819
      %1433 = vmatmul.mubr.bf16.gmra.mrb[0].mxu0 %v818
      %v1434 = vpop.f32.mrb[0].mxu0
      %v1435 = vadd.f32 0.0, %v1434
      %v1436 = vpop.f32.mrb[0].mxu0
      %v1437 = vpop.f32.mrb[0].mxu0
      %v1438 = vadd.f32 0.0, %v1437
      %v1439 = vpop.f32.mrb[0].mxu0
      %1440 = vmatprep.mubr.bf16.mxu0 %v826
      %1441 = vmatmul.mubr.bf16.gmra.mrb[0].mxu0 %v825
      %v1442 = vpop.f32.mrb[0].mxu0
      %v1443 = vadd.f32 0.0, %v1442
      %v1444 = vpop.f32.mrb[0].mxu0
      %v1445 = vpop.f32.mrb[0].mxu0
      %v1446 = vadd.f32 0.0, %v1445
      %v1447 = vpop.f32.mrb[0].mxu0
      %1448 = vmatprep.mubr.bf16.mxu0 %v833
      %1449 = vmatmul.mubr.bf16.gmra.mrb[0].mxu0 %v832
      %v1450 = vpop.f32.mrb[0].mxu0
      %v1451 = vadd.f32 0.0, %v1450
      %v1452 = vpop.f32.mrb[0].mxu0
      %v1453 = vpop.f32.mrb[0].mxu0
      %v1454 = vadd.f32 0.0, %v1453
      %v1455 = vpop.f32.mrb[0].mxu0
      %1456 = vmatprep.mubr.bf16.mxu0 %v840
      %1457 = vmatmul.mubr.bf16.gmra.mrb[0].mxu0 %v839
      %v1458 = vpop.f32.mrb[0].mxu0
      %v1459 = vadd.f32 0.0, %v1458
      %v1460 = vpop.f32.mrb[0].mxu0
      %v1461 = vpop.f32.mrb[0].mxu0
      %v1462 = vadd.f32 0.0, %v1461
      %v1463 = vpop.f32.mrb[0].mxu0
      %1464 = vmatprep.mubr.bf16.mxu0 %v847
      %1465 = vmatmul.mubr.bf16.gmra.mrb[0].mxu0 %v846
      %v1466 = vpop.f32.mrb[0].mxu0
      %v1467 = vadd.f32 0.0, %v1466
      %v1468 = vpop.f32.mrb[0].mxu0
      %v1469 = vpop.f32.mrb[0].mxu0
      %v1470 = vadd.f32 0.0, %v1469
      %v1471 = vpop.f32.mrb[0].mxu0
      %1472 = vmatprep.mubr.bf16.mxu0 %v854
      %1473 = vmatmul.mubr.bf16.gmra.mrb[0].mxu0 %v853
      %v1474 = vpop.f32.mrb[0].mxu0
      %v1475 = vadd.f32 0.0, %v1474
      %v1476 = vpop.f32.mrb[0].mxu0
      %v1477 = vpop.f32.mrb[0].mxu0
      %v1478 = vadd.f32 0.0, %v1477
      %v1479 = vpop.f32.mrb[0].mxu0
      %1480 = vmatprep.mubr.bf16.mxu0 %v861
      %1481 = vmatmul.mubr.bf16.gmra.mrb[0].mxu0 %v860
      %v1482 = vpop.f32.mrb[0].mxu0
      %v1483 = vadd.f32 0.0, %v1482
      %v1484 = vpop.f32.mrb[0].mxu0
      %v1485 = vpop.f32.mrb[0].mxu0
      %v1486 = vadd.f32 0.0, %v1485
      %v1487 = vpop.f32.mrb[0].mxu0
      %1488 = vmatprep.mubr.bf16.mxu0 %v868
      %1489 = vmatmul.mubr.bf16.gmra.mrb[0].mxu0 %v867
      %v1490 = vpop.f32.mrb[0].mxu0
      %v1491 = vadd.f32 0.0, %v1490
      %v1492 = vpop.f32.mrb[0].mxu0
      %v1493 = vpop.f32.mrb[0].mxu0
      %v1494 = vadd.f32 0.0, %v1493
      %v1495 = vpop.f32.mrb[0].mxu0
      %1496 = vmatprep.mubr.bf16.mxu0 %v875
      %1497 = vmatmul.mubr.bf16.gmra.mrb[0].mxu0 %v874
      %v1498 = vpop.f32.mrb[0].mxu0
      %v1499 = vadd.f32 0.0, %v1498
      %v1500 = vpop.f32.mrb[0].mxu0
      %v1501 = vpop.f32.mrb[0].mxu0
      %v1502 = vadd.f32 0.0, %v1501
      %v1503 = vpop.f32.mrb[0].mxu0
      %1504 = vmatprep.mubr.bf16.mxu0 %v882
      %1505 = vmatmul.mubr.bf16.gmra.mrb[0].mxu0 %v881
      %v1506 = vpop.f32.mrb[0].mxu0
      %v1507 = vadd.f32 0.0, %v1506
      %v1508 = vpop.f32.mrb[0].mxu0
      %v1509 = vpop.f32.mrb[0].mxu0
      %v1510 = vadd.f32 0.0, %v1509
      %v1511 = vpop.f32.mrb[0].mxu0
      %1512 = vmatprep.mubr.bf16.mxu0 %v889
      %1513 = vmatmul.mubr.bf16.gmra.mrb[0].mxu0 %v888
      %v1514 = vpop.f32.mrb[0].mxu0
      %v1515 = vadd.f32 0.0, %v1514
      %v1516 = vpop.f32.mrb[0].mxu0
      %v1517 = vpop.f32.mrb[0].mxu0
      %v1518 = vadd.f32 0.0, %v1517
      %v1519 = vpop.f32.mrb[0].mxu0
      %1520 = vmatprep.mubr.bf16.mxu0 %v896
      %1521 = vmatmul.mubr.bf16.gmra.mrb[0].mxu0 %v895
      %v1522 = vpop.f32.mrb[0].mxu0
      %v1523 = vadd.f32 0.0, %v1522
      %v1524 = vpop.f32.mrb[0].mxu0
      %v1525 = vpop.f32.mrb[0].mxu0
      %v1526 = vadd.f32 0.0, %v1525
      %v1527 = vpop.f32.mrb[0].mxu0
      %1528 = vmatprep.mubr.bf16.mxu0 %v903
      %1529 = vmatmul.mubr.bf16.gmra.mrb[0].mxu0 %v902
      %v1530 = vpop.f32.mrb[0].mxu0
      %v1531 = vadd.f32 0.0, %v1530
      %v1532 = vpop.f32.mrb[0].mxu0
      %v1533 = vpop.f32.mrb[0].mxu0
      %v1534 = vadd.f32 0.0, %v1533
      %v1535 = vpop.f32.mrb[0].mxu0
      %1536 = vmatprep.mubr.bf16.mxu0 %v910
      %1537 = vmatmul.mubr.bf16.gmra.mrb[0].mxu0 %v909
      %v1538 = vpop.f32.mrb[0].mxu0
      %v1539 = vadd.f32 0.0, %v1538
      %v1540 = vpop.f32.mrb[0].mxu0
      %v1541 = vpop.f32.mrb[0].mxu0
      %v1542 = vadd.f32 0.0, %v1541
      %v1543 = vpop.f32.mrb[0].mxu0
      %1544 = vmatprep.mubr.bf16.mxu0 %v917
      %1545 = vmatmul.mubr.bf16.gmra.mrb[0].mxu0 %v916
      %v1546 = vpop.f32.mrb[0].mxu0
      %v1547 = vadd.f32 0.0, %v1546
      %v1548 = vpop.f32.mrb[0].mxu0
      %v1549 = vpop.f32.mrb[0].mxu0
      %v1550 = vadd.f32 0.0, %v1549
      %v1551 = vpop.f32.mrb[0].mxu0
      %1552 = vdwg.mxu0
      %1553 = vmatprep.subr.bf16.mxu0 0
      %1554 = vmatpush1.bf16.msra.mxu0 %v1251
      %1555 = vmatprep.subr.bf16.mxu0 0
      %1556 = vmatpush1.bf16.msra.mxu0 %v1252
      %1557 = vmatprep.subr.bf16.mxu0 0
      %1558 = vmatpush1.bf16.msra.mxu0 %v1253
      %1559 = vmatprep.subr.bf16.mxu0 0
      %1560 = vmatpush1.bf16.msra.mxu0 %v1254
      %1561 = vmatprep.subr.bf16.mxu0 0
      %1562 = vmatpush1.bf16.msra.mxu0 %v1255
      %1563 = vmatprep.subr.bf16.mxu0 0
      %1564 = vmatpush1.bf16.msra.mxu0 %v1256
      %1565 = vmatprep.subr.bf16.mxu0 0
      %1566 = vmatpush1.bf16.msra.mxu0 %v1257
      %1567 = vmatprep.subr.bf16.mxu0 0
      %1568 = vmatpush1.bf16.msra.mxu0 %v1258
      %1569 = vmatprep.subr.bf16.mxu0 0
      %1570 = vmatpush1.bf16.msra.mxu0 %v1259
      %1571 = vmatprep.subr.bf16.mxu0 0
      %1572 = vmatpush1.bf16.msra.mxu0 %v1260
      %1573 = vmatprep.subr.bf16.mxu0 0
      %1574 = vmatpush1.bf16.msra.mxu0 %v1261
      %1575 = vmatprep.subr.bf16.mxu0 0
      %1576 = vmatpush1.bf16.msra.mxu0 %v1262
      %1577 = vmatprep.subr.bf16.mxu0 0
      %1578 = vmatpush1.bf16.msra.mxu0 %v1263
      %1579 = vmatprep.subr.bf16.mxu0 0
      %1580 = vmatpush1.bf16.msra.mxu0 %v1264
      %1581 = vmatprep.subr.bf16.mxu0 0
      %1582 = vmatpush1.bf16.msra.mxu0 %v1265
      %1583 = vmatprep.subr.bf16.mxu0 0
      %1584 = vmatpush1.bf16.msra.mxu0 %v1266
      %1585 = vmatprep.mubr.bf16.mxu0 %v814
      %1586 = vmatmul.mubr.bf16.gmra.mrb[0].mxu0 %v813
      %v1587 = vpop.f32.mrb[0].mxu0
      %v1588 = vadd.f32 %v1427, %v1587
      %v1589 = vpop.f32.mrb[0].mxu0
      %v1590 = vpop.f32.mrb[0].mxu0
      %v1591 = vadd.f32 %v1430, %v1590
      %v1592 = vpop.f32.mrb[0].mxu0
      %1593 = vmatprep.mubr.bf16.mxu0 %v821
      %1594 = vmatmul.mubr.bf16.gmra.mrb[0].mxu0 %v820
      %v1595 = vpop.f32.mrb[0].mxu0
      %v1596 = vadd.f32 %v1435, %v1595
      %v1597 = vpop.f32.mrb[0].mxu0
      %v1598 = vpop.f32.mrb[0].mxu0
      %v1599 = vadd.f32 %v1438, %v1598
      %v1600 = vpop.f32.mrb[0].mxu0
      %1601 = vmatprep.mubr.bf16.mxu0 %v828
      %1602 = vmatmul.mubr.bf16.gmra.mrb[0].mxu0 %v827
      %v1603 = vpop.f32.mrb[0].mxu0
      %v1604 = vadd.f32 %v1443, %v1603
      %v1605 = vpop.f32.mrb[0].mxu0
      %v1606 = vpop.f32.mrb[0].mxu0
      %v1607 = vadd.f32 %v1446, %v1606
      %v1608 = vpop.f32.mrb[0].mxu0
      %1609 = vmatprep.mubr.bf16.mxu0 %v835
      %1610 = vmatmul.mubr.bf16.gmra.mrb[0].mxu0 %v834
      %v1611 = vpop.f32.mrb[0].mxu0
      %v1612 = vadd.f32 %v1451, %v1611
      %v1613 = vpop.f32.mrb[0].mxu0
      %v1614 = vpop.f32.mrb[0].mxu0
      %v1615 = vadd.f32 %v1454, %v1614
      %v1616 = vpop.f32.mrb[0].mxu0
      %1617 = vmatprep.mubr.bf16.mxu0 %v842
      %1618 = vmatmul.mubr.bf16.gmra.mrb[0].mxu0 %v841
      %v1619 = vpop.f32.mrb[0].mxu0
      %v1620 = vadd.f32 %v1459, %v1619
      %v1621 = vpop.f32.mrb[0].mxu0
      %v1622 = vpop.f32.mrb[0].mxu0
      %v1623 = vadd.f32 %v1462, %v1622
      %v1624 = vpop.f32.mrb[0].mxu0
      %1625 = vmatprep.mubr.bf16.mxu0 %v849
      %1626 = vmatmul.mubr.bf16.gmra.mrb[0].mxu0 %v848
      %v1627 = vpop.f32.mrb[0].mxu0
      %v1628 = vadd.f32 %v1467, %v1627
      %v1629 = vpop.f32.mrb[0].mxu0
      %v1630 = vpop.f32.mrb[0].mxu0
      %v1631 = vadd.f32 %v1470, %v1630
      %v1632 = vpop.f32.mrb[0].mxu0
      %1633 = vmatprep.mubr.bf16.mxu0 %v856
      %1634 = vmatmul.mubr.bf16.gmra.mrb[0].mxu0 %v855
      %v1635 = vpop.f32.mrb[0].mxu0
      %v1636 = vadd.f32 %v1475, %v1635
      %v1637 = vpop.f32.mrb[0].mxu0
      %v1638 = vpop.f32.mrb[0].mxu0
      %v1639 = vadd.f32 %v1478, %v1638
      %v1640 = vpop.f32.mrb[0].mxu0
      %1641 = vmatprep.mubr.bf16.mxu0 %v863
      %1642 = vmatmul.mubr.bf16.gmra.mrb[0].mxu0 %v862
      %v1643 = vpop.f32.mrb[0].mxu0
      %v1644 = vadd.f32 %v1483, %v1643
      %v1645 = vpop.f32.mrb[0].mxu0
      %v1646 = vpop.f32.mrb[0].mxu0
      %v1647 = vadd.f32 %v1486, %v1646
      %v1648 = vpop.f32.mrb[0].mxu0
      %1649 = vmatprep.mubr.bf16.mxu0 %v870
      %1650 = vmatmul.mubr.bf16.gmra.mrb[0].mxu0 %v869
      %v1651 = vpop.f32.mrb[0].mxu0
      %v1652 = vadd.f32 %v1491, %v1651
      %v1653 = vpop.f32.mrb[0].mxu0
      %v1654 = vpop.f32.mrb[0].mxu0
      %v1655 = vadd.f32 %v1494, %v1654
      %v1656 = vpop.f32.mrb[0].mxu0
      %1657 = vmatprep.mubr.bf16.mxu0 %v877
      %1658 = vmatmul.mubr.bf16.gmra.mrb[0].mxu0 %v876
      %v1659 = vpop.f32.mrb[0].mxu0
      %v1660 = vadd.f32 %v1499, %v1659
      %v1661 = vpop.f32.mrb[0].mxu0
      %v1662 = vpop.f32.mrb[0].mxu0
      %v1663 = vadd.f32 %v1502, %v1662
      %v1664 = vpop.f32.mrb[0].mxu0
      %1665 = vmatprep.mubr.bf16.mxu0 %v884
      %1666 = vmatmul.mubr.bf16.gmra.mrb[0].mxu0 %v883
      %v1667 = vpop.f32.mrb[0].mxu0
      %v1668 = vadd.f32 %v1507, %v1667
      %v1669 = vpop.f32.mrb[0].mxu0
      %v1670 = vpop.f32.mrb[0].mxu0
      %v1671 = vadd.f32 %v1510, %v1670
      %v1672 = vpop.f32.mrb[0].mxu0
      %1673 = vmatprep.mubr.bf16.mxu0 %v891
      %1674 = vmatmul.mubr.bf16.gmra.mrb[0].mxu0 %v890
      %v1675 = vpop.f32.mrb[0].mxu0
      %v1676 = vadd.f32 %v1515, %v1675
      %v1677 = vpop.f32.mrb[0].mxu0
      %v1678 = vpop.f32.mrb[0].mxu0
      %v1679 = vadd.f32 %v1518, %v1678
      %v1680 = vpop.f32.mrb[0].mxu0
      %1681 = vmatprep.mubr.bf16.mxu0 %v898
      %1682 = vmatmul.mubr.bf16.gmra.mrb[0].mxu0 %v897
      %v1683 = vpop.f32.mrb[0].mxu0
      %v1684 = vadd.f32 %v1523, %v1683
      %v1685 = vpop.f32.mrb[0].mxu0
      %v1686 = vpop.f32.mrb[0].mxu0
      %v1687 = vadd.f32 %v1526, %v1686
      %v1688 = vpop.f32.mrb[0].mxu0
      %1689 = vmatprep.mubr.bf16.mxu0 %v905
      %1690 = vmatmul.mubr.bf16.gmra.mrb[0].mxu0 %v904
      %v1691 = vpop.f32.mrb[0].mxu0
      %v1692 = vadd.f32 %v1531, %v1691
      %v1693 = vpop.f32.mrb[0].mxu0
      %v1694 = vpop.f32.mrb[0].mxu0
      %v1695 = vadd.f32 %v1534, %v1694
      %v1696 = vpop.f32.mrb[0].mxu0
      %1697 = vmatprep.mubr.bf16.mxu0 %v912
      %1698 = vmatmul.mubr.bf16.gmra.mrb[0].mxu0 %v911
      %v1699 = vpop.f32.mrb[0].mxu0
      %v1700 = vadd.f32 %v1539, %v1699
      %v1701 = vpop.f32.mrb[0].mxu0
      %v1702 = vpop.f32.mrb[0].mxu0
      %v1703 = vadd.f32 %v1542, %v1702
      %v1704 = vpop.f32.mrb[0].mxu0
      %1705 = vmatprep.mubr.bf16.mxu0 %v919
      %1706 = vmatmul.mubr.bf16.gmra.mrb[0].mxu0 %v918
      %v1707 = vpop.f32.mrb[0].mxu0
      %v1708 = vadd.f32 %v1547, %v1707
      %v1709 = vpop.f32.mrb[0].mxu0
      %v1710 = vpop.f32.mrb[0].mxu0
      %v1711 = vadd.f32 %v1550, %v1710
      %v1712 = vpop.f32.mrb[0].mxu0
      %1713 = vdwg.mxu0
      %1714 = vmatprep.subr.bf16.mxu0 0
      %1715 = vmatpush1.bf16.msra.mxu0 %v1267
      %1716 = vmatprep.subr.bf16.mxu0 0
      %1717 = vmatpush1.bf16.msra.mxu0 %v1268
      %1718 = vmatprep.subr.bf16.mxu0 0
      %1719 = vmatpush1.bf16.msra.mxu0 %v1269
      %1720 = vmatprep.subr.bf16.mxu0 0
      %1721 = vmatpush1.bf16.msra.mxu0 %v1270
      %1722 = vmatprep.subr.bf16.mxu0 0
      %1723 = vmatpush1.bf16.msra.mxu0 %v1271
      %1724 = vmatprep.subr.bf16.mxu0 0
      %1725 = vmatpush1.bf16.msra.mxu0 %v1272
      %1726 = vmatprep.subr.bf16.mxu0 0
      %1727 = vmatpush1.bf16.msra.mxu0 %v1273
      %1728 = vmatprep.subr.bf16.mxu0 0
      %1729 = vmatpush1.bf16.msra.mxu0 %v1274
      %1730 = vmatprep.subr.bf16.mxu0 0
      %1731 = vmatpush1.bf16.msra.mxu0 %v1275
      %1732 = vmatprep.subr.bf16.mxu0 0
      %1733 = vmatpush1.bf16.msra.mxu0 %v1276
      %1734 = vmatprep.subr.bf16.mxu0 0
      %1735 = vmatpush1.bf16.msra.mxu0 %v1277
      %1736 = vmatprep.subr.bf16.mxu0 0
      %1737 = vmatpush1.bf16.msra.mxu0 %v1278
      %1738 = vmatprep.subr.bf16.mxu0 0
      %1739 = vmatpush1.bf16.msra.mxu0 %v1279
      %1740 = vmatprep.subr.bf16.mxu0 0
      %1741 = vmatpush1.bf16.msra.mxu0 %v1280
      %1742 = vmatprep.subr.bf16.mxu0 0
      %1743 = vmatpush1.bf16.msra.mxu0 %v1281
      %1744 = vmatprep.subr.bf16.mxu0 0
      %1745 = vmatpush1.bf16.msra.mxu0 %v1282
      %1746 = vmatprep.mubr.bf16.mxu0 %v816
      %1747 = vmatmul.mubr.bf16.gmra.mrb[0].mxu0 %v815
      %v1748 = vpop.f32.mrb[0].mxu0
      %v1749 = vadd.f32 %v1588, %v1748
      %v1750 = vpop.f32.mrb[0].mxu0
      %v1751 = vpop.f32.mrb[0].mxu0
      %v1752 = vadd.f32 %v1591, %v1751
      %v1753 = vpop.f32.mrb[0].mxu0
      %1754 = vmatprep.mubr.bf16.mxu0 %v823
      %1755 = vmatmul.mubr.bf16.gmra.mrb[0].mxu0 %v822
      %v1756 = vpop.f32.mrb[0].mxu0
      %v1757 = vadd.f32 %v1596, %v1756
      %v1758 = vpop.f32.mrb[0].mxu0
      %v1759 = vpop.f32.mrb[0].mxu0
      %v1760 = vadd.f32 %v1599, %v1759
      %v1761 = vpop.f32.mrb[0].mxu0
      %1762 = vmatprep.mubr.bf16.mxu0 %v830
      %1763 = vmatmul.mubr.bf16.gmra.mrb[0].mxu0 %v829
      %v1764 = vpop.f32.mrb[0].mxu0
      %v1765 = vadd.f32 %v1604, %v1764
      %v1766 = vpop.f32.mrb[0].mxu0
      %v1767 = vpop.f32.mrb[0].mxu0
      %v1768 = vadd.f32 %v1607, %v1767
      %v1769 = vpop.f32.mrb[0].mxu0
      %1770 = vmatprep.mubr.bf16.mxu0 %v837
      %1771 = vmatmul.mubr.bf16.gmra.mrb[0].mxu0 %v836
      %v1772 = vpop.f32.mrb[0].mxu0
      %v1773 = vadd.f32 %v1612, %v1772
      %v1774 = vpop.f32.mrb[0].mxu0
      %v1775 = vpop.f32.mrb[0].mxu0
      %v1776 = vadd.f32 %v1615, %v1775
      %v1777 = vpop.f32.mrb[0].mxu0
      %1778 = vmatprep.mubr.bf16.mxu0 %v844
      %1779 = vmatmul.mubr.bf16.gmra.mrb[0].mxu0 %v843
      %v1780 = vpop.f32.mrb[0].mxu0
      %v1781 = vadd.f32 %v1620, %v1780
      %v1782 = vpop.f32.mrb[0].mxu0
      %v1783 = vpop.f32.mrb[0].mxu0
      %v1784 = vadd.f32 %v1623, %v1783
      %v1785 = vpop.f32.mrb[0].mxu0
      %1786 = vmatprep.mubr.bf16.mxu0 %v851
      %1787 = vmatmul.mubr.bf16.gmra.mrb[0].mxu0 %v850
      %v1788 = vpop.f32.mrb[0].mxu0
      %v1789 = vadd.f32 %v1628, %v1788
      %v1790 = vpop.f32.mrb[0].mxu0
      %v1791 = vpop.f32.mrb[0].mxu0
      %v1792 = vadd.f32 %v1631, %v1791
      %v1793 = vpop.f32.mrb[0].mxu0
      %1794 = vmatprep.mubr.bf16.mxu0 %v858
      %1795 = vmatmul.mubr.bf16.gmra.mrb[0].mxu0 %v857
      %v1796 = vpop.f32.mrb[0].mxu0
      %v1797 = vadd.f32 %v1636, %v1796
      %v1798 = vpop.f32.mrb[0].mxu0
      %v1799 = vpop.f32.mrb[0].mxu0
      %v1800 = vadd.f32 %v1639, %v1799
      %v1801 = vpop.f32.mrb[0].mxu0
      %1802 = vmatprep.mubr.bf16.mxu0 %v865
      %1803 = vmatmul.mubr.bf16.gmra.mrb[0].mxu0 %v864
      %v1804 = vpop.f32.mrb[0].mxu0
      %v1805 = vadd.f32 %v1644, %v1804
      %v1806 = vpop.f32.mrb[0].mxu0
      %v1807 = vpop.f32.mrb[0].mxu0
      %v1808 = vadd.f32 %v1647, %v1807
      %v1809 = vpop.f32.mrb[0].mxu0
      %1810 = vmatprep.mubr.bf16.mxu0 %v872
      %1811 = vmatmul.mubr.bf16.gmra.mrb[0].mxu0 %v871
      %v1812 = vpop.f32.mrb[0].mxu0
      %v1813 = vadd.f32 %v1652, %v1812
      %v1814 = vpop.f32.mrb[0].mxu0
      %v1815 = vpop.f32.mrb[0].mxu0
      %v1816 = vadd.f32 %v1655, %v1815
      %v1817 = vpop.f32.mrb[0].mxu0
      %1818 = vmatprep.mubr.bf16.mxu0 %v879
      %1819 = vmatmul.mubr.bf16.gmra.mrb[0].mxu0 %v878
      %v1820 = vpop.f32.mrb[0].mxu0
      %v1821 = vadd.f32 %v1660, %v1820
      %v1822 = vpop.f32.mrb[0].mxu0
      %v1823 = vpop.f32.mrb[0].mxu0
      %v1824 = vadd.f32 %v1663, %v1823
      %v1825 = vpop.f32.mrb[0].mxu0
      %1826 = vmatprep.mubr.bf16.mxu0 %v886
      %1827 = vmatmul.mubr.bf16.gmra.mrb[0].mxu0 %v885
      %v1828 = vpop.f32.mrb[0].mxu0
      %v1829 = vadd.f32 %v1668, %v1828
      %v1830 = vpop.f32.mrb[0].mxu0
      %v1831 = vpop.f32.mrb[0].mxu0
      %v1832 = vadd.f32 %v1671, %v1831
      %v1833 = vpop.f32.mrb[0].mxu0
      %1834 = vmatprep.mubr.bf16.mxu0 %v893
      %1835 = vmatmul.mubr.bf16.gmra.mrb[0].mxu0 %v892
      %v1836 = vpop.f32.mrb[0].mxu0
      %v1837 = vadd.f32 %v1676, %v1836
      %v1838 = vpop.f32.mrb[0].mxu0
      %v1839 = vpop.f32.mrb[0].mxu0
      %v1840 = vadd.f32 %v1679, %v1839
      %v1841 = vpop.f32.mrb[0].mxu0
      %1842 = vmatprep.mubr.bf16.mxu0 %v900
      %1843 = vmatmul.mubr.bf16.gmra.mrb[0].mxu0 %v899
      %v1844 = vpop.f32.mrb[0].mxu0
      %v1845 = vadd.f32 %v1684, %v1844
      %v1846 = vpop.f32.mrb[0].mxu0
      %v1847 = vpop.f32.mrb[0].mxu0
      %v1848 = vadd.f32 %v1687, %v1847
      %v1849 = vpop.f32.mrb[0].mxu0
      %1850 = vmatprep.mubr.bf16.mxu0 %v907
      %1851 = vmatmul.mubr.bf16.gmra.mrb[0].mxu0 %v906
      %v1852 = vpop.f32.mrb[0].mxu0
      %v1853 = vadd.f32 %v1692, %v1852
      %v1854 = vpop.f32.mrb[0].mxu0
      %v1855 = vpop.f32.mrb[0].mxu0
      %v1856 = vadd.f32 %v1695, %v1855
      %v1857 = vpop.f32.mrb[0].mxu0
      %1858 = vmatprep.mubr.bf16.mxu0 %v914
      %1859 = vmatmul.mubr.bf16.gmra.mrb[0].mxu0 %v913
      %v1860 = vpop.f32.mrb[0].mxu0
      %v1861 = vadd.f32 %v1700, %v1860
      %v1862 = vpop.f32.mrb[0].mxu0
      %v1863 = vpop.f32.mrb[0].mxu0
      %v1864 = vadd.f32 %v1703, %v1863
      %v1865 = vpop.f32.mrb[0].mxu0
      %1866 = vmatprep.mubr.bf16.mxu0 %v921
      %1867 = vmatmul.mubr.bf16.gmra.mrb[0].mxu0 %v920
      %v1868 = vpop.f32.mrb[0].mxu0
      %v1869 = vadd.f32 %v1708, %v1868
      %v1870 = vpop.f32.mrb[0].mxu0
      %v1871 = vpop.f32.mrb[0].mxu0
      %v1872 = vadd.f32 %v1711, %v1871
      %v1873 = vpop.f32.mrb[0].mxu0
      %1874 = vdwg.mxu0
      %1875 = vmatprep.subr.bf16.mxu0 0
      %1876 = vmatpush1.bf16.msra.mxu0 %v1283
      %1877 = vmatprep.subr.bf16.mxu0 0
      %1878 = vmatpush1.bf16.msra.mxu0 %v1284
      %1879 = vmatprep.subr.bf16.mxu0 0
      %1880 = vmatpush1.bf16.msra.mxu0 %v1285
      %1881 = vmatprep.subr.bf16.mxu0 0
      %1882 = vmatpush1.bf16.msra.mxu0 %v1286
      %1883 = vmatprep.subr.bf16.mxu0 0
      %1884 = vmatpush1.bf16.msra.mxu0 %v1287
      %1885 = vmatprep.subr.bf16.mxu0 0
      %1886 = vmatpush1.bf16.msra.mxu0 %v1288
      %1887 = vmatprep.subr.bf16.mxu0 0
      %1888 = vmatpush1.bf16.msra.mxu0 0
      %1889 = vmatprep.subr.bf16.mxu0 0
      %1890 = vmatpush1.bf16.msra.mxu0 0
      %1891 = vmatprep.subr.bf16.mxu0 0
      %1892 = vmatpush1.bf16.msra.mxu0 0
      %1893 = vmatprep.subr.bf16.mxu0 0
      %1894 = vmatpush1.bf16.msra.mxu0 0
      %1895 = vmatprep.subr.bf16.mxu0 0
      %1896 = vmatpush1.bf16.msra.mxu0 0
      %1897 = vmatprep.subr.bf16.mxu0 0
      %1898 = vmatpush1.bf16.msra.mxu0 0
      %1899 = vmatprep.subr.bf16.mxu0 0
      %1900 = vmatpush1.bf16.msra.mxu0 0
      %1901 = vmatprep.subr.bf16.mxu0 0
      %1902 = vmatpush1.bf16.msra.mxu0 0
      %1903 = vmatprep.subr.bf16.mxu0 0
      %1904 = vmatpush1.bf16.msra.mxu0 0
      %1905 = vmatprep.subr.bf16.mxu0 0
      %1906 = vmatpush1.bf16.msra.mxu0 0
      %1907 = vmatprep.mubr.bf16.mxu0 0
      %1908 = vmatmul.mubr.bf16.gmra.mrb[0].mxu0 %v1345
      %v1909 = vpop.f32.mrb[0].mxu0
      %v1910 = vadd.f32 %v1749, %v1909
      %v1911 = vpop.f32.mrb[0].mxu0
      %v1912 = vpop.f32.mrb[0].mxu0
      %v1913 = vadd.f32 %v1752, %v1912
      %v1914 = vpop.f32.mrb[0].mxu0
      %1915 = vmatprep.mubr.bf16.mxu0 0
      %1916 = vmatmul.mubr.bf16.gmra.mrb[0].mxu0 %v1348
      %v1917 = vpop.f32.mrb[0].mxu0
      %v1918 = vadd.f32 %v1757, %v1917
      %v1919 = vpop.f32.mrb[0].mxu0
      %v1920 = vpop.f32.mrb[0].mxu0
      %v1921 = vadd.f32 %v1760, %v1920
      %v1922 = vpop.f32.mrb[0].mxu0
      %1923 = vmatprep.mubr.bf16.mxu0 0
      %1924 = vmatmul.mubr.bf16.gmra.mrb[0].mxu0 %v1351
      %v1925 = vpop.f32.mrb[0].mxu0
      %v1926 = vadd.f32 %v1765, %v1925
      %v1927 = vpop.f32.mrb[0].mxu0
      %v1928 = vpop.f32.mrb[0].mxu0
      %v1929 = vadd.f32 %v1768, %v1928
      %v1930 = vpop.f32.mrb[0].mxu0
      %1931 = vmatprep.mubr.bf16.mxu0 0
      %1932 = vmatmul.mubr.bf16.gmra.mrb[0].mxu0 %v1354
      %v1933 = vpop.f32.mrb[0].mxu0
      %v1934 = vadd.f32 %v1773, %v1933
      %v1935 = vpop.f32.mrb[0].mxu0
      %v1936 = vpop.f32.mrb[0].mxu0
      %v1937 = vadd.f32 %v1776, %v1936
      %v1938 = vpop.f32.mrb[0].mxu0
      %1939 = vmatprep.mubr.bf16.mxu0 0
      %1940 = vmatmul.mubr.bf16.gmra.mrb[0].mxu0 %v1357
      %v1941 = vpop.f32.mrb[0].mxu0
      %v1942 = vadd.f32 %v1781, %v1941
      %v1943 = vpop.f32.mrb[0].mxu0
      %v1944 = vpop.f32.mrb[0].mxu0
      %v1945 = vadd.f32 %v1784, %v1944
      %v1946 = vpop.f32.mrb[0].mxu0
      %1947 = vmatprep.mubr.bf16.mxu0 0
      %1948 = vmatmul.mubr.bf16.gmra.mrb[0].mxu0 %v1360
      %v1949 = vpop.f32.mrb[0].mxu0
      %v1950 = vadd.f32 %v1789, %v1949
      %v1951 = vpop.f32.mrb[0].mxu0
      %v1952 = vpop.f32.mrb[0].mxu0
      %v1953 = vadd.f32 %v1792, %v1952
      %v1954 = vpop.f32.mrb[0].mxu0
      %1955 = vmatprep.mubr.bf16.mxu0 0
      %1956 = vmatmul.mubr.bf16.gmra.mrb[0].mxu0 %v1363
      %v1957 = vpop.f32.mrb[0].mxu0
      %v1958 = vadd.f32 %v1797, %v1957
      %v1959 = vpop.f32.mrb[0].mxu0
      %v1960 = vpop.f32.mrb[0].mxu0
      %v1961 = vadd.f32 %v1800, %v1960
      %v1962 = vpop.f32.mrb[0].mxu0
      %1963 = vmatprep.mubr.bf16.mxu0 0
      %1964 = vmatmul.mubr.bf16.gmra.mrb[0].mxu0 %v1366
      %v1965 = vpop.f32.mrb[0].mxu0
      %v1966 = vadd.f32 %v1805, %v1965
      %v1967 = vpop.f32.mrb[0].mxu0
      %v1968 = vpop.f32.mrb[0].mxu0
      %v1969 = vadd.f32 %v1808, %v1968
      %v1970 = vpop.f32.mrb[0].mxu0
      %1971 = vmatprep.mubr.bf16.mxu0 0
      %1972 = vmatmul.mubr.bf16.gmra.mrb[0].mxu0 %v1369
      %v1973 = vpop.f32.mrb[0].mxu0
      %v1974 = vadd.f32 %v1813, %v1973
      %v1975 = vpop.f32.mrb[0].mxu0
      %v1976 = vpop.f32.mrb[0].mxu0
      %v1977 = vadd.f32 %v1816, %v1976
      %v1978 = vpop.f32.mrb[0].mxu0
      %1979 = vmatprep.mubr.bf16.mxu0 0
      %1980 = vmatmul.mubr.bf16.gmra.mrb[0].mxu0 %v1372
      %v1981 = vpop.f32.mrb[0].mxu0
      %v1982 = vadd.f32 %v1821, %v1981
      %v1983 = vpop.f32.mrb[0].mxu0
      %v1984 = vpop.f32.mrb[0].mxu0
      %v1985 = vadd.f32 %v1824, %v1984
      %v1986 = vpop.f32.mrb[0].mxu0
      %1987 = vmatprep.mubr.bf16.mxu0 0
      %1988 = vmatmul.mubr.bf16.gmra.mrb[0].mxu0 %v1375
      %v1989 = vpop.f32.mrb[0].mxu0
      %v1990 = vadd.f32 %v1829, %v1989
      %v1991 = vpop.f32.mrb[0].mxu0
      %v1992 = vpop.f32.mrb[0].mxu0
      %v1993 = vadd.f32 %v1832, %v1992
      %v1994 = vpop.f32.mrb[0].mxu0
      %1995 = vmatprep.mubr.bf16.mxu0 0
      %1996 = vmatmul.mubr.bf16.gmra.mrb[0].mxu0 %v1378
      %v1997 = vpop.f32.mrb[0].mxu0
      %v1998 = vadd.f32 %v1837, %v1997
      %v1999 = vpop.f32.mrb[0].mxu0
      %v2000 = vpop.f32.mrb[0].mxu0
      %v2001 = vadd.f32 %v1840, %v2000
      %v2002 = vpop.f32.mrb[0].mxu0
      %2003 = vmatprep.mubr.bf16.mxu0 0
      %2004 = vmatmul.mubr.bf16.gmra.mrb[0].mxu0 %v1381
      %v2005 = vpop.f32.mrb[0].mxu0
      %v2006 = vadd.f32 %v1845, %v2005
      %v2007 = vpop.f32.mrb[0].mxu0
      %v2008 = vpop.f32.mrb[0].mxu0
      %v2009 = vadd.f32 %v1848, %v2008
      %v2010 = vpop.f32.mrb[0].mxu0
      %2011 = vmatprep.mubr.bf16.mxu0 0
      %2012 = vmatmul.mubr.bf16.gmra.mrb[0].mxu0 %v1384
      %v2013 = vpop.f32.mrb[0].mxu0
      %v2014 = vadd.f32 %v1853, %v2013
      %v2015 = vpop.f32.mrb[0].mxu0
      %v2016 = vpop.f32.mrb[0].mxu0
      %v2017 = vadd.f32 %v1856, %v2016
      %v2018 = vpop.f32.mrb[0].mxu0
      %2019 = vmatprep.mubr.bf16.mxu0 0
      %2020 = vmatmul.mubr.bf16.gmra.mrb[0].mxu0 %v1387
      %v2021 = vpop.f32.mrb[0].mxu0
      %v2022 = vadd.f32 %v1861, %v2021
      %v2023 = vpop.f32.mrb[0].mxu0
      %v2024 = vpop.f32.mrb[0].mxu0
      %v2025 = vadd.f32 %v1864, %v2024
      %v2026 = vpop.f32.mrb[0].mxu0
      %2027 = vmatprep.mubr.bf16.mxu0 0
      %2028 = vmatmul.mubr.bf16.gmra.mrb[0].mxu0 %v1390
      %v2029 = vpop.f32.mrb[0].mxu0
      %v2030 = vadd.f32 %v1869, %v2029
      %v2031 = vpop.f32.mrb[0].mxu0
      %v2032 = vpop.f32.mrb[0].mxu0
      %v2033 = vadd.f32 %v1872, %v2032
      %v2034 = vpop.f32.mrb[0].mxu0
      %2035 = vdwg.mxu0
      %2036 = vst [vmem:[#allocation2] sm:$0xff] %v1910
      %2037 = vst [vmem:[#allocation2 + $0x8] sm:$0xff] %v1913
      %2038 = vst [vmem:[#allocation2 + $0x10] sm:$0xff] %v1918
      %2039 = vst [vmem:[#allocation2 + $0x18] sm:$0xff] %v1921
      %2040 = vst [vmem:[#allocation2 + $0x20] sm:$0xff] %v1926
      %2041 = vst [vmem:[#allocation2 + $0x28] sm:$0xff] %v1929
      %2042 = vst [vmem:[#allocation2 + $0x30] sm:$0xff] %v1934
      %2043 = vst [vmem:[#allocation2 + $0x38] sm:$0xff] %v1937
      %2044 = vst [vmem:[#allocation2 + $0x40] sm:$0xff] %v1942
      %2045 = vst [vmem:[#allocation2 + $0x48] sm:$0xff] %v1945
      %2046 = vst [vmem:[#allocation2 + $0x50] sm:$0xff] %v1950
      %2047 = vst [vmem:[#allocation2 + $0x58] sm:$0xff] %v1953
      %2048 = vst [vmem:[#allocation2 + $0x60] sm:$0xff] %v1958
      %2049 = vst [vmem:[#allocation2 + $0x68] sm:$0xff] %v1961
      %2050 = vst [vmem:[#allocation2 + $0x70] sm:$0xff] %v1966
      %2051 = vst [vmem:[#allocation2 + $0x78] sm:$0xff] %v1969
      %2052 = vst [vmem:[#allocation2 + $0x80] sm:$0xff] %v1974
      %2053 = vst [vmem:[#allocation2 + $0x88] sm:$0xff] %v1977
      %2054 = vst [vmem:[#allocation2 + $0x90] sm:$0xff] %v1982
      %2055 = vst [vmem:[#allocation2 + $0x98] sm:$0xff] %v1985
      %2056 = vst [vmem:[#allocation2 + $0xa0] sm:$0xff] %v1990
      %2057 = vst [vmem:[#allocation2 + $0xa8] sm:$0xff] %v1993
      %2058 = vst [vmem:[#allocation2 + $0xb0] sm:$0xff] %v1998
      %2059 = vst [vmem:[#allocation2 + $0xb8] sm:$0xff] %v2001
      %2060 = vst [vmem:[#allocation2 + $0xc0] sm:$0xff] %v2006
      %2061 = vst [vmem:[#allocation2 + $0xc8] sm:$0xff] %v2009
      %2062 = vst [vmem:[#allocation2 + $0xd0] sm:$0xff] %v2014
      %2063 = vst [vmem:[#allocation2 + $0xd8] sm:$0xff] %v2017
      %2064 = vst [vmem:[#allocation2 + $0xe0] sm:$0xff] %v2022
      %2065 = vst [vmem:[#allocation2 + $0xe8] sm:$0xff] %v2025
      %2066 = vst [vmem:[#allocation2 + $0xf0] sm:$0xff] %v2030
      %2067 = vst [vmem:[#allocation2 + $0xf8] sm:$0xff] %v2033
      %v2068 = vld [vmem:[%s206 + $0xe0] sm:$0xff]
      %v2069 = vld [vmem:[%s206 + $0xe8] sm:$0xff]
      %v2070 = vld [vmem:[%s206 + $0xf0] sm:$0xff]
      %v2071 = vld [vmem:[%s206 + $0xf8] sm:$0xf]
      %v2072 = vld [vmem:[%s206 + $0xfc] sm:$0xff]
      %v2073 = vld [vmem:[%s206 + $0x104] sm:$0xff]
      %v2074 = vld [vmem:[%s206 + $0x10c] sm:$0xff]
      %v2075 = vld [vmem:[%s206 + $0x114] sm:$0xf]
      %v2076 = vld [vmem:[%s206 + $0x118] sm:$0xff]
      %v2077 = vld [vmem:[%s206 + $0x120] sm:$0xff]
      %v2078 = vld [vmem:[%s206 + $0x128] sm:$0xff]
      %v2079 = vld [vmem:[%s206 + $0x130] sm:$0xf]
      %v2080 = vld [vmem:[%s206 + $0x134] sm:$0xff]
      %v2081 = vld [vmem:[%s206 + $0x13c] sm:$0xff]
      %v2082 = vld [vmem:[%s206 + $0x144] sm:$0xff]
      %v2083 = vld [vmem:[%s206 + $0x14c] sm:$0xf]
      %v2084 = vld [vmem:[%s206 + $0x150] sm:$0xff]
      %v2085 = vld [vmem:[%s206 + $0x158] sm:$0xff]
      %v2086 = vld [vmem:[%s206 + $0x160] sm:$0xff]
      %v2087 = vld [vmem:[%s206 + $0x168] sm:$0xf]
      %v2088 = vld [vmem:[%s206 + $0x16c] sm:$0xff]
      %v2089 = vld [vmem:[%s206 + $0x174] sm:$0xff]
      %v2090 = vld [vmem:[%s206 + $0x17c] sm:$0xff]
      %v2091 = vld [vmem:[%s206 + $0x184] sm:$0xf]
      %v2092 = vld [vmem:[%s206 + $0x188] sm:$0xff]
      %v2093 = vld [vmem:[%s206 + $0x190] sm:$0xff]
      %v2094 = vld [vmem:[%s206 + $0x198] sm:$0xff]
      %v2095 = vld [vmem:[%s206 + $0x1a0] sm:$0xf]
      %v2096 = vld [vmem:[%s206 + $0x1a4] sm:$0xff]
      %v2097 = vld [vmem:[%s206 + $0x1ac] sm:$0xff]
      %v2098 = vld [vmem:[%s206 + $0x1b4] sm:$0xff]
      %v2099 = vld [vmem:[%s206 + $0x1bc] sm:$0xf]
      %v2100 = vld [vmem:[%s206 + $0x1c0] sm:$0xff]
      %v2101 = vld [vmem:[%s206 + $0x1c8] sm:$0xff]
      %v2102 = vld [vmem:[%s206 + $0x1d0] sm:$0xff]
      %v2103 = vld [vmem:[%s206 + $0x1d8] sm:$0xf]
      %v2104 = vld [vmem:[%s206 + $0x1dc] sm:$0xff]
      %v2105 = vld [vmem:[%s206 + $0x1e4] sm:$0xff]
      %v2106 = vld [vmem:[%s206 + $0x1ec] sm:$0xff]
      %v2107 = vld [vmem:[%s206 + $0x1f4] sm:$0xf]
      %v2108 = vld [vmem:[%s206 + $0x1f8] sm:$0xff]
      %v2109 = vld [vmem:[%s206 + $0x200] sm:$0xff]
      %v2110 = vld [vmem:[%s206 + $0x208] sm:$0xff]
      %v2111 = vld [vmem:[%s206 + $0x210] sm:$0xf]
      %v2112 = vld [vmem:[%s206 + $0x214] sm:$0xff]
      %v2113 = vld [vmem:[%s206 + $0x21c] sm:$0xff]
      %v2114 = vld [vmem:[%s206 + $0x224] sm:$0xff]
      %v2115 = vld [vmem:[%s206 + $0x22c] sm:$0xf]
      %v2116 = vld [vmem:[%s206 + $0x230] sm:$0xff]
      %v2117 = vld [vmem:[%s206 + $0x238] sm:$0xff]
      %v2118 = vld [vmem:[%s206 + $0x240] sm:$0xff]
      %v2119 = vld [vmem:[%s206 + $0x248] sm:$0xf]
      %v2120 = vld [vmem:[%s206 + $0x24c] sm:$0xff]
      %v2121 = vld [vmem:[%s206 + $0x254] sm:$0xff]
      %v2122 = vld [vmem:[%s206 + $0x25c] sm:$0xff]
      %v2123 = vld [vmem:[%s206 + $0x264] sm:$0xf]
      %v2124 = vld [vmem:[%s206 + $0x268] sm:$0xff]
      %v2125 = vld [vmem:[%s206 + $0x270] sm:$0xff]
      %v2126 = vld [vmem:[%s206 + $0x278] sm:$0xff]
      %v2127 = vld [vmem:[%s206 + $0x280] sm:$0xf]
      %v2128 = vld [vmem:[%s206 + $0x284] sm:$0xff]
      %v2129 = vld [vmem:[%s206 + $0x28c] sm:$0xff]
      %v2130 = vld [vmem:[%s206 + $0x294] sm:$0xff]
      %v2131 = vld [vmem:[%s206 + $0x29c] sm:$0xf]
      %v2132 = vld [vmem:[%s206 + $0x2a0] sm:$0xff]
      %v2133 = vld [vmem:[%s206 + $0x2a8] sm:$0xff]
      %v2134 = vld [vmem:[%s206 + $0x2b0] sm:$0xff]
      %v2135 = vld [vmem:[%s206 + $0x2b8] sm:$0xf]
      %v2136 = vld [vmem:[%s206 + $0x2bc] sm:$0xff]
      %v2137 = vld [vmem:[%s206 + $0x2c4] sm:$0xff]
      %v2138 = vld [vmem:[%s206 + $0x2cc] sm:$0xff]
      %v2139 = vld [vmem:[%s206 + $0x2d4] sm:$0xf]
      %v2140 = vld [vmem:[%s206 + $0x2d8] sm:$0xff]
      %v2141 = vld [vmem:[%s206 + $0x2e0] sm:$0xff]
      %v2142 = vld [vmem:[%s206 + $0x2e8] sm:$0xff]
      %v2143 = vld [vmem:[%s206 + $0x2f0] sm:$0xf]
      %v2144 = vld [vmem:[%s206 + $0x2f4] sm:$0xff]
      %v2145 = vld [vmem:[%s206 + $0x2fc] sm:$0xff]
      %v2146 = vld [vmem:[%s206 + $0x304] sm:$0xff]
      %v2147 = vld [vmem:[%s206 + $0x30c] sm:$0xf]
      %v2148 = vld [vmem:[%s206 + $0x310] sm:$0xff]
      %v2149 = vld [vmem:[%s206 + $0x318] sm:$0xff]
      %v2150 = vld [vmem:[%s206 + $0x320] sm:$0xff]
      %v2151 = vld [vmem:[%s206 + $0x328] sm:$0xf]
      %v2152 = vld [vmem:[%s206 + $0x32c] sm:$0xff]
      %v2153 = vld [vmem:[%s206 + $0x334] sm:$0xff]
      %v2154 = vld [vmem:[%s206 + $0x33c] sm:$0xff]
      %v2155 = vld [vmem:[%s206 + $0x344] sm:$0xf]
      %v2156 = vld [vmem:[%s206 + $0x348] sm:$0xff]
      %v2157 = vld [vmem:[%s206 + $0x350] sm:$0xff]
      %v2158 = vld [vmem:[%s206 + $0x358] sm:$0xff]
      %v2159 = vld [vmem:[%s206 + $0x360] sm:$0xf]
      %v2160 = vld [vmem:[%s206 + $0x364] sm:$0xff]
      %v2161 = vld [vmem:[%s206 + $0x36c] sm:$0xff]
      %v2162 = vld [vmem:[%s206 + $0x374] sm:$0xff]
      %v2163 = vld [vmem:[%s206 + $0x37c] sm:$0xf]
      %v2164 = vld [vmem:[%s206 + $0x380] sm:$0xff]
      %v2165 = vld [vmem:[%s206 + $0x388] sm:$0xff]
      %v2166 = vld [vmem:[%s206 + $0x390] sm:$0xff]
      %v2167 = vld [vmem:[%s206 + $0x398] sm:$0xf]
      %v2168 = vld [vmem:[%s206 + $0x39c] sm:$0xff]
      %v2169 = vld [vmem:[%s206 + $0x3a4] sm:$0xff]
      %v2170 = vld [vmem:[%s206 + $0x3ac] sm:$0xff]
      %v2171 = vld [vmem:[%s206 + $0x3b4] sm:$0xf]
      %v2172 = vld [vmem:[%s206 + $0x3b8] sm:$0xff]
      %v2173 = vld [vmem:[%s206 + $0x3c0] sm:$0xff]
      %v2174 = vld [vmem:[%s206 + $0x3c8] sm:$0xff]
      %v2175 = vld [vmem:[%s206 + $0x3d0] sm:$0xf]
      %v2176 = vld [vmem:[%s206 + $0x3d4] sm:$0xff]
      %v2177 = vld [vmem:[%s206 + $0x3dc] sm:$0xff]
      %v2178 = vld [vmem:[%s206 + $0x3e4] sm:$0xff]
      %v2179 = vld [vmem:[%s206 + $0x3ec] sm:$0xf]
      %v2180 = vld [vmem:[%s206 + $0x3f0] sm:$0xff]
      %v2181 = vld [vmem:[%s206 + $0x3f8] sm:$0xff]
      %v2182 = vld [vmem:[%s206 + $0x400] sm:$0xff]
      %v2183 = vld [vmem:[%s206 + $0x408] sm:$0xf]
      %v2184 = vld [vmem:[%s206 + $0x40c] sm:$0xff]
      %v2185 = vld [vmem:[%s206 + $0x414] sm:$0xff]
      %v2186 = vld [vmem:[%s206 + $0x41c] sm:$0xff]
      %v2187 = vld [vmem:[%s206 + $0x424] sm:$0xf]
      %v2188 = vld [vmem:[%s206 + $0x428] sm:$0xff]
      %v2189 = vld [vmem:[%s206 + $0x430] sm:$0xff]
      %v2190 = vld [vmem:[%s206 + $0x438] sm:$0xff]
      %v2191 = vld [vmem:[%s206 + $0x440] sm:$0xf]
      %v2192 = vld [vmem:[%s206 + $0x444] sm:$0xff]
      %v2193 = vld [vmem:[%s206 + $0x44c] sm:$0xff]
      %v2194 = vld [vmem:[%s206 + $0x454] sm:$0xff]
      %v2195 = vld [vmem:[%s206 + $0x45c] sm:$0xf]
      %s2196 = scalar_lea.vmem %s210, 432
      %v2197 = vld [vmem:[%s2196] sm:$0xf]
      %v2198 = vld [vmem:[%s2196 + $0x4] sm:$0xf]
      %v2199 = vld [vmem:[%s2196 + $0x8] sm:$0xf]
      %v2200 = vld [vmem:[%s2196 + $0xc] sm:$0xf]
      %v2201 = vld [vmem:[%s2196 + $0x10] sm:$0xf]
      %v2202 = vld [vmem:[%s2196 + $0x14] sm:$0xf]
      %v2203 = vld [vmem:[%s2196 + $0x18] sm:$0xf]
      %v2204 = vld [vmem:[%s2196 + $0x1c] sm:$0xf]
      %v2205 = vld [vmem:[%s2196 + $0x20] sm:$0xf]
      %v2206 = vld [vmem:[%s2196 + $0x24] sm:$0xf]
      %v2207 = vld [vmem:[%s2196 + $0x28] sm:$0xf]
      %v2208 = vld [vmem:[%s2196 + $0x2c] sm:$0xf]
      %v2209 = vld [vmem:[%s2196 + $0x30] sm:$0xf]
      %v2210 = vld [vmem:[%s2196 + $0x34] sm:$0xf]
      %v2211 = vld [vmem:[%s2196 + $0x38] sm:$0xf]
      %v2212 = vld [vmem:[%s2196 + $0x3c] sm:$0xf]
      %v2213 = vld [vmem:[%s2196 + $0x40] sm:$0xf]
      %v2214 = vld [vmem:[%s2196 + $0x44] sm:$0xf]
      %v2215 = vld [vmem:[%s2196 + $0x48] sm:$0xf]
      %v2216 = vld [vmem:[%s2196 + $0x4c] sm:$0xf]
      %v2217 = vld [vmem:[%s2196 + $0x50] sm:$0xf]
      %v2218 = vld [vmem:[%s2196 + $0x54] sm:$0xf]
      %v2219 = vld [vmem:[%s2196 + $0x58] sm:$0xf]
      %v2220 = vld [vmem:[%s2196 + $0x5c] sm:$0xf]
      %v2221 = vld [vmem:[%s2196 + $0x60] sm:$0xf]
      %v2222 = vld [vmem:[%s2196 + $0x64] sm:$0xf]
      %v2223 = vld [vmem:[%s2196 + $0x68] sm:$0xf]
      %v2224 = vld [vmem:[%s2196 + $0x6c] sm:$0xf]
      %v2225 = vld [vmem:[%s2196 + $0x70] sm:$0xf]
      %v2226 = vld [vmem:[%s2196 + $0x74] sm:$0xf]
      %v2227 = vld [vmem:[%s2196 + $0x78] sm:$0xf]
      %v2228 = vld [vmem:[%s2196 + $0x7c] sm:$0xf]
      %v2229 = vld [vmem:[%s2196 + $0x80] sm:$0xf]
      %v2230 = vld [vmem:[%s2196 + $0x84] sm:$0xf]
      %v2231 = vld [vmem:[%s2196 + $0x88] sm:$0xf]
      %v2232 = vld [vmem:[%s2196 + $0x8c] sm:$0xf]
      %v2233 = vld [vmem:[%s2196 + $0x90] sm:$0xf]
      %v2234 = vld [vmem:[%s2196 + $0x94] sm:$0xf]
      %v2235 = vld [vmem:[%s2196 + $0x98] sm:$0xf]
      %v2236 = vld [vmem:[%s2196 + $0x9c] sm:$0xf]
      %v2237 = vld [vmem:[%s2196 + $0xa0] sm:$0xf]
      %v2238 = vld [vmem:[%s2196 + $0xa4] sm:$0xf]
      %v2239 = vld [vmem:[%s2196 + $0xa8] sm:$0xf]
      %v2240 = vld [vmem:[%s2196 + $0xac] sm:$0xf]
      %v2241 = vld [vmem:[%s2196 + $0xb0] sm:$0xf]
      %v2242 = vld [vmem:[%s2196 + $0xb4] sm:$0xf]
      %v2243 = vld [vmem:[%s2196 + $0xb8] sm:$0xf]
      %v2244 = vld [vmem:[%s2196 + $0xbc] sm:$0xf]
      %v2245 = vld [vmem:[%s2196 + $0xc0] sm:$0xf]
      %v2246 = vld [vmem:[%s2196 + $0xc4] sm:$0xf]
      %v2247 = vld [vmem:[%s2196 + $0xc8] sm:$0xf]
      %v2248 = vld [vmem:[%s2196 + $0xcc] sm:$0xf]
      %v2249 = vld [vmem:[%s2196 + $0xd0] sm:$0xf]
      %v2250 = vld [vmem:[%s2196 + $0xd4] sm:$0xf]
      %v2251 = vld [vmem:[%s2196 + $0xd8] sm:$0xf]
      %v2252 = vld [vmem:[%s2196 + $0xdc] sm:$0xf]
      %v2253 = vld [vmem:[%s2196 + $0xe0] sm:$0xf]
      %v2254 = vld [vmem:[%s2196 + $0xe4] sm:$0xf]
      %v2255 = vld [vmem:[%s2196 + $0xe8] sm:$0xf]
      %v2256 = vld [vmem:[%s2196 + $0xec] sm:$0xf]
      %v2257 = vld [vmem:[%s2196 + $0xf0] sm:$0xf]
      %v2258 = vld [vmem:[%s2196 + $0xf4] sm:$0xf]
      %v2259 = vld [vmem:[%s2196 + $0xf8] sm:$0xf]
      %v2260 = vld [vmem:[%s2196 + $0xfc] sm:$0xf]
      %v2261 = vld [vmem:[%s2196 + $0x100] sm:$0xf]
      %v2262 = vld [vmem:[%s2196 + $0x104] sm:$0xf]
      %v2263 = vld [vmem:[%s2196 + $0x108] sm:$0xf]
      %v2264 = vld [vmem:[%s2196 + $0x10c] sm:$0xf]
      %v2265 = vld [vmem:[%s2196 + $0x110] sm:$0xf]
      %v2266 = vld [vmem:[%s2196 + $0x114] sm:$0xf]
      %v2267 = vld [vmem:[%s2196 + $0x118] sm:$0xf]
      %v2268 = vld [vmem:[%s2196 + $0x11c] sm:$0xf]
      %v2269 = vld [vmem:[%s2196 + $0x120] sm:$0xf]
      %v2270 = vld [vmem:[%s2196 + $0x124] sm:$0xf]
      %v2271 = vld [vmem:[%s2196 + $0x128] sm:$0xf]
      %v2272 = vld [vmem:[%s2196 + $0x12c] sm:$0xf]
      %v2273 = vld [vmem:[%s2196 + $0x130] sm:$0xf]
      %v2274 = vld [vmem:[%s2196 + $0x134] sm:$0xf]
      %v2275 = vld [vmem:[%s2196 + $0x138] sm:$0xf]
      %v2276 = vld [vmem:[%s2196 + $0x13c] sm:$0xf]
      %v2277 = vld [vmem:[%s2196 + $0x140] sm:$0xf]
      %v2278 = vld [vmem:[%s2196 + $0x144] sm:$0xf]
      %v2279 = vld [vmem:[%s2196 + $0x148] sm:$0xf]
      %v2280 = vld [vmem:[%s2196 + $0x14c] sm:$0xf]
      %v2281 = vld [vmem:[%s2196 + $0x150] sm:$0xf]
      %v2282 = vld [vmem:[%s2196 + $0x154] sm:$0xf]
      %v2283 = vld [vmem:[%s2196 + $0x158] sm:$0xf]
      %v2284 = vld [vmem:[%s2196 + $0x15c] sm:$0xf]
      %v2285 = vld [vmem:[%s2196 + $0x160] sm:$0xf]
      %v2286 = vld [vmem:[%s2196 + $0x164] sm:$0xf]
      %v2287 = vld [vmem:[%s2196 + $0x168] sm:$0xf]
      %v2288 = vld [vmem:[%s2196 + $0x16c] sm:$0xf]
      %v2289 = vld [vmem:[%s2196 + $0x170] sm:$0xf]
      %v2290 = vld [vmem:[%s2196 + $0x174] sm:$0xf]
      %v2291 = vld [vmem:[%s2196 + $0x178] sm:$0xf]
      %v2292 = vld [vmem:[%s2196 + $0x17c] sm:$0xf]
      %v2293 = vld [vmem:[%s2196 + $0x180] sm:$0xf]
      %v2294 = vld [vmem:[%s2196 + $0x184] sm:$0xf]
      %v2295 = vld [vmem:[%s2196 + $0x188] sm:$0xf]
      %v2296 = vld [vmem:[%s2196 + $0x18c] sm:$0xf]
      %v2297 = vld [vmem:[%s2196 + $0x190] sm:$0xf]
      %v2298 = vld [vmem:[%s2196 + $0x194] sm:$0xf]
      %v2299 = vld [vmem:[%s2196 + $0x198] sm:$0xf]
      %v2300 = vld [vmem:[%s2196 + $0x19c] sm:$0xf]
      %v2301 = vld [vmem:[%s2196 + $0x1a0] sm:$0xf]
      %v2302 = vld [vmem:[%s2196 + $0x1a4] sm:$0xf]
      %v2303 = vld [vmem:[%s2196 + $0x1a8] sm:$0xf]
      %v2304 = vld [vmem:[%s2196 + $0x1ac] sm:$0xf]
      %v2433 = vunpack.c.l.b16 %v2068
      %v2434 = vunpack.c.h.b16 %v2068
      %v2435 = vunpack.c.l.b16 %v2069
      %v2436 = vunpack.c.h.b16 %v2069
      %v2437 = vunpack.c.l.b16 %v2070
      %v2438 = vunpack.c.h.b16 %v2070
      %v2439 = vunpack.c.l.b16 %v2071
      %v2440 = vunpack.c.l.b16 %v2072
      %v2441 = vunpack.c.h.b16 %v2072
      %v2442 = vunpack.c.l.b16 %v2073
      %v2443 = vunpack.c.h.b16 %v2073
      %v2444 = vunpack.c.l.b16 %v2074
      %v2445 = vunpack.c.h.b16 %v2074
      %v2446 = vunpack.c.l.b16 %v2075
      %v2447 = vunpack.c.l.b16 %v2076
      %v2448 = vunpack.c.h.b16 %v2076
      %v2449 = vunpack.c.l.b16 %v2077
      %v2450 = vunpack.c.h.b16 %v2077
      %v2451 = vunpack.c.l.b16 %v2078
      %v2452 = vunpack.c.h.b16 %v2078
      %v2453 = vunpack.c.l.b16 %v2079
      %v2454 = vunpack.c.l.b16 %v2080
      %v2455 = vunpack.c.h.b16 %v2080
      %v2456 = vunpack.c.l.b16 %v2081
      %v2457 = vunpack.c.h.b16 %v2081
      %v2458 = vunpack.c.l.b16 %v2082
      %v2459 = vunpack.c.h.b16 %v2082
      %v2460 = vunpack.c.l.b16 %v2083
      %v2461 = vunpack.c.l.b16 %v2084
      %v2462 = vunpack.c.h.b16 %v2084
      %v2463 = vunpack.c.l.b16 %v2085
      %v2464 = vunpack.c.h.b16 %v2085
      %v2465 = vunpack.c.l.b16 %v2086
      %v2466 = vunpack.c.h.b16 %v2086
      %v2467 = vunpack.c.l.b16 %v2087
      %v2468 = vunpack.c.l.b16 %v2088
      %v2469 = vunpack.c.h.b16 %v2088
      %v2470 = vunpack.c.l.b16 %v2089
      %v2471 = vunpack.c.h.b16 %v2089
      %v2472 = vunpack.c.l.b16 %v2090
      %v2473 = vunpack.c.h.b16 %v2090
      %v2474 = vunpack.c.l.b16 %v2091
      %v2475 = vunpack.c.l.b16 %v2092
      %v2476 = vunpack.c.h.b16 %v2092
      %v2477 = vunpack.c.l.b16 %v2093
      %v2478 = vunpack.c.h.b16 %v2093
      %v2479 = vunpack.c.l.b16 %v2094
      %v2480 = vunpack.c.h.b16 %v2094
      %v2481 = vunpack.c.l.b16 %v2095
      %v2482 = vunpack.c.l.b16 %v2096
      %v2483 = vunpack.c.h.b16 %v2096
      %v2484 = vunpack.c.l.b16 %v2097
      %v2485 = vunpack.c.h.b16 %v2097
      %v2486 = vunpack.c.l.b16 %v2098
      %v2487 = vunpack.c.h.b16 %v2098
      %v2488 = vunpack.c.l.b16 %v2099
      %v2489 = vunpack.c.l.b16 %v2100
      %v2490 = vunpack.c.h.b16 %v2100
      %v2491 = vunpack.c.l.b16 %v2101
      %v2492 = vunpack.c.h.b16 %v2101
      %v2493 = vunpack.c.l.b16 %v2102
      %v2494 = vunpack.c.h.b16 %v2102
      %v2495 = vunpack.c.l.b16 %v2103
      %v2496 = vunpack.c.l.b16 %v2104
      %v2497 = vunpack.c.h.b16 %v2104
      %v2498 = vunpack.c.l.b16 %v2105
      %v2499 = vunpack.c.h.b16 %v2105
      %v2500 = vunpack.c.l.b16 %v2106
      %v2501 = vunpack.c.h.b16 %v2106
      %v2502 = vunpack.c.l.b16 %v2107
      %v2503 = vunpack.c.l.b16 %v2108
      %v2504 = vunpack.c.h.b16 %v2108
      %v2505 = vunpack.c.l.b16 %v2109
      %v2506 = vunpack.c.h.b16 %v2109
      %v2507 = vunpack.c.l.b16 %v2110
      %v2508 = vunpack.c.h.b16 %v2110
      %v2509 = vunpack.c.l.b16 %v2111
      %v2510 = vunpack.c.l.b16 %v2112
      %v2511 = vunpack.c.h.b16 %v2112
      %v2512 = vunpack.c.l.b16 %v2113
      %v2513 = vunpack.c.h.b16 %v2113
      %v2514 = vunpack.c.l.b16 %v2114
      %v2515 = vunpack.c.h.b16 %v2114
      %v2516 = vunpack.c.l.b16 %v2115
      %v2517 = vunpack.c.l.b16 %v2116
      %v2518 = vunpack.c.h.b16 %v2116
      %v2519 = vunpack.c.l.b16 %v2117
      %v2520 = vunpack.c.h.b16 %v2117
      %v2521 = vunpack.c.l.b16 %v2118
      %v2522 = vunpack.c.h.b16 %v2118
      %v2523 = vunpack.c.l.b16 %v2119
      %v2524 = vunpack.c.l.b16 %v2120
      %v2525 = vunpack.c.h.b16 %v2120
      %v2526 = vunpack.c.l.b16 %v2121
      %v2527 = vunpack.c.h.b16 %v2121
      %v2528 = vunpack.c.l.b16 %v2122
      %v2529 = vunpack.c.h.b16 %v2122
      %v2530 = vunpack.c.l.b16 %v2123
      %v2531 = vunpack.c.l.b16 %v2124
      %v2532 = vunpack.c.h.b16 %v2124
      %v2533 = vunpack.c.l.b16 %v2125
      %v2534 = vunpack.c.h.b16 %v2125
      %v2535 = vunpack.c.l.b16 %v2126
      %v2536 = vunpack.c.h.b16 %v2126
      %v2537 = vunpack.c.l.b16 %v2127
      %v2538 = vunpack.c.l.b16 %v2128
      %v2539 = vunpack.c.h.b16 %v2128
      %v2540 = vunpack.c.l.b16 %v2129
      %v2541 = vunpack.c.h.b16 %v2129
      %v2542 = vunpack.c.l.b16 %v2130
      %v2543 = vunpack.c.h.b16 %v2130
      %v2544 = vunpack.c.l.b16 %v2131
      %v2545 = vunpack.c.l.b16 %v2132
      %v2546 = vunpack.c.h.b16 %v2132
      %v2547 = vunpack.c.l.b16 %v2133
      %v2548 = vunpack.c.h.b16 %v2133
      %v2549 = vunpack.c.l.b16 %v2134
      %v2550 = vunpack.c.h.b16 %v2134
      %v2551 = vunpack.c.l.b16 %v2135
      %v2552 = vunpack.c.l.b16 %v2136
      %v2553 = vunpack.c.h.b16 %v2136
      %v2554 = vunpack.c.l.b16 %v2137
      %v2555 = vunpack.c.h.b16 %v2137
      %v2556 = vunpack.c.l.b16 %v2138
      %v2557 = vunpack.c.h.b16 %v2138
      %v2558 = vunpack.c.l.b16 %v2139
      %v2559 = vunpack.c.l.b16 %v2140
      %v2560 = vunpack.c.h.b16 %v2140
      %v2561 = vunpack.c.l.b16 %v2141
      %v2562 = vunpack.c.h.b16 %v2141
      %v2563 = vunpack.c.l.b16 %v2142
      %v2564 = vunpack.c.h.b16 %v2142
      %v2565 = vunpack.c.l.b16 %v2143
      %v2566 = vunpack.c.l.b16 %v2144
      %v2567 = vunpack.c.h.b16 %v2144
      %v2568 = vunpack.c.l.b16 %v2145
      %v2569 = vunpack.c.h.b16 %v2145
      %v2570 = vunpack.c.l.b16 %v2146
      %v2571 = vunpack.c.h.b16 %v2146
      %v2572 = vunpack.c.l.b16 %v2147
      %v2573 = vunpack.c.l.b16 %v2148
      %v2574 = vunpack.c.h.b16 %v2148
      %v2575 = vunpack.c.l.b16 %v2149
      %v2576 = vunpack.c.h.b16 %v2149
      %v2577 = vunpack.c.l.b16 %v2150
      %v2578 = vunpack.c.h.b16 %v2150
      %v2579 = vunpack.c.l.b16 %v2151
      %v2580 = vunpack.c.l.b16 %v2152
      %v2581 = vunpack.c.h.b16 %v2152
      %v2582 = vunpack.c.l.b16 %v2153
      %v2583 = vunpack.c.h.b16 %v2153
      %v2584 = vunpack.c.l.b16 %v2154
      %v2585 = vunpack.c.h.b16 %v2154
      %v2586 = vunpack.c.l.b16 %v2155
      %v2587 = vunpack.c.l.b16 %v2156
      %v2588 = vunpack.c.h.b16 %v2156
      %v2589 = vunpack.c.l.b16 %v2157
      %v2590 = vunpack.c.h.b16 %v2157
      %v2591 = vunpack.c.l.b16 %v2158
      %v2592 = vunpack.c.h.b16 %v2158
      %v2593 = vunpack.c.l.b16 %v2159
      %v2594 = vunpack.c.l.b16 %v2160
      %v2595 = vunpack.c.h.b16 %v2160
      %v2596 = vunpack.c.l.b16 %v2161
      %v2597 = vunpack.c.h.b16 %v2161
      %v2598 = vunpack.c.l.b16 %v2162
      %v2599 = vunpack.c.h.b16 %v2162
      %v2600 = vunpack.c.l.b16 %v2163
      %v2601 = vunpack.c.l.b16 %v2164
      %v2602 = vunpack.c.h.b16 %v2164
      %v2603 = vunpack.c.l.b16 %v2165
      %v2604 = vunpack.c.h.b16 %v2165
      %v2605 = vunpack.c.l.b16 %v2166
      %v2606 = vunpack.c.h.b16 %v2166
      %v2607 = vunpack.c.l.b16 %v2167
      %v2608 = vunpack.c.l.b16 %v2168
      %v2609 = vunpack.c.h.b16 %v2168
      %v2610 = vunpack.c.l.b16 %v2169
      %v2611 = vunpack.c.h.b16 %v2169
      %v2612 = vunpack.c.l.b16 %v2170
      %v2613 = vunpack.c.h.b16 %v2170
      %v2614 = vunpack.c.l.b16 %v2171
      %v2615 = vunpack.c.l.b16 %v2172
      %v2616 = vunpack.c.h.b16 %v2172
      %v2617 = vunpack.c.l.b16 %v2173
      %v2618 = vunpack.c.h.b16 %v2173
      %v2619 = vunpack.c.l.b16 %v2174
      %v2620 = vunpack.c.h.b16 %v2174
      %v2621 = vunpack.c.l.b16 %v2175
      %v2622 = vunpack.c.l.b16 %v2176
      %v2623 = vunpack.c.h.b16 %v2176
      %v2624 = vunpack.c.l.b16 %v2177
      %v2625 = vunpack.c.h.b16 %v2177
      %v2626 = vunpack.c.l.b16 %v2178
      %v2627 = vunpack.c.h.b16 %v2178
      %v2628 = vunpack.c.l.b16 %v2179
      %v2629 = vunpack.c.l.b16 %v2180
      %v2630 = vunpack.c.h.b16 %v2180
      %v2631 = vunpack.c.l.b16 %v2181
      %v2632 = vunpack.c.h.b16 %v2181
      %v2633 = vunpack.c.l.b16 %v2182
      %v2634 = vunpack.c.h.b16 %v2182
      %v2635 = vunpack.c.l.b16 %v2183
      %v2636 = vunpack.c.l.b16 %v2184
      %v2637 = vunpack.c.h.b16 %v2184
      %v2638 = vunpack.c.l.b16 %v2185
      %v2639 = vunpack.c.h.b16 %v2185
      %v2640 = vunpack.c.l.b16 %v2186
      %v2641 = vunpack.c.h.b16 %v2186
      %v2642 = vunpack.c.l.b16 %v2187
      %v2643 = vunpack.c.l.b16 %v2188
      %v2644 = vunpack.c.h.b16 %v2188
      %v2645 = vunpack.c.l.b16 %v2189
      %v2646 = vunpack.c.h.b16 %v2189
      %v2647 = vunpack.c.l.b16 %v2190
      %v2648 = vunpack.c.h.b16 %v2190
      %v2649 = vunpack.c.l.b16 %v2191
      %v2650 = vunpack.c.l.b16 %v2192
      %v2651 = vunpack.c.h.b16 %v2192
      %v2652 = vunpack.c.l.b16 %v2193
      %v2653 = vunpack.c.h.b16 %v2193
      %v2654 = vunpack.c.l.b16 %v2194
      %v2655 = vunpack.c.h.b16 %v2194
      %v2656 = vunpack.c.l.b16 %v2195
      %v2657 = vpack.c.b16 %v2440, %v2433
      %v2658 = vpack.c.b16 %v2441, %v2434
      %v2659 = vpack.c.b16 %v2442, %v2435
      %v2660 = vpack.c.b16 %v2443, %v2436
      %v2661 = vpack.c.b16 %v2444, %v2437
      %v2662 = vpack.c.b16 %v2445, %v2438
      %v2663 = vpack.c.b16 %v2446, %v2439
      %v2664 = vpack.c.b16 %v2454, %v2447
      %v2665 = vpack.c.b16 %v2455, %v2448
      %v2666 = vpack.c.b16 %v2456, %v2449
      %v2667 = vpack.c.b16 %v2457, %v2450
      %v2668 = vpack.c.b16 %v2458, %v2451
      %v2669 = vpack.c.b16 %v2459, %v2452
      %v2670 = vpack.c.b16 %v2460, %v2453
      %v2671 = vpack.c.b16 %v2468, %v2461
      %v2672 = vpack.c.b16 %v2469, %v2462
      %v2673 = vpack.c.b16 %v2470, %v2463
      %v2674 = vpack.c.b16 %v2471, %v2464
      %v2675 = vpack.c.b16 %v2472, %v2465
      %v2676 = vpack.c.b16 %v2473, %v2466
      %v2677 = vpack.c.b16 %v2474, %v2467
      %v2678 = vpack.c.b16 %v2482, %v2475
      %v2679 = vpack.c.b16 %v2483, %v2476
      %v2680 = vpack.c.b16 %v2484, %v2477
      %v2681 = vpack.c.b16 %v2485, %v2478
      %v2682 = vpack.c.b16 %v2486, %v2479
      %v2683 = vpack.c.b16 %v2487, %v2480
      %v2684 = vpack.c.b16 %v2488, %v2481
      %v2685 = vpack.c.b16 %v2496, %v2489
      %v2686 = vpack.c.b16 %v2497, %v2490
      %v2687 = vpack.c.b16 %v2498, %v2491
      %v2688 = vpack.c.b16 %v2499, %v2492
      %v2689 = vpack.c.b16 %v2500, %v2493
      %v2690 = vpack.c.b16 %v2501, %v2494
      %v2691 = vpack.c.b16 %v2502, %v2495
      %v2692 = vpack.c.b16 %v2510, %v2503
      %v2693 = vpack.c.b16 %v2511, %v2504
      %v2694 = vpack.c.b16 %v2512, %v2505
      %v2695 = vpack.c.b16 %v2513, %v2506
      %v2696 = vpack.c.b16 %v2514, %v2507
      %v2697 = vpack.c.b16 %v2515, %v2508
      %v2698 = vpack.c.b16 %v2516, %v2509
      %v2699 = vpack.c.b16 %v2524, %v2517
      %v2700 = vpack.c.b16 %v2525, %v2518
      %v2701 = vpack.c.b16 %v2526, %v2519
      %v2702 = vpack.c.b16 %v2527, %v2520
      %v2703 = vpack.c.b16 %v2528, %v2521
      %v2704 = vpack.c.b16 %v2529, %v2522
      %v2705 = vpack.c.b16 %v2530, %v2523
      %v2706 = vpack.c.b16 %v2538, %v2531
      %v2707 = vpack.c.b16 %v2539, %v2532
      %v2708 = vpack.c.b16 %v2540, %v2533
      %v2709 = vpack.c.b16 %v2541, %v2534
      %v2710 = vpack.c.b16 %v2542, %v2535
      %v2711 = vpack.c.b16 %v2543, %v2536
      %v2712 = vpack.c.b16 %v2544, %v2537
      %v2713 = vpack.c.b16 %v2552, %v2545
      %v2714 = vpack.c.b16 %v2553, %v2546
      %v2715 = vpack.c.b16 %v2554, %v2547
      %v2716 = vpack.c.b16 %v2555, %v2548
      %v2717 = vpack.c.b16 %v2556, %v2549
      %v2718 = vpack.c.b16 %v2557, %v2550
      %v2719 = vpack.c.b16 %v2558, %v2551
      %v2720 = vpack.c.b16 %v2566, %v2559
      %v2721 = vpack.c.b16 %v2567, %v2560
      %v2722 = vpack.c.b16 %v2568, %v2561
      %v2723 = vpack.c.b16 %v2569, %v2562
      %v2724 = vpack.c.b16 %v2570, %v2563
      %v2725 = vpack.c.b16 %v2571, %v2564
      %v2726 = vpack.c.b16 %v2572, %v2565
      %v2727 = vpack.c.b16 %v2580, %v2573
      %v2728 = vpack.c.b16 %v2581, %v2574
      %v2729 = vpack.c.b16 %v2582, %v2575
      %v2730 = vpack.c.b16 %v2583, %v2576
      %v2731 = vpack.c.b16 %v2584, %v2577
      %v2732 = vpack.c.b16 %v2585, %v2578
      %v2733 = vpack.c.b16 %v2586, %v2579
      %v2734 = vpack.c.b16 %v2594, %v2587
      %v2735 = vpack.c.b16 %v2595, %v2588
      %v2736 = vpack.c.b16 %v2596, %v2589
      %v2737 = vpack.c.b16 %v2597, %v2590
      %v2738 = vpack.c.b16 %v2598, %v2591
      %v2739 = vpack.c.b16 %v2599, %v2592
      %v2740 = vpack.c.b16 %v2600, %v2593
      %v2741 = vpack.c.b16 %v2608, %v2601
      %v2742 = vpack.c.b16 %v2609, %v2602
      %v2743 = vpack.c.b16 %v2610, %v2603
      %v2744 = vpack.c.b16 %v2611, %v2604
      %v2745 = vpack.c.b16 %v2612, %v2605
      %v2746 = vpack.c.b16 %v2613, %v2606
      %v2747 = vpack.c.b16 %v2614, %v2607
      %v2748 = vpack.c.b16 %v2622, %v2615
      %v2749 = vpack.c.b16 %v2623, %v2616
      %v2750 = vpack.c.b16 %v2624, %v2617
      %v2751 = vpack.c.b16 %v2625, %v2618
      %v2752 = vpack.c.b16 %v2626, %v2619
      %v2753 = vpack.c.b16 %v2627, %v2620
      %v2754 = vpack.c.b16 %v2628, %v2621
      %v2755 = vpack.c.b16 %v2636, %v2629
      %v2756 = vpack.c.b16 %v2637, %v2630
      %v2757 = vpack.c.b16 %v2638, %v2631
      %v2758 = vpack.c.b16 %v2639, %v2632
      %v2759 = vpack.c.b16 %v2640, %v2633
      %v2760 = vpack.c.b16 %v2641, %v2634
      %v2761 = vpack.c.b16 %v2642, %v2635
      %v2762 = vpack.c.b16 %v2650, %v2643
      %v2763 = vpack.c.b16 %v2651, %v2644
      %v2764 = vpack.c.b16 %v2652, %v2645
      %v2765 = vpack.c.b16 %v2653, %v2646
      %v2766 = vpack.c.b16 %v2654, %v2647
      %v2767 = vpack.c.b16 %v2655, %v2648
      %v2768 = vpack.c.b16 %v2656, %v2649
      %v2973 = vunpack.c.l.b16 %v2197
      %v2974 = vunpack.c.l.b16 %v2198
      %v2975 = vunpack.c.l.b16 %v2199
      %v2976 = vunpack.c.l.b16 %v2200
      %v2977 = vunpack.c.l.b16 %v2201
      %v2978 = vunpack.c.l.b16 %v2202
      %v2979 = vunpack.c.l.b16 %v2203
      %v2980 = vunpack.c.l.b16 %v2204
      %v2981 = vunpack.c.l.b16 %v2205
      %v2982 = vunpack.c.l.b16 %v2206
      %v2983 = vunpack.c.l.b16 %v2207
      %v2984 = vunpack.c.l.b16 %v2208
      %v2985 = vunpack.c.l.b16 %v2209
      %v2986 = vunpack.c.l.b16 %v2210
      %v2987 = vunpack.c.l.b16 %v2211
      %v2988 = vunpack.c.l.b16 %v2212
      %v2989 = vunpack.c.l.b16 %v2213
      %v2990 = vunpack.c.l.b16 %v2214
      %v2991 = vunpack.c.l.b16 %v2215
      %v2992 = vunpack.c.l.b16 %v2216
      %v2993 = vunpack.c.l.b16 %v2217
      %v2994 = vunpack.c.l.b16 %v2218
      %v2995 = vunpack.c.l.b16 %v2219
      %v2996 = vunpack.c.l.b16 %v2220
      %v2997 = vunpack.c.l.b16 %v2221
      %v2998 = vunpack.c.l.b16 %v2222
      %v2999 = vunpack.c.l.b16 %v2223
      %v3000 = vunpack.c.l.b16 %v2224
      %v3001 = vunpack.c.l.b16 %v2225
      %v3002 = vunpack.c.l.b16 %v2226
      %v3003 = vunpack.c.l.b16 %v2227
      %v3004 = vunpack.c.l.b16 %v2228
      %v3005 = vunpack.c.l.b16 %v2229
      %v3006 = vunpack.c.l.b16 %v2230
      %v3007 = vunpack.c.l.b16 %v2231
      %v3008 = vunpack.c.l.b16 %v2232
      %v3009 = vunpack.c.l.b16 %v2233
      %v3010 = vunpack.c.l.b16 %v2234
      %v3011 = vunpack.c.l.b16 %v2235
      %v3012 = vunpack.c.l.b16 %v2236
      %v3013 = vunpack.c.l.b16 %v2237
      %v3014 = vunpack.c.l.b16 %v2238
      %v3015 = vunpack.c.l.b16 %v2239
      %v3016 = vunpack.c.l.b16 %v2240
      %v3017 = vunpack.c.l.b16 %v2241
      %v3018 = vunpack.c.l.b16 %v2242
      %v3019 = vunpack.c.l.b16 %v2243
      %v3020 = vunpack.c.l.b16 %v2244
      %v3021 = vunpack.c.l.b16 %v2245
      %v3022 = vunpack.c.l.b16 %v2246
      %v3023 = vunpack.c.l.b16 %v2247
      %v3024 = vunpack.c.l.b16 %v2248
      %v3025 = vunpack.c.l.b16 %v2249
      %v3026 = vunpack.c.l.b16 %v2250
      %v3027 = vunpack.c.l.b16 %v2251
      %v3028 = vunpack.c.l.b16 %v2252
      %v3029 = vunpack.c.l.b16 %v2253
      %v3030 = vunpack.c.l.b16 %v2254
      %v3031 = vunpack.c.l.b16 %v2255
      %v3032 = vunpack.c.l.b16 %v2256
      %v3033 = vunpack.c.l.b16 %v2257
      %v3034 = vunpack.c.l.b16 %v2258
      %v3035 = vunpack.c.l.b16 %v2259
      %v3036 = vunpack.c.l.b16 %v2260
      %v3037 = vunpack.c.l.b16 %v2261
      %v3038 = vunpack.c.l.b16 %v2262
      %v3039 = vunpack.c.l.b16 %v2263
      %v3040 = vunpack.c.l.b16 %v2264
      %v3041 = vunpack.c.l.b16 %v2265
      %v3042 = vunpack.c.l.b16 %v2266
      %v3043 = vunpack.c.l.b16 %v2267
      %v3044 = vunpack.c.l.b16 %v2268
      %v3045 = vunpack.c.l.b16 %v2269
      %v3046 = vunpack.c.l.b16 %v2270
      %v3047 = vunpack.c.l.b16 %v2271
      %v3048 = vunpack.c.l.b16 %v2272
      %v3049 = vunpack.c.l.b16 %v2273
      %v3050 = vunpack.c.l.b16 %v2274
      %v3051 = vunpack.c.l.b16 %v2275
      %v3052 = vunpack.c.l.b16 %v2276
      %v3053 = vunpack.c.l.b16 %v2277
      %v3054 = vunpack.c.l.b16 %v2278
      %v3055 = vunpack.c.l.b16 %v2279
      %v3056 = vunpack.c.l.b16 %v2280
      %v3057 = vunpack.c.l.b16 %v2281
      %v3058 = vunpack.c.l.b16 %v2282
      %v3059 = vunpack.c.l.b16 %v2283
      %v3060 = vunpack.c.l.b16 %v2284
      %v3061 = vunpack.c.l.b16 %v2285
      %v3062 = vunpack.c.l.b16 %v2286
      %v3063 = vunpack.c.l.b16 %v2287
      %v3064 = vunpack.c.l.b16 %v2288
      %v3065 = vunpack.c.l.b16 %v2289
      %v3066 = vunpack.c.l.b16 %v2290
      %v3067 = vunpack.c.l.b16 %v2291
      %v3068 = vunpack.c.l.b16 %v2292
      %v3069 = vunpack.c.l.b16 %v2293
      %v3070 = vunpack.c.l.b16 %v2294
      %v3071 = vunpack.c.l.b16 %v2295
      %v3072 = vunpack.c.l.b16 %v2296
      %v3073 = vunpack.c.l.b16 %v2297
      %v3074 = vunpack.c.l.b16 %v2298
      %v3075 = vunpack.c.l.b16 %v2299
      %v3076 = vunpack.c.l.b16 %v2300
      %v3077 = vunpack.c.l.b16 %v2301
      %v3078 = vunpack.c.l.b16 %v2302
      %v3079 = vunpack.c.l.b16 %v2303
      %v3080 = vunpack.c.l.b16 %v2304
      %v3081 = vpack.c.b16 %v2974, %v2973
      %v3082 = vpack.c.b16 %v2976, %v2975
      %v3083 = vpack.c.b16 %v2978, %v2977
      %v3084 = vpack.c.b16 %v2980, %v2979
      %v3085 = vpack.c.b16 %v2982, %v2981
      %v3086 = vpack.c.b16 %v2984, %v2983
      %v3087 = vpack.c.b16 %v2986, %v2985
      %v3088 = vpack.c.b16 %v2988, %v2987
      %v3089 = vpack.c.b16 %v2990, %v2989
      %v3090 = vpack.c.b16 %v2992, %v2991
      %v3091 = vpack.c.b16 %v2994, %v2993
      %v3092 = vpack.c.b16 %v2996, %v2995
      %v3093 = vpack.c.b16 %v2998, %v2997
      %v3094 = vpack.c.b16 %v3000, %v2999
      %v3095 = vpack.c.b16 %v3002, %v3001
      %v3096 = vpack.c.b16 %v3004, %v3003
      %v3097 = vpack.c.b16 %v3006, %v3005
      %v3098 = vpack.c.b16 %v3008, %v3007
      %v3099 = vpack.c.b16 %v3010, %v3009
      %v3100 = vpack.c.b16 %v3012, %v3011
      %v3101 = vpack.c.b16 %v3014, %v3013
      %v3102 = vpack.c.b16 %v3016, %v3015
      %v3103 = vpack.c.b16 %v3018, %v3017
      %v3104 = vpack.c.b16 %v3020, %v3019
      %v3105 = vpack.c.b16 %v3022, %v3021
      %v3106 = vpack.c.b16 %v3024, %v3023
      %v3107 = vpack.c.b16 %v3026, %v3025
      %v3108 = vpack.c.b16 %v3028, %v3027
      %v3109 = vpack.c.b16 %v3030, %v3029
      %v3110 = vpack.c.b16 %v3032, %v3031
      %v3111 = vpack.c.b16 %v3034, %v3033
      %v3112 = vpack.c.b16 %v3036, %v3035
      %v3113 = vpack.c.b16 %v3038, %v3037
      %v3114 = vpack.c.b16 %v3040, %v3039
      %v3115 = vpack.c.b16 %v3042, %v3041
      %v3116 = vpack.c.b16 %v3044, %v3043
      %v3117 = vpack.c.b16 %v3046, %v3045
      %v3118 = vpack.c.b16 %v3048, %v3047
      %v3119 = vpack.c.b16 %v3050, %v3049
      %v3120 = vpack.c.b16 %v3052, %v3051
      %v3121 = vpack.c.b16 %v3054, %v3053
      %v3122 = vpack.c.b16 %v3056, %v3055
      %v3123 = vpack.c.b16 %v3058, %v3057
      %v3124 = vpack.c.b16 %v3060, %v3059
      %v3125 = vpack.c.b16 %v3062, %v3061
      %v3126 = vpack.c.b16 %v3064, %v3063
      %v3127 = vpack.c.b16 %v3066, %v3065
      %v3128 = vpack.c.b16 %v3068, %v3067
      %v3129 = vpack.c.b16 %v3070, %v3069
      %v3130 = vpack.c.b16 %v3072, %v3071
      %v3131 = vpack.c.b16 %v3074, %v3073
      %v3132 = vpack.c.b16 %v3076, %v3075
      %v3133 = vpack.c.b16 %v3078, %v3077
      %v3134 = vpack.c.b16 %v3080, %v3079
      %v3190 = vsel %vm1343, %v2663, 0
      %v3193 = vsel %vm1343, %v2670, 0
      %v3196 = vsel %vm1343, %v2677, 0
      %v3199 = vsel %vm1343, %v2684, 0
      %v3202 = vsel %vm1343, %v2691, 0
      %v3205 = vsel %vm1343, %v2698, 0
      %v3208 = vsel %vm1343, %v2705, 0
      %v3211 = vsel %vm1343, %v2712, 0
      %v3214 = vsel %vm1343, %v2719, 0
      %v3217 = vsel %vm1343, %v2726, 0
      %v3220 = vsel %vm1343, %v2733, 0
      %v3223 = vsel %vm1343, %v2740, 0
      %v3226 = vsel %vm1343, %v2747, 0
      %v3229 = vsel %vm1343, %v2754, 0
      %v3232 = vsel %vm1343, %v2761, 0
      %v3235 = vsel %vm1343, %v2768, 0
      %3237 = vmatprep.subr.bf16.mxu0 0
      %3238 = vmatpush1.bf16.msra.mxu0 %v3081
      %3239 = vmatprep.subr.bf16.mxu0 0
      %3240 = vmatpush1.bf16.msra.mxu0 %v3082
      %3241 = vmatprep.subr.bf16.mxu0 0
      %3242 = vmatpush1.bf16.msra.mxu0 %v3083
      %3243 = vmatprep.subr.bf16.mxu0 0
      %3244 = vmatpush1.bf16.msra.mxu0 %v3084
      %3245 = vmatprep.subr.bf16.mxu0 0
      %3246 = vmatpush1.bf16.msra.mxu0 %v3085
      %3247 = vmatprep.subr.bf16.mxu0 0
      %3248 = vmatpush1.bf16.msra.mxu0 %v3086
      %3249 = vmatprep.subr.bf16.mxu0 0
      %3250 = vmatpush1.bf16.msra.mxu0 %v3087
      %3251 = vmatprep.subr.bf16.mxu0 0
      %3252 = vmatpush1.bf16.msra.mxu0 %v3088
      %3253 = vmatprep.subr.bf16.mxu0 0
      %3254 = vmatpush1.bf16.msra.mxu0 %v3089
      %3255 = vmatprep.subr.bf16.mxu0 0
      %3256 = vmatpush1.bf16.msra.mxu0 %v3090
      %3257 = vmatprep.subr.bf16.mxu0 0
      %3258 = vmatpush1.bf16.msra.mxu0 %v3091
      %3259 = vmatprep.subr.bf16.mxu0 0
      %3260 = vmatpush1.bf16.msra.mxu0 %v3092
      %3261 = vmatprep.subr.bf16.mxu0 0
      %3262 = vmatpush1.bf16.msra.mxu0 %v3093
      %3263 = vmatprep.subr.bf16.mxu0 0
      %3264 = vmatpush1.bf16.msra.mxu0 %v3094
      %3265 = vmatprep.subr.bf16.mxu0 0
      %3266 = vmatpush1.bf16.msra.mxu0 %v3095
      %3267 = vmatprep.subr.bf16.mxu0 0
      %3268 = vmatpush1.bf16.msra.mxu0 %v3096
      %3269 = vmatprep.mubr.bf16.mxu0 %v2658
      %3270 = vmatmul.mubr.bf16.gmra.mrb[0].mxu0 %v2657
      %v3271 = vpop.f32.mrb[0].mxu0
      %v3272 = vadd.f32 0.0, %v3271
      %v3273 = vpop.f32.mrb[0].mxu0
      %v3274 = vpop.f32.mrb[0].mxu0
      %v3275 = vadd.f32 0.0, %v3274
      %v3276 = vpop.f32.mrb[0].mxu0
      %3277 = vmatprep.mubr.bf16.mxu0 %v2665
      %3278 = vmatmul.mubr.bf16.gmra.mrb[0].mxu0 %v2664
      %v3279 = vpop.f32.mrb[0].mxu0
      %v3280 = vadd.f32 0.0, %v3279
      %v3281 = vpop.f32.mrb[0].mxu0
      %v3282 = vpop.f32.mrb[0].mxu0
      %v3283 = vadd.f32 0.0, %v3282
      %v3284 = vpop.f32.mrb[0].mxu0
      %3285 = vmatprep.mubr.bf16.mxu0 %v2672
      %3286 = vmatmul.mubr.bf16.gmra.mrb[0].mxu0 %v2671
      %v3287 = vpop.f32.mrb[0].mxu0
      %v3288 = vadd.f32 0.0, %v3287
      %v3289 = vpop.f32.mrb[0].mxu0
      %v3290 = vpop.f32.mrb[0].mxu0
      %v3291 = vadd.f32 0.0, %v3290
      %v3292 = vpop.f32.mrb[0].mxu0
      %3293 = vmatprep.mubr.bf16.mxu0 %v2679
      %3294 = vmatmul.mubr.bf16.gmra.mrb[0].mxu0 %v2678
      %v3295 = vpop.f32.mrb[0].mxu0
      %v3296 = vadd.f32 0.0, %v3295
      %v3297 = vpop.f32.mrb[0].mxu0
      %v3298 = vpop.f32.mrb[0].mxu0
      %v3299 = vadd.f32 0.0, %v3298
      %v3300 = vpop.f32.mrb[0].mxu0
      %3301 = vmatprep.mubr.bf16.mxu0 %v2686
      %3302 = vmatmul.mubr.bf16.gmra.mrb[0].mxu0 %v2685
      %v3303 = vpop.f32.mrb[0].mxu0
      %v3304 = vadd.f32 0.0, %v3303
      %v3305 = vpop.f32.mrb[0].mxu0
      %v3306 = vpop.f32.mrb[0].mxu0
      %v3307 = vadd.f32 0.0, %v3306
      %v3308 = vpop.f32.mrb[0].mxu0
      %3309 = vmatprep.mubr.bf16.mxu0 %v2693
      %3310 = vmatmul.mubr.bf16.gmra.mrb[0].mxu0 %v2692
      %v3311 = vpop.f32.mrb[0].mxu0
      %v3312 = vadd.f32 0.0, %v3311
      %v3313 = vpop.f32.mrb[0].mxu0
      %v3314 = vpop.f32.mrb[0].mxu0
      %v3315 = vadd.f32 0.0, %v3314
      %v3316 = vpop.f32.mrb[0].mxu0
      %3317 = vmatprep.mubr.bf16.mxu0 %v2700
      %3318 = vmatmul.mubr.bf16.gmra.mrb[0].mxu0 %v2699
      %v3319 = vpop.f32.mrb[0].mxu0
      %v3320 = vadd.f32 0.0, %v3319
      %v3321 = vpop.f32.mrb[0].mxu0
      %v3322 = vpop.f32.mrb[0].mxu0
      %v3323 = vadd.f32 0.0, %v3322
      %v3324 = vpop.f32.mrb[0].mxu0
      %3325 = vmatprep.mubr.bf16.mxu0 %v2707
      %3326 = vmatmul.mubr.bf16.gmra.mrb[0].mxu0 %v2706
      %v3327 = vpop.f32.mrb[0].mxu0
      %v3328 = vadd.f32 0.0, %v3327
      %v3329 = vpop.f32.mrb[0].mxu0
      %v3330 = vpop.f32.mrb[0].mxu0
      %v3331 = vadd.f32 0.0, %v3330
      %v3332 = vpop.f32.mrb[0].mxu0
      %3333 = vmatprep.mubr.bf16.mxu0 %v2714
      %3334 = vmatmul.mubr.bf16.gmra.mrb[0].mxu0 %v2713
      %v3335 = vpop.f32.mrb[0].mxu0
      %v3336 = vadd.f32 0.0, %v3335
      %v3337 = vpop.f32.mrb[0].mxu0
      %v3338 = vpop.f32.mrb[0].mxu0
      %v3339 = vadd.f32 0.0, %v3338
      %v3340 = vpop.f32.mrb[0].mxu0
      %3341 = vmatprep.mubr.bf16.mxu0 %v2721
      %3342 = vmatmul.mubr.bf16.gmra.mrb[0].mxu0 %v2720
      %v3343 = vpop.f32.mrb[0].mxu0
      %v3344 = vadd.f32 0.0, %v3343
      %v3345 = vpop.f32.mrb[0].mxu0
      %v3346 = vpop.f32.mrb[0].mxu0
      %v3347 = vadd.f32 0.0, %v3346
      %v3348 = vpop.f32.mrb[0].mxu0
      %3349 = vmatprep.mubr.bf16.mxu0 %v2728
      %3350 = vmatmul.mubr.bf16.gmra.mrb[0].mxu0 %v2727
      %v3351 = vpop.f32.mrb[0].mxu0
      %v3352 = vadd.f32 0.0, %v3351
      %v3353 = vpop.f32.mrb[0].mxu0
      %v3354 = vpop.f32.mrb[0].mxu0
      %v3355 = vadd.f32 0.0, %v3354
      %v3356 = vpop.f32.mrb[0].mxu0
      %3357 = vmatprep.mubr.bf16.mxu0 %v2735
      %3358 = vmatmul.mubr.bf16.gmra.mrb[0].mxu0 %v2734
      %v3359 = vpop.f32.mrb[0].mxu0
      %v3360 = vadd.f32 0.0, %v3359
      %v3361 = vpop.f32.mrb[0].mxu0
      %v3362 = vpop.f32.mrb[0].mxu0
      %v3363 = vadd.f32 0.0, %v3362
      %v3364 = vpop.f32.mrb[0].mxu0
      %3365 = vmatprep.mubr.bf16.mxu0 %v2742
      %3366 = vmatmul.mubr.bf16.gmra.mrb[0].mxu0 %v2741
      %v3367 = vpop.f32.mrb[0].mxu0
      %v3368 = vadd.f32 0.0, %v3367
      %v3369 = vpop.f32.mrb[0].mxu0
      %v3370 = vpop.f32.mrb[0].mxu0
      %v3371 = vadd.f32 0.0, %v3370
      %v3372 = vpop.f32.mrb[0].mxu0
      %3373 = vmatprep.mubr.bf16.mxu0 %v2749
      %3374 = vmatmul.mubr.bf16.gmra.mrb[0].mxu0 %v2748
      %v3375 = vpop.f32.mrb[0].mxu0
      %v3376 = vadd.f32 0.0, %v3375
      %v3377 = vpop.f32.mrb[0].mxu0
      %v3378 = vpop.f32.mrb[0].mxu0
      %v3379 = vadd.f32 0.0, %v3378
      %v3380 = vpop.f32.mrb[0].mxu0
      %3381 = vmatprep.mubr.bf16.mxu0 %v2756
      %3382 = vmatmul.mubr.bf16.gmra.mrb[0].mxu0 %v2755
      %v3383 = vpop.f32.mrb[0].mxu0
      %v3384 = vadd.f32 0.0, %v3383
      %v3385 = vpop.f32.mrb[0].mxu0
      %v3386 = vpop.f32.mrb[0].mxu0
      %v3387 = vadd.f32 0.0, %v3386
      %v3388 = vpop.f32.mrb[0].mxu0
      %3389 = vmatprep.mubr.bf16.mxu0 %v2763
      %3390 = vmatmul.mubr.bf16.gmra.mrb[0].mxu0 %v2762
      %v3391 = vpop.f32.mrb[0].mxu0
      %v3392 = vadd.f32 0.0, %v3391
      %v3393 = vpop.f32.mrb[0].mxu0
      %v3394 = vpop.f32.mrb[0].mxu0
      %v3395 = vadd.f32 0.0, %v3394
      %v3396 = vpop.f32.mrb[0].mxu0
      %3397 = vdwg.mxu0
      %3398 = vmatprep.subr.bf16.mxu0 0
      %3399 = vmatpush1.bf16.msra.mxu0 %v3097
      %3400 = vmatprep.subr.bf16.mxu0 0
      %3401 = vmatpush1.bf16.msra.mxu0 %v3098
      %3402 = vmatprep.subr.bf16.mxu0 0
      %3403 = vmatpush1.bf16.msra.mxu0 %v3099
      %3404 = vmatprep.subr.bf16.mxu0 0
      %3405 = vmatpush1.bf16.msra.mxu0 %v3100
      %3406 = vmatprep.subr.bf16.mxu0 0
      %3407 = vmatpush1.bf16.msra.mxu0 %v3101
      %3408 = vmatprep.subr.bf16.mxu0 0
      %3409 = vmatpush1.bf16.msra.mxu0 %v3102
      %3410 = vmatprep.subr.bf16.mxu0 0
      %3411 = vmatpush1.bf16.msra.mxu0 %v3103
      %3412 = vmatprep.subr.bf16.mxu0 0
      %3413 = vmatpush1.bf16.msra.mxu0 %v3104
      %3414 = vmatprep.subr.bf16.mxu0 0
      %3415 = vmatpush1.bf16.msra.mxu0 %v3105
      %3416 = vmatprep.subr.bf16.mxu0 0
      %3417 = vmatpush1.bf16.msra.mxu0 %v3106
      %3418 = vmatprep.subr.bf16.mxu0 0
      %3419 = vmatpush1.bf16.msra.mxu0 %v3107
      %3420 = vmatprep.subr.bf16.mxu0 0
      %3421 = vmatpush1.bf16.msra.mxu0 %v3108
      %3422 = vmatprep.subr.bf16.mxu0 0
      %3423 = vmatpush1.bf16.msra.mxu0 %v3109
      %3424 = vmatprep.subr.bf16.mxu0 0
      %3425 = vmatpush1.bf16.msra.mxu0 %v3110
      %3426 = vmatprep.subr.bf16.mxu0 0
      %3427 = vmatpush1.bf16.msra.mxu0 %v3111
      %3428 = vmatprep.subr.bf16.mxu0 0
      %3429 = vmatpush1.bf16.msra.mxu0 %v3112
      %3430 = vmatprep.mubr.bf16.mxu0 %v2660
      %3431 = vmatmul.mubr.bf16.gmra.mrb[0].mxu0 %v2659
      %v3432 = vpop.f32.mrb[0].mxu0
      %v3433 = vadd.f32 %v3272, %v3432
      %v3434 = vpop.f32.mrb[0].mxu0
      %v3435 = vpop.f32.mrb[0].mxu0
      %v3436 = vadd.f32 %v3275, %v3435
      %v3437 = vpop.f32.mrb[0].mxu0
      %3438 = vmatprep.mubr.bf16.mxu0 %v2667
      %3439 = vmatmul.mubr.bf16.gmra.mrb[0].mxu0 %v2666
      %v3440 = vpop.f32.mrb[0].mxu0
      %v3441 = vadd.f32 %v3280, %v3440
      %v3442 = vpop.f32.mrb[0].mxu0
      %v3443 = vpop.f32.mrb[0].mxu0
      %v3444 = vadd.f32 %v3283, %v3443
      %v3445 = vpop.f32.mrb[0].mxu0
      %3446 = vmatprep.mubr.bf16.mxu0 %v2674
      %3447 = vmatmul.mubr.bf16.gmra.mrb[0].mxu0 %v2673
      %v3448 = vpop.f32.mrb[0].mxu0
      %v3449 = vadd.f32 %v3288, %v3448
      %v3450 = vpop.f32.mrb[0].mxu0
      %v3451 = vpop.f32.mrb[0].mxu0
      %v3452 = vadd.f32 %v3291, %v3451
      %v3453 = vpop.f32.mrb[0].mxu0
      %3454 = vmatprep.mubr.bf16.mxu0 %v2681
      %3455 = vmatmul.mubr.bf16.gmra.mrb[0].mxu0 %v2680
      %v3456 = vpop.f32.mrb[0].mxu0
      %v3457 = vadd.f32 %v3296, %v3456
      %v3458 = vpop.f32.mrb[0].mxu0
      %v3459 = vpop.f32.mrb[0].mxu0
      %v3460 = vadd.f32 %v3299, %v3459
      %v3461 = vpop.f32.mrb[0].mxu0
      %3462 = vmatprep.mubr.bf16.mxu0 %v2688
      %3463 = vmatmul.mubr.bf16.gmra.mrb[0].mxu0 %v2687
      %v3464 = vpop.f32.mrb[0].mxu0
      %v3465 = vadd.f32 %v3304, %v3464
      %v3466 = vpop.f32.mrb[0].mxu0
      %v3467 = vpop.f32.mrb[0].mxu0
      %v3468 = vadd.f32 %v3307, %v3467
      %v3469 = vpop.f32.mrb[0].mxu0
      %3470 = vmatprep.mubr.bf16.mxu0 %v2695
      %3471 = vmatmul.mubr.bf16.gmra.mrb[0].mxu0 %v2694
      %v3472 = vpop.f32.mrb[0].mxu0
      %v3473 = vadd.f32 %v3312, %v3472
      %v3474 = vpop.f32.mrb[0].mxu0
      %v3475 = vpop.f32.mrb[0].mxu0
      %v3476 = vadd.f32 %v3315, %v3475
      %v3477 = vpop.f32.mrb[0].mxu0
      %3478 = vmatprep.mubr.bf16.mxu0 %v2702
      %3479 = vmatmul.mubr.bf16.gmra.mrb[0].mxu0 %v2701
      %v3480 = vpop.f32.mrb[0].mxu0
      %v3481 = vadd.f32 %v3320, %v3480
      %v3482 = vpop.f32.mrb[0].mxu0
      %v3483 = vpop.f32.mrb[0].mxu0
      %v3484 = vadd.f32 %v3323, %v3483
      %v3485 = vpop.f32.mrb[0].mxu0
      %3486 = vmatprep.mubr.bf16.mxu0 %v2709
      %3487 = vmatmul.mubr.bf16.gmra.mrb[0].mxu0 %v2708
      %v3488 = vpop.f32.mrb[0].mxu0
      %v3489 = vadd.f32 %v3328, %v3488
      %v3490 = vpop.f32.mrb[0].mxu0
      %v3491 = vpop.f32.mrb[0].mxu0
      %v3492 = vadd.f32 %v3331, %v3491
      %v3493 = vpop.f32.mrb[0].mxu0
      %3494 = vmatprep.mubr.bf16.mxu0 %v2716
      %3495 = vmatmul.mubr.bf16.gmra.mrb[0].mxu0 %v2715
      %v3496 = vpop.f32.mrb[0].mxu0
      %v3497 = vadd.f32 %v3336, %v3496
      %v3498 = vpop.f32.mrb[0].mxu0
      %v3499 = vpop.f32.mrb[0].mxu0
      %v3500 = vadd.f32 %v3339, %v3499
      %v3501 = vpop.f32.mrb[0].mxu0
      %3502 = vmatprep.mubr.bf16.mxu0 %v2723
      %3503 = vmatmul.mubr.bf16.gmra.mrb[0].mxu0 %v2722
      %v3504 = vpop.f32.mrb[0].mxu0
      %v3505 = vadd.f32 %v3344, %v3504
      %v3506 = vpop.f32.mrb[0].mxu0
      %v3507 = vpop.f32.mrb[0].mxu0
      %v3508 = vadd.f32 %v3347, %v3507
      %v3509 = vpop.f32.mrb[0].mxu0
      %3510 = vmatprep.mubr.bf16.mxu0 %v2730
      %3511 = vmatmul.mubr.bf16.gmra.mrb[0].mxu0 %v2729
      %v3512 = vpop.f32.mrb[0].mxu0
      %v3513 = vadd.f32 %v3352, %v3512
      %v3514 = vpop.f32.mrb[0].mxu0
      %v3515 = vpop.f32.mrb[0].mxu0
      %v3516 = vadd.f32 %v3355, %v3515
      %v3517 = vpop.f32.mrb[0].mxu0
      %3518 = vmatprep.mubr.bf16.mxu0 %v2737
      %3519 = vmatmul.mubr.bf16.gmra.mrb[0].mxu0 %v2736
      %v3520 = vpop.f32.mrb[0].mxu0
      %v3521 = vadd.f32 %v3360, %v3520
      %v3522 = vpop.f32.mrb[0].mxu0
      %v3523 = vpop.f32.mrb[0].mxu0
      %v3524 = vadd.f32 %v3363, %v3523
      %v3525 = vpop.f32.mrb[0].mxu0
      %3526 = vmatprep.mubr.bf16.mxu0 %v2744
      %3527 = vmatmul.mubr.bf16.gmra.mrb[0].mxu0 %v2743
      %v3528 = vpop.f32.mrb[0].mxu0
      %v3529 = vadd.f32 %v3368, %v3528
      %v3530 = vpop.f32.mrb[0].mxu0
      %v3531 = vpop.f32.mrb[0].mxu0
      %v3532 = vadd.f32 %v3371, %v3531
      %v3533 = vpop.f32.mrb[0].mxu0
      %3534 = vmatprep.mubr.bf16.mxu0 %v2751
      %3535 = vmatmul.mubr.bf16.gmra.mrb[0].mxu0 %v2750
      %v3536 = vpop.f32.mrb[0].mxu0
      %v3537 = vadd.f32 %v3376, %v3536
      %v3538 = vpop.f32.mrb[0].mxu0
      %v3539 = vpop.f32.mrb[0].mxu0
      %v3540 = vadd.f32 %v3379, %v3539
      %v3541 = vpop.f32.mrb[0].mxu0
      %3542 = vmatprep.mubr.bf16.mxu0 %v2758
      %3543 = vmatmul.mubr.bf16.gmra.mrb[0].mxu0 %v2757
      %v3544 = vpop.f32.mrb[0].mxu0
      %v3545 = vadd.f32 %v3384, %v3544
      %v3546 = vpop.f32.mrb[0].mxu0
      %v3547 = vpop.f32.mrb[0].mxu0
      %v3548 = vadd.f32 %v3387, %v3547
      %v3549 = vpop.f32.mrb[0].mxu0
      %3550 = vmatprep.mubr.bf16.mxu0 %v2765
      %3551 = vmatmul.mubr.bf16.gmra.mrb[0].mxu0 %v2764
      %v3552 = vpop.f32.mrb[0].mxu0
      %v3553 = vadd.f32 %v3392, %v3552
      %v3554 = vpop.f32.mrb[0].mxu0
      %v3555 = vpop.f32.mrb[0].mxu0
      %v3556 = vadd.f32 %v3395, %v3555
      %v3557 = vpop.f32.mrb[0].mxu0
      %3558 = vdwg.mxu0
      %3559 = vmatprep.subr.bf16.mxu0 0
      %3560 = vmatpush1.bf16.msra.mxu0 %v3113
      %3561 = vmatprep.subr.bf16.mxu0 0
      %3562 = vmatpush1.bf16.msra.mxu0 %v3114
      %3563 = vmatprep.subr.bf16.mxu0 0
      %3564 = vmatpush1.bf16.msra.mxu0 %v3115
      %3565 = vmatprep.subr.bf16.mxu0 0
      %3566 = vmatpush1.bf16.msra.mxu0 %v3116
      %3567 = vmatprep.subr.bf16.mxu0 0
      %3568 = vmatpush1.bf16.msra.mxu0 %v3117
      %3569 = vmatprep.subr.bf16.mxu0 0
      %3570 = vmatpush1.bf16.msra.mxu0 %v3118
      %3571 = vmatprep.subr.bf16.mxu0 0
      %3572 = vmatpush1.bf16.msra.mxu0 %v3119
      %3573 = vmatprep.subr.bf16.mxu0 0
      %3574 = vmatpush1.bf16.msra.mxu0 %v3120
      %3575 = vmatprep.subr.bf16.mxu0 0
      %3576 = vmatpush1.bf16.msra.mxu0 %v3121
      %3577 = vmatprep.subr.bf16.mxu0 0
      %3578 = vmatpush1.bf16.msra.mxu0 %v3122
      %3579 = vmatprep.subr.bf16.mxu0 0
      %3580 = vmatpush1.bf16.msra.mxu0 %v3123
      %3581 = vmatprep.subr.bf16.mxu0 0
      %3582 = vmatpush1.bf16.msra.mxu0 %v3124
      %3583 = vmatprep.subr.bf16.mxu0 0
      %3584 = vmatpush1.bf16.msra.mxu0 %v3125
      %3585 = vmatprep.subr.bf16.mxu0 0
      %3586 = vmatpush1.bf16.msra.mxu0 %v3126
      %3587 = vmatprep.subr.bf16.mxu0 0
      %3588 = vmatpush1.bf16.msra.mxu0 %v3127
      %3589 = vmatprep.subr.bf16.mxu0 0
      %3590 = vmatpush1.bf16.msra.mxu0 %v3128
      %3591 = vmatprep.mubr.bf16.mxu0 %v2662
      %3592 = vmatmul.mubr.bf16.gmra.mrb[0].mxu0 %v2661
      %v3593 = vpop.f32.mrb[0].mxu0
      %v3594 = vadd.f32 %v3433, %v3593
      %v3595 = vpop.f32.mrb[0].mxu0
      %v3596 = vpop.f32.mrb[0].mxu0
      %v3597 = vadd.f32 %v3436, %v3596
      %v3598 = vpop.f32.mrb[0].mxu0
      %3599 = vmatprep.mubr.bf16.mxu0 %v2669
      %3600 = vmatmul.mubr.bf16.gmra.mrb[0].mxu0 %v2668
      %v3601 = vpop.f32.mrb[0].mxu0
      %v3602 = vadd.f32 %v3441, %v3601
      %v3603 = vpop.f32.mrb[0].mxu0
      %v3604 = vpop.f32.mrb[0].mxu0
      %v3605 = vadd.f32 %v3444, %v3604
      %v3606 = vpop.f32.mrb[0].mxu0
      %3607 = vmatprep.mubr.bf16.mxu0 %v2676
      %3608 = vmatmul.mubr.bf16.gmra.mrb[0].mxu0 %v2675
      %v3609 = vpop.f32.mrb[0].mxu0
      %v3610 = vadd.f32 %v3449, %v3609
      %v3611 = vpop.f32.mrb[0].mxu0
      %v3612 = vpop.f32.mrb[0].mxu0
      %v3613 = vadd.f32 %v3452, %v3612
      %v3614 = vpop.f32.mrb[0].mxu0
      %3615 = vmatprep.mubr.bf16.mxu0 %v2683
      %3616 = vmatmul.mubr.bf16.gmra.mrb[0].mxu0 %v2682
      %v3617 = vpop.f32.mrb[0].mxu0
      %v3618 = vadd.f32 %v3457, %v3617
      %v3619 = vpop.f32.mrb[0].mxu0
      %v3620 = vpop.f32.mrb[0].mxu0
      %v3621 = vadd.f32 %v3460, %v3620
      %v3622 = vpop.f32.mrb[0].mxu0
      %3623 = vmatprep.mubr.bf16.mxu0 %v2690
      %3624 = vmatmul.mubr.bf16.gmra.mrb[0].mxu0 %v2689
      %v3625 = vpop.f32.mrb[0].mxu0
      %v3626 = vadd.f32 %v3465, %v3625
      %v3627 = vpop.f32.mrb[0].mxu0
      %v3628 = vpop.f32.mrb[0].mxu0
      %v3629 = vadd.f32 %v3468, %v3628
      %v3630 = vpop.f32.mrb[0].mxu0
      %3631 = vmatprep.mubr.bf16.mxu0 %v2697
      %3632 = vmatmul.mubr.bf16.gmra.mrb[0].mxu0 %v2696
      %v3633 = vpop.f32.mrb[0].mxu0
      %v3634 = vadd.f32 %v3473, %v3633
      %v3635 = vpop.f32.mrb[0].mxu0
      %v3636 = vpop.f32.mrb[0].mxu0
      %v3637 = vadd.f32 %v3476, %v3636
      %v3638 = vpop.f32.mrb[0].mxu0
      %3639 = vmatprep.mubr.bf16.mxu0 %v2704
      %3640 = vmatmul.mubr.bf16.gmra.mrb[0].mxu0 %v2703
      %v3641 = vpop.f32.mrb[0].mxu0
      %v3642 = vadd.f32 %v3481, %v3641
      %v3643 = vpop.f32.mrb[0].mxu0
      %v3644 = vpop.f32.mrb[0].mxu0
      %v3645 = vadd.f32 %v3484, %v3644
      %v3646 = vpop.f32.mrb[0].mxu0
      %3647 = vmatprep.mubr.bf16.mxu0 %v2711
      %3648 = vmatmul.mubr.bf16.gmra.mrb[0].mxu0 %v2710
      %v3649 = vpop.f32.mrb[0].mxu0
      %v3650 = vadd.f32 %v3489, %v3649
      %v3651 = vpop.f32.mrb[0].mxu0
      %v3652 = vpop.f32.mrb[0].mxu0
      %v3653 = vadd.f32 %v3492, %v3652
      %v3654 = vpop.f32.mrb[0].mxu0
      %3655 = vmatprep.mubr.bf16.mxu0 %v2718
      %3656 = vmatmul.mubr.bf16.gmra.mrb[0].mxu0 %v2717
      %v3657 = vpop.f32.mrb[0].mxu0
      %v3658 = vadd.f32 %v3497, %v3657
      %v3659 = vpop.f32.mrb[0].mxu0
      %v3660 = vpop.f32.mrb[0].mxu0
      %v3661 = vadd.f32 %v3500, %v3660
      %v3662 = vpop.f32.mrb[0].mxu0
      %3663 = vmatprep.mubr.bf16.mxu0 %v2725
      %3664 = vmatmul.mubr.bf16.gmra.mrb[0].mxu0 %v2724
      %v3665 = vpop.f32.mrb[0].mxu0
      %v3666 = vadd.f32 %v3505, %v3665
      %v3667 = vpop.f32.mrb[0].mxu0
      %v3668 = vpop.f32.mrb[0].mxu0
      %v3669 = vadd.f32 %v3508, %v3668
      %v3670 = vpop.f32.mrb[0].mxu0
      %3671 = vmatprep.mubr.bf16.mxu0 %v2732
      %3672 = vmatmul.mubr.bf16.gmra.mrb[0].mxu0 %v2731
      %v3673 = vpop.f32.mrb[0].mxu0
      %v3674 = vadd.f32 %v3513, %v3673
      %v3675 = vpop.f32.mrb[0].mxu0
      %v3676 = vpop.f32.mrb[0].mxu0
      %v3677 = vadd.f32 %v3516, %v3676
      %v3678 = vpop.f32.mrb[0].mxu0
      %3679 = vmatprep.mubr.bf16.mxu0 %v2739
      %3680 = vmatmul.mubr.bf16.gmra.mrb[0].mxu0 %v2738
      %v3681 = vpop.f32.mrb[0].mxu0
      %v3682 = vadd.f32 %v3521, %v3681
      %v3683 = vpop.f32.mrb[0].mxu0
      %v3684 = vpop.f32.mrb[0].mxu0
      %v3685 = vadd.f32 %v3524, %v3684
      %v3686 = vpop.f32.mrb[0].mxu0
      %3687 = vmatprep.mubr.bf16.mxu0 %v2746
      %3688 = vmatmul.mubr.bf16.gmra.mrb[0].mxu0 %v2745
      %v3689 = vpop.f32.mrb[0].mxu0
      %v3690 = vadd.f32 %v3529, %v3689
      %v3691 = vpop.f32.mrb[0].mxu0
      %v3692 = vpop.f32.mrb[0].mxu0
      %v3693 = vadd.f32 %v3532, %v3692
      %v3694 = vpop.f32.mrb[0].mxu0
      %3695 = vmatprep.mubr.bf16.mxu0 %v2753
      %3696 = vmatmul.mubr.bf16.gmra.mrb[0].mxu0 %v2752
      %v3697 = vpop.f32.mrb[0].mxu0
      %v3698 = vadd.f32 %v3537, %v3697
      %v3699 = vpop.f32.mrb[0].mxu0
      %v3700 = vpop.f32.mrb[0].mxu0
      %v3701 = vadd.f32 %v3540, %v3700
      %v3702 = vpop.f32.mrb[0].mxu0
      %3703 = vmatprep.mubr.bf16.mxu0 %v2760
      %3704 = vmatmul.mubr.bf16.gmra.mrb[0].mxu0 %v2759
      %v3705 = vpop.f32.mrb[0].mxu0
      %v3706 = vadd.f32 %v3545, %v3705
      %v3707 = vpop.f32.mrb[0].mxu0
      %v3708 = vpop.f32.mrb[0].mxu0
      %v3709 = vadd.f32 %v3548, %v3708
      %v3710 = vpop.f32.mrb[0].mxu0
      %3711 = vmatprep.mubr.bf16.mxu0 %v2767
      %3712 = vmatmul.mubr.bf16.gmra.mrb[0].mxu0 %v2766
      %v3713 = vpop.f32.mrb[0].mxu0
      %v3714 = vadd.f32 %v3553, %v3713
      %v3715 = vpop.f32.mrb[0].mxu0
      %v3716 = vpop.f32.mrb[0].mxu0
      %v3717 = vadd.f32 %v3556, %v3716
      %v3718 = vpop.f32.mrb[0].mxu0
      %3719 = vdwg.mxu0
      %3720 = vmatprep.subr.bf16.mxu0 0
      %3721 = vmatpush1.bf16.msra.mxu0 %v3129
      %3722 = vmatprep.subr.bf16.mxu0 0
      %3723 = vmatpush1.bf16.msra.mxu0 %v3130
      %3724 = vmatprep.subr.bf16.mxu0 0
      %3725 = vmatpush1.bf16.msra.mxu0 %v3131
      %3726 = vmatprep.subr.bf16.mxu0 0
      %3727 = vmatpush1.bf16.msra.mxu0 %v3132
      %3728 = vmatprep.subr.bf16.mxu0 0
      %3729 = vmatpush1.bf16.msra.mxu0 %v3133
      %3730 = vmatprep.subr.bf16.mxu0 0
      %3731 = vmatpush1.bf16.msra.mxu0 %v3134
      %3732 = vmatprep.subr.bf16.mxu0 0
      %3733 = vmatpush1.bf16.msra.mxu0 0
      %3734 = vmatprep.subr.bf16.mxu0 0
      %3735 = vmatpush1.bf16.msra.mxu0 0
      %3736 = vmatprep.subr.bf16.mxu0 0
      %3737 = vmatpush1.bf16.msra.mxu0 0
      %3738 = vmatprep.subr.bf16.mxu0 0
      %3739 = vmatpush1.bf16.msra.mxu0 0
      %3740 = vmatprep.subr.bf16.mxu0 0
      %3741 = vmatpush1.bf16.msra.mxu0 0
      %3742 = vmatprep.subr.bf16.mxu0 0
      %3743 = vmatpush1.bf16.msra.mxu0 0
      %3744 = vmatprep.subr.bf16.mxu0 0
      %3745 = vmatpush1.bf16.msra.mxu0 0
      %3746 = vmatprep.subr.bf16.mxu0 0
      %3747 = vmatpush1.bf16.msra.mxu0 0
      %3748 = vmatprep.subr.bf16.mxu0 0
      %3749 = vmatpush1.bf16.msra.mxu0 0
      %3750 = vmatprep.subr.bf16.mxu0 0
      %3751 = vmatpush1.bf16.msra.mxu0 0
      %3752 = vmatprep.mubr.bf16.mxu0 0
      %3753 = vmatmul.mubr.bf16.gmra.mrb[0].mxu0 %v3190
      %v3754 = vpop.f32.mrb[0].mxu0
      %v3755 = vadd.f32 %v3594, %v3754
      %v3756 = vpop.f32.mrb[0].mxu0
      %v3757 = vpop.f32.mrb[0].mxu0
      %v3758 = vadd.f32 %v3597, %v3757
      %v3759 = vpop.f32.mrb[0].mxu0
      %3760 = vmatprep.mubr.bf16.mxu0 0
      %3761 = vmatmul.mubr.bf16.gmra.mrb[0].mxu0 %v3193
      %v3762 = vpop.f32.mrb[0].mxu0
      %v3763 = vadd.f32 %v3602, %v3762
      %v3764 = vpop.f32.mrb[0].mxu0
      %v3765 = vpop.f32.mrb[0].mxu0
      %v3766 = vadd.f32 %v3605, %v3765
      %v3767 = vpop.f32.mrb[0].mxu0
      %3768 = vmatprep.mubr.bf16.mxu0 0
      %3769 = vmatmul.mubr.bf16.gmra.mrb[0].mxu0 %v3196
      %v3770 = vpop.f32.mrb[0].mxu0
      %v3771 = vadd.f32 %v3610, %v3770
      %v3772 = vpop.f32.mrb[0].mxu0
      %v3773 = vpop.f32.mrb[0].mxu0
      %v3774 = vadd.f32 %v3613, %v3773
      %v3775 = vpop.f32.mrb[0].mxu0
      %3776 = vmatprep.mubr.bf16.mxu0 0
      %3777 = vmatmul.mubr.bf16.gmra.mrb[0].mxu0 %v3199
      %v3778 = vpop.f32.mrb[0].mxu0
      %v3779 = vadd.f32 %v3618, %v3778
      %v3780 = vpop.f32.mrb[0].mxu0
      %v3781 = vpop.f32.mrb[0].mxu0
      %v3782 = vadd.f32 %v3621, %v3781
      %v3783 = vpop.f32.mrb[0].mxu0
      %3784 = vmatprep.mubr.bf16.mxu0 0
      %3785 = vmatmul.mubr.bf16.gmra.mrb[0].mxu0 %v3202
      %v3786 = vpop.f32.mrb[0].mxu0
      %v3787 = vadd.f32 %v3626, %v3786
      %v3788 = vpop.f32.mrb[0].mxu0
      %v3789 = vpop.f32.mrb[0].mxu0
      %v3790 = vadd.f32 %v3629, %v3789
      %v3791 = vpop.f32.mrb[0].mxu0
      %3792 = vmatprep.mubr.bf16.mxu0 0
      %3793 = vmatmul.mubr.bf16.gmra.mrb[0].mxu0 %v3205
      %v3794 = vpop.f32.mrb[0].mxu0
      %v3795 = vadd.f32 %v3634, %v3794
      %v3796 = vpop.f32.mrb[0].mxu0
      %v3797 = vpop.f32.mrb[0].mxu0
      %v3798 = vadd.f32 %v3637, %v3797
      %v3799 = vpop.f32.mrb[0].mxu0
      %3800 = vmatprep.mubr.bf16.mxu0 0
      %3801 = vmatmul.mubr.bf16.gmra.mrb[0].mxu0 %v3208
      %v3802 = vpop.f32.mrb[0].mxu0
      %v3803 = vadd.f32 %v3642, %v3802
      %v3804 = vpop.f32.mrb[0].mxu0
      %v3805 = vpop.f32.mrb[0].mxu0
      %v3806 = vadd.f32 %v3645, %v3805
      %v3807 = vpop.f32.mrb[0].mxu0
      %3808 = vmatprep.mubr.bf16.mxu0 0
      %3809 = vmatmul.mubr.bf16.gmra.mrb[0].mxu0 %v3211
      %v3810 = vpop.f32.mrb[0].mxu0
      %v3811 = vadd.f32 %v3650, %v3810
      %v3812 = vpop.f32.mrb[0].mxu0
      %v3813 = vpop.f32.mrb[0].mxu0
      %v3814 = vadd.f32 %v3653, %v3813
      %v3815 = vpop.f32.mrb[0].mxu0
      %3816 = vmatprep.mubr.bf16.mxu0 0
      %3817 = vmatmul.mubr.bf16.gmra.mrb[0].mxu0 %v3214
      %v3818 = vpop.f32.mrb[0].mxu0
      %v3819 = vadd.f32 %v3658, %v3818
      %v3820 = vpop.f32.mrb[0].mxu0
      %v3821 = vpop.f32.mrb[0].mxu0
      %v3822 = vadd.f32 %v3661, %v3821
      %v3823 = vpop.f32.mrb[0].mxu0
      %3824 = vmatprep.mubr.bf16.mxu0 0
      %3825 = vmatmul.mubr.bf16.gmra.mrb[0].mxu0 %v3217
      %v3826 = vpop.f32.mrb[0].mxu0
      %v3827 = vadd.f32 %v3666, %v3826
      %v3828 = vpop.f32.mrb[0].mxu0
      %v3829 = vpop.f32.mrb[0].mxu0
      %v3830 = vadd.f32 %v3669, %v3829
      %v3831 = vpop.f32.mrb[0].mxu0
      %3832 = vmatprep.mubr.bf16.mxu0 0
      %3833 = vmatmul.mubr.bf16.gmra.mrb[0].mxu0 %v3220
      %v3834 = vpop.f32.mrb[0].mxu0
      %v3835 = vadd.f32 %v3674, %v3834
      %v3836 = vpop.f32.mrb[0].mxu0
      %v3837 = vpop.f32.mrb[0].mxu0
      %v3838 = vadd.f32 %v3677, %v3837
      %v3839 = vpop.f32.mrb[0].mxu0
      %3840 = vmatprep.mubr.bf16.mxu0 0
      %3841 = vmatmul.mubr.bf16.gmra.mrb[0].mxu0 %v3223
      %v3842 = vpop.f32.mrb[0].mxu0
      %v3843 = vadd.f32 %v3682, %v3842
      %v3844 = vpop.f32.mrb[0].mxu0
      %v3845 = vpop.f32.mrb[0].mxu0
      %v3846 = vadd.f32 %v3685, %v3845
      %v3847 = vpop.f32.mrb[0].mxu0
      %3848 = vmatprep.mubr.bf16.mxu0 0
      %3849 = vmatmul.mubr.bf16.gmra.mrb[0].mxu0 %v3226
      %v3850 = vpop.f32.mrb[0].mxu0
      %v3851 = vadd.f32 %v3690, %v3850
      %v3852 = vpop.f32.mrb[0].mxu0
      %v3853 = vpop.f32.mrb[0].mxu0
      %v3854 = vadd.f32 %v3693, %v3853
      %v3855 = vpop.f32.mrb[0].mxu0
      %3856 = vmatprep.mubr.bf16.mxu0 0
      %3857 = vmatmul.mubr.bf16.gmra.mrb[0].mxu0 %v3229
      %v3858 = vpop.f32.mrb[0].mxu0
      %v3859 = vadd.f32 %v3698, %v3858
      %v3860 = vpop.f32.mrb[0].mxu0
      %v3861 = vpop.f32.mrb[0].mxu0
      %v3862 = vadd.f32 %v3701, %v3861
      %v3863 = vpop.f32.mrb[0].mxu0
      %3864 = vmatprep.mubr.bf16.mxu0 0
      %3865 = vmatmul.mubr.bf16.gmra.mrb[0].mxu0 %v3232
      %v3866 = vpop.f32.mrb[0].mxu0
      %v3867 = vadd.f32 %v3706, %v3866
      %v3868 = vpop.f32.mrb[0].mxu0
      %v3869 = vpop.f32.mrb[0].mxu0
      %v3870 = vadd.f32 %v3709, %v3869
      %v3871 = vpop.f32.mrb[0].mxu0
      %3872 = vmatprep.mubr.bf16.mxu0 0
      %3873 = vmatmul.mubr.bf16.gmra.mrb[0].mxu0 %v3235
      %v3874 = vpop.f32.mrb[0].mxu0
      %v3875 = vadd.f32 %v3714, %v3874
      %v3876 = vpop.f32.mrb[0].mxu0
      %v3877 = vpop.f32.mrb[0].mxu0
      %v3878 = vadd.f32 %v3717, %v3877
      %v3879 = vpop.f32.mrb[0].mxu0
      %3880 = vdwg.mxu0
      %v3881 = vld [vmem:[#allocation2] sm:$0xff]
      %v3882 = vld [vmem:[#allocation2 + $0x8] sm:$0xff]
      %v3883 = vld [vmem:[#allocation2 + $0x10] sm:$0xff]
      %v3884 = vld [vmem:[#allocation2 + $0x18] sm:$0xff]
      %v3885 = vld [vmem:[#allocation2 + $0x20] sm:$0xff]
      %v3886 = vld [vmem:[#allocation2 + $0x28] sm:$0xff]
      %v3887 = vld [vmem:[#allocation2 + $0x30] sm:$0xff]
      %v3888 = vld [vmem:[#allocation2 + $0x38] sm:$0xff]
      %v3889 = vld [vmem:[#allocation2 + $0x40] sm:$0xff]
      %v3890 = vld [vmem:[#allocation2 + $0x48] sm:$0xff]
      %v3891 = vld [vmem:[#allocation2 + $0x50] sm:$0xff]
      %v3892 = vld [vmem:[#allocation2 + $0x58] sm:$0xff]
      %v3893 = vld [vmem:[#allocation2 + $0x60] sm:$0xff]
      %v3894 = vld [vmem:[#allocation2 + $0x68] sm:$0xff]
      %v3895 = vld [vmem:[#allocation2 + $0x70] sm:$0xff]
      %v3896 = vld [vmem:[#allocation2 + $0x78] sm:$0xff]
      %v3897 = vld [vmem:[#allocation2 + $0x80] sm:$0xff]
      %v3898 = vld [vmem:[#allocation2 + $0x88] sm:$0xff]
      %v3899 = vld [vmem:[#allocation2 + $0x90] sm:$0xff]
      %v3900 = vld [vmem:[#allocation2 + $0x98] sm:$0xff]
      %v3901 = vld [vmem:[#allocation2 + $0xa0] sm:$0xff]
      %v3902 = vld [vmem:[#allocation2 + $0xa8] sm:$0xff]
      %v3903 = vld [vmem:[#allocation2 + $0xb0] sm:$0xff]
      %v3904 = vld [vmem:[#allocation2 + $0xb8] sm:$0xff]
      %v3905 = vld [vmem:[#allocation2 + $0xc0] sm:$0xff]
      %v3906 = vld [vmem:[#allocation2 + $0xc8] sm:$0xff]
      %v3907 = vld [vmem:[#allocation2 + $0xd0] sm:$0xff]
      %v3908 = vld [vmem:[#allocation2 + $0xd8] sm:$0xff]
      %v3909 = vld [vmem:[#allocation2 + $0xe0] sm:$0xff]
      %v3910 = vld [vmem:[#allocation2 + $0xe8] sm:$0xff]
      %v3911 = vld [vmem:[#allocation2 + $0xf0] sm:$0xff]
      %v3912 = vld [vmem:[#allocation2 + $0xf8] sm:$0xff]
      %v3913 = vadd.f32 %v3881, %v3755
      %v3914 = vadd.f32 %v3882, %v3758
      %v3915 = vadd.f32 %v3883, %v3763
      %v3916 = vadd.f32 %v3884, %v3766
      %v3917 = vadd.f32 %v3885, %v3771
      %v3918 = vadd.f32 %v3886, %v3774
      %v3919 = vadd.f32 %v3887, %v3779
      %v3920 = vadd.f32 %v3888, %v3782
      %v3921 = vadd.f32 %v3889, %v3787
      %v3922 = vadd.f32 %v3890, %v3790
      %v3923 = vadd.f32 %v3891, %v3795
      %v3924 = vadd.f32 %v3892, %v3798
      %v3925 = vadd.f32 %v3893, %v3803
      %v3926 = vadd.f32 %v3894, %v3806
      %v3927 = vadd.f32 %v3895, %v3811
      %v3928 = vadd.f32 %v3896, %v3814
      %v3929 = vadd.f32 %v3897, %v3819
      %v3930 = vadd.f32 %v3898, %v3822
      %v3931 = vadd.f32 %v3899, %v3827
      %v3932 = vadd.f32 %v3900, %v3830
      %v3933 = vadd.f32 %v3901, %v3835
      %v3934 = vadd.f32 %v3902, %v3838
      %v3935 = vadd.f32 %v3903, %v3843
      %v3936 = vadd.f32 %v3904, %v3846
      %v3937 = vadd.f32 %v3905, %v3851
      %v3938 = vadd.f32 %v3906, %v3854
      %v3939 = vadd.f32 %v3907, %v3859
      %v3940 = vadd.f32 %v3908, %v3862
      %v3941 = vadd.f32 %v3909, %v3867
      %v3942 = vadd.f32 %v3910, %v3870
      %v3943 = vadd.f32 %v3911, %v3875
      %v3944 = vadd.f32 %v3912, %v3878
      %3945 = vst [vmem:[#allocation2] sm:$0xff] %v3913
      %3946 = vst [vmem:[#allocation2 + $0x8] sm:$0xff] %v3914
      %3947 = vst [vmem:[#allocation2 + $0x10] sm:$0xff] %v3915
      %3948 = vst [vmem:[#allocation2 + $0x18] sm:$0xff] %v3916
      %3949 = vst [vmem:[#allocation2 + $0x20] sm:$0xff] %v3917
      %3950 = vst [vmem:[#allocation2 + $0x28] sm:$0xff] %v3918
      %3951 = vst [vmem:[#allocation2 + $0x30] sm:$0xff] %v3919
      %3952 = vst [vmem:[#allocation2 + $0x38] sm:$0xff] %v3920
      %3953 = vst [vmem:[#allocation2 + $0x40] sm:$0xff] %v3921
      %3954 = vst [vmem:[#allocation2 + $0x48] sm:$0xff] %v3922
      %3955 = vst [vmem:[#allocation2 + $0x50] sm:$0xff] %v3923
      %3956 = vst [vmem:[#allocation2 + $0x58] sm:$0xff] %v3924
      %3957 = vst [vmem:[#allocation2 + $0x60] sm:$0xff] %v3925
      %3958 = vst [vmem:[#allocation2 + $0x68] sm:$0xff] %v3926
      %3959 = vst [vmem:[#allocation2 + $0x70] sm:$0xff] %v3927
      %3960 = vst [vmem:[#allocation2 + $0x78] sm:$0xff] %v3928
      %3961 = vst [vmem:[#allocation2 + $0x80] sm:$0xff] %v3929
      %3962 = vst [vmem:[#allocation2 + $0x88] sm:$0xff] %v3930
      %3963 = vst [vmem:[#allocation2 + $0x90] sm:$0xff] %v3931
      %3964 = vst [vmem:[#allocation2 + $0x98] sm:$0xff] %v3932
      %3965 = vst [vmem:[#allocation2 + $0xa0] sm:$0xff] %v3933
      %3966 = vst [vmem:[#allocation2 + $0xa8] sm:$0xff] %v3934
      %3967 = vst [vmem:[#allocation2 + $0xb0] sm:$0xff] %v3935
      %3968 = vst [vmem:[#allocation2 + $0xb8] sm:$0xff] %v3936
      %3969 = vst [vmem:[#allocation2 + $0xc0] sm:$0xff] %v3937
      %3970 = vst [vmem:[#allocation2 + $0xc8] sm:$0xff] %v3938
      %3971 = vst [vmem:[#allocation2 + $0xd0] sm:$0xff] %v3939
      %3972 = vst [vmem:[#allocation2 + $0xd8] sm:$0xff] %v3940
      %3973 = vst [vmem:[#allocation2 + $0xe0] sm:$0xff] %v3941
      %3974 = vst [vmem:[#allocation2 + $0xe8] sm:$0xff] %v3942
      %3975 = vst [vmem:[#allocation2 + $0xf0] sm:$0xff] %v3943
      %3976 = vst [vmem:[#allocation2 + $0xf8] sm:$0xff] %v3944
      %v3977 = vld [vmem:[%s206 + $0x1c0] sm:$0xff]
      %v3978 = vld [vmem:[%s206 + $0x1c8] sm:$0xff]
      %v3979 = vld [vmem:[%s206 + $0x1d0] sm:$0xff]
      %v3980 = vld [vmem:[%s206 + $0x1d8] sm:$0xf]
      %v3981 = vld [vmem:[%s206 + $0x1dc] sm:$0xff]
      %v3982 = vld [vmem:[%s206 + $0x1e4] sm:$0xff]
      %v3983 = vld [vmem:[%s206 + $0x1ec] sm:$0xff]
      %v3984 = vld [vmem:[%s206 + $0x1f4] sm:$0xf]
      %v3985 = vld [vmem:[%s206 + $0x1f8] sm:$0xff]
      %v3986 = vld [vmem:[%s206 + $0x200] sm:$0xff]
      %v3987 = vld [vmem:[%s206 + $0x208] sm:$0xff]
      %v3988 = vld [vmem:[%s206 + $0x210] sm:$0xf]
      %v3989 = vld [vmem:[%s206 + $0x214] sm:$0xff]
      %v3990 = vld [vmem:[%s206 + $0x21c] sm:$0xff]
      %v3991 = vld [vmem:[%s206 + $0x224] sm:$0xff]
      %v3992 = vld [vmem:[%s206 + $0x22c] sm:$0xf]
      %v3993 = vld [vmem:[%s206 + $0x230] sm:$0xff]
      %v3994 = vld [vmem:[%s206 + $0x238] sm:$0xff]
      %v3995 = vld [vmem:[%s206 + $0x240] sm:$0xff]
      %v3996 = vld [vmem:[%s206 + $0x248] sm:$0xf]
      %v3997 = vld [vmem:[%s206 + $0x24c] sm:$0xff]
      %v3998 = vld [vmem:[%s206 + $0x254] sm:$0xff]
      %v3999 = vld [vmem:[%s206 + $0x25c] sm:$0xff]
      %v4000 = vld [vmem:[%s206 + $0x264] sm:$0xf]
      %v4001 = vld [vmem:[%s206 + $0x268] sm:$0xff]
      %v4002 = vld [vmem:[%s206 + $0x270] sm:$0xff]
      %v4003 = vld [vmem:[%s206 + $0x278] sm:$0xff]
      %v4004 = vld [vmem:[%s206 + $0x280] sm:$0xf]
      %v4005 = vld [vmem:[%s206 + $0x284] sm:$0xff]
      %v4006 = vld [vmem:[%s206 + $0x28c] sm:$0xff]
      %v4007 = vld [vmem:[%s206 + $0x294] sm:$0xff]
      %v4008 = vld [vmem:[%s206 + $0x29c] sm:$0xf]
      %v4009 = vld [vmem:[%s206 + $0x2a0] sm:$0xff]
      %v4010 = vld [vmem:[%s206 + $0x2a8] sm:$0xff]
      %v4011 = vld [vmem:[%s206 + $0x2b0] sm:$0xff]
      %v4012 = vld [vmem:[%s206 + $0x2b8] sm:$0xf]
      %v4013 = vld [vmem:[%s206 + $0x2bc] sm:$0xff]
      %v4014 = vld [vmem:[%s206 + $0x2c4] sm:$0xff]
      %v4015 = vld [vmem:[%s206 + $0x2cc] sm:$0xff]
      %v4016 = vld [vmem:[%s206 + $0x2d4] sm:$0xf]
      %v4017 = vld [vmem:[%s206 + $0x2d8] sm:$0xff]
      %v4018 = vld [vmem:[%s206 + $0x2e0] sm:$0xff]
      %v4019 = vld [vmem:[%s206 + $0x2e8] sm:$0xff]
      %v4020 = vld [vmem:[%s206 + $0x2f0] sm:$0xf]
      %v4021 = vld [vmem:[%s206 + $0x2f4] sm:$0xff]
      %v4022 = vld [vmem:[%s206 + $0x2fc] sm:$0xff]
      %v4023 = vld [vmem:[%s206 + $0x304] sm:$0xff]
      %v4024 = vld [vmem:[%s206 + $0x30c] sm:$0xf]
      %v4025 = vld [vmem:[%s206 + $0x310] sm:$0xff]
      %v4026 = vld [vmem:[%s206 + $0x318] sm:$0xff]
      %v4027 = vld [vmem:[%s206 + $0x320] sm:$0xff]
      %v4028 = vld [vmem:[%s206 + $0x328] sm:$0xf]
      %v4029 = vld [vmem:[%s206 + $0x32c] sm:$0xff]
      %v4030 = vld [vmem:[%s206 + $0x334] sm:$0xff]
      %v4031 = vld [vmem:[%s206 + $0x33c] sm:$0xff]
      %v4032 = vld [vmem:[%s206 + $0x344] sm:$0xf]
      %v4033 = vld [vmem:[%s206 + $0x348] sm:$0xff]
      %v4034 = vld [vmem:[%s206 + $0x350] sm:$0xff]
      %v4035 = vld [vmem:[%s206 + $0x358] sm:$0xff]
      %v4036 = vld [vmem:[%s206 + $0x360] sm:$0xf]
      %v4037 = vld [vmem:[%s206 + $0x364] sm:$0xff]
      %v4038 = vld [vmem:[%s206 + $0x36c] sm:$0xff]
      %v4039 = vld [vmem:[%s206 + $0x374] sm:$0xff]
      %v4040 = vld [vmem:[%s206 + $0x37c] sm:$0xf]
      %v4041 = vld [vmem:[%s206 + $0x380] sm:$0xff]
      %v4042 = vld [vmem:[%s206 + $0x388] sm:$0xff]
      %v4043 = vld [vmem:[%s206 + $0x390] sm:$0xff]
      %v4044 = vld [vmem:[%s206 + $0x398] sm:$0xf]
      %v4045 = vld [vmem:[%s206 + $0x39c] sm:$0xff]
      %v4046 = vld [vmem:[%s206 + $0x3a4] sm:$0xff]
      %v4047 = vld [vmem:[%s206 + $0x3ac] sm:$0xff]
      %v4048 = vld [vmem:[%s206 + $0x3b4] sm:$0xf]
      %v4049 = vld [vmem:[%s206 + $0x3b8] sm:$0xff]
      %v4050 = vld [vmem:[%s206 + $0x3c0] sm:$0xff]
      %v4051 = vld [vmem:[%s206 + $0x3c8] sm:$0xff]
      %v4052 = vld [vmem:[%s206 + $0x3d0] sm:$0xf]
      %v4053 = vld [vmem:[%s206 + $0x3d4] sm:$0xff]
      %v4054 = vld [vmem:[%s206 + $0x3dc] sm:$0xff]
      %v4055 = vld [vmem:[%s206 + $0x3e4] sm:$0xff]
      %v4056 = vld [vmem:[%s206 + $0x3ec] sm:$0xf]
      %v4057 = vld [vmem:[%s206 + $0x3f0] sm:$0xff]
      %v4058 = vld [vmem:[%s206 + $0x3f8] sm:$0xff]
      %v4059 = vld [vmem:[%s206 + $0x400] sm:$0xff]
      %v4060 = vld [vmem:[%s206 + $0x408] sm:$0xf]
      %v4061 = vld [vmem:[%s206 + $0x40c] sm:$0xff]
      %v4062 = vld [vmem:[%s206 + $0x414] sm:$0xff]
      %v4063 = vld [vmem:[%s206 + $0x41c] sm:$0xff]
      %v4064 = vld [vmem:[%s206 + $0x424] sm:$0xf]
      %v4065 = vld [vmem:[%s206 + $0x428] sm:$0xff]
      %v4066 = vld [vmem:[%s206 + $0x430] sm:$0xff]
      %v4067 = vld [vmem:[%s206 + $0x438] sm:$0xff]
      %v4068 = vld [vmem:[%s206 + $0x440] sm:$0xf]
      %v4069 = vld [vmem:[%s206 + $0x444] sm:$0xff]
      %v4070 = vld [vmem:[%s206 + $0x44c] sm:$0xff]
      %v4071 = vld [vmem:[%s206 + $0x454] sm:$0xff]
      %v4072 = vld [vmem:[%s206 + $0x45c] sm:$0xf]
      %v4073 = vld [vmem:[%s206 + $0x460] sm:$0xff]
      %v4074 = vld [vmem:[%s206 + $0x468] sm:$0xff]
      %v4075 = vld [vmem:[%s206 + $0x470] sm:$0xff]
      %v4076 = vld [vmem:[%s206 + $0x478] sm:$0xf]
      %v4077 = vld [vmem:[%s206 + $0x47c] sm:$0xff]
      %v4078 = vld [vmem:[%s206 + $0x484] sm:$0xff]
      %v4079 = vld [vmem:[%s206 + $0x48c] sm:$0xff]
      %v4080 = vld [vmem:[%s206 + $0x494] sm:$0xf]
      %v4081 = vld [vmem:[%s206 + $0x498] sm:$0xff]
      %v4082 = vld [vmem:[%s206 + $0x4a0] sm:$0xff]
      %v4083 = vld [vmem:[%s206 + $0x4a8] sm:$0xff]
      %v4084 = vld [vmem:[%s206 + $0x4b0] sm:$0xf]
      %v4085 = vld [vmem:[%s206 + $0x4b4] sm:$0xff]
      %v4086 = vld [vmem:[%s206 + $0x4bc] sm:$0xff]
      %v4087 = vld [vmem:[%s206 + $0x4c4] sm:$0xff]
      %v4088 = vld [vmem:[%s206 + $0x4cc] sm:$0xf]
      %v4089 = vld [vmem:[%s206 + $0x4d0] sm:$0xff]
      %v4090 = vld [vmem:[%s206 + $0x4d8] sm:$0xff]
      %v4091 = vld [vmem:[%s206 + $0x4e0] sm:$0xff]
      %v4092 = vld [vmem:[%s206 + $0x4e8] sm:$0xf]
      %v4093 = vld [vmem:[%s206 + $0x4ec] sm:$0xff]
      %v4094 = vld [vmem:[%s206 + $0x4f4] sm:$0xff]
      %v4095 = vld [vmem:[%s206 + $0x4fc] sm:$0xff]
      %v4096 = vld [vmem:[%s206 + $0x504] sm:$0xf]
      %v4097 = vld [vmem:[%s206 + $0x508] sm:$0xff]
      %v4098 = vld [vmem:[%s206 + $0x510] sm:$0xff]
      %v4099 = vld [vmem:[%s206 + $0x518] sm:$0xff]
      %v4100 = vld [vmem:[%s206 + $0x520] sm:$0xf]
      %v4101 = vld [vmem:[%s206 + $0x524] sm:$0xff]
      %v4102 = vld [vmem:[%s206 + $0x52c] sm:$0xff]
      %v4103 = vld [vmem:[%s206 + $0x534] sm:$0xff]
      %v4104 = vld [vmem:[%s206 + $0x53c] sm:$0xf]
      %s4105 = scalar_lea.vmem %s210, 864
      %v4106 = vld [vmem:[%s4105] sm:$0xf]
      %v4107 = vld [vmem:[%s4105 + $0x4] sm:$0xf]
      %v4108 = vld [vmem:[%s4105 + $0x8] sm:$0xf]
      %v4109 = vld [vmem:[%s4105 + $0xc] sm:$0xf]
      %v4110 = vld [vmem:[%s4105 + $0x10] sm:$0xf]
      %v4111 = vld [vmem:[%s4105 + $0x14] sm:$0xf]
      %v4112 = vld [vmem:[%s4105 + $0x18] sm:$0xf]
      %v4113 = vld [vmem:[%s4105 + $0x1c] sm:$0xf]
      %v4114 = vld [vmem:[%s4105 + $0x20] sm:$0xf]
      %v4115 = vld [vmem:[%s4105 + $0x24] sm:$0xf]
      %v4116 = vld [vmem:[%s4105 + $0x28] sm:$0xf]
      %v4117 = vld [vmem:[%s4105 + $0x2c] sm:$0xf]
      %v4118 = vld [vmem:[%s4105 + $0x30] sm:$0xf]
      %v4119 = vld [vmem:[%s4105 + $0x34] sm:$0xf]
      %v4120 = vld [vmem:[%s4105 + $0x38] sm:$0xf]
      %v4121 = vld [vmem:[%s4105 + $0x3c] sm:$0xf]
      %v4122 = vld [vmem:[%s4105 + $0x40] sm:$0xf]
      %v4123 = vld [vmem:[%s4105 + $0x44] sm:$0xf]
      %v4124 = vld [vmem:[%s4105 + $0x48] sm:$0xf]
      %v4125 = vld [vmem:[%s4105 + $0x4c] sm:$0xf]
      %v4126 = vld [vmem:[%s4105 + $0x50] sm:$0xf]
      %v4127 = vld [vmem:[%s4105 + $0x54] sm:$0xf]
      %v4128 = vld [vmem:[%s4105 + $0x58] sm:$0xf]
      %v4129 = vld [vmem:[%s4105 + $0x5c] sm:$0xf]
      %v4130 = vld [vmem:[%s4105 + $0x60] sm:$0xf]
      %v4131 = vld [vmem:[%s4105 + $0x64] sm:$0xf]
      %v4132 = vld [vmem:[%s4105 + $0x68] sm:$0xf]
      %v4133 = vld [vmem:[%s4105 + $0x6c] sm:$0xf]
      %v4134 = vld [vmem:[%s4105 + $0x70] sm:$0xf]
      %v4135 = vld [vmem:[%s4105 + $0x74] sm:$0xf]
      %v4136 = vld [vmem:[%s4105 + $0x78] sm:$0xf]
      %v4137 = vld [vmem:[%s4105 + $0x7c] sm:$0xf]
      %v4138 = vld [vmem:[%s4105 + $0x80] sm:$0xf]
      %v4139 = vld [vmem:[%s4105 + $0x84] sm:$0xf]
      %v4140 = vld [vmem:[%s4105 + $0x88] sm:$0xf]
      %v4141 = vld [vmem:[%s4105 + $0x8c] sm:$0xf]
      %v4142 = vld [vmem:[%s4105 + $0x90] sm:$0xf]
      %v4143 = vld [vmem:[%s4105 + $0x94] sm:$0xf]
      %v4144 = vld [vmem:[%s4105 + $0x98] sm:$0xf]
      %v4145 = vld [vmem:[%s4105 + $0x9c] sm:$0xf]
      %v4146 = vld [vmem:[%s4105 + $0xa0] sm:$0xf]
      %v4147 = vld [vmem:[%s4105 + $0xa4] sm:$0xf]
      %v4148 = vld [vmem:[%s4105 + $0xa8] sm:$0xf]
      %v4149 = vld [vmem:[%s4105 + $0xac] sm:$0xf]
      %v4150 = vld [vmem:[%s4105 + $0xb0] sm:$0xf]
      %v4151 = vld [vmem:[%s4105 + $0xb4] sm:$0xf]
      %v4152 = vld [vmem:[%s4105 + $0xb8] sm:$0xf]
      %v4153 = vld [vmem:[%s4105 + $0xbc] sm:$0xf]
      %v4154 = vld [vmem:[%s4105 + $0xc0] sm:$0xf]
      %v4155 = vld [vmem:[%s4105 + $0xc4] sm:$0xf]
      %v4156 = vld [vmem:[%s4105 + $0xc8] sm:$0xf]
      %v4157 = vld [vmem:[%s4105 + $0xcc] sm:$0xf]
      %v4158 = vld [vmem:[%s4105 + $0xd0] sm:$0xf]
      %v4159 = vld [vmem:[%s4105 + $0xd4] sm:$0xf]
      %v4160 = vld [vmem:[%s4105 + $0xd8] sm:$0xf]
      %v4161 = vld [vmem:[%s4105 + $0xdc] sm:$0xf]
      %v4162 = vld [vmem:[%s4105 + $0xe0] sm:$0xf]
      %v4163 = vld [vmem:[%s4105 + $0xe4] sm:$0xf]
      %v4164 = vld [vmem:[%s4105 + $0xe8] sm:$0xf]
      %v4165 = vld [vmem:[%s4105 + $0xec] sm:$0xf]
      %v4166 = vld [vmem:[%s4105 + $0xf0] sm:$0xf]
      %v4167 = vld [vmem:[%s4105 + $0xf4] sm:$0xf]
      %v4168 = vld [vmem:[%s4105 + $0xf8] sm:$0xf]
      %v4169 = vld [vmem:[%s4105 + $0xfc] sm:$0xf]
      %v4170 = vld [vmem:[%s4105 + $0x100] sm:$0xf]
      %v4171 = vld [vmem:[%s4105 + $0x104] sm:$0xf]
      %v4172 = vld [vmem:[%s4105 + $0x108] sm:$0xf]
      %v4173 = vld [vmem:[%s4105 + $0x10c] sm:$0xf]
      %v4174 = vld [vmem:[%s4105 + $0x110] sm:$0xf]
      %v4175 = vld [vmem:[%s4105 + $0x114] sm:$0xf]
      %v4176 = vld [vmem:[%s4105 + $0x118] sm:$0xf]
      %v4177 = vld [vmem:[%s4105 + $0x11c] sm:$0xf]
      %v4178 = vld [vmem:[%s4105 + $0x120] sm:$0xf]
      %v4179 = vld [vmem:[%s4105 + $0x124] sm:$0xf]
      %v4180 = vld [vmem:[%s4105 + $0x128] sm:$0xf]
      %v4181 = vld [vmem:[%s4105 + $0x12c] sm:$0xf]
      %v4182 = vld [vmem:[%s4105 + $0x130] sm:$0xf]
      %v4183 = vld [vmem:[%s4105 + $0x134] sm:$0xf]
      %v4184 = vld [vmem:[%s4105 + $0x138] sm:$0xf]
      %v4185 = vld [vmem:[%s4105 + $0x13c] sm:$0xf]
      %v4186 = vld [vmem:[%s4105 + $0x140] sm:$0xf]
      %v4187 = vld [vmem:[%s4105 + $0x144] sm:$0xf]
      %v4188 = vld [vmem:[%s4105 + $0x148] sm:$0xf]
      %v4189 = vld [vmem:[%s4105 + $0x14c] sm:$0xf]
      %v4190 = vld [vmem:[%s4105 + $0x150] sm:$0xf]
      %v4191 = vld [vmem:[%s4105 + $0x154] sm:$0xf]
      %v4192 = vld [vmem:[%s4105 + $0x158] sm:$0xf]
      %v4193 = vld [vmem:[%s4105 + $0x15c] sm:$0xf]
      %v4194 = vld [vmem:[%s4105 + $0x160] sm:$0xf]
      %v4195 = vld [vmem:[%s4105 + $0x164] sm:$0xf]
      %v4196 = vld [vmem:[%s4105 + $0x168] sm:$0xf]
      %v4197 = vld [vmem:[%s4105 + $0x16c] sm:$0xf]
      %v4198 = vld [vmem:[%s4105 + $0x170] sm:$0xf]
      %v4199 = vld [vmem:[%s4105 + $0x174] sm:$0xf]
      %v4200 = vld [vmem:[%s4105 + $0x178] sm:$0xf]
      %v4201 = vld [vmem:[%s4105 + $0x17c] sm:$0xf]
      %v4202 = vld [vmem:[%s4105 + $0x180] sm:$0xf]
      %v4203 = vld [vmem:[%s4105 + $0x184] sm:$0xf]
      %v4204 = vld [vmem:[%s4105 + $0x188] sm:$0xf]
      %v4205 = vld [vmem:[%s4105 + $0x18c] sm:$0xf]
      %v4206 = vld [vmem:[%s4105 + $0x190] sm:$0xf]
      %v4207 = vld [vmem:[%s4105 + $0x194] sm:$0xf]
      %v4208 = vld [vmem:[%s4105 + $0x198] sm:$0xf]
      %v4209 = vld [vmem:[%s4105 + $0x19c] sm:$0xf]
      %v4210 = vld [vmem:[%s4105 + $0x1a0] sm:$0xf]
      %v4211 = vld [vmem:[%s4105 + $0x1a4] sm:$0xf]
      %v4212 = vld [vmem:[%s4105 + $0x1a8] sm:$0xf]
      %v4213 = vld [vmem:[%s4105 + $0x1ac] sm:$0xf]
      %v4342 = vunpack.c.l.b16 %v3977
      %v4343 = vunpack.c.h.b16 %v3977
      %v4344 = vunpack.c.l.b16 %v3978
      %v4345 = vunpack.c.h.b16 %v3978
      %v4346 = vunpack.c.l.b16 %v3979
      %v4347 = vunpack.c.h.b16 %v3979
      %v4348 = vunpack.c.l.b16 %v3980
      %v4349 = vunpack.c.l.b16 %v3981
      %v4350 = vunpack.c.h.b16 %v3981
      %v4351 = vunpack.c.l.b16 %v3982
      %v4352 = vunpack.c.h.b16 %v3982
      %v4353 = vunpack.c.l.b16 %v3983
      %v4354 = vunpack.c.h.b16 %v3983
      %v4355 = vunpack.c.l.b16 %v3984
      %v4356 = vunpack.c.l.b16 %v3985
      %v4357 = vunpack.c.h.b16 %v3985
      %v4358 = vunpack.c.l.b16 %v3986
      %v4359 = vunpack.c.h.b16 %v3986
      %v4360 = vunpack.c.l.b16 %v3987
      %v4361 = vunpack.c.h.b16 %v3987
      %v4362 = vunpack.c.l.b16 %v3988
      %v4363 = vunpack.c.l.b16 %v3989
      %v4364 = vunpack.c.h.b16 %v3989
      %v4365 = vunpack.c.l.b16 %v3990
      %v4366 = vunpack.c.h.b16 %v3990
      %v4367 = vunpack.c.l.b16 %v3991
      %v4368 = vunpack.c.h.b16 %v3991
      %v4369 = vunpack.c.l.b16 %v3992
      %v4370 = vunpack.c.l.b16 %v3993
      %v4371 = vunpack.c.h.b16 %v3993
      %v4372 = vunpack.c.l.b16 %v3994
      %v4373 = vunpack.c.h.b16 %v3994
      %v4374 = vunpack.c.l.b16 %v3995
      %v4375 = vunpack.c.h.b16 %v3995
      %v4376 = vunpack.c.l.b16 %v3996
      %v4377 = vunpack.c.l.b16 %v3997
      %v4378 = vunpack.c.h.b16 %v3997
      %v4379 = vunpack.c.l.b16 %v3998
      %v4380 = vunpack.c.h.b16 %v3998
      %v4381 = vunpack.c.l.b16 %v3999
      %v4382 = vunpack.c.h.b16 %v3999
      %v4383 = vunpack.c.l.b16 %v4000
      %v4384 = vunpack.c.l.b16 %v4001
      %v4385 = vunpack.c.h.b16 %v4001
      %v4386 = vunpack.c.l.b16 %v4002
      %v4387 = vunpack.c.h.b16 %v4002
      %v4388 = vunpack.c.l.b16 %v4003
      %v4389 = vunpack.c.h.b16 %v4003
      %v4390 = vunpack.c.l.b16 %v4004
      %v4391 = vunpack.c.l.b16 %v4005
      %v4392 = vunpack.c.h.b16 %v4005
      %v4393 = vunpack.c.l.b16 %v4006
      %v4394 = vunpack.c.h.b16 %v4006
      %v4395 = vunpack.c.l.b16 %v4007
      %v4396 = vunpack.c.h.b16 %v4007
      %v4397 = vunpack.c.l.b16 %v4008
      %v4398 = vunpack.c.l.b16 %v4009
      %v4399 = vunpack.c.h.b16 %v4009
      %v4400 = vunpack.c.l.b16 %v4010
      %v4401 = vunpack.c.h.b16 %v4010
      %v4402 = vunpack.c.l.b16 %v4011
      %v4403 = vunpack.c.h.b16 %v4011
      %v4404 = vunpack.c.l.b16 %v4012
      %v4405 = vunpack.c.l.b16 %v4013
      %v4406 = vunpack.c.h.b16 %v4013
      %v4407 = vunpack.c.l.b16 %v4014
      %v4408 = vunpack.c.h.b16 %v4014
      %v4409 = vunpack.c.l.b16 %v4015
      %v4410 = vunpack.c.h.b16 %v4015
      %v4411 = vunpack.c.l.b16 %v4016
      %v4412 = vunpack.c.l.b16 %v4017
      %v4413 = vunpack.c.h.b16 %v4017
      %v4414 = vunpack.c.l.b16 %v4018
      %v4415 = vunpack.c.h.b16 %v4018
      %v4416 = vunpack.c.l.b16 %v4019
      %v4417 = vunpack.c.h.b16 %v4019
      %v4418 = vunpack.c.l.b16 %v4020
      %v4419 = vunpack.c.l.b16 %v4021
      %v4420 = vunpack.c.h.b16 %v4021
      %v4421 = vunpack.c.l.b16 %v4022
      %v4422 = vunpack.c.h.b16 %v4022
      %v4423 = vunpack.c.l.b16 %v4023
      %v4424 = vunpack.c.h.b16 %v4023
      %v4425 = vunpack.c.l.b16 %v4024
      %v4426 = vunpack.c.l.b16 %v4025
      %v4427 = vunpack.c.h.b16 %v4025
      %v4428 = vunpack.c.l.b16 %v4026
      %v4429 = vunpack.c.h.b16 %v4026
      %v4430 = vunpack.c.l.b16 %v4027
      %v4431 = vunpack.c.h.b16 %v4027
      %v4432 = vunpack.c.l.b16 %v4028
      %v4433 = vunpack.c.l.b16 %v4029
      %v4434 = vunpack.c.h.b16 %v4029
      %v4435 = vunpack.c.l.b16 %v4030
      %v4436 = vunpack.c.h.b16 %v4030
      %v4437 = vunpack.c.l.b16 %v4031
      %v4438 = vunpack.c.h.b16 %v4031
      %v4439 = vunpack.c.l.b16 %v4032
      %v4440 = vunpack.c.l.b16 %v4033
      %v4441 = vunpack.c.h.b16 %v4033
      %v4442 = vunpack.c.l.b16 %v4034
      %v4443 = vunpack.c.h.b16 %v4034
      %v4444 = vunpack.c.l.b16 %v4035
      %v4445 = vunpack.c.h.b16 %v4035
      %v4446 = vunpack.c.l.b16 %v4036
      %v4447 = vunpack.c.l.b16 %v4037
      %v4448 = vunpack.c.h.b16 %v4037
      %v4449 = vunpack.c.l.b16 %v4038
      %v4450 = vunpack.c.h.b16 %v4038
      %v4451 = vunpack.c.l.b16 %v4039
      %v4452 = vunpack.c.h.b16 %v4039
      %v4453 = vunpack.c.l.b16 %v4040
      %v4454 = vunpack.c.l.b16 %v4041
      %v4455 = vunpack.c.h.b16 %v4041
      %v4456 = vunpack.c.l.b16 %v4042
      %v4457 = vunpack.c.h.b16 %v4042
      %v4458 = vunpack.c.l.b16 %v4043
      %v4459 = vunpack.c.h.b16 %v4043
      %v4460 = vunpack.c.l.b16 %v4044
      %v4461 = vunpack.c.l.b16 %v4045
      %v4462 = vunpack.c.h.b16 %v4045
      %v4463 = vunpack.c.l.b16 %v4046
      %v4464 = vunpack.c.h.b16 %v4046
      %v4465 = vunpack.c.l.b16 %v4047
      %v4466 = vunpack.c.h.b16 %v4047
      %v4467 = vunpack.c.l.b16 %v4048
      %v4468 = vunpack.c.l.b16 %v4049
      %v4469 = vunpack.c.h.b16 %v4049
      %v4470 = vunpack.c.l.b16 %v4050
      %v4471 = vunpack.c.h.b16 %v4050
      %v4472 = vunpack.c.l.b16 %v4051
      %v4473 = vunpack.c.h.b16 %v4051
      %v4474 = vunpack.c.l.b16 %v4052
      %v4475 = vunpack.c.l.b16 %v4053
      %v4476 = vunpack.c.h.b16 %v4053
      %v4477 = vunpack.c.l.b16 %v4054
      %v4478 = vunpack.c.h.b16 %v4054
      %v4479 = vunpack.c.l.b16 %v4055
      %v4480 = vunpack.c.h.b16 %v4055
      %v4481 = vunpack.c.l.b16 %v4056
      %v4482 = vunpack.c.l.b16 %v4057
      %v4483 = vunpack.c.h.b16 %v4057
      %v4484 = vunpack.c.l.b16 %v4058
      %v4485 = vunpack.c.h.b16 %v4058
      %v4486 = vunpack.c.l.b16 %v4059
      %v4487 = vunpack.c.h.b16 %v4059
      %v4488 = vunpack.c.l.b16 %v4060
      %v4489 = vunpack.c.l.b16 %v4061
      %v4490 = vunpack.c.h.b16 %v4061
      %v4491 = vunpack.c.l.b16 %v4062
      %v4492 = vunpack.c.h.b16 %v4062
      %v4493 = vunpack.c.l.b16 %v4063
      %v4494 = vunpack.c.h.b16 %v4063
      %v4495 = vunpack.c.l.b16 %v4064
      %v4496 = vunpack.c.l.b16 %v4065
      %v4497 = vunpack.c.h.b16 %v4065
      %v4498 = vunpack.c.l.b16 %v4066
      %v4499 = vunpack.c.h.b16 %v4066
      %v4500 = vunpack.c.l.b16 %v4067
      %v4501 = vunpack.c.h.b16 %v4067
      %v4502 = vunpack.c.l.b16 %v4068
      %v4503 = vunpack.c.l.b16 %v4069
      %v4504 = vunpack.c.h.b16 %v4069
      %v4505 = vunpack.c.l.b16 %v4070
      %v4506 = vunpack.c.h.b16 %v4070
      %v4507 = vunpack.c.l.b16 %v4071
      %v4508 = vunpack.c.h.b16 %v4071
      %v4509 = vunpack.c.l.b16 %v4072
      %v4510 = vunpack.c.l.b16 %v4073
      %v4511 = vunpack.c.h.b16 %v4073
      %v4512 = vunpack.c.l.b16 %v4074
      %v4513 = vunpack.c.h.b16 %v4074
      %v4514 = vunpack.c.l.b16 %v4075
      %v4515 = vunpack.c.h.b16 %v4075
      %v4516 = vunpack.c.l.b16 %v4076
      %v4517 = vunpack.c.l.b16 %v4077
      %v4518 = vunpack.c.h.b16 %v4077
      %v4519 = vunpack.c.l.b16 %v4078
      %v4520 = vunpack.c.h.b16 %v4078
      %v4521 = vunpack.c.l.b16 %v4079
      %v4522 = vunpack.c.h.b16 %v4079
      %v4523 = vunpack.c.l.b16 %v4080
      %v4524 = vunpack.c.l.b16 %v4081
      %v4525 = vunpack.c.h.b16 %v4081
      %v4526 = vunpack.c.l.b16 %v4082
      %v4527 = vunpack.c.h.b16 %v4082
      %v4528 = vunpack.c.l.b16 %v4083
      %v4529 = vunpack.c.h.b16 %v4083
      %v4530 = vunpack.c.l.b16 %v4084
      %v4531 = vunpack.c.l.b16 %v4085
      %v4532 = vunpack.c.h.b16 %v4085
      %v4533 = vunpack.c.l.b16 %v4086
      %v4534 = vunpack.c.h.b16 %v4086
      %v4535 = vunpack.c.l.b16 %v4087
      %v4536 = vunpack.c.h.b16 %v4087
      %v4537 = vunpack.c.l.b16 %v4088
      %v4538 = vunpack.c.l.b16 %v4089
      %v4539 = vunpack.c.h.b16 %v4089
      %v4540 = vunpack.c.l.b16 %v4090
      %v4541 = vunpack.c.h.b16 %v4090
      %v4542 = vunpack.c.l.b16 %v4091
      %v4543 = vunpack.c.h.b16 %v4091
      %v4544 = vunpack.c.l.b16 %v4092
      %v4545 = vunpack.c.l.b16 %v4093
      %v4546 = vunpack.c.h.b16 %v4093
      %v4547 = vunpack.c.l.b16 %v4094
      %v4548 = vunpack.c.h.b16 %v4094
      %v4549 = vunpack.c.l.b16 %v4095
      %v4550 = vunpack.c.h.b16 %v4095
      %v4551 = vunpack.c.l.b16 %v4096
      %v4552 = vunpack.c.l.b16 %v4097
      %v4553 = vunpack.c.h.b16 %v4097
      %v4554 = vunpack.c.l.b16 %v4098
      %v4555 = vunpack.c.h.b16 %v4098
      %v4556 = vunpack.c.l.b16 %v4099
      %v4557 = vunpack.c.h.b16 %v4099
      %v4558 = vunpack.c.l.b16 %v4100
      %v4559 = vunpack.c.l.b16 %v4101
      %v4560 = vunpack.c.h.b16 %v4101
      %v4561 = vunpack.c.l.b16 %v4102
      %v4562 = vunpack.c.h.b16 %v4102
      %v4563 = vunpack.c.l.b16 %v4103
      %v4564 = vunpack.c.h.b16 %v4103
      %v4565 = vunpack.c.l.b16 %v4104
      %v4566 = vpack.c.b16 %v4349, %v4342
      %v4567 = vpack.c.b16 %v4350, %v4343
      %v4568 = vpack.c.b16 %v4351, %v4344
      %v4569 = vpack.c.b16 %v4352, %v4345
      %v4570 = vpack.c.b16 %v4353, %v4346
      %v4571 = vpack.c.b16 %v4354, %v4347
      %v4572 = vpack.c.b16 %v4355, %v4348
      %v4573 = vpack.c.b16 %v4363, %v4356
      %v4574 = vpack.c.b16 %v4364, %v4357
      %v4575 = vpack.c.b16 %v4365, %v4358
      %v4576 = vpack.c.b16 %v4366, %v4359
      %v4577 = vpack.c.b16 %v4367, %v4360
      %v4578 = vpack.c.b16 %v4368, %v4361
      %v4579 = vpack.c.b16 %v4369, %v4362
      %v4580 = vpack.c.b16 %v4377, %v4370
      %v4581 = vpack.c.b16 %v4378, %v4371
      %v4582 = vpack.c.b16 %v4379, %v4372
      %v4583 = vpack.c.b16 %v4380, %v4373
      %v4584 = vpack.c.b16 %v4381, %v4374
      %v4585 = vpack.c.b16 %v4382, %v4375
      %v4586 = vpack.c.b16 %v4383, %v4376
      %v4587 = vpack.c.b16 %v4391, %v4384
      %v4588 = vpack.c.b16 %v4392, %v4385
      %v4589 = vpack.c.b16 %v4393, %v4386
      %v4590 = vpack.c.b16 %v4394, %v4387
      %v4591 = vpack.c.b16 %v4395, %v4388
      %v4592 = vpack.c.b16 %v4396, %v4389
      %v4593 = vpack.c.b16 %v4397, %v4390
      %v4594 = vpack.c.b16 %v4405, %v4398
      %v4595 = vpack.c.b16 %v4406, %v4399
      %v4596 = vpack.c.b16 %v4407, %v4400
      %v4597 = vpack.c.b16 %v4408, %v4401
      %v4598 = vpack.c.b16 %v4409, %v4402
      %v4599 = vpack.c.b16 %v4410, %v4403
      %v4600 = vpack.c.b16 %v4411, %v4404
      %v4601 = vpack.c.b16 %v4419, %v4412
      %v4602 = vpack.c.b16 %v4420, %v4413
      %v4603 = vpack.c.b16 %v4421, %v4414
      %v4604 = vpack.c.b16 %v4422, %v4415
      %v4605 = vpack.c.b16 %v4423, %v4416
      %v4606 = vpack.c.b16 %v4424, %v4417
      %v4607 = vpack.c.b16 %v4425, %v4418
      %v4608 = vpack.c.b16 %v4433, %v4426
      %v4609 = vpack.c.b16 %v4434, %v4427
      %v4610 = vpack.c.b16 %v4435, %v4428
      %v4611 = vpack.c.b16 %v4436, %v4429
      %v4612 = vpack.c.b16 %v4437, %v4430
      %v4613 = vpack.c.b16 %v4438, %v4431
      %v4614 = vpack.c.b16 %v4439, %v4432
      %v4615 = vpack.c.b16 %v4447, %v4440
      %v4616 = vpack.c.b16 %v4448, %v4441
      %v4617 = vpack.c.b16 %v4449, %v4442
      %v4618 = vpack.c.b16 %v4450, %v4443
      %v4619 = vpack.c.b16 %v4451, %v4444
      %v4620 = vpack.c.b16 %v4452, %v4445
      %v4621 = vpack.c.b16 %v4453, %v4446
      %v4622 = vpack.c.b16 %v4461, %v4454
      %v4623 = vpack.c.b16 %v4462, %v4455
      %v4624 = vpack.c.b16 %v4463, %v4456
      %v4625 = vpack.c.b16 %v4464, %v4457
      %v4626 = vpack.c.b16 %v4465, %v4458
      %v4627 = vpack.c.b16 %v4466, %v4459
      %v4628 = vpack.c.b16 %v4467, %v4460
      %v4629 = vpack.c.b16 %v4475, %v4468
      %v4630 = vpack.c.b16 %v4476, %v4469
      %v4631 = vpack.c.b16 %v4477, %v4470
      %v4632 = vpack.c.b16 %v4478, %v4471
      %v4633 = vpack.c.b16 %v4479, %v4472
      %v4634 = vpack.c.b16 %v4480, %v4473
      %v4635 = vpack.c.b16 %v4481, %v4474
      %v4636 = vpack.c.b16 %v4489, %v4482
      %v4637 = vpack.c.b16 %v4490, %v4483
      %v4638 = vpack.c.b16 %v4491, %v4484
      %v4639 = vpack.c.b16 %v4492, %v4485
      %v4640 = vpack.c.b16 %v4493, %v4486
      %v4641 = vpack.c.b16 %v4494, %v4487
      %v4642 = vpack.c.b16 %v4495, %v4488
      %v4643 = vpack.c.b16 %v4503, %v4496
      %v4644 = vpack.c.b16 %v4504, %v4497
      %v4645 = vpack.c.b16 %v4505, %v4498
      %v4646 = vpack.c.b16 %v4506, %v4499
      %v4647 = vpack.c.b16 %v4507, %v4500
      %v4648 = vpack.c.b16 %v4508, %v4501
      %v4649 = vpack.c.b16 %v4509, %v4502
      %v4650 = vpack.c.b16 %v4517, %v4510
      %v4651 = vpack.c.b16 %v4518, %v4511
      %v4652 = vpack.c.b16 %v4519, %v4512
      %v4653 = vpack.c.b16 %v4520, %v4513
      %v4654 = vpack.c.b16 %v4521, %v4514
      %v4655 = vpack.c.b16 %v4522, %v4515
      %v4656 = vpack.c.b16 %v4523, %v4516
      %v4657 = vpack.c.b16 %v4531, %v4524
      %v4658 = vpack.c.b16 %v4532, %v4525
      %v4659 = vpack.c.b16 %v4533, %v4526
      %v4660 = vpack.c.b16 %v4534, %v4527
      %v4661 = vpack.c.b16 %v4535, %v4528
      %v4662 = vpack.c.b16 %v4536, %v4529
      %v4663 = vpack.c.b16 %v4537, %v4530
      %v4664 = vpack.c.b16 %v4545, %v4538
      %v4665 = vpack.c.b16 %v4546, %v4539
      %v4666 = vpack.c.b16 %v4547, %v4540
      %v4667 = vpack.c.b16 %v4548, %v4541
      %v4668 = vpack.c.b16 %v4549, %v4542
      %v4669 = vpack.c.b16 %v4550, %v4543
      %v4670 = vpack.c.b16 %v4551, %v4544
      %v4671 = vpack.c.b16 %v4559, %v4552
      %v4672 = vpack.c.b16 %v4560, %v4553
      %v4673 = vpack.c.b16 %v4561, %v4554
      %v4674 = vpack.c.b16 %v4562, %v4555
      %v4675 = vpack.c.b16 %v4563, %v4556
      %v4676 = vpack.c.b16 %v4564, %v4557
      %v4677 = vpack.c.b16 %v4565, %v4558
      %v4882 = vunpack.c.l.b16 %v4106
      %v4883 = vunpack.c.l.b16 %v4107
      %v4884 = vunpack.c.l.b16 %v4108
      %v4885 = vunpack.c.l.b16 %v4109
      %v4886 = vunpack.c.l.b16 %v4110
      %v4887 = vunpack.c.l.b16 %v4111
      %v4888 = vunpack.c.l.b16 %v4112
      %v4889 = vunpack.c.l.b16 %v4113
      %v4890 = vunpack.c.l.b16 %v4114
      %v4891 = vunpack.c.l.b16 %v4115
      %v4892 = vunpack.c.l.b16 %v4116
      %v4893 = vunpack.c.l.b16 %v4117
      %v4894 = vunpack.c.l.b16 %v4118
      %v4895 = vunpack.c.l.b16 %v4119
      %v4896 = vunpack.c.l.b16 %v4120
      %v4897 = vunpack.c.l.b16 %v4121
      %v4898 = vunpack.c.l.b16 %v4122
      %v4899 = vunpack.c.l.b16 %v4123
      %v4900 = vunpack.c.l.b16 %v4124
      %v4901 = vunpack.c.l.b16 %v4125
      %v4902 = vunpack.c.l.b16 %v4126
      %v4903 = vunpack.c.l.b16 %v4127
      %v4904 = vunpack.c.l.b16 %v4128
      %v4905 = vunpack.c.l.b16 %v4129
      %v4906 = vunpack.c.l.b16 %v4130
      %v4907 = vunpack.c.l.b16 %v4131
      %v4908 = vunpack.c.l.b16 %v4132
      %v4909 = vunpack.c.l.b16 %v4133
      %v4910 = vunpack.c.l.b16 %v4134
      %v4911 = vunpack.c.l.b16 %v4135
      %v4912 = vunpack.c.l.b16 %v4136
      %v4913 = vunpack.c.l.b16 %v4137
      %v4914 = vunpack.c.l.b16 %v4138
      %v4915 = vunpack.c.l.b16 %v4139
      %v4916 = vunpack.c.l.b16 %v4140
      %v4917 = vunpack.c.l.b16 %v4141
      %v4918 = vunpack.c.l.b16 %v4142
      %v4919 = vunpack.c.l.b16 %v4143
      %v4920 = vunpack.c.l.b16 %v4144
      %v4921 = vunpack.c.l.b16 %v4145
      %v4922 = vunpack.c.l.b16 %v4146
      %v4923 = vunpack.c.l.b16 %v4147
      %v4924 = vunpack.c.l.b16 %v4148
      %v4925 = vunpack.c.l.b16 %v4149
      %v4926 = vunpack.c.l.b16 %v4150
      %v4927 = vunpack.c.l.b16 %v4151
      %v4928 = vunpack.c.l.b16 %v4152
      %v4929 = vunpack.c.l.b16 %v4153
      %v4930 = vunpack.c.l.b16 %v4154
      %v4931 = vunpack.c.l.b16 %v4155
      %v4932 = vunpack.c.l.b16 %v4156
      %v4933 = vunpack.c.l.b16 %v4157
      %v4934 = vunpack.c.l.b16 %v4158
      %v4935 = vunpack.c.l.b16 %v4159
      %v4936 = vunpack.c.l.b16 %v4160
      %v4937 = vunpack.c.l.b16 %v4161
      %v4938 = vunpack.c.l.b16 %v4162
      %v4939 = vunpack.c.l.b16 %v4163
      %v4940 = vunpack.c.l.b16 %v4164
      %v4941 = vunpack.c.l.b16 %v4165
      %v4942 = vunpack.c.l.b16 %v4166
      %v4943 = vunpack.c.l.b16 %v4167
      %v4944 = vunpack.c.l.b16 %v4168
      %v4945 = vunpack.c.l.b16 %v4169
      %v4946 = vunpack.c.l.b16 %v4170
      %v4947 = vunpack.c.l.b16 %v4171
      %v4948 = vunpack.c.l.b16 %v4172
      %v4949 = vunpack.c.l.b16 %v4173
      %v4950 = vunpack.c.l.b16 %v4174
      %v4951 = vunpack.c.l.b16 %v4175
      %v4952 = vunpack.c.l.b16 %v4176
      %v4953 = vunpack.c.l.b16 %v4177
      %v4954 = vunpack.c.l.b16 %v4178
      %v4955 = vunpack.c.l.b16 %v4179
      %v4956 = vunpack.c.l.b16 %v4180
      %v4957 = vunpack.c.l.b16 %v4181
      %v4958 = vunpack.c.l.b16 %v4182
      %v4959 = vunpack.c.l.b16 %v4183
      %v4960 = vunpack.c.l.b16 %v4184
      %v4961 = vunpack.c.l.b16 %v4185
      %v4962 = vunpack.c.l.b16 %v4186
      %v4963 = vunpack.c.l.b16 %v4187
      %v4964 = vunpack.c.l.b16 %v4188
      %v4965 = vunpack.c.l.b16 %v4189
      %v4966 = vunpack.c.l.b16 %v4190
      %v4967 = vunpack.c.l.b16 %v4191
      %v4968 = vunpack.c.l.b16 %v4192
      %v4969 = vunpack.c.l.b16 %v4193
      %v4970 = vunpack.c.l.b16 %v4194
      %v4971 = vunpack.c.l.b16 %v4195
      %v4972 = vunpack.c.l.b16 %v4196
      %v4973 = vunpack.c.l.b16 %v4197
      %v4974 = vunpack.c.l.b16 %v4198
      %v4975 = vunpack.c.l.b16 %v4199
      %v4976 = vunpack.c.l.b16 %v4200
      %v4977 = vunpack.c.l.b16 %v4201
      %v4978 = vunpack.c.l.b16 %v4202
      %v4979 = vunpack.c.l.b16 %v4203
      %v4980 = vunpack.c.l.b16 %v4204
      %v4981 = vunpack.c.l.b16 %v4205
      %v4982 = vunpack.c.l.b16 %v4206
      %v4983 = vunpack.c.l.b16 %v4207
      %v4984 = vunpack.c.l.b16 %v4208
      %v4985 = vunpack.c.l.b16 %v4209
      %v4986 = vunpack.c.l.b16 %v4210
      %v4987 = vunpack.c.l.b16 %v4211
      %v4988 = vunpack.c.l.b16 %v4212
      %v4989 = vunpack.c.l.b16 %v4213
      %v4990 = vpack.c.b16 %v4883, %v4882
      %v4991 = vpack.c.b16 %v4885, %v4884
      %v4992 = vpack.c.b16 %v4887, %v4886
      %v4993 = vpack.c.b16 %v4889, %v4888
      %v4994 = vpack.c.b16 %v4891, %v4890
      %v4995 = vpack.c.b16 %v4893, %v4892
      %v4996 = vpack.c.b16 %v4895, %v4894
      %v4997 = vpack.c.b16 %v4897, %v4896
      %v4998 = vpack.c.b16 %v4899, %v4898
      %v4999 = vpack.c.b16 %v4901, %v4900
      %v5000 = vpack.c.b16 %v4903, %v4902
      %v5001 = vpack.c.b16 %v4905, %v4904
      %v5002 = vpack.c.b16 %v4907, %v4906
      %v5003 = vpack.c.b16 %v4909, %v4908
      %v5004 = vpack.c.b16 %v4911, %v4910
      %v5005 = vpack.c.b16 %v4913, %v4912
      %v5006 = vpack.c.b16 %v4915, %v4914
      %v5007 = vpack.c.b16 %v4917, %v4916
      %v5008 = vpack.c.b16 %v4919, %v4918
      %v5009 = vpack.c.b16 %v4921, %v4920
      %v5010 = vpack.c.b16 %v4923, %v4922
      %v5011 = vpack.c.b16 %v4925, %v4924
      %v5012 = vpack.c.b16 %v4927, %v4926
      %v5013 = vpack.c.b16 %v4929, %v4928
      %v5014 = vpack.c.b16 %v4931, %v4930
      %v5015 = vpack.c.b16 %v4933, %v4932
      %v5016 = vpack.c.b16 %v4935, %v4934
      %v5017 = vpack.c.b16 %v4937, %v4936
      %v5018 = vpack.c.b16 %v4939, %v4938
      %v5019 = vpack.c.b16 %v4941, %v4940
      %v5020 = vpack.c.b16 %v4943, %v4942
      %v5021 = vpack.c.b16 %v4945, %v4944
      %v5022 = vpack.c.b16 %v4947, %v4946
      %v5023 = vpack.c.b16 %v4949, %v4948
      %v5024 = vpack.c.b16 %v4951, %v4950
      %v5025 = vpack.c.b16 %v4953, %v4952
      %v5026 = vpack.c.b16 %v4955, %v4954
      %v5027 = vpack.c.b16 %v4957, %v4956
      %v5028 = vpack.c.b16 %v4959, %v4958
      %v5029 = vpack.c.b16 %v4961, %v4960
      %v5030 = vpack.c.b16 %v4963, %v4962
      %v5031 = vpack.c.b16 %v4965, %v4964
      %v5032 = vpack.c.b16 %v4967, %v4966
      %v5033 = vpack.c.b16 %v4969, %v4968
      %v5034 = vpack.c.b16 %v4971, %v4970
      %v5035 = vpack.c.b16 %v4973, %v4972
      %v5036 = vpack.c.b16 %v4975, %v4974
      %v5037 = vpack.c.b16 %v4977, %v4976
      %v5038 = vpack.c.b16 %v4979, %v4978
      %v5039 = vpack.c.b16 %v4981, %v4980
      %v5040 = vpack.c.b16 %v4983, %v4982
      %v5041 = vpack.c.b16 %v4985, %v4984
      %v5042 = vpack.c.b16 %v4987, %v4986
      %v5043 = vpack.c.b16 %v4989, %v4988
      %v5099 = vsel %vm1343, %v4572, 0
      %v5102 = vsel %vm1343, %v4579, 0
      %v5105 = vsel %vm1343, %v4586, 0
      %v5108 = vsel %vm1343, %v4593, 0
      %v5111 = vsel %vm1343, %v4600, 0
      %v5114 = vsel %vm1343, %v4607, 0
      %v5117 = vsel %vm1343, %v4614, 0
      %v5120 = vsel %vm1343, %v4621, 0
      %v5123 = vsel %vm1343, %v4628, 0
      %v5126 = vsel %vm1343, %v4635, 0
      %v5129 = vsel %vm1343, %v4642, 0
      %v5132 = vsel %vm1343, %v4649, 0
      %v5135 = vsel %vm1343, %v4656, 0
      %v5138 = vsel %vm1343, %v4663, 0
      %v5141 = vsel %vm1343, %v4670, 0
      %v5144 = vsel %vm1343, %v4677, 0
      %5146 = vmatprep.subr.bf16.mxu0 0
      %5147 = vmatpush1.bf16.msra.mxu0 %v4990
      %5148 = vmatprep.subr.bf16.mxu0 0
      %5149 = vmatpush1.bf16.msra.mxu0 %v4991
      %5150 = vmatprep.subr.bf16.mxu0 0
      %5151 = vmatpush1.bf16.msra.mxu0 %v4992
      %5152 = vmatprep.subr.bf16.mxu0 0
      %5153 = vmatpush1.bf16.msra.mxu0 %v4993
      %5154 = vmatprep.subr.bf16.mxu0 0
      %5155 = vmatpush1.bf16.msra.mxu0 %v4994
      %5156 = vmatprep.subr.bf16.mxu0 0
      %5157 = vmatpush1.bf16.msra.mxu0 %v4995
      %5158 = vmatprep.subr.bf16.mxu0 0
      %5159 = vmatpush1.bf16.msra.mxu0 %v4996
      %5160 = vmatprep.subr.bf16.mxu0 0
      %5161 = vmatpush1.bf16.msra.mxu0 %v4997
      %5162 = vmatprep.subr.bf16.mxu0 0
      %5163 = vmatpush1.bf16.msra.mxu0 %v4998
      %5164 = vmatprep.subr.bf16.mxu0 0
      %5165 = vmatpush1.bf16.msra.mxu0 %v4999
      %5166 = vmatprep.subr.bf16.mxu0 0
      %5167 = vmatpush1.bf16.msra.mxu0 %v5000
      %5168 = vmatprep.subr.bf16.mxu0 0
      %5169 = vmatpush1.bf16.msra.mxu0 %v5001
      %5170 = vmatprep.subr.bf16.mxu0 0
      %5171 = vmatpush1.bf16.msra.mxu0 %v5002
      %5172 = vmatprep.subr.bf16.mxu0 0
      %5173 = vmatpush1.bf16.msra.mxu0 %v5003
      %5174 = vmatprep.subr.bf16.mxu0 0
      %5175 = vmatpush1.bf16.msra.mxu0 %v5004
      %5176 = vmatprep.subr.bf16.mxu0 0
      %5177 = vmatpush1.bf16.msra.mxu0 %v5005
      %5178 = vmatprep.mubr.bf16.mxu0 %v4567
      %5179 = vmatmul.mubr.bf16.gmra.mrb[0].mxu0 %v4566
      %v5180 = vpop.f32.mrb[0].mxu0
      %v5181 = vadd.f32 0.0, %v5180
      %v5182 = vpop.f32.mrb[0].mxu0
      %v5183 = vpop.f32.mrb[0].mxu0
      %v5184 = vadd.f32 0.0, %v5183
      %v5185 = vpop.f32.mrb[0].mxu0
      %5186 = vmatprep.mubr.bf16.mxu0 %v4574
      %5187 = vmatmul.mubr.bf16.gmra.mrb[0].mxu0 %v4573
      %v5188 = vpop.f32.mrb[0].mxu0
      %v5189 = vadd.f32 0.0, %v5188
      %v5190 = vpop.f32.mrb[0].mxu0
      %v5191 = vpop.f32.mrb[0].mxu0
      %v5192 = vadd.f32 0.0, %v5191
      %v5193 = vpop.f32.mrb[0].mxu0
      %5194 = vmatprep.mubr.bf16.mxu0 %v4581
      %5195 = vmatmul.mubr.bf16.gmra.mrb[0].mxu0 %v4580
      %v5196 = vpop.f32.mrb[0].mxu0
      %v5197 = vadd.f32 0.0, %v5196
      %v5198 = vpop.f32.mrb[0].mxu0
      %v5199 = vpop.f32.mrb[0].mxu0
      %v5200 = vadd.f32 0.0, %v5199
      %v5201 = vpop.f32.mrb[0].mxu0
      %5202 = vmatprep.mubr.bf16.mxu0 %v4588
      %5203 = vmatmul.mubr.bf16.gmra.mrb[0].mxu0 %v4587
      %v5204 = vpop.f32.mrb[0].mxu0
      %v5205 = vadd.f32 0.0, %v5204
      %v5206 = vpop.f32.mrb[0].mxu0
      %v5207 = vpop.f32.mrb[0].mxu0
      %v5208 = vadd.f32 0.0, %v5207
      %v5209 = vpop.f32.mrb[0].mxu0
      %5210 = vmatprep.mubr.bf16.mxu0 %v4595
      %5211 = vmatmul.mubr.bf16.gmra.mrb[0].mxu0 %v4594
      %v5212 = vpop.f32.mrb[0].mxu0
      %v5213 = vadd.f32 0.0, %v5212
      %v5214 = vpop.f32.mrb[0].mxu0
      %v5215 = vpop.f32.mrb[0].mxu0
      %v5216 = vadd.f32 0.0, %v5215
      %v5217 = vpop.f32.mrb[0].mxu0
      %5218 = vmatprep.mubr.bf16.mxu0 %v4602
      %5219 = vmatmul.mubr.bf16.gmra.mrb[0].mxu0 %v4601
      %v5220 = vpop.f32.mrb[0].mxu0
      %v5221 = vadd.f32 0.0, %v5220
      %v5222 = vpop.f32.mrb[0].mxu0
      %v5223 = vpop.f32.mrb[0].mxu0
      %v5224 = vadd.f32 0.0, %v5223
      %v5225 = vpop.f32.mrb[0].mxu0
      %5226 = vmatprep.mubr.bf16.mxu0 %v4609
      %5227 = vmatmul.mubr.bf16.gmra.mrb[0].mxu0 %v4608
      %v5228 = vpop.f32.mrb[0].mxu0
      %v5229 = vadd.f32 0.0, %v5228
      %v5230 = vpop.f32.mrb[0].mxu0
      %v5231 = vpop.f32.mrb[0].mxu0
      %v5232 = vadd.f32 0.0, %v5231
      %v5233 = vpop.f32.mrb[0].mxu0
      %5234 = vmatprep.mubr.bf16.mxu0 %v4616
      %5235 = vmatmul.mubr.bf16.gmra.mrb[0].mxu0 %v4615
      %v5236 = vpop.f32.mrb[0].mxu0
      %v5237 = vadd.f32 0.0, %v5236
      %v5238 = vpop.f32.mrb[0].mxu0
      %v5239 = vpop.f32.mrb[0].mxu0
      %v5240 = vadd.f32 0.0, %v5239
      %v5241 = vpop.f32.mrb[0].mxu0
      %5242 = vmatprep.mubr.bf16.mxu0 %v4623
      %5243 = vmatmul.mubr.bf16.gmra.mrb[0].mxu0 %v4622
      %v5244 = vpop.f32.mrb[0].mxu0
      %v5245 = vadd.f32 0.0, %v5244
      %v5246 = vpop.f32.mrb[0].mxu0
      %v5247 = vpop.f32.mrb[0].mxu0
      %v5248 = vadd.f32 0.0, %v5247
      %v5249 = vpop.f32.mrb[0].mxu0
      %5250 = vmatprep.mubr.bf16.mxu0 %v4630
      %5251 = vmatmul.mubr.bf16.gmra.mrb[0].mxu0 %v4629
      %v5252 = vpop.f32.mrb[0].mxu0
      %v5253 = vadd.f32 0.0, %v5252
      %v5254 = vpop.f32.mrb[0].mxu0
      %v5255 = vpop.f32.mrb[0].mxu0
      %v5256 = vadd.f32 0.0, %v5255
      %v5257 = vpop.f32.mrb[0].mxu0
      %5258 = vmatprep.mubr.bf16.mxu0 %v4637
      %5259 = vmatmul.mubr.bf16.gmra.mrb[0].mxu0 %v4636
      %v5260 = vpop.f32.mrb[0].mxu0
      %v5261 = vadd.f32 0.0, %v5260
      %v5262 = vpop.f32.mrb[0].mxu0
      %v5263 = vpop.f32.mrb[0].mxu0
      %v5264 = vadd.f32 0.0, %v5263
      %v5265 = vpop.f32.mrb[0].mxu0
      %5266 = vmatprep.mubr.bf16.mxu0 %v4644
      %5267 = vmatmul.mubr.bf16.gmra.mrb[0].mxu0 %v4643
      %v5268 = vpop.f32.mrb[0].mxu0
      %v5269 = vadd.f32 0.0, %v5268
      %v5270 = vpop.f32.mrb[0].mxu0
      %v5271 = vpop.f32.mrb[0].mxu0
      %v5272 = vadd.f32 0.0, %v5271
      %v5273 = vpop.f32.mrb[0].mxu0
      %5274 = vmatprep.mubr.bf16.mxu0 %v4651
      %5275 = vmatmul.mubr.bf16.gmra.mrb[0].mxu0 %v4650
      %v5276 = vpop.f32.mrb[0].mxu0
      %v5277 = vadd.f32 0.0, %v5276
      %v5278 = vpop.f32.mrb[0].mxu0
      %v5279 = vpop.f32.mrb[0].mxu0
      %v5280 = vadd.f32 0.0, %v5279
      %v5281 = vpop.f32.mrb[0].mxu0
      %5282 = vmatprep.mubr.bf16.mxu0 %v4658
      %5283 = vmatmul.mubr.bf16.gmra.mrb[0].mxu0 %v4657
      %v5284 = vpop.f32.mrb[0].mxu0
      %v5285 = vadd.f32 0.0, %v5284
      %v5286 = vpop.f32.mrb[0].mxu0
      %v5287 = vpop.f32.mrb[0].mxu0
      %v5288 = vadd.f32 0.0, %v5287
      %v5289 = vpop.f32.mrb[0].mxu0
      %5290 = vmatprep.mubr.bf16.mxu0 %v4665
      %5291 = vmatmul.mubr.bf16.gmra.mrb[0].mxu0 %v4664
      %v5292 = vpop.f32.mrb[0].mxu0
      %v5293 = vadd.f32 0.0, %v5292
      %v5294 = vpop.f32.mrb[0].mxu0
      %v5295 = vpop.f32.mrb[0].mxu0
      %v5296 = vadd.f32 0.0, %v5295
      %v5297 = vpop.f32.mrb[0].mxu0
      %5298 = vmatprep.mubr.bf16.mxu0 %v4672
      %5299 = vmatmul.mubr.bf16.gmra.mrb[0].mxu0 %v4671
      %v5300 = vpop.f32.mrb[0].mxu0
      %v5301 = vadd.f32 0.0, %v5300
      %v5302 = vpop.f32.mrb[0].mxu0
      %v5303 = vpop.f32.mrb[0].mxu0
      %v5304 = vadd.f32 0.0, %v5303
      %v5305 = vpop.f32.mrb[0].mxu0
      %5306 = vdwg.mxu0
      %5307 = vmatprep.subr.bf16.mxu0 0
      %5308 = vmatpush1.bf16.msra.mxu0 %v5006
      %5309 = vmatprep.subr.bf16.mxu0 0
      %5310 = vmatpush1.bf16.msra.mxu0 %v5007
      %5311 = vmatprep.subr.bf16.mxu0 0
      %5312 = vmatpush1.bf16.msra.mxu0 %v5008
      %5313 = vmatprep.subr.bf16.mxu0 0
      %5314 = vmatpush1.bf16.msra.mxu0 %v5009
      %5315 = vmatprep.subr.bf16.mxu0 0
      %5316 = vmatpush1.bf16.msra.mxu0 %v5010
      %5317 = vmatprep.subr.bf16.mxu0 0
      %5318 = vmatpush1.bf16.msra.mxu0 %v5011
      %5319 = vmatprep.subr.bf16.mxu0 0
      %5320 = vmatpush1.bf16.msra.mxu0 %v5012
      %5321 = vmatprep.subr.bf16.mxu0 0
      %5322 = vmatpush1.bf16.msra.mxu0 %v5013
      %5323 = vmatprep.subr.bf16.mxu0 0
      %5324 = vmatpush1.bf16.msra.mxu0 %v5014
      %5325 = vmatprep.subr.bf16.mxu0 0
      %5326 = vmatpush1.bf16.msra.mxu0 %v5015
      %5327 = vmatprep.subr.bf16.mxu0 0
      %5328 = vmatpush1.bf16.msra.mxu0 %v5016
      %5329 = vmatprep.subr.bf16.mxu0 0
      %5330 = vmatpush1.bf16.msra.mxu0 %v5017
      %5331 = vmatprep.subr.bf16.mxu0 0
      %5332 = vmatpush1.bf16.msra.mxu0 %v5018
      %5333 = vmatprep.subr.bf16.mxu0 0
      %5334 = vmatpush1.bf16.msra.mxu0 %v5019
      %5335 = vmatprep.subr.bf16.mxu0 0
      %5336 = vmatpush1.bf16.msra.mxu0 %v5020
      %5337 = vmatprep.subr.bf16.mxu0 0
      %5338 = vmatpush1.bf16.msra.mxu0 %v5021
      %5339 = vmatprep.mubr.bf16.mxu0 %v4569
      %5340 = vmatmul.mubr.bf16.gmra.mrb[0].mxu0 %v4568
      %v5341 = vpop.f32.mrb[0].mxu0
      %v5342 = vadd.f32 %v5181, %v5341
      %v5343 = vpop.f32.mrb[0].mxu0
      %v5344 = vpop.f32.mrb[0].mxu0
      %v5345 = vadd.f32 %v5184, %v5344
      %v5346 = vpop.f32.mrb[0].mxu0
      %5347 = vmatprep.mubr.bf16.mxu0 %v4576
      %5348 = vmatmul.mubr.bf16.gmra.mrb[0].mxu0 %v4575
      %v5349 = vpop.f32.mrb[0].mxu0
      %v5350 = vadd.f32 %v5189, %v5349
      %v5351 = vpop.f32.mrb[0].mxu0
      %v5352 = vpop.f32.mrb[0].mxu0
      %v5353 = vadd.f32 %v5192, %v5352
      %v5354 = vpop.f32.mrb[0].mxu0
      %5355 = vmatprep.mubr.bf16.mxu0 %v4583
      %5356 = vmatmul.mubr.bf16.gmra.mrb[0].mxu0 %v4582
      %v5357 = vpop.f32.mrb[0].mxu0
      %v5358 = vadd.f32 %v5197, %v5357
      %v5359 = vpop.f32.mrb[0].mxu0
      %v5360 = vpop.f32.mrb[0].mxu0
      %v5361 = vadd.f32 %v5200, %v5360
      %v5362 = vpop.f32.mrb[0].mxu0
      %5363 = vmatprep.mubr.bf16.mxu0 %v4590
      %5364 = vmatmul.mubr.bf16.gmra.mrb[0].mxu0 %v4589
      %v5365 = vpop.f32.mrb[0].mxu0
      %v5366 = vadd.f32 %v5205, %v5365
      %v5367 = vpop.f32.mrb[0].mxu0
      %v5368 = vpop.f32.mrb[0].mxu0
      %v5369 = vadd.f32 %v5208, %v5368
      %v5370 = vpop.f32.mrb[0].mxu0
      %5371 = vmatprep.mubr.bf16.mxu0 %v4597
      %5372 = vmatmul.mubr.bf16.gmra.mrb[0].mxu0 %v4596
      %v5373 = vpop.f32.mrb[0].mxu0
      %v5374 = vadd.f32 %v5213, %v5373
      %v5375 = vpop.f32.mrb[0].mxu0
      %v5376 = vpop.f32.mrb[0].mxu0
      %v5377 = vadd.f32 %v5216, %v5376
      %v5378 = vpop.f32.mrb[0].mxu0
      %5379 = vmatprep.mubr.bf16.mxu0 %v4604
      %5380 = vmatmul.mubr.bf16.gmra.mrb[0].mxu0 %v4603
      %v5381 = vpop.f32.mrb[0].mxu0
      %v5382 = vadd.f32 %v5221, %v5381
      %v5383 = vpop.f32.mrb[0].mxu0
      %v5384 = vpop.f32.mrb[0].mxu0
      %v5385 = vadd.f32 %v5224, %v5384
      %v5386 = vpop.f32.mrb[0].mxu0
      %5387 = vmatprep.mubr.bf16.mxu0 %v4611
      %5388 = vmatmul.mubr.bf16.gmra.mrb[0].mxu0 %v4610
      %v5389 = vpop.f32.mrb[0].mxu0
      %v5390 = vadd.f32 %v5229, %v5389
      %v5391 = vpop.f32.mrb[0].mxu0
      %v5392 = vpop.f32.mrb[0].mxu0
      %v5393 = vadd.f32 %v5232, %v5392
      %v5394 = vpop.f32.mrb[0].mxu0
      %5395 = vmatprep.mubr.bf16.mxu0 %v4618
      %5396 = vmatmul.mubr.bf16.gmra.mrb[0].mxu0 %v4617
      %v5397 = vpop.f32.mrb[0].mxu0
      %v5398 = vadd.f32 %v5237, %v5397
      %v5399 = vpop.f32.mrb[0].mxu0
      %v5400 = vpop.f32.mrb[0].mxu0
      %v5401 = vadd.f32 %v5240, %v5400
      %v5402 = vpop.f32.mrb[0].mxu0
      %5403 = vmatprep.mubr.bf16.mxu0 %v4625
      %5404 = vmatmul.mubr.bf16.gmra.mrb[0].mxu0 %v4624
      %v5405 = vpop.f32.mrb[0].mxu0
      %v5406 = vadd.f32 %v5245, %v5405
      %v5407 = vpop.f32.mrb[0].mxu0
      %v5408 = vpop.f32.mrb[0].mxu0
      %v5409 = vadd.f32 %v5248, %v5408
      %v5410 = vpop.f32.mrb[0].mxu0
      %5411 = vmatprep.mubr.bf16.mxu0 %v4632
      %5412 = vmatmul.mubr.bf16.gmra.mrb[0].mxu0 %v4631
      %v5413 = vpop.f32.mrb[0].mxu0
      %v5414 = vadd.f32 %v5253, %v5413
      %v5415 = vpop.f32.mrb[0].mxu0
      %v5416 = vpop.f32.mrb[0].mxu0
      %v5417 = vadd.f32 %v5256, %v5416
      %v5418 = vpop.f32.mrb[0].mxu0
      %5419 = vmatprep.mubr.bf16.mxu0 %v4639
      %5420 = vmatmul.mubr.bf16.gmra.mrb[0].mxu0 %v4638
      %v5421 = vpop.f32.mrb[0].mxu0
      %v5422 = vadd.f32 %v5261, %v5421
      %v5423 = vpop.f32.mrb[0].mxu0
      %v5424 = vpop.f32.mrb[0].mxu0
      %v5425 = vadd.f32 %v5264, %v5424
      %v5426 = vpop.f32.mrb[0].mxu0
      %5427 = vmatprep.mubr.bf16.mxu0 %v4646
      %5428 = vmatmul.mubr.bf16.gmra.mrb[0].mxu0 %v4645
      %v5429 = vpop.f32.mrb[0].mxu0
      %v5430 = vadd.f32 %v5269, %v5429
      %v5431 = vpop.f32.mrb[0].mxu0
      %v5432 = vpop.f32.mrb[0].mxu0
      %v5433 = vadd.f32 %v5272, %v5432
      %v5434 = vpop.f32.mrb[0].mxu0
      %5435 = vmatprep.mubr.bf16.mxu0 %v4653
      %5436 = vmatmul.mubr.bf16.gmra.mrb[0].mxu0 %v4652
      %v5437 = vpop.f32.mrb[0].mxu0
      %v5438 = vadd.f32 %v5277, %v5437
      %v5439 = vpop.f32.mrb[0].mxu0
      %v5440 = vpop.f32.mrb[0].mxu0
      %v5441 = vadd.f32 %v5280, %v5440
      %v5442 = vpop.f32.mrb[0].mxu0
      %5443 = vmatprep.mubr.bf16.mxu0 %v4660
      %5444 = vmatmul.mubr.bf16.gmra.mrb[0].mxu0 %v4659
      %v5445 = vpop.f32.mrb[0].mxu0
      %v5446 = vadd.f32 %v5285, %v5445
      %v5447 = vpop.f32.mrb[0].mxu0
      %v5448 = vpop.f32.mrb[0].mxu0
      %v5449 = vadd.f32 %v5288, %v5448
      %v5450 = vpop.f32.mrb[0].mxu0
      %5451 = vmatprep.mubr.bf16.mxu0 %v4667
      %5452 = vmatmul.mubr.bf16.gmra.mrb[0].mxu0 %v4666
      %v5453 = vpop.f32.mrb[0].mxu0
      %v5454 = vadd.f32 %v5293, %v5453
      %v5455 = vpop.f32.mrb[0].mxu0
      %v5456 = vpop.f32.mrb[0].mxu0
      %v5457 = vadd.f32 %v5296, %v5456
      %v5458 = vpop.f32.mrb[0].mxu0
      %5459 = vmatprep.mubr.bf16.mxu0 %v4674
      %5460 = vmatmul.mubr.bf16.gmra.mrb[0].mxu0 %v4673
      %v5461 = vpop.f32.mrb[0].mxu0
      %v5462 = vadd.f32 %v5301, %v5461
      %v5463 = vpop.f32.mrb[0].mxu0
      %v5464 = vpop.f32.mrb[0].mxu0
      %v5465 = vadd.f32 %v5304, %v5464
      %v5466 = vpop.f32.mrb[0].mxu0
      %5467 = vdwg.mxu0
      %5468 = vmatprep.subr.bf16.mxu0 0
      %5469 = vmatpush1.bf16.msra.mxu0 %v5022
      %5470 = vmatprep.subr.bf16.mxu0 0
      %5471 = vmatpush1.bf16.msra.mxu0 %v5023
      %5472 = vmatprep.subr.bf16.mxu0 0
      %5473 = vmatpush1.bf16.msra.mxu0 %v5024
      %5474 = vmatprep.subr.bf16.mxu0 0
      %5475 = vmatpush1.bf16.msra.mxu0 %v5025
      %5476 = vmatprep.subr.bf16.mxu0 0
      %5477 = vmatpush1.bf16.msra.mxu0 %v5026
      %5478 = vmatprep.subr.bf16.mxu0 0
      %5479 = vmatpush1.bf16.msra.mxu0 %v5027
      %5480 = vmatprep.subr.bf16.mxu0 0
      %5481 = vmatpush1.bf16.msra.mxu0 %v5028
      %5482 = vmatprep.subr.bf16.mxu0 0
      %5483 = vmatpush1.bf16.msra.mxu0 %v5029
      %5484 = vmatprep.subr.bf16.mxu0 0
      %5485 = vmatpush1.bf16.msra.mxu0 %v5030
      %5486 = vmatprep.subr.bf16.mxu0 0
      %5487 = vmatpush1.bf16.msra.mxu0 %v5031
      %5488 = vmatprep.subr.bf16.mxu0 0
      %5489 = vmatpush1.bf16.msra.mxu0 %v5032
      %5490 = vmatprep.subr.bf16.mxu0 0
      %5491 = vmatpush1.bf16.msra.mxu0 %v5033
      %5492 = vmatprep.subr.bf16.mxu0 0
      %5493 = vmatpush1.bf16.msra.mxu0 %v5034
      %5494 = vmatprep.subr.bf16.mxu0 0
      %5495 = vmatpush1.bf16.msra.mxu0 %v5035
      %5496 = vmatprep.subr.bf16.mxu0 0
      %5497 = vmatpush1.bf16.msra.mxu0 %v5036
      %5498 = vmatprep.subr.bf16.mxu0 0
      %5499 = vmatpush1.bf16.msra.mxu0 %v5037
      %5500 = vmatprep.mubr.bf16.mxu0 %v4571
      %5501 = vmatmul.mubr.bf16.gmra.mrb[0].mxu0 %v4570
      %v5502 = vpop.f32.mrb[0].mxu0
      %v5503 = vadd.f32 %v5342, %v5502
      %v5504 = vpop.f32.mrb[0].mxu0
      %v5505 = vpop.f32.mrb[0].mxu0
      %v5506 = vadd.f32 %v5345, %v5505
      %v5507 = vpop.f32.mrb[0].mxu0
      %5508 = vmatprep.mubr.bf16.mxu0 %v4578
      %5509 = vmatmul.mubr.bf16.gmra.mrb[0].mxu0 %v4577
      %v5510 = vpop.f32.mrb[0].mxu0
      %v5511 = vadd.f32 %v5350, %v5510
      %v5512 = vpop.f32.mrb[0].mxu0
      %v5513 = vpop.f32.mrb[0].mxu0
      %v5514 = vadd.f32 %v5353, %v5513
      %v5515 = vpop.f32.mrb[0].mxu0
      %5516 = vmatprep.mubr.bf16.mxu0 %v4585
      %5517 = vmatmul.mubr.bf16.gmra.mrb[0].mxu0 %v4584
      %v5518 = vpop.f32.mrb[0].mxu0
      %v5519 = vadd.f32 %v5358, %v5518
      %v5520 = vpop.f32.mrb[0].mxu0
      %v5521 = vpop.f32.mrb[0].mxu0
      %v5522 = vadd.f32 %v5361, %v5521
      %v5523 = vpop.f32.mrb[0].mxu0
      %5524 = vmatprep.mubr.bf16.mxu0 %v4592
      %5525 = vmatmul.mubr.bf16.gmra.mrb[0].mxu0 %v4591
      %v5526 = vpop.f32.mrb[0].mxu0
      %v5527 = vadd.f32 %v5366, %v5526
      %v5528 = vpop.f32.mrb[0].mxu0
      %v5529 = vpop.f32.mrb[0].mxu0
      %v5530 = vadd.f32 %v5369, %v5529
      %v5531 = vpop.f32.mrb[0].mxu0
      %5532 = vmatprep.mubr.bf16.mxu0 %v4599
      %5533 = vmatmul.mubr.bf16.gmra.mrb[0].mxu0 %v4598
      %v5534 = vpop.f32.mrb[0].mxu0
      %v5535 = vadd.f32 %v5374, %v5534
      %v5536 = vpop.f32.mrb[0].mxu0
      %v5537 = vpop.f32.mrb[0].mxu0
      %v5538 = vadd.f32 %v5377, %v5537
      %v5539 = vpop.f32.mrb[0].mxu0
      %5540 = vmatprep.mubr.bf16.mxu0 %v4606
      %5541 = vmatmul.mubr.bf16.gmra.mrb[0].mxu0 %v4605
      %v5542 = vpop.f32.mrb[0].mxu0
      %v5543 = vadd.f32 %v5382, %v5542
      %v5544 = vpop.f32.mrb[0].mxu0
      %v5545 = vpop.f32.mrb[0].mxu0
      %v5546 = vadd.f32 %v5385, %v5545
      %v5547 = vpop.f32.mrb[0].mxu0
      %5548 = vmatprep.mubr.bf16.mxu0 %v4613
      %5549 = vmatmul.mubr.bf16.gmra.mrb[0].mxu0 %v4612
      %v5550 = vpop.f32.mrb[0].mxu0
      %v5551 = vadd.f32 %v5390, %v5550
      %v5552 = vpop.f32.mrb[0].mxu0
      %v5553 = vpop.f32.mrb[0].mxu0
      %v5554 = vadd.f32 %v5393, %v5553
      %v5555 = vpop.f32.mrb[0].mxu0
      %5556 = vmatprep.mubr.bf16.mxu0 %v4620
      %5557 = vmatmul.mubr.bf16.gmra.mrb[0].mxu0 %v4619
      %v5558 = vpop.f32.mrb[0].mxu0
      %v5559 = vadd.f32 %v5398, %v5558
      %v5560 = vpop.f32.mrb[0].mxu0
      %v5561 = vpop.f32.mrb[0].mxu0
      %v5562 = vadd.f32 %v5401, %v5561
      %v5563 = vpop.f32.mrb[0].mxu0
      %5564 = vmatprep.mubr.bf16.mxu0 %v4627
      %5565 = vmatmul.mubr.bf16.gmra.mrb[0].mxu0 %v4626
      %v5566 = vpop.f32.mrb[0].mxu0
      %v5567 = vadd.f32 %v5406, %v5566
      %v5568 = vpop.f32.mrb[0].mxu0
      %v5569 = vpop.f32.mrb[0].mxu0
      %v5570 = vadd.f32 %v5409, %v5569
      %v5571 = vpop.f32.mrb[0].mxu0
      %5572 = vmatprep.mubr.bf16.mxu0 %v4634
      %5573 = vmatmul.mubr.bf16.gmra.mrb[0].mxu0 %v4633
      %v5574 = vpop.f32.mrb[0].mxu0
      %v5575 = vadd.f32 %v5414, %v5574
      %v5576 = vpop.f32.mrb[0].mxu0
      %v5577 = vpop.f32.mrb[0].mxu0
      %v5578 = vadd.f32 %v5417, %v5577
      %v5579 = vpop.f32.mrb[0].mxu0
      %5580 = vmatprep.mubr.bf16.mxu0 %v4641
      %5581 = vmatmul.mubr.bf16.gmra.mrb[0].mxu0 %v4640
      %v5582 = vpop.f32.mrb[0].mxu0
      %v5583 = vadd.f32 %v5422, %v5582
      %v5584 = vpop.f32.mrb[0].mxu0
      %v5585 = vpop.f32.mrb[0].mxu0
      %v5586 = vadd.f32 %v5425, %v5585
      %v5587 = vpop.f32.mrb[0].mxu0
      %5588 = vmatprep.mubr.bf16.mxu0 %v4648
      %5589 = vmatmul.mubr.bf16.gmra.mrb[0].mxu0 %v4647
      %v5590 = vpop.f32.mrb[0].mxu0
      %v5591 = vadd.f32 %v5430, %v5590
      %v5592 = vpop.f32.mrb[0].mxu0
      %v5593 = vpop.f32.mrb[0].mxu0
      %v5594 = vadd.f32 %v5433, %v5593
      %v5595 = vpop.f32.mrb[0].mxu0
      %5596 = vmatprep.mubr.bf16.mxu0 %v4655
      %5597 = vmatmul.mubr.bf16.gmra.mrb[0].mxu0 %v4654
      %v5598 = vpop.f32.mrb[0].mxu0
      %v5599 = vadd.f32 %v5438, %v5598
      %v5600 = vpop.f32.mrb[0].mxu0
      %v5601 = vpop.f32.mrb[0].mxu0
      %v5602 = vadd.f32 %v5441, %v5601
      %v5603 = vpop.f32.mrb[0].mxu0
      %5604 = vmatprep.mubr.bf16.mxu0 %v4662
      %5605 = vmatmul.mubr.bf16.gmra.mrb[0].mxu0 %v4661
      %v5606 = vpop.f32.mrb[0].mxu0
      %v5607 = vadd.f32 %v5446, %v5606
      %v5608 = vpop.f32.mrb[0].mxu0
      %v5609 = vpop.f32.mrb[0].mxu0
      %v5610 = vadd.f32 %v5449, %v5609
      %v5611 = vpop.f32.mrb[0].mxu0
      %5612 = vmatprep.mubr.bf16.mxu0 %v4669
      %5613 = vmatmul.mubr.bf16.gmra.mrb[0].mxu0 %v4668
      %v5614 = vpop.f32.mrb[0].mxu0
      %v5615 = vadd.f32 %v5454, %v5614
      %v5616 = vpop.f32.mrb[0].mxu0
      %v5617 = vpop.f32.mrb[0].mxu0
      %v5618 = vadd.f32 %v5457, %v5617
      %v5619 = vpop.f32.mrb[0].mxu0
      %5620 = vmatprep.mubr.bf16.mxu0 %v4676
      %5621 = vmatmul.mubr.bf16.gmra.mrb[0].mxu0 %v4675
      %v5622 = vpop.f32.mrb[0].mxu0
      %v5623 = vadd.f32 %v5462, %v5622
      %v5624 = vpop.f32.mrb[0].mxu0
      %v5625 = vpop.f32.mrb[0].mxu0
      %v5626 = vadd.f32 %v5465, %v5625
      %v5627 = vpop.f32.mrb[0].mxu0
      %5628 = vdwg.mxu0
      %5629 = vmatprep.subr.bf16.mxu0 0
      %5630 = vmatpush1.bf16.msra.mxu0 %v5038
      %5631 = vmatprep.subr.bf16.mxu0 0
      %5632 = vmatpush1.bf16.msra.mxu0 %v5039
      %5633 = vmatprep.subr.bf16.mxu0 0
      %5634 = vmatpush1.bf16.msra.mxu0 %v5040
      %5635 = vmatprep.subr.bf16.mxu0 0
      %5636 = vmatpush1.bf16.msra.mxu0 %v5041
      %5637 = vmatprep.subr.bf16.mxu0 0
      %5638 = vmatpush1.bf16.msra.mxu0 %v5042
      %5639 = vmatprep.subr.bf16.mxu0 0
      %5640 = vmatpush1.bf16.msra.mxu0 %v5043
      %5641 = vmatprep.subr.bf16.mxu0 0
      %5642 = vmatpush1.bf16.msra.mxu0 0
      %5643 = vmatprep.subr.bf16.mxu0 0
      %5644 = vmatpush1.bf16.msra.mxu0 0
      %5645 = vmatprep.subr.bf16.mxu0 0
      %5646 = vmatpush1.bf16.msra.mxu0 0
      %5647 = vmatprep.subr.bf16.mxu0 0
      %5648 = vmatpush1.bf16.msra.mxu0 0
      %5649 = vmatprep.subr.bf16.mxu0 0
      %5650 = vmatpush1.bf16.msra.mxu0 0
      %5651 = vmatprep.subr.bf16.mxu0 0
      %5652 = vmatpush1.bf16.msra.mxu0 0
      %5653 = vmatprep.subr.bf16.mxu0 0
      %5654 = vmatpush1.bf16.msra.mxu0 0
      %5655 = vmatprep.subr.bf16.mxu0 0
      %5656 = vmatpush1.bf16.msra.mxu0 0
      %5657 = vmatprep.subr.bf16.mxu0 0
      %5658 = vmatpush1.bf16.msra.mxu0 0
      %5659 = vmatprep.subr.bf16.mxu0 0
      %5660 = vmatpush1.bf16.msra.mxu0 0
      %5661 = vmatprep.mubr.bf16.mxu0 0
      %5662 = vmatmul.mubr.bf16.gmra.mrb[0].mxu0 %v5099
      %v5663 = vpop.f32.mrb[0].mxu0
      %v5664 = vadd.f32 %v5503, %v5663
      %v5665 = vpop.f32.mrb[0].mxu0
      %v5666 = vpop.f32.mrb[0].mxu0
      %v5667 = vadd.f32 %v5506, %v5666
      %v5668 = vpop.f32.mrb[0].mxu0
      %5669 = vmatprep.mubr.bf16.mxu0 0
      %5670 = vmatmul.mubr.bf16.gmra.mrb[0].mxu0 %v5102
      %v5671 = vpop.f32.mrb[0].mxu0
      %v5672 = vadd.f32 %v5511, %v5671
      %v5673 = vpop.f32.mrb[0].mxu0
      %v5674 = vpop.f32.mrb[0].mxu0
      %v5675 = vadd.f32 %v5514, %v5674
      %v5676 = vpop.f32.mrb[0].mxu0
      %5677 = vmatprep.mubr.bf16.mxu0 0
      %5678 = vmatmul.mubr.bf16.gmra.mrb[0].mxu0 %v5105
      %v5679 = vpop.f32.mrb[0].mxu0
      %v5680 = vadd.f32 %v5519, %v5679
      %v5681 = vpop.f32.mrb[0].mxu0
      %v5682 = vpop.f32.mrb[0].mxu0
      %v5683 = vadd.f32 %v5522, %v5682
      %v5684 = vpop.f32.mrb[0].mxu0
      %5685 = vmatprep.mubr.bf16.mxu0 0
      %5686 = vmatmul.mubr.bf16.gmra.mrb[0].mxu0 %v5108
      %v5687 = vpop.f32.mrb[0].mxu0
      %v5688 = vadd.f32 %v5527, %v5687
      %v5689 = vpop.f32.mrb[0].mxu0
      %v5690 = vpop.f32.mrb[0].mxu0
      %v5691 = vadd.f32 %v5530, %v5690
      %v5692 = vpop.f32.mrb[0].mxu0
      %5693 = vmatprep.mubr.bf16.mxu0 0
      %5694 = vmatmul.mubr.bf16.gmra.mrb[0].mxu0 %v5111
      %v5695 = vpop.f32.mrb[0].mxu0
      %v5696 = vadd.f32 %v5535, %v5695
      %v5697 = vpop.f32.mrb[0].mxu0
      %v5698 = vpop.f32.mrb[0].mxu0
      %v5699 = vadd.f32 %v5538, %v5698
      %v5700 = vpop.f32.mrb[0].mxu0
      %5701 = vmatprep.mubr.bf16.mxu0 0
      %5702 = vmatmul.mubr.bf16.gmra.mrb[0].mxu0 %v5114
      %v5703 = vpop.f32.mrb[0].mxu0
      %v5704 = vadd.f32 %v5543, %v5703
      %v5705 = vpop.f32.mrb[0].mxu0
      %v5706 = vpop.f32.mrb[0].mxu0
      %v5707 = vadd.f32 %v5546, %v5706
      %v5708 = vpop.f32.mrb[0].mxu0
      %5709 = vmatprep.mubr.bf16.mxu0 0
      %5710 = vmatmul.mubr.bf16.gmra.mrb[0].mxu0 %v5117
      %v5711 = vpop.f32.mrb[0].mxu0
      %v5712 = vadd.f32 %v5551, %v5711
      %v5713 = vpop.f32.mrb[0].mxu0
      %v5714 = vpop.f32.mrb[0].mxu0
      %v5715 = vadd.f32 %v5554, %v5714
      %v5716 = vpop.f32.mrb[0].mxu0
      %5717 = vmatprep.mubr.bf16.mxu0 0
      %5718 = vmatmul.mubr.bf16.gmra.mrb[0].mxu0 %v5120
      %v5719 = vpop.f32.mrb[0].mxu0
      %v5720 = vadd.f32 %v5559, %v5719
      %v5721 = vpop.f32.mrb[0].mxu0
      %v5722 = vpop.f32.mrb[0].mxu0
      %v5723 = vadd.f32 %v5562, %v5722
      %v5724 = vpop.f32.mrb[0].mxu0
      %5725 = vmatprep.mubr.bf16.mxu0 0
      %5726 = vmatmul.mubr.bf16.gmra.mrb[0].mxu0 %v5123
      %v5727 = vpop.f32.mrb[0].mxu0
      %v5728 = vadd.f32 %v5567, %v5727
      %v5729 = vpop.f32.mrb[0].mxu0
      %v5730 = vpop.f32.mrb[0].mxu0
      %v5731 = vadd.f32 %v5570, %v5730
      %v5732 = vpop.f32.mrb[0].mxu0
      %5733 = vmatprep.mubr.bf16.mxu0 0
      %5734 = vmatmul.mubr.bf16.gmra.mrb[0].mxu0 %v5126
      %v5735 = vpop.f32.mrb[0].mxu0
      %v5736 = vadd.f32 %v5575, %v5735
      %v5737 = vpop.f32.mrb[0].mxu0
      %v5738 = vpop.f32.mrb[0].mxu0
      %v5739 = vadd.f32 %v5578, %v5738
      %v5740 = vpop.f32.mrb[0].mxu0
      %5741 = vmatprep.mubr.bf16.mxu0 0
      %5742 = vmatmul.mubr.bf16.gmra.mrb[0].mxu0 %v5129
      %v5743 = vpop.f32.mrb[0].mxu0
      %v5744 = vadd.f32 %v5583, %v5743
      %v5745 = vpop.f32.mrb[0].mxu0
      %v5746 = vpop.f32.mrb[0].mxu0
      %v5747 = vadd.f32 %v5586, %v5746
      %v5748 = vpop.f32.mrb[0].mxu0
      %5749 = vmatprep.mubr.bf16.mxu0 0
      %5750 = vmatmul.mubr.bf16.gmra.mrb[0].mxu0 %v5132
      %v5751 = vpop.f32.mrb[0].mxu0
      %v5752 = vadd.f32 %v5591, %v5751
      %v5753 = vpop.f32.mrb[0].mxu0
      %v5754 = vpop.f32.mrb[0].mxu0
      %v5755 = vadd.f32 %v5594, %v5754
      %v5756 = vpop.f32.mrb[0].mxu0
      %5757 = vmatprep.mubr.bf16.mxu0 0
      %5758 = vmatmul.mubr.bf16.gmra.mrb[0].mxu0 %v5135
      %v5759 = vpop.f32.mrb[0].mxu0
      %v5760 = vadd.f32 %v5599, %v5759
      %v5761 = vpop.f32.mrb[0].mxu0
      %v5762 = vpop.f32.mrb[0].mxu0
      %v5763 = vadd.f32 %v5602, %v5762
      %v5764 = vpop.f32.mrb[0].mxu0
      %5765 = vmatprep.mubr.bf16.mxu0 0
      %5766 = vmatmul.mubr.bf16.gmra.mrb[0].mxu0 %v5138
      %v5767 = vpop.f32.mrb[0].mxu0
      %v5768 = vadd.f32 %v5607, %v5767
      %v5769 = vpop.f32.mrb[0].mxu0
      %v5770 = vpop.f32.mrb[0].mxu0
      %v5771 = vadd.f32 %v5610, %v5770
      %v5772 = vpop.f32.mrb[0].mxu0
      %5773 = vmatprep.mubr.bf16.mxu0 0
      %5774 = vmatmul.mubr.bf16.gmra.mrb[0].mxu0 %v5141
      %v5775 = vpop.f32.mrb[0].mxu0
      %v5776 = vadd.f32 %v5615, %v5775
      %v5777 = vpop.f32.mrb[0].mxu0
      %v5778 = vpop.f32.mrb[0].mxu0
      %v5779 = vadd.f32 %v5618, %v5778
      %v5780 = vpop.f32.mrb[0].mxu0
      %5781 = vmatprep.mubr.bf16.mxu0 0
      %5782 = vmatmul.mubr.bf16.gmra.mrb[0].mxu0 %v5144
      %v5783 = vpop.f32.mrb[0].mxu0
      %v5784 = vadd.f32 %v5623, %v5783
      %v5785 = vpop.f32.mrb[0].mxu0
      %v5786 = vpop.f32.mrb[0].mxu0
      %v5787 = vadd.f32 %v5626, %v5786
      %v5788 = vpop.f32.mrb[0].mxu0
      %5789 = vdwg.mxu0
      %v5790 = vld [vmem:[#allocation2] sm:$0xff]
      %v5791 = vld [vmem:[#allocation2 + $0x8] sm:$0xff]
      %v5792 = vld [vmem:[#allocation2 + $0x10] sm:$0xff]
      %v5793 = vld [vmem:[#allocation2 + $0x18] sm:$0xff]
      %v5794 = vld [vmem:[#allocation2 + $0x20] sm:$0xff]
      %v5795 = vld [vmem:[#allocation2 + $0x28] sm:$0xff]
      %v5796 = vld [vmem:[#allocation2 + $0x30] sm:$0xff]
      %v5797 = vld [vmem:[#allocation2 + $0x38] sm:$0xff]
      %v5798 = vld [vmem:[#allocation2 + $0x40] sm:$0xff]
      %v5799 = vld [vmem:[#allocation2 + $0x48] sm:$0xff]
      %v5800 = vld [vmem:[#allocation2 + $0x50] sm:$0xff]
      %v5801 = vld [vmem:[#allocation2 + $0x58] sm:$0xff]
      %v5802 = vld [vmem:[#allocation2 + $0x60] sm:$0xff]
      %v5803 = vld [vmem:[#allocation2 + $0x68] sm:$0xff]
      %v5804 = vld [vmem:[#allocation2 + $0x70] sm:$0xff]
      %v5805 = vld [vmem:[#allocation2 + $0x78] sm:$0xff]
      %v5806 = vld [vmem:[#allocation2 + $0x80] sm:$0xff]
      %v5807 = vld [vmem:[#allocation2 + $0x88] sm:$0xff]
      %v5808 = vld [vmem:[#allocation2 + $0x90] sm:$0xff]
      %v5809 = vld [vmem:[#allocation2 + $0x98] sm:$0xff]
      %v5810 = vld [vmem:[#allocation2 + $0xa0] sm:$0xff]
      %v5811 = vld [vmem:[#allocation2 + $0xa8] sm:$0xff]
      %v5812 = vld [vmem:[#allocation2 + $0xb0] sm:$0xff]
      %v5813 = vld [vmem:[#allocation2 + $0xb8] sm:$0xff]
      %v5814 = vld [vmem:[#allocation2 + $0xc0] sm:$0xff]
      %v5815 = vld [vmem:[#allocation2 + $0xc8] sm:$0xff]
      %v5816 = vld [vmem:[#allocation2 + $0xd0] sm:$0xff]
      %v5817 = vld [vmem:[#allocation2 + $0xd8] sm:$0xff]
      %v5818 = vld [vmem:[#allocation2 + $0xe0] sm:$0xff]
      %v5819 = vld [vmem:[#allocation2 + $0xe8] sm:$0xff]
      %v5820 = vld [vmem:[#allocation2 + $0xf0] sm:$0xff]
      %v5821 = vld [vmem:[#allocation2 + $0xf8] sm:$0xff]
      %v5822 = vadd.f32 %v5790, %v5664
      %v5823 = vadd.f32 %v5791, %v5667
      %v5824 = vadd.f32 %v5792, %v5672
      %v5825 = vadd.f32 %v5793, %v5675
      %v5826 = vadd.f32 %v5794, %v5680
      %v5827 = vadd.f32 %v5795, %v5683
      %v5828 = vadd.f32 %v5796, %v5688
      %v5829 = vadd.f32 %v5797, %v5691
      %v5830 = vadd.f32 %v5798, %v5696
      %v5831 = vadd.f32 %v5799, %v5699
      %v5832 = vadd.f32 %v5800, %v5704
      %v5833 = vadd.f32 %v5801, %v5707
      %v5834 = vadd.f32 %v5802, %v5712
      %v5835 = vadd.f32 %v5803, %v5715
      %v5836 = vadd.f32 %v5804, %v5720
      %v5837 = vadd.f32 %v5805, %v5723
      %v5838 = vadd.f32 %v5806, %v5728
      %v5839 = vadd.f32 %v5807, %v5731
      %v5840 = vadd.f32 %v5808, %v5736
      %v5841 = vadd.f32 %v5809, %v5739
      %v5842 = vadd.f32 %v5810, %v5744
      %v5843 = vadd.f32 %v5811, %v5747
      %v5844 = vadd.f32 %v5812, %v5752
      %v5845 = vadd.f32 %v5813, %v5755
      %v5846 = vadd.f32 %v5814, %v5760
      %v5847 = vadd.f32 %v5815, %v5763
      %v5848 = vadd.f32 %v5816, %v5768
      %v5849 = vadd.f32 %v5817, %v5771
      %v5850 = vadd.f32 %v5818, %v5776
      %v5851 = vadd.f32 %v5819, %v5779
      %v5852 = vadd.f32 %v5820, %v5784
      %v5853 = vadd.f32 %v5821, %v5787
      %5854 = vst [vmem:[#allocation2] sm:$0xff] %v5822
      %5855 = vst [vmem:[#allocation2 + $0x8] sm:$0xff] %v5823
      %5856 = vst [vmem:[#allocation2 + $0x10] sm:$0xff] %v5824
      %5857 = vst [vmem:[#allocation2 + $0x18] sm:$0xff] %v5825
      %5858 = vst [vmem:[#allocation2 + $0x20] sm:$0xff] %v5826
      %5859 = vst [vmem:[#allocation2 + $0x28] sm:$0xff] %v5827
      %5860 = vst [vmem:[#allocation2 + $0x30] sm:$0xff] %v5828
      %5861 = vst [vmem:[#allocation2 + $0x38] sm:$0xff] %v5829
      %5862 = vst [vmem:[#allocation2 + $0x40] sm:$0xff] %v5830
      %5863 = vst [vmem:[#allocation2 + $0x48] sm:$0xff] %v5831
      %5864 = vst [vmem:[#allocation2 + $0x50] sm:$0xff] %v5832
      %5865 = vst [vmem:[#allocation2 + $0x58] sm:$0xff] %v5833
      %5866 = vst [vmem:[#allocation2 + $0x60] sm:$0xff] %v5834
      %5867 = vst [vmem:[#allocation2 + $0x68] sm:$0xff] %v5835
      %5868 = vst [vmem:[#allocation2 + $0x70] sm:$0xff] %v5836
      %5869 = vst [vmem:[#allocation2 + $0x78] sm:$0xff] %v5837
      %5870 = vst [vmem:[#allocation2 + $0x80] sm:$0xff] %v5838
      %5871 = vst [vmem:[#allocation2 + $0x88] sm:$0xff] %v5839
      %5872 = vst [vmem:[#allocation2 + $0x90] sm:$0xff] %v5840
      %5873 = vst [vmem:[#allocation2 + $0x98] sm:$0xff] %v5841
      %5874 = vst [vmem:[#allocation2 + $0xa0] sm:$0xff] %v5842
      %5875 = vst [vmem:[#allocation2 + $0xa8] sm:$0xff] %v5843
      %5876 = vst [vmem:[#allocation2 + $0xb0] sm:$0xff] %v5844
      %5877 = vst [vmem:[#allocation2 + $0xb8] sm:$0xff] %v5845
      %5878 = vst [vmem:[#allocation2 + $0xc0] sm:$0xff] %v5846
      %5879 = vst [vmem:[#allocation2 + $0xc8] sm:$0xff] %v5847
      %5880 = vst [vmem:[#allocation2 + $0xd0] sm:$0xff] %v5848
      %5881 = vst [vmem:[#allocation2 + $0xd8] sm:$0xff] %v5849
      %5882 = vst [vmem:[#allocation2 + $0xe0] sm:$0xff] %v5850
      %5883 = vst [vmem:[#allocation2 + $0xe8] sm:$0xff] %v5851
      %5884 = vst [vmem:[#allocation2 + $0xf0] sm:$0xff] %v5852
      %5885 = vst [vmem:[#allocation2 + $0xf8] sm:$0xff] %v5853
      %v5886 = vld [vmem:[#allocation2] sm:$0xff]
      %v5887 = vld [vmem:[#allocation2 + $0x8] sm:$0xff]
      %v5888 = vld [vmem:[#allocation2 + $0x10] sm:$0xff]
      %v5889 = vld [vmem:[#allocation2 + $0x18] sm:$0xff]
      %v5890 = vld [vmem:[#allocation2 + $0x20] sm:$0xff]
      %v5891 = vld [vmem:[#allocation2 + $0x28] sm:$0xff]
      %v5892 = vld [vmem:[#allocation2 + $0x30] sm:$0xff]
      %v5893 = vld [vmem:[#allocation2 + $0x38] sm:$0xff]
      %v5894 = vld [vmem:[#allocation2 + $0x40] sm:$0xff]
      %v5895 = vld [vmem:[#allocation2 + $0x48] sm:$0xff]
      %v5896 = vld [vmem:[#allocation2 + $0x50] sm:$0xff]
      %v5897 = vld [vmem:[#allocation2 + $0x58] sm:$0xff]
      %v5898 = vld [vmem:[#allocation2 + $0x60] sm:$0xff]
      %v5899 = vld [vmem:[#allocation2 + $0x68] sm:$0xff]
      %v5900 = vld [vmem:[#allocation2 + $0x70] sm:$0xff]
      %v5901 = vld [vmem:[#allocation2 + $0x78] sm:$0xff]
      %v5902 = vld [vmem:[#allocation2 + $0x80] sm:$0xff]
      %v5903 = vld [vmem:[#allocation2 + $0x88] sm:$0xff]
      %v5904 = vld [vmem:[#allocation2 + $0x90] sm:$0xff]
      %v5905 = vld [vmem:[#allocation2 + $0x98] sm:$0xff]
      %v5906 = vld [vmem:[#allocation2 + $0xa0] sm:$0xff]
      %v5907 = vld [vmem:[#allocation2 + $0xa8] sm:$0xff]
      %v5908 = vld [vmem:[#allocation2 + $0xb0] sm:$0xff]
      %v5909 = vld [vmem:[#allocation2 + $0xb8] sm:$0xff]
      %v5910 = vld [vmem:[#allocation2 + $0xc0] sm:$0xff]
      %v5911 = vld [vmem:[#allocation2 + $0xc8] sm:$0xff]
      %v5912 = vld [vmem:[#allocation2 + $0xd0] sm:$0xff]
      %v5913 = vld [vmem:[#allocation2 + $0xd8] sm:$0xff]
      %v5914 = vld [vmem:[#allocation2 + $0xe0] sm:$0xff]
      %v5915 = vld [vmem:[#allocation2 + $0xe8] sm:$0xff]
      %v5916 = vld [vmem:[#allocation2 + $0xf0] sm:$0xff]
      %v5917 = vld [vmem:[#allocation2 + $0xf8] sm:$0xff]
      %v5918 = vld [vmem:[%s213] sm:$0x1]
      %v5920 = vlaneseq
      %v5921 = vshrl.u32 %v5920, 7
      %v5922 = vsub.s32 0, %v5921
      %v5923 = vrot.slane %v5918, %v5922
      %v5925 = vadd.f32 %v5886, %v5923
      %v5926 = vadd.f32 %v5887, %v5923
      %v5927 = vadd.f32 %v5888, %v5923
      %v5928 = vadd.f32 %v5889, %v5923
      %v5929 = vadd.f32 %v5890, %v5923
      %v5930 = vadd.f32 %v5891, %v5923
      %v5931 = vadd.f32 %v5892, %v5923
      %v5932 = vadd.f32 %v5893, %v5923
      %v5933 = vadd.f32 %v5894, %v5923
      %v5934 = vadd.f32 %v5895, %v5923
      %v5935 = vadd.f32 %v5896, %v5923
      %v5936 = vadd.f32 %v5897, %v5923
      %v5937 = vadd.f32 %v5898, %v5923
      %v5938 = vadd.f32 %v5899, %v5923
      %v5939 = vadd.f32 %v5900, %v5923
      %v5940 = vadd.f32 %v5901, %v5923
      %v5941 = vadd.f32 %v5902, %v5923
      %v5942 = vadd.f32 %v5903, %v5923
      %v5943 = vadd.f32 %v5904, %v5923
      %v5944 = vadd.f32 %v5905, %v5923
      %v5945 = vadd.f32 %v5906, %v5923
      %v5946 = vadd.f32 %v5907, %v5923
      %v5947 = vadd.f32 %v5908, %v5923
      %v5948 = vadd.f32 %v5909, %v5923
      %v5949 = vadd.f32 %v5910, %v5923
      %v5950 = vadd.f32 %v5911, %v5923
      %v5951 = vadd.f32 %v5912, %v5923
      %v5952 = vadd.f32 %v5913, %v5923
      %v5953 = vadd.f32 %v5914, %v5923
      %v5954 = vadd.f32 %v5915, %v5923
      %v5955 = vadd.f32 %v5916, %v5923
      %v5956 = vadd.f32 %v5917, %v5923
      %v5957 = vmax.f32 %v5925, 0.0
      %v5958 = vmax.f32 %v5926, 0.0
      %v5959 = vmax.f32 %v5927, 0.0
      %v5960 = vmax.f32 %v5928, 0.0
      %v5961 = vmax.f32 %v5929, 0.0
      %v5962 = vmax.f32 %v5930, 0.0
      %v5963 = vmax.f32 %v5931, 0.0
      %v5964 = vmax.f32 %v5932, 0.0
      %v5965 = vmax.f32 %v5933, 0.0
      %v5966 = vmax.f32 %v5934, 0.0
      %v5967 = vmax.f32 %v5935, 0.0
      %v5968 = vmax.f32 %v5936, 0.0
      %v5969 = vmax.f32 %v5937, 0.0
      %v5970 = vmax.f32 %v5938, 0.0
      %v5971 = vmax.f32 %v5939, 0.0
      %v5972 = vmax.f32 %v5940, 0.0
      %v5973 = vmax.f32 %v5941, 0.0
      %v5974 = vmax.f32 %v5942, 0.0
      %v5975 = vmax.f32 %v5943, 0.0
      %v5976 = vmax.f32 %v5944, 0.0
      %v5977 = vmax.f32 %v5945, 0.0
      %v5978 = vmax.f32 %v5946, 0.0
      %v5979 = vmax.f32 %v5947, 0.0
      %v5980 = vmax.f32 %v5948, 0.0
      %v5981 = vmax.f32 %v5949, 0.0
      %v5982 = vmax.f32 %v5950, 0.0
      %v5983 = vmax.f32 %v5951, 0.0
      %v5984 = vmax.f32 %v5952, 0.0
      %v5985 = vmax.f32 %v5953, 0.0
      %v5986 = vmax.f32 %v5954, 0.0
      %v5987 = vmax.f32 %v5955, 0.0
      %v5988 = vmax.f32 %v5956, 0.0
      %v5989 = vpack.c.bf16 %v5958, %v5957
      %v5990 = vpack.c.bf16 %v5960, %v5959
      %v5991 = vpack.c.bf16 %v5962, %v5961
      %v5992 = vpack.c.bf16 %v5964, %v5963
      %v5993 = vpack.c.bf16 %v5966, %v5965
      %v5994 = vpack.c.bf16 %v5968, %v5967
      %v5995 = vpack.c.bf16 %v5970, %v5969
      %v5996 = vpack.c.bf16 %v5972, %v5971
      %v5997 = vpack.c.bf16 %v5974, %v5973
      %v5998 = vpack.c.bf16 %v5976, %v5975
      %v5999 = vpack.c.bf16 %v5978, %v5977
      %v6000 = vpack.c.bf16 %v5980, %v5979
      %v6001 = vpack.c.bf16 %v5982, %v5981
      %v6002 = vpack.c.bf16 %v5984, %v5983
      %v6003 = vpack.c.bf16 %v5986, %v5985
      %v6004 = vpack.c.bf16 %v5988, %v5987
      %v6021 = vunpack.c.l.b16 %v5989
      %v6022 = vunpack.c.h.b16 %v5989
      %v6023 = vunpack.c.l.b16 %v5990
      %v6024 = vunpack.c.h.b16 %v5990
      %v6025 = vunpack.c.l.b16 %v5991
      %v6026 = vunpack.c.h.b16 %v5991
      %v6027 = vunpack.c.l.b16 %v5992
      %v6028 = vunpack.c.h.b16 %v5992
      %v6029 = vunpack.c.l.b16 %v5993
      %v6030 = vunpack.c.h.b16 %v5993
      %v6031 = vunpack.c.l.b16 %v5994
      %v6032 = vunpack.c.h.b16 %v5994
      %v6033 = vunpack.c.l.b16 %v5995
      %v6034 = vunpack.c.h.b16 %v5995
      %v6035 = vunpack.c.l.b16 %v5996
      %v6036 = vunpack.c.h.b16 %v5996
      %v6037 = vunpack.c.l.b16 %v5997
      %v6038 = vunpack.c.h.b16 %v5997
      %v6039 = vunpack.c.l.b16 %v5998
      %v6040 = vunpack.c.h.b16 %v5998
      %v6041 = vunpack.c.l.b16 %v5999
      %v6042 = vunpack.c.h.b16 %v5999
      %v6043 = vunpack.c.l.b16 %v6000
      %v6044 = vunpack.c.h.b16 %v6000
      %v6045 = vunpack.c.l.b16 %v6001
      %v6046 = vunpack.c.h.b16 %v6001
      %v6047 = vunpack.c.l.b16 %v6002
      %v6048 = vunpack.c.h.b16 %v6002
      %v6049 = vunpack.c.l.b16 %v6003
      %v6050 = vunpack.c.h.b16 %v6003
      %v6051 = vunpack.c.l.b16 %v6004
      %v6052 = vunpack.c.h.b16 %v6004
      %v6053 = vpack.c.b16 %v6021, %v6021
      %v6054 = vpack.c.b16 %v6022, %v6022
      %v6055 = vpack.c.b16 %v6023, %v6023
      %v6056 = vpack.c.b16 %v6024, %v6024
      %v6057 = vpack.c.b16 %v6025, %v6025
      %v6058 = vpack.c.b16 %v6026, %v6026
      %v6059 = vpack.c.b16 %v6027, %v6027
      %v6060 = vpack.c.b16 %v6028, %v6028
      %v6061 = vpack.c.b16 %v6029, %v6029
      %v6062 = vpack.c.b16 %v6030, %v6030
      %v6063 = vpack.c.b16 %v6031, %v6031
      %v6064 = vpack.c.b16 %v6032, %v6032
      %v6065 = vpack.c.b16 %v6033, %v6033
      %v6066 = vpack.c.b16 %v6034, %v6034
      %v6067 = vpack.c.b16 %v6035, %v6035
      %v6068 = vpack.c.b16 %v6036, %v6036
      %v6069 = vpack.c.b16 %v6037, %v6037
      %v6070 = vpack.c.b16 %v6038, %v6038
      %v6071 = vpack.c.b16 %v6039, %v6039
      %v6072 = vpack.c.b16 %v6040, %v6040
      %v6073 = vpack.c.b16 %v6041, %v6041
      %v6074 = vpack.c.b16 %v6042, %v6042
      %v6075 = vpack.c.b16 %v6043, %v6043
      %v6076 = vpack.c.b16 %v6044, %v6044
      %v6077 = vpack.c.b16 %v6045, %v6045
      %v6078 = vpack.c.b16 %v6046, %v6046
      %v6079 = vpack.c.b16 %v6047, %v6047
      %v6080 = vpack.c.b16 %v6048, %v6048
      %v6081 = vpack.c.b16 %v6049, %v6049
      %v6082 = vpack.c.b16 %v6050, %v6050
      %v6083 = vpack.c.b16 %v6051, %v6051
      %v6084 = vpack.c.b16 %v6052, %v6052
      %6117 = vst [vmem:[%s221] sm:$0xf] %v6053
      %6118 = vst [vmem:[%s221 + $0x4] sm:$0xf] %v6054
      %6119 = vst [vmem:[%s221 + $0x8] sm:$0xf] %v6055
      %6120 = vst [vmem:[%s221 + $0xc] sm:$0xf] %v6056
      %6121 = vst [vmem:[%s221 + $0x10] sm:$0xf] %v6057
      %6122 = vst [vmem:[%s221 + $0x14] sm:$0xf] %v6058
      %6123 = vst [vmem:[%s221 + $0x18] sm:$0xf] %v6059
      %6124 = vst [vmem:[%s221 + $0x1c] sm:$0xf] %v6060
      %6125 = vst [vmem:[%s221 + $0x20] sm:$0xf] %v6061
      %6126 = vst [vmem:[%s221 + $0x24] sm:$0xf] %v6062
      %6127 = vst [vmem:[%s221 + $0x28] sm:$0xf] %v6063
      %6128 = vst [vmem:[%s221 + $0x2c] sm:$0xf] %v6064
      %6129 = vst [vmem:[%s221 + $0x30] sm:$0xf] %v6065
      %6130 = vst [vmem:[%s221 + $0x34] sm:$0xf] %v6066
      %6131 = vst [vmem:[%s221 + $0x38] sm:$0xf] %v6067
      %6132 = vst [vmem:[%s221 + $0x3c] sm:$0xf] %v6068
      %6133 = vst [vmem:[%s221 + $0x40] sm:$0xf] %v6069
      %6134 = vst [vmem:[%s221 + $0x44] sm:$0xf] %v6070
      %6135 = vst [vmem:[%s221 + $0x48] sm:$0xf] %v6071
      %6136 = vst [vmem:[%s221 + $0x4c] sm:$0xf] %v6072
      %6137 = vst [vmem:[%s221 + $0x50] sm:$0xf] %v6073
      %6138 = vst [vmem:[%s221 + $0x54] sm:$0xf] %v6074
      %6139 = vst [vmem:[%s221 + $0x58] sm:$0xf] %v6075
      %6140 = vst [vmem:[%s221 + $0x5c] sm:$0xf] %v6076
      %6141 = vst [vmem:[%s221 + $0x60] sm:$0xf] %v6077
      %6142 = vst [vmem:[%s221 + $0x64] sm:$0xf] %v6078
      %6143 = vst [vmem:[%s221 + $0x68] sm:$0xf] %v6079
      %6144 = vst [vmem:[%s221 + $0x6c] sm:$0xf] %v6080
      %6145 = vst [vmem:[%s221 + $0x70] sm:$0xf] %v6081
      %6146 = vst [vmem:[%s221 + $0x74] sm:$0xf] %v6082
      %6147 = vst [vmem:[%s221 + $0x78] sm:$0xf] %v6083
      %6148 = vst [vmem:[%s221 + $0x7c] sm:$0xf] %v6084
      %p6149 = scmp.lt.s32.totalorder %s18, 1
      %s6150 = scalar_select %p6149, %s18, 1
      %p6151 = scmp.lt.s32.totalorder %s19, 0
      %s6152 = scalar_select %p6151, %s19, 0
      %s6153 = smul.addr %s6150, 32
      %s6154 = sadd.s32 %s6152, %s6153
      %s6155 = smul.addr %s6154, 4
      %s6156 = scalar_lea.vmem %s3, %s6155
      // Predicated region
      $region33: #{mixed_3b.5} parent=31 // pred_check
        %p6157 = pneg %p124
      $region34: #{mixed_3b.5} parent=31 // pred_check_branch
        %6159 = sbr.rel (%p6157) target = $region36
      $region35: #{mixed_3b.5} parent=31 // pred_region
        _
      $region36: #{mixed_3b.5} parent=31 // pred_fallthru
        _
    $region32: #{mixed_3b.5} parent=5 // pred_fallthru
      _
    %p6160 = scmp.le.s32.totalorder 2, %s9
    // Predicated region
    $region37: #{mixed_3b.5} parent=5 // pred_check
      %p6161 = pneg %p6160
    $region38: #{mixed_3b.5} parent=5 // pred_check_branch
      %6163 = sbr.rel (%p6161) target = $region40
    $region39: #{mixed_3b.5} parent=5 // pred_region
      %s6164 = ssub.s32 %s9, 2
      // Predicated region
      $region41: #{mixed_3b.5} parent=39 // pred_check
        %p6165 = pneg %p130
      $region42: #{mixed_3b.5} parent=39 // pred_check_branch
        %6167 = sbr.rel (%p6165) target = $region44
      $region43: #{mixed_3b.5} parent=39 // pred_region
        %p6168 = scmp.lt.s32.totalorder %s20, 1
        %s6169 = scalar_select %p6168, %s20, 1
        %p6170 = scmp.lt.s32.totalorder %s21, 0
        %s6171 = scalar_select %p6170, %s21, 0
        %s6172 = smul.addr %s6169, 32
        %s6173 = sadd.s32 %s6171, %s6172
        %s6174 = smul.addr %s6173, 4
        %s6175 = scalar_lea.vmem %s3, %s6174
      $region44: #{mixed_3b.5} parent=39 // pred_fallthru
        _
    $region40: #{mixed_3b.5} parent=5 // pred_fallthru
      _
  $region6: #{mixed_3b.5} parent=0 // loop_footer
    %s13 = sadd.s32 1, %s9
  $region7: #{mixed_3b.5} parent=0 // loop_footer_branch
    %8 = sbr.rel target = $region3
  $region8: #{mixed_3b.5} parent=0 // loop_exit
    _

// kernel: mixed_3b.7
$region0: #{mixed_3b.7}
  #allocation0 [shape = 'u32[]', space=smem, size = 0x4, offset = 0x4, fixed_abs, tag = 'smem constant byte address 0x4 - core index']
  #allocation1 [shape = 'u32[144,128]{1,0:T(1,128)}', space=vmem, size = 0x12000, scoped, tag = 'internal scratch']
  %s0 = inlined_call_operand.vmem [shape: bf16[2,6,10,10,192], index: 0, kind: input, shape index: {}]
  %s1 = inlined_call_operand.vmem [shape: bf16[192,128], index: 1, kind: input, shape index: {}]
  %s2 = inlined_call_operand.vmem [shape: f32[1,128], index: 2, kind: input, shape index: {}]
  %s3 = inlined_call_operand.vmem [shape: bf16[2,4,64,128], index: 3, kind: output, shape index: {}]
  %s4 = sld [smem:[#allocation0]]
  $region45: #{mixed_3b.7} parent=0
    _
  %s6 = ssub.s32 1, %s4
  %s7 = scalar_select 0, %s6, %s4
  loop: start=0, step=1, limit=4
  $region2: #{mixed_3b.7} parent=0 // loop_pre_header
    _
  $region3: #{mixed_3b.7} parent=0 // loop_header
    %s9 = sphi 0, %s13
    %p10 = scmp.ge.s32.totalorder %s9, 4
    %s16 = sphi 0, %s28
    %s17 = sphi 0, %s24
    %s18 = sphi 0, %s16
    %s19 = sphi 0, %s17
    %s20 = sphi 0, %s18
    %s21 = sphi 0, %s19
    %s31 = sphi 0, %s33
    %s34 = sphi 0, %s31
    %s35 = sphi 0, %s34
    %s51 = sphi 0, %s35
    %s57 = sphi 0, %s59
    %s60 = sphi 0, %s57
    %s61 = sphi 0, %s60
    %s77 = sphi 0, %s61
    %s83 = sphi 0, %s85
    %s86 = sphi 0, %s83
    %s87 = sphi 0, %s86
    %s103 = sphi 0, %s87
    %s111 = sphi 0, %s113
    %s114 = sphi 0, %s111
    %s115 = sphi 0, %s114
    %s131 = sphi 0, %s115
  $region4: #{mixed_3b.7} parent=0 // loop_header_branch
    %12 = sbr.rel (%p10) target = $region8
  $region5: #{mixed_3b.7} parent=0 // loop_body
    %s14 = ssub.s32 %s9, 1
    %s15 = ssub.s32 %s9, 2
    %s22 = sadd.s32 1, %s17
    %p23 = scmp.ge.s32.totalorder %s22, 1
    %s24 = scalar_select %p23, 0, %s22
    %s25 = sadd.s32 1, %s16
    %s26 = scalar_select %p23, %s25, %s16
    %p27 = scmp.ge.s32.totalorder %s26, 2
    %s28 = scalar_select %p27, 0, %s26
    %s29 = ssub.s32 %s16, %s28
    %p30 = scmp.eq.s32.totalorder %s29, 0
    %s32 = sadd.s32 %s31, 1
    %s33 = scalar_select %p30, %s31, %s32
    %p36 = pneg %p30
    %p37 = scmp.eq.s32.totalorder %s9, 1
    %p38 = por %p36, %p37
    %p39 = scmp.ne.s32.totalorder %s31, %s34
    %p40 = scmp.eq.s32.totalorder %s9, 0
    %p41 = por %p39, %p40
    %p42 = scmp.ne.s32.totalorder %s31, %s34
    %p43 = scmp.eq.s32.totalorder %s14, 1
    %p44 = por %p42, %p43
    %p45 = scmp.ne.s32.totalorder %s34, %s35
    %p46 = scmp.eq.s32.totalorder %s14, 0
    %p47 = por %p45, %p46
    %p48 = scmp.ne.s32.totalorder %s34, %s35
    %p49 = scmp.eq.s32.totalorder %s15, 1
    %p50 = por %p48, %p49
    %p52 = scmp.ne.s32.totalorder %s35, %s51
    %p53 = scmp.eq.s32.totalorder %s15, 0
    %p54 = por %p52, %p53
    %s55 = ssub.s32 %s17, %s24
    %p56 = scmp.eq.s32.totalorder %s55, 0
    %s58 = sadd.s32 %s57, 1
    %s59 = scalar_select %p56, %s57, %s58
    %p62 = pneg %p56
    %p63 = scmp.eq.s32.totalorder %s9, 1
    %p64 = por %p62, %p63
    %p65 = scmp.ne.s32.totalorder %s57, %s60
    %p66 = scmp.eq.s32.totalorder %s9, 0
    %p67 = por %p65, %p66
    %p68 = scmp.ne.s32.totalorder %s57, %s60
    %p69 = scmp.eq.s32.totalorder %s14, 1
    %p70 = por %p68, %p69
    %p71 = scmp.ne.s32.totalorder %s60, %s61
    %p72 = scmp.eq.s32.totalorder %s14, 0
    %p73 = por %p71, %p72
    %p74 = scmp.ne.s32.totalorder %s60, %s61
    %p75 = scmp.eq.s32.totalorder %s15, 1
    %p76 = por %p74, %p75
    %p78 = scmp.ne.s32.totalorder %s61, %s77
    %p79 = scmp.eq.s32.totalorder %s15, 0
    %p80 = por %p78, %p79
    %s81 = ssub.s32 %s17, %s24
    %p82 = scmp.eq.s32.totalorder %s81, 0
    %s84 = sadd.s32 %s83, 1
    %s85 = scalar_select %p82, %s83, %s84
    %p88 = pneg %p82
    %p89 = scmp.eq.s32.totalorder %s9, 1
    %p90 = por %p88, %p89
    %p91 = scmp.ne.s32.totalorder %s83, %s86
    %p92 = scmp.eq.s32.totalorder %s9, 0
    %p93 = por %p91, %p92
    %p94 = scmp.ne.s32.totalorder %s83, %s86
    %p95 = scmp.eq.s32.totalorder %s14, 1
    %p96 = por %p94, %p95
    %p97 = scmp.ne.s32.totalorder %s86, %s87
    %p98 = scmp.eq.s32.totalorder %s14, 0
    %p99 = por %p97, %p98
    %p100 = scmp.ne.s32.totalorder %s86, %s87
    %p101 = scmp.eq.s32.totalorder %s15, 1
    %p102 = por %p100, %p101
    %p104 = scmp.ne.s32.totalorder %s87, %s103
    %p105 = scmp.eq.s32.totalorder %s15, 0
    %p106 = por %p104, %p105
    %s107 = ssub.s32 %s16, %s28
    %s108 = ssub.s32 %s17, %s24
    %s109 = sor.u32 %s107, %s108
    %p110 = scmp.eq.s32.totalorder %s109, 0
    %s112 = sadd.s32 %s111, 1
    %s113 = scalar_select %p110, %s111, %s112
    %p116 = pneg %p110
    %p117 = scmp.eq.s32.totalorder %s9, 1
    %p118 = por %p116, %p117
    %p119 = scmp.ne.s32.totalorder %s111, %s114
    %p120 = scmp.eq.s32.totalorder %s9, 0
    %p121 = por %p119, %p120
    %p122 = scmp.ne.s32.totalorder %s111, %s114
    %p123 = scmp.eq.s32.totalorder %s14, 1
    %p124 = por %p122, %p123
    %p125 = scmp.ne.s32.totalorder %s114, %s115
    %p126 = scmp.eq.s32.totalorder %s14, 0
    %p127 = por %p125, %p126
    %p128 = scmp.ne.s32.totalorder %s114, %s115
    %p129 = scmp.eq.s32.totalorder %s15, 1
    %p130 = por %p128, %p129
    %p132 = scmp.ne.s32.totalorder %s115, %s131
    %p133 = scmp.eq.s32.totalorder %s15, 0
    %p134 = por %p132, %p133
    %p135 = scmp.le.s32.totalorder 1, %s9
    %p136 = scmp.lt.s32.totalorder %s9, 3
    %p137 = pnand %p135, %p136
    %p138 = pneg %p137
    // Predicated region
    $region9: #{mixed_3b.7} parent=5 // pred_check
      _
    $region10: #{mixed_3b.7} parent=5 // pred_check_branch
      %140 = sbr.rel (%p137) target = $region12
    $region11: #{mixed_3b.7} parent=5 // pred_region
      %s141 = ssub.s32 %s9, 1
      // Predicated region
      $region13: #{mixed_3b.7} parent=11 // pred_check
        %p142 = pneg %p73
      $region14: #{mixed_3b.7} parent=11 // pred_check_branch
        %144 = sbr.rel (%p142) target = $region16
      $region15: #{mixed_3b.7} parent=11 // pred_region
        %p145 = scmp.lt.s32.totalorder %s19, 0
        %s146 = scalar_select %p145, %s19, 0
        %s147 = smul.addr %s146, 4
        %s148 = scalar_lea.vmem %s1, %s147
      $region16: #{mixed_3b.7} parent=11 // pred_fallthru
        _
      // Predicated region
      $region17: #{mixed_3b.7} parent=11 // pred_check
        %p149 = pneg %p99
      $region18: #{mixed_3b.7} parent=11 // pred_check_branch
        %151 = sbr.rel (%p149) target = $region20
      $region19: #{mixed_3b.7} parent=11 // pred_region
        %p152 = scmp.lt.s32.totalorder %s19, 0
        %s153 = scalar_select %p152, %s19, 0
        %s154 = scalar_lea.vmem %s2, %s153
      $region20: #{mixed_3b.7} parent=11 // pred_fallthru
        _
    $region12: #{mixed_3b.7} parent=5 // pred_fallthru
      _
    %p155 = scmp.lt.s32.totalorder %s9, 2
    // Predicated region
    $region21: #{mixed_3b.7} parent=5 // pred_check
      %p156 = pneg %p155
    $region22: #{mixed_3b.7} parent=5 // pred_check_branch
      %158 = sbr.rel (%p156) target = $region24
    $region23: #{mixed_3b.7} parent=5 // pred_region
      // Predicated region
      $region25: #{mixed_3b.7} parent=23 // pred_check
        %p159 = pneg %p41
      $region26: #{mixed_3b.7} parent=23 // pred_check_branch
        %161 = sbr.rel (%p159) target = $region28
      $region27: #{mixed_3b.7} parent=23 // pred_region
        %p162 = scmp.lt.s32.totalorder %s16, 1
        %s163 = scalar_select %p162, %s16, 1
        %s164 = smul.addr %s163, 240
        %s165 = smul.addr %s164, 4
        %s166 = scalar_lea.vmem %s0, %s165
      $region28: #{mixed_3b.7} parent=23 // pred_fallthru
        _
    $region24: #{mixed_3b.7} parent=5 // pred_fallthru
      _
    %p167 = scmp.le.s32.totalorder 1, %s9
    %p168 = scmp.lt.s32.totalorder %s9, 3
    %p169 = pnand %p167, %p168
    %p170 = pneg %p169
    // Predicated region
    $region29: #{mixed_3b.7} parent=5 // pred_check
      _
    $region30: #{mixed_3b.7} parent=5 // pred_check_branch
      %172 = sbr.rel (%p169) target = $region32
    $region31: #{mixed_3b.7} parent=5 // pred_region
      %s173 = ssub.s32 %s9, 1
      %p174 = scmp.lt.s32.totalorder %s18, 1
      %s175 = scalar_select %p174, %s18, 1
      %s176 = smul.addr %s175, 240
      %s177 = smul.addr %s176, 4
      %s178 = scalar_lea.vmem %s0, %s177
      %p179 = pneg %p47
      %p180 = pneg %p44
      %p181 = scmp.lt.s32.totalorder %s19, 0
      %s182 = scalar_select %p181, %s19, 0
      %s183 = smul.addr %s182, 4
      %s184 = scalar_lea.vmem %s1, %s183
      %p185 = pneg %p73
      %p186 = pneg %p70
      %p187 = scmp.lt.s32.totalorder %s19, 0
      %s188 = scalar_select %p187, %s19, 0
      %s189 = scalar_lea.vmem %s2, %s188
      %p190 = pneg %p99
      %p191 = pneg %p96
      %p192 = pneg %p127
      %p193 = pneg %p124
      %p194 = scmp.lt.s32.totalorder %s18, 1
      %s195 = scalar_select %p194, %s18, 1
      %p196 = scmp.lt.s32.totalorder %s19, 0
      %s197 = scalar_select %p196, %s19, 0
      %s198 = smul.addr %s195, 32
      %s199 = sadd.s32 %s197, %s198
      %s200 = smul.addr %s199, 4
      %s201 = scalar_lea.vmem %s3, %s200
      %p202 = scmp.lt.s32.totalorder %s18, 1
      %s203 = scalar_select %p202, %s18, 1
      %s204 = smul.addr %s203, 240
      %s205 = smul.addr %s204, 4
      %s206 = scalar_lea.vmem %s0, %s205
      %p207 = scmp.lt.s32.totalorder %s19, 0
      %s208 = scalar_select %p207, %s19, 0
      %s209 = smul.addr %s208, 4
      %s210 = scalar_lea.vmem %s1, %s209
      %p211 = scmp.lt.s32.totalorder %s19, 0
      %s212 = scalar_select %p211, %s19, 0
      %s213 = scalar_lea.vmem %s2, %s212
      %p214 = scmp.lt.s32.totalorder %s18, 1
      %s215 = scalar_select %p214, %s18, 1
      %p216 = scmp.lt.s32.totalorder %s19, 0
      %s217 = scalar_select %p216, %s19, 0
      %s218 = smul.addr %s215, 32
      %s219 = sadd.s32 %s217, %s218
      %s220 = smul.addr %s219, 4
      %s221 = scalar_lea.vmem %s3, %s220
      %v223 = vld [vmem:[%s206] sm:$0xff]
      %v224 = vld [vmem:[%s206 + $0x8] sm:$0x11]
      %v225 = vld [vmem:[%s206 + $0x10] sm:$0xff]
      %v226 = vld [vmem:[%s206 + $0x18] sm:$0x11]
      %v227 = vld [vmem:[%s206 + $0x20] sm:$0xff]
      %v228 = vld [vmem:[%s206 + $0x28] sm:$0x11]
      %v229 = vld [vmem:[%s206 + $0x30] sm:$0xff]
      %v230 = vld [vmem:[%s206 + $0x38] sm:$0x11]
      %v231 = vld [vmem:[%s206 + $0x40] sm:$0xff]
      %v232 = vld [vmem:[%s206 + $0x48] sm:$0x11]
      %v233 = vld [vmem:[%s206 + $0x50] sm:$0xff]
      %v234 = vld [vmem:[%s206 + $0x58] sm:$0x11]
      %v235 = vld [vmem:[%s206 + $0x60] sm:$0xff]
      %v236 = vld [vmem:[%s206 + $0x68] sm:$0x11]
      %v237 = vld [vmem:[%s206 + $0x70] sm:$0xff]
      %v238 = vld [vmem:[%s206 + $0x78] sm:$0x11]
      %v239 = vld [vmem:[%s206 + $0x80] sm:$0xff]
      %v240 = vld [vmem:[%s206 + $0x88] sm:$0x11]
      %v241 = vld [vmem:[%s206 + $0x90] sm:$0xff]
      %v242 = vld [vmem:[%s206 + $0x98] sm:$0x11]
      %s243 = scalar_lea.vmem %s206, 160
      %v244 = vld [vmem:[%s243] sm:$0xff]
      %v245 = vld [vmem:[%s243 + $0x8] sm:$0x11]
      %v246 = vld [vmem:[%s243 + $0x10] sm:$0xff]
      %v247 = vld [vmem:[%s243 + $0x18] sm:$0x11]
      %v248 = vld [vmem:[%s243 + $0x20] sm:$0xff]
      %v249 = vld [vmem:[%s243 + $0x28] sm:$0x11]
      %v250 = vld [vmem:[%s243 + $0x30] sm:$0xff]
      %v251 = vld [vmem:[%s243 + $0x38] sm:$0x11]
      %v252 = vld [vmem:[%s243 + $0x40] sm:$0xff]
      %v253 = vld [vmem:[%s243 + $0x48] sm:$0x11]
      %v254 = vld [vmem:[%s243 + $0x50] sm:$0xff]
      %v255 = vld [vmem:[%s243 + $0x58] sm:$0x11]
      %v256 = vld [vmem:[%s243 + $0x60] sm:$0xff]
      %v257 = vld [vmem:[%s243 + $0x68] sm:$0x11]
      %v258 = vld [vmem:[%s243 + $0x70] sm:$0xff]
      %v259 = vld [vmem:[%s243 + $0x78] sm:$0x11]
      %v260 = vld [vmem:[%s243 + $0x80] sm:$0xff]
      %v261 = vld [vmem:[%s243 + $0x88] sm:$0x11]
      %v262 = vld [vmem:[%s243 + $0x90] sm:$0xff]
      %v263 = vld [vmem:[%s243 + $0x98] sm:$0x11]
      %v264 = vmax.bf16 %v223, %v244
      %v265 = vmax.bf16 %v224, %v245
      %v266 = vmax.bf16 %v225, %v246
      %v267 = vmax.bf16 %v226, %v247
      %v268 = vmax.bf16 %v227, %v248
      %v269 = vmax.bf16 %v228, %v249
      %v270 = vmax.bf16 %v229, %v250
      %v271 = vmax.bf16 %v230, %v251
      %v272 = vmax.bf16 %v231, %v252
      %v273 = vmax.bf16 %v232, %v253
      %v274 = vmax.bf16 %v233, %v254
      %v275 = vmax.bf16 %v234, %v255
      %v276 = vmax.bf16 %v235, %v256
      %v277 = vmax.bf16 %v236, %v257
      %v278 = vmax.bf16 %v237, %v258
      %v279 = vmax.bf16 %v238, %v259
      %v280 = vmax.bf16 %v239, %v260
      %v281 = vmax.bf16 %v240, %v261
      %v282 = vmax.bf16 %v241, %v262
      %v283 = vmax.bf16 %v242, %v263
      %s284 = scalar_lea.vmem %s206, 320
      %v285 = vld [vmem:[%s284] sm:$0xff]
      %v286 = vld [vmem:[%s284 + $0x8] sm:$0x11]
      %v287 = vld [vmem:[%s284 + $0x10] sm:$0xff]
      %v288 = vld [vmem:[%s284 + $0x18] sm:$0x11]
      %v289 = vld [vmem:[%s284 + $0x20] sm:$0xff]
      %v290 = vld [vmem:[%s284 + $0x28] sm:$0x11]
      %v291 = vld [vmem:[%s284 + $0x30] sm:$0xff]
      %v292 = vld [vmem:[%s284 + $0x38] sm:$0x11]
      %v293 = vld [vmem:[%s284 + $0x40] sm:$0xff]
      %v294 = vld [vmem:[%s284 + $0x48] sm:$0x11]
      %v295 = vld [vmem:[%s284 + $0x50] sm:$0xff]
      %v296 = vld [vmem:[%s284 + $0x58] sm:$0x11]
      %v297 = vld [vmem:[%s284 + $0x60] sm:$0xff]
      %v298 = vld [vmem:[%s284 + $0x68] sm:$0x11]
      %v299 = vld [vmem:[%s284 + $0x70] sm:$0xff]
      %v300 = vld [vmem:[%s284 + $0x78] sm:$0x11]
      %v301 = vld [vmem:[%s284 + $0x80] sm:$0xff]
      %v302 = vld [vmem:[%s284 + $0x88] sm:$0x11]
      %v303 = vld [vmem:[%s284 + $0x90] sm:$0xff]
      %v304 = vld [vmem:[%s284 + $0x98] sm:$0x11]
      %v305 = vmax.bf16 %v264, %v285
      %v306 = vmax.bf16 %v265, %v286
      %v307 = vmax.bf16 %v266, %v287
      %v308 = vmax.bf16 %v267, %v288
      %v309 = vmax.bf16 %v268, %v289
      %v310 = vmax.bf16 %v269, %v290
      %v311 = vmax.bf16 %v270, %v291
      %v312 = vmax.bf16 %v271, %v292
      %v313 = vmax.bf16 %v272, %v293
      %v314 = vmax.bf16 %v273, %v294
      %v315 = vmax.bf16 %v274, %v295
      %v316 = vmax.bf16 %v275, %v296
      %v317 = vmax.bf16 %v276, %v297
      %v318 = vmax.bf16 %v277, %v298
      %v319 = vmax.bf16 %v278, %v299
      %v320 = vmax.bf16 %v279, %v300
      %v321 = vmax.bf16 %v280, %v301
      %v322 = vmax.bf16 %v281, %v302
      %v323 = vmax.bf16 %v282, %v303
      %v324 = vmax.bf16 %v283, %v304
      %v325 = vmax.bf16 %v305, %v307
      %v326 = vmax.bf16 %v306, %v308
      %v327 = vmax.bf16 %v307, %v309
      %v328 = vmax.bf16 %v308, %v310
      %v329 = vmax.bf16 %v309, %v311
      %v330 = vmax.bf16 %v310, %v312
      %v331 = vmax.bf16 %v311, %v313
      %v332 = vmax.bf16 %v312, %v314
      %v333 = vmax.bf16 %v313, %v315
      %v334 = vmax.bf16 %v314, %v316
      %v335 = vmax.bf16 %v315, %v317
      %v336 = vmax.bf16 %v316, %v318
      %v337 = vmax.bf16 %v317, %v319
      %v338 = vmax.bf16 %v318, %v320
      %v339 = vmax.bf16 %v319, %v321
      %v340 = vmax.bf16 %v320, %v322
      %v341 = vmax.bf16 %v325, %v309
      %v342 = vmax.bf16 %v326, %v310
      %v343 = vmax.bf16 %v327, %v311
      %v344 = vmax.bf16 %v328, %v312
      %v345 = vmax.bf16 %v329, %v313
      %v346 = vmax.bf16 %v330, %v314
      %v347 = vmax.bf16 %v331, %v315
      %v348 = vmax.bf16 %v332, %v316
      %v349 = vmax.bf16 %v333, %v317
      %v350 = vmax.bf16 %v334, %v318
      %v351 = vmax.bf16 %v335, %v319
      %v352 = vmax.bf16 %v336, %v320
      %v353 = vmax.bf16 %v337, %v321
      %v354 = vmax.bf16 %v338, %v322
      %v355 = vmax.bf16 %v339, %v323
      %v356 = vmax.bf16 %v340, %v324
      %vm357 = vsmask.f32 3328
      %vm358 = vsmask.f32 7440
      %vm359 = vmor %vm357, %vm358
      %v361 = vshrl.u32 %v341, 16
      %v363 = vrot.slane %v361, 4
      %v364 = vshll.u32 %v341, 16
      %v366 = vrot.slane %v364, 5
      %v367 = vor.u32 %v363, %v366
      %v368 = vrot.slane %v367, 4
      %v370 = vshll.u32 %v342, 16
      %v372 = vrot.slane %v370, 5
      %v373 = vsel %vm359, %v368, %v372
      %v375 = vshrl.u32 %v343, 16
      %v377 = vrot.slane %v375, 4
      %v378 = vshll.u32 %v343, 16
      %v380 = vrot.slane %v378, 5
      %v381 = vor.u32 %v377, %v380
      %v382 = vrot.slane %v381, 4
      %v384 = vshll.u32 %v344, 16
      %v386 = vrot.slane %v384, 5
      %v387 = vsel %vm359, %v382, %v386
      %v389 = vshrl.u32 %v345, 16
      %v391 = vrot.slane %v389, 4
      %v392 = vshll.u32 %v345, 16
      %v394 = vrot.slane %v392, 5
      %v395 = vor.u32 %v391, %v394
      %v396 = vrot.slane %v395, 4
      %v398 = vshll.u32 %v346, 16
      %v400 = vrot.slane %v398, 5
      %v401 = vsel %vm359, %v396, %v400
      %v403 = vshrl.u32 %v347, 16
      %v405 = vrot.slane %v403, 4
      %v406 = vshll.u32 %v347, 16
      %v408 = vrot.slane %v406, 5
      %v409 = vor.u32 %v405, %v408
      %v410 = vrot.slane %v409, 4
      %v412 = vshll.u32 %v348, 16
      %v414 = vrot.slane %v412, 5
      %v415 = vsel %vm359, %v410, %v414
      %v417 = vshrl.u32 %v349, 16
      %v419 = vrot.slane %v417, 4
      %v420 = vshll.u32 %v349, 16
      %v422 = vrot.slane %v420, 5
      %v423 = vor.u32 %v419, %v422
      %v424 = vrot.slane %v423, 4
      %v426 = vshll.u32 %v350, 16
      %v428 = vrot.slane %v426, 5
      %v429 = vsel %vm359, %v424, %v428
      %v431 = vshrl.u32 %v351, 16
      %v433 = vrot.slane %v431, 4
      %v434 = vshll.u32 %v351, 16
      %v436 = vrot.slane %v434, 5
      %v437 = vor.u32 %v433, %v436
      %v438 = vrot.slane %v437, 4
      %v440 = vshll.u32 %v352, 16
      %v442 = vrot.slane %v440, 5
      %v443 = vsel %vm359, %v438, %v442
      %v445 = vshrl.u32 %v353, 16
      %v447 = vrot.slane %v445, 4
      %v448 = vshll.u32 %v353, 16
      %v450 = vrot.slane %v448, 5
      %v451 = vor.u32 %v447, %v450
      %v452 = vrot.slane %v451, 4
      %v454 = vshll.u32 %v354, 16
      %v456 = vrot.slane %v454, 5
      %v457 = vsel %vm359, %v452, %v456
      %v459 = vshrl.u32 %v355, 16
      %v461 = vrot.slane %v459, 4
      %v462 = vshll.u32 %v355, 16
      %v464 = vrot.slane %v462, 5
      %v465 = vor.u32 %v461, %v464
      %v466 = vrot.slane %v465, 4
      %v468 = vshll.u32 %v356, 16
      %v470 = vrot.slane %v468, 5
      %v471 = vsel %vm359, %v466, %v470
      %v480 = vmax.bf16 %v341, %v373
      %v481 = vmax.bf16 %v343, %v387
      %v482 = vmax.bf16 %v345, %v401
      %v483 = vmax.bf16 %v347, %v415
      %v484 = vmax.bf16 %v349, %v429
      %v485 = vmax.bf16 %v351, %v443
      %v486 = vmax.bf16 %v353, %v457
      %v487 = vmax.bf16 %v355, %v471
      %vm504 = vcmask 1042432
      %vm505 = vcmask 1046532
      %vm506 = vmor %vm504, %vm505
      %v507 = vrot.slane %v341, 5
      %v508 = vrot.slane %v507, 4
      %v509 = vrot.slane %v342, 5
      %v510 = vsel %vm506, %v508, %v509
      %v511 = vrot.slane %v343, 5
      %v512 = vrot.slane %v511, 4
      %v513 = vrot.slane %v344, 5
      %v514 = vsel %vm506, %v512, %v513
      %v515 = vrot.slane %v345, 5
      %v516 = vrot.slane %v515, 4
      %v517 = vrot.slane %v346, 5
      %v518 = vsel %vm506, %v516, %v517
      %v519 = vrot.slane %v347, 5
      %v520 = vrot.slane %v519, 4
      %v521 = vrot.slane %v348, 5
      %v522 = vsel %vm506, %v520, %v521
      %v523 = vrot.slane %v349, 5
      %v524 = vrot.slane %v523, 4
      %v525 = vrot.slane %v350, 5
      %v526 = vsel %vm506, %v524, %v525
      %v527 = vrot.slane %v351, 5
      %v528 = vrot.slane %v527, 4
      %v529 = vrot.slane %v352, 5
      %v530 = vsel %vm506, %v528, %v529
      %v531 = vrot.slane %v353, 5
      %v532 = vrot.slane %v531, 4
      %v533 = vrot.slane %v354, 5
      %v534 = vsel %vm506, %v532, %v533
      %v535 = vrot.slane %v355, 5
      %v536 = vrot.slane %v535, 4
      %v537 = vrot.slane %v356, 5
      %v538 = vsel %vm506, %v536, %v537
      %v547 = vmax.bf16 %v480, %v510
      %v548 = vmax.bf16 %v481, %v514
      %v549 = vmax.bf16 %v482, %v518
      %v550 = vmax.bf16 %v483, %v522
      %v551 = vmax.bf16 %v484, %v526
      %v552 = vmax.bf16 %v485, %v530
      %v553 = vmax.bf16 %v486, %v534
      %v554 = vmax.bf16 %v487, %v538
      %v555 = vld [vmem:[%s210] sm:$0xf]
      %v556 = vld [vmem:[%s210 + $0x4] sm:$0xf]
      %v557 = vld [vmem:[%s210 + $0x8] sm:$0xf]
      %v558 = vld [vmem:[%s210 + $0xc] sm:$0xf]
      %v559 = vld [vmem:[%s210 + $0x10] sm:$0xf]
      %v560 = vld [vmem:[%s210 + $0x14] sm:$0xf]
      %v561 = vld [vmem:[%s210 + $0x18] sm:$0xf]
      %v562 = vld [vmem:[%s210 + $0x1c] sm:$0xf]
      %v563 = vld [vmem:[%s210 + $0x20] sm:$0xf]
      %v564 = vld [vmem:[%s210 + $0x24] sm:$0xf]
      %v565 = vld [vmem:[%s210 + $0x28] sm:$0xf]
      %v566 = vld [vmem:[%s210 + $0x2c] sm:$0xf]
      %v567 = vld [vmem:[%s210 + $0x30] sm:$0xf]
      %v568 = vld [vmem:[%s210 + $0x34] sm:$0xf]
      %v569 = vld [vmem:[%s210 + $0x38] sm:$0xf]
      %v570 = vld [vmem:[%s210 + $0x3c] sm:$0xf]
      %v571 = vld [vmem:[%s210 + $0x40] sm:$0xf]
      %v572 = vld [vmem:[%s210 + $0x44] sm:$0xf]
      %v573 = vld [vmem:[%s210 + $0x48] sm:$0xf]
      %v574 = vld [vmem:[%s210 + $0x4c] sm:$0xf]
      %v575 = vld [vmem:[%s210 + $0x50] sm:$0xf]
      %v576 = vld [vmem:[%s210 + $0x54] sm:$0xf]
      %v577 = vld [vmem:[%s210 + $0x58] sm:$0xf]
      %v578 = vld [vmem:[%s210 + $0x5c] sm:$0xf]
      %v579 = vld [vmem:[%s213] sm:$0x1]
      %v581 = vlaneseq
      %v582 = vshrl.u32 %v581, 7
      %v583 = vsub.s32 0, %v582
      %v584 = vrot.slane %v579, %v583
      %v594 = vunpack.c.l.b16 %v547
      %v595 = vunpack.c.h.b16 %v547
      %v596 = vunpack.c.l.b16 %v548
      %v597 = vunpack.c.h.b16 %v548
      %v598 = vunpack.c.l.b16 %v549
      %v599 = vunpack.c.h.b16 %v549
      %v600 = vunpack.c.l.b16 %v550
      %v601 = vunpack.c.h.b16 %v550
      %v602 = vunpack.c.l.b16 %v551
      %v603 = vunpack.c.h.b16 %v551
      %v604 = vunpack.c.l.b16 %v552
      %v605 = vunpack.c.h.b16 %v552
      %v606 = vunpack.c.l.b16 %v553
      %v607 = vunpack.c.h.b16 %v553
      %v608 = vunpack.c.l.b16 %v554
      %v609 = vunpack.c.h.b16 %v554
      %v610 = vpack.c.b16 %v596, %v594
      %v611 = vpack.c.b16 %v597, %v595
      %v612 = vpack.c.b16 %v600, %v598
      %v613 = vpack.c.b16 %v601, %v599
      %v614 = vpack.c.b16 %v604, %v602
      %v615 = vpack.c.b16 %v605, %v603
      %v616 = vpack.c.b16 %v608, %v606
      %v617 = vpack.c.b16 %v609, %v607
      %v646 = vunpack.c.l.b16 %v555
      %v647 = vunpack.c.l.b16 %v556
      %v648 = vunpack.c.l.b16 %v557
      %v649 = vunpack.c.l.b16 %v558
      %v650 = vunpack.c.l.b16 %v559
      %v651 = vunpack.c.l.b16 %v560
      %v652 = vunpack.c.l.b16 %v561
      %v653 = vunpack.c.l.b16 %v562
      %v654 = vunpack.c.l.b16 %v563
      %v655 = vunpack.c.l.b16 %v564
      %v656 = vunpack.c.l.b16 %v565
      %v657 = vunpack.c.l.b16 %v566
      %v658 = vunpack.c.l.b16 %v567
      %v659 = vunpack.c.l.b16 %v568
      %v660 = vunpack.c.l.b16 %v569
      %v661 = vunpack.c.l.b16 %v570
      %v662 = vunpack.c.l.b16 %v571
      %v663 = vunpack.c.l.b16 %v572
      %v664 = vunpack.c.l.b16 %v573
      %v665 = vunpack.c.l.b16 %v574
      %v666 = vunpack.c.l.b16 %v575
      %v667 = vunpack.c.l.b16 %v576
      %v668 = vunpack.c.l.b16 %v577
      %v669 = vunpack.c.l.b16 %v578
      %v670 = vpack.c.b16 %v647, %v646
      %v671 = vpack.c.b16 %v649, %v648
      %v672 = vpack.c.b16 %v651, %v650
      %v673 = vpack.c.b16 %v653, %v652
      %v674 = vpack.c.b16 %v655, %v654
      %v675 = vpack.c.b16 %v657, %v656
      %v676 = vpack.c.b16 %v659, %v658
      %v677 = vpack.c.b16 %v661, %v660
      %v678 = vpack.c.b16 %v663, %v662
      %v679 = vpack.c.b16 %v665, %v664
      %v680 = vpack.c.b16 %v667, %v666
      %v681 = vpack.c.b16 %v669, %v668
      %vm694 = vcmask 523264
      %v696 = vsel %vm694, %v611, 0
      %v699 = vsel %vm694, %v613, 0
      %v702 = vsel %vm694, %v615, 0
      %v705 = vsel %vm694, %v617, 0
      %707 = vmatprep.subr.bf16.mxu0 0
      %708 = vmatpush1.bf16.msra.mxu0 %v670
      %709 = vmatprep.subr.bf16.mxu0 0
      %710 = vmatpush1.bf16.msra.mxu0 %v671
      %711 = vmatprep.subr.bf16.mxu0 0
      %712 = vmatpush1.bf16.msra.mxu0 %v672
      %713 = vmatprep.subr.bf16.mxu0 0
      %714 = vmatpush1.bf16.msra.mxu0 %v673
      %715 = vmatprep.subr.bf16.mxu0 0
      %716 = vmatpush1.bf16.msra.mxu0 %v674
      %717 = vmatprep.subr.bf16.mxu0 0
      %718 = vmatpush1.bf16.msra.mxu0 %v675
      %719 = vmatprep.subr.bf16.mxu0 0
      %720 = vmatpush1.bf16.msra.mxu0 %v676
      %721 = vmatprep.subr.bf16.mxu0 0
      %722 = vmatpush1.bf16.msra.mxu0 %v677
      %723 = vmatprep.subr.bf16.mxu0 0
      %724 = vmatpush1.bf16.msra.mxu0 %v678
      %725 = vmatprep.subr.bf16.mxu0 0
      %726 = vmatpush1.bf16.msra.mxu0 %v679
      %727 = vmatprep.subr.bf16.mxu0 0
      %728 = vmatpush1.bf16.msra.mxu0 %v680
      %729 = vmatprep.subr.bf16.mxu0 0
      %730 = vmatpush1.bf16.msra.mxu0 %v681
      %731 = vmatprep.subr.bf16.mxu0 0
      %732 = vmatpush1.bf16.msra.mxu0 0
      %733 = vmatprep.subr.bf16.mxu0 0
      %734 = vmatpush1.bf16.msra.mxu0 0
      %735 = vmatprep.subr.bf16.mxu0 0
      %736 = vmatpush1.bf16.msra.mxu0 0
      %737 = vmatprep.subr.bf16.mxu0 0
      %738 = vmatpush1.bf16.msra.mxu0 0
      %739 = vmatprep.mubr.bf16.mxu0 %v696
      %740 = vmatmul.mubr.bf16.gmra.mrb[0].mxu0 %v610
      %v741 = vpop.f32.mrb[0].mxu0
      %v742 = vadd.f32 %v584, %v741
      %v743 = vpop.f32.mrb[0].mxu0
      %v744 = vpop.f32.mrb[0].mxu0
      %v745 = vadd.f32 %v584, %v744
      %v746 = vpop.f32.mrb[0].mxu0
      %747 = vmatprep.mubr.bf16.mxu0 %v699
      %748 = vmatmul.mubr.bf16.gmra.mrb[0].mxu0 %v612
      %v749 = vpop.f32.mrb[0].mxu0
      %v750 = vadd.f32 %v584, %v749
      %v751 = vpop.f32.mrb[0].mxu0
      %v752 = vpop.f32.mrb[0].mxu0
      %v753 = vadd.f32 %v584, %v752
      %v754 = vpop.f32.mrb[0].mxu0
      %755 = vmatprep.mubr.bf16.mxu0 %v702
      %756 = vmatmul.mubr.bf16.gmra.mrb[0].mxu0 %v614
      %v757 = vpop.f32.mrb[0].mxu0
      %v758 = vadd.f32 %v584, %v757
      %v759 = vpop.f32.mrb[0].mxu0
      %v760 = vpop.f32.mrb[0].mxu0
      %v761 = vadd.f32 %v584, %v760
      %v762 = vpop.f32.mrb[0].mxu0
      %763 = vmatprep.mubr.bf16.mxu0 %v705
      %764 = vmatmul.mubr.bf16.gmra.mrb[0].mxu0 %v616
      %v765 = vpop.f32.mrb[0].mxu0
      %v766 = vadd.f32 %v584, %v765
      %v767 = vpop.f32.mrb[0].mxu0
      %v768 = vpop.f32.mrb[0].mxu0
      %v769 = vadd.f32 %v584, %v768
      %v770 = vpop.f32.mrb[0].mxu0
      %771 = vdwg.mxu0
      %v772 = vmax.f32 %v742, 0.0
      %v773 = vmax.f32 %v745, 0.0
      %v774 = vmax.f32 %v750, 0.0
      %v775 = vmax.f32 %v753, 0.0
      %v776 = vmax.f32 %v758, 0.0
      %v777 = vmax.f32 %v761, 0.0
      %v778 = vmax.f32 %v766, 0.0
      %v779 = vmax.f32 %v769, 0.0
      %v780 = vpack.c.bf16 %v773, %v772
      %v781 = vpack.c.bf16 %v775, %v774
      %v782 = vpack.c.bf16 %v777, %v776
      %v783 = vpack.c.bf16 %v779, %v778
      %v788 = vunpack.c.l.b16 %v780
      %v789 = vunpack.c.h.b16 %v780
      %v790 = vunpack.c.l.b16 %v781
      %v791 = vunpack.c.h.b16 %v781
      %v792 = vunpack.c.l.b16 %v782
      %v793 = vunpack.c.h.b16 %v782
      %v794 = vunpack.c.l.b16 %v783
      %v795 = vunpack.c.h.b16 %v783
      %v796 = vpack.c.b16 %v788, %v788
      %v797 = vpack.c.b16 %v789, %v789
      %v798 = vpack.c.b16 %v790, %v790
      %v799 = vpack.c.b16 %v791, %v791
      %v800 = vpack.c.b16 %v792, %v792
      %v801 = vpack.c.b16 %v793, %v793
      %v802 = vpack.c.b16 %v794, %v794
      %v803 = vpack.c.b16 %v795, %v795
      %812 = vst [vmem:[%s221] sm:$0xf] %v796
      %813 = vst [vmem:[%s221 + $0x4] sm:$0xf] %v797
      %814 = vst [vmem:[%s221 + $0x8] sm:$0xf] %v798
      %815 = vst [vmem:[%s221 + $0xc] sm:$0xf] %v799
      %816 = vst [vmem:[%s221 + $0x10] sm:$0xf] %v800
      %817 = vst [vmem:[%s221 + $0x14] sm:$0xf] %v801
      %818 = vst [vmem:[%s221 + $0x18] sm:$0xf] %v802
      %819 = vst [vmem:[%s221 + $0x1c] sm:$0xf] %v803
      %v820 = vld [vmem:[%s243] sm:$0xff]
      %v821 = vld [vmem:[%s243 + $0x8] sm:$0x11]
      %v822 = vld [vmem:[%s243 + $0x10] sm:$0xff]
      %v823 = vld [vmem:[%s243 + $0x18] sm:$0x11]
      %v824 = vld [vmem:[%s243 + $0x20] sm:$0xff]
      %v825 = vld [vmem:[%s243 + $0x28] sm:$0x11]
      %v826 = vld [vmem:[%s243 + $0x30] sm:$0xff]
      %v827 = vld [vmem:[%s243 + $0x38] sm:$0x11]
      %v828 = vld [vmem:[%s243 + $0x40] sm:$0xff]
      %v829 = vld [vmem:[%s243 + $0x48] sm:$0x11]
      %v830 = vld [vmem:[%s243 + $0x50] sm:$0xff]
      %v831 = vld [vmem:[%s243 + $0x58] sm:$0x11]
      %v832 = vld [vmem:[%s243 + $0x60] sm:$0xff]
      %v833 = vld [vmem:[%s243 + $0x68] sm:$0x11]
      %v834 = vld [vmem:[%s243 + $0x70] sm:$0xff]
      %v835 = vld [vmem:[%s243 + $0x78] sm:$0x11]
      %v836 = vld [vmem:[%s243 + $0x80] sm:$0xff]
      %v837 = vld [vmem:[%s243 + $0x88] sm:$0x11]
      %v838 = vld [vmem:[%s243 + $0x90] sm:$0xff]
      %v839 = vld [vmem:[%s243 + $0x98] sm:$0x11]
      %v840 = vld [vmem:[%s284] sm:$0xff]
      %v841 = vld [vmem:[%s284 + $0x8] sm:$0x11]
      %v842 = vld [vmem:[%s284 + $0x10] sm:$0xff]
      %v843 = vld [vmem:[%s284 + $0x18] sm:$0x11]
      %v844 = vld [vmem:[%s284 + $0x20] sm:$0xff]
      %v845 = vld [vmem:[%s284 + $0x28] sm:$0x11]
      %v846 = vld [vmem:[%s284 + $0x30] sm:$0xff]
      %v847 = vld [vmem:[%s284 + $0x38] sm:$0x11]
      %v848 = vld [vmem:[%s284 + $0x40] sm:$0xff]
      %v849 = vld [vmem:[%s284 + $0x48] sm:$0x11]
      %v850 = vld [vmem:[%s284 + $0x50] sm:$0xff]
      %v851 = vld [vmem:[%s284 + $0x58] sm:$0x11]
      %v852 = vld [vmem:[%s284 + $0x60] sm:$0xff]
      %v853 = vld [vmem:[%s284 + $0x68] sm:$0x11]
      %v854 = vld [vmem:[%s284 + $0x70] sm:$0xff]
      %v855 = vld [vmem:[%s284 + $0x78] sm:$0x11]
      %v856 = vld [vmem:[%s284 + $0x80] sm:$0xff]
      %v857 = vld [vmem:[%s284 + $0x88] sm:$0x11]
      %v858 = vld [vmem:[%s284 + $0x90] sm:$0xff]
      %v859 = vld [vmem:[%s284 + $0x98] sm:$0x11]
      %v860 = vmax.bf16 %v820, %v840
      %v861 = vmax.bf16 %v821, %v841
      %v862 = vmax.bf16 %v822, %v842
      %v863 = vmax.bf16 %v823, %v843
      %v864 = vmax.bf16 %v824, %v844
      %v865 = vmax.bf16 %v825, %v845
      %v866 = vmax.bf16 %v826, %v846
      %v867 = vmax.bf16 %v827, %v847
      %v868 = vmax.bf16 %v828, %v848
      %v869 = vmax.bf16 %v829, %v849
      %v870 = vmax.bf16 %v830, %v850
      %v871 = vmax.bf16 %v831, %v851
      %v872 = vmax.bf16 %v832, %v852
      %v873 = vmax.bf16 %v833, %v853
      %v874 = vmax.bf16 %v834, %v854
      %v875 = vmax.bf16 %v835, %v855
      %v876 = vmax.bf16 %v836, %v856
      %v877 = vmax.bf16 %v837, %v857
      %v878 = vmax.bf16 %v838, %v858
      %v879 = vmax.bf16 %v839, %v859
      %s880 = scalar_lea.vmem %s206, 480
      %v881 = vld [vmem:[%s880] sm:$0xff]
      %v882 = vld [vmem:[%s880 + $0x8] sm:$0x11]
      %v883 = vld [vmem:[%s880 + $0x10] sm:$0xff]
      %v884 = vld [vmem:[%s880 + $0x18] sm:$0x11]
      %v885 = vld [vmem:[%s880 + $0x20] sm:$0xff]
      %v886 = vld [vmem:[%s880 + $0x28] sm:$0x11]
      %v887 = vld [vmem:[%s880 + $0x30] sm:$0xff]
      %v888 = vld [vmem:[%s880 + $0x38] sm:$0x11]
      %v889 = vld [vmem:[%s880 + $0x40] sm:$0xff]
      %v890 = vld [vmem:[%s880 + $0x48] sm:$0x11]
      %v891 = vld [vmem:[%s880 + $0x50] sm:$0xff]
      %v892 = vld [vmem:[%s880 + $0x58] sm:$0x11]
      %v893 = vld [vmem:[%s880 + $0x60] sm:$0xff]
      %v894 = vld [vmem:[%s880 + $0x68] sm:$0x11]
      %v895 = vld [vmem:[%s880 + $0x70] sm:$0xff]
      %v896 = vld [vmem:[%s880 + $0x78] sm:$0x11]
      %v897 = vld [vmem:[%s880 + $0x80] sm:$0xff]
      %v898 = vld [vmem:[%s880 + $0x88] sm:$0x11]
      %v899 = vld [vmem:[%s880 + $0x90] sm:$0xff]
      %v900 = vld [vmem:[%s880 + $0x98] sm:$0x11]
      %v901 = vmax.bf16 %v860, %v881
      %v902 = vmax.bf16 %v861, %v882
      %v903 = vmax.bf16 %v862, %v883
      %v904 = vmax.bf16 %v863, %v884
      %v905 = vmax.bf16 %v864, %v885
      %v906 = vmax.bf16 %v865, %v886
      %v907 = vmax.bf16 %v866, %v887
      %v908 = vmax.bf16 %v867, %v888
      %v909 = vmax.bf16 %v868, %v889
      %v910 = vmax.bf16 %v869, %v890
      %v911 = vmax.bf16 %v870, %v891
      %v912 = vmax.bf16 %v871, %v892
      %v913 = vmax.bf16 %v872, %v893
      %v914 = vmax.bf16 %v873, %v894
      %v915 = vmax.bf16 %v874, %v895
      %v916 = vmax.bf16 %v875, %v896
      %v917 = vmax.bf16 %v876, %v897
      %v918 = vmax.bf16 %v877, %v898
      %v919 = vmax.bf16 %v878, %v899
      %v920 = vmax.bf16 %v879, %v900
      %v921 = vmax.bf16 %v901, %v903
      %v922 = vmax.bf16 %v902, %v904
      %v923 = vmax.bf16 %v903, %v905
      %v924 = vmax.bf16 %v904, %v906
      %v925 = vmax.bf16 %v905, %v907
      %v926 = vmax.bf16 %v906, %v908
      %v927 = vmax.bf16 %v907, %v909
      %v928 = vmax.bf16 %v908, %v910
      %v929 = vmax.bf16 %v909, %v911
      %v930 = vmax.bf16 %v910, %v912
      %v931 = vmax.bf16 %v911, %v913
      %v932 = vmax.bf16 %v912, %v914
      %v933 = vmax.bf16 %v913, %v915
      %v934 = vmax.bf16 %v914, %v916
      %v935 = vmax.bf16 %v915, %v917
      %v936 = vmax.bf16 %v916, %v918
      %v937 = vmax.bf16 %v921, %v905
      %v938 = vmax.bf16 %v922, %v906
      %v939 = vmax.bf16 %v923, %v907
      %v940 = vmax.bf16 %v924, %v908
      %v941 = vmax.bf16 %v925, %v909
      %v942 = vmax.bf16 %v926, %v910
      %v943 = vmax.bf16 %v927, %v911
      %v944 = vmax.bf16 %v928, %v912
      %v945 = vmax.bf16 %v929, %v913
      %v946 = vmax.bf16 %v930, %v914
      %v947 = vmax.bf16 %v931, %v915
      %v948 = vmax.bf16 %v932, %v916
      %v949 = vmax.bf16 %v933, %v917
      %v950 = vmax.bf16 %v934, %v918
      %v951 = vmax.bf16 %v935, %v919
      %v952 = vmax.bf16 %v936, %v920
      %v954 = vshrl.u32 %v937, 16
      %v956 = vrot.slane %v954, 4
      %v957 = vshll.u32 %v937, 16
      %v959 = vrot.slane %v957, 5
      %v960 = vor.u32 %v956, %v959
      %v961 = vrot.slane %v960, 4
      %v963 = vshll.u32 %v938, 16
      %v965 = vrot.slane %v963, 5
      %v966 = vsel %vm359, %v961, %v965
      %v968 = vshrl.u32 %v939, 16
      %v970 = vrot.slane %v968, 4
      %v971 = vshll.u32 %v939, 16
      %v973 = vrot.slane %v971, 5
      %v974 = vor.u32 %v970, %v973
      %v975 = vrot.slane %v974, 4
      %v977 = vshll.u32 %v940, 16
      %v979 = vrot.slane %v977, 5
      %v980 = vsel %vm359, %v975, %v979
      %v982 = vshrl.u32 %v941, 16
      %v984 = vrot.slane %v982, 4
      %v985 = vshll.u32 %v941, 16
      %v987 = vrot.slane %v985, 5
      %v988 = vor.u32 %v984, %v987
      %v989 = vrot.slane %v988, 4
      %v991 = vshll.u32 %v942, 16
      %v993 = vrot.slane %v991, 5
      %v994 = vsel %vm359, %v989, %v993
      %v996 = vshrl.u32 %v943, 16
      %v998 = vrot.slane %v996, 4
      %v999 = vshll.u32 %v943, 16
      %v1001 = vrot.slane %v999, 5
      %v1002 = vor.u32 %v998, %v1001
      %v1003 = vrot.slane %v1002, 4
      %v1005 = vshll.u32 %v944, 16
      %v1007 = vrot.slane %v1005, 5
      %v1008 = vsel %vm359, %v1003, %v1007
      %v1010 = vshrl.u32 %v945, 16
      %v1012 = vrot.slane %v1010, 4
      %v1013 = vshll.u32 %v945, 16
      %v1015 = vrot.slane %v1013, 5
      %v1016 = vor.u32 %v1012, %v1015
      %v1017 = vrot.slane %v1016, 4
      %v1019 = vshll.u32 %v946, 16
      %v1021 = vrot.slane %v1019, 5
      %v1022 = vsel %vm359, %v1017, %v1021
      %v1024 = vshrl.u32 %v947, 16
      %v1026 = vrot.slane %v1024, 4
      %v1027 = vshll.u32 %v947, 16
      %v1029 = vrot.slane %v1027, 5
      %v1030 = vor.u32 %v1026, %v1029
      %v1031 = vrot.slane %v1030, 4
      %v1033 = vshll.u32 %v948, 16
      %v1035 = vrot.slane %v1033, 5
      %v1036 = vsel %vm359, %v1031, %v1035
      %v1038 = vshrl.u32 %v949, 16
      %v1040 = vrot.slane %v1038, 4
      %v1041 = vshll.u32 %v949, 16
      %v1043 = vrot.slane %v1041, 5
      %v1044 = vor.u32 %v1040, %v1043
      %v1045 = vrot.slane %v1044, 4
      %v1047 = vshll.u32 %v950, 16
      %v1049 = vrot.slane %v1047, 5
      %v1050 = vsel %vm359, %v1045, %v1049
      %v1052 = vshrl.u32 %v951, 16
      %v1054 = vrot.slane %v1052, 4
      %v1055 = vshll.u32 %v951, 16
      %v1057 = vrot.slane %v1055, 5
      %v1058 = vor.u32 %v1054, %v1057
      %v1059 = vrot.slane %v1058, 4
      %v1061 = vshll.u32 %v952, 16
      %v1063 = vrot.slane %v1061, 5
      %v1064 = vsel %vm359, %v1059, %v1063
      %v1073 = vmax.bf16 %v937, %v966
      %v1074 = vmax.bf16 %v939, %v980
      %v1075 = vmax.bf16 %v941, %v994
      %v1076 = vmax.bf16 %v943, %v1008
      %v1077 = vmax.bf16 %v945, %v1022
      %v1078 = vmax.bf16 %v947, %v1036
      %v1079 = vmax.bf16 %v949, %v1050
      %v1080 = vmax.bf16 %v951, %v1064
      %v1097 = vrot.slane %v937, 5
      %v1098 = vrot.slane %v1097, 4
      %v1099 = vrot.slane %v938, 5
      %v1100 = vsel %vm506, %v1098, %v1099
      %v1101 = vrot.slane %v939, 5
      %v1102 = vrot.slane %v1101, 4
      %v1103 = vrot.slane %v940, 5
      %v1104 = vsel %vm506, %v1102, %v1103
      %v1105 = vrot.slane %v941, 5
      %v1106 = vrot.slane %v1105, 4
      %v1107 = vrot.slane %v942, 5
      %v1108 = vsel %vm506, %v1106, %v1107
      %v1109 = vrot.slane %v943, 5
      %v1110 = vrot.slane %v1109, 4
      %v1111 = vrot.slane %v944, 5
      %v1112 = vsel %vm506, %v1110, %v1111
      %v1113 = vrot.slane %v945, 5
      %v1114 = vrot.slane %v1113, 4
      %v1115 = vrot.slane %v946, 5
      %v1116 = vsel %vm506, %v1114, %v1115
      %v1117 = vrot.slane %v947, 5
      %v1118 = vrot.slane %v1117, 4
      %v1119 = vrot.slane %v948, 5
      %v1120 = vsel %vm506, %v1118, %v1119
      %v1121 = vrot.slane %v949, 5
      %v1122 = vrot.slane %v1121, 4
      %v1123 = vrot.slane %v950, 5
      %v1124 = vsel %vm506, %v1122, %v1123
      %v1125 = vrot.slane %v951, 5
      %v1126 = vrot.slane %v1125, 4
      %v1127 = vrot.slane %v952, 5
      %v1128 = vsel %vm506, %v1126, %v1127
      %v1137 = vmax.bf16 %v1073, %v1100
      %v1138 = vmax.bf16 %v1074, %v1104
      %v1139 = vmax.bf16 %v1075, %v1108
      %v1140 = vmax.bf16 %v1076, %v1112
      %v1141 = vmax.bf16 %v1077, %v1116
      %v1142 = vmax.bf16 %v1078, %v1120
      %v1143 = vmax.bf16 %v1079, %v1124
      %v1144 = vmax.bf16 %v1080, %v1128
      %v1145 = vld [vmem:[%s210] sm:$0xf]
      %v1146 = vld [vmem:[%s210 + $0x4] sm:$0xf]
      %v1147 = vld [vmem:[%s210 + $0x8] sm:$0xf]
      %v1148 = vld [vmem:[%s210 + $0xc] sm:$0xf]
      %v1149 = vld [vmem:[%s210 + $0x10] sm:$0xf]
      %v1150 = vld [vmem:[%s210 + $0x14] sm:$0xf]
      %v1151 = vld [vmem:[%s210 + $0x18] sm:$0xf]
      %v1152 = vld [vmem:[%s210 + $0x1c] sm:$0xf]
      %v1153 = vld [vmem:[%s210 + $0x20] sm:$0xf]
      %v1154 = vld [vmem:[%s210 + $0x24] sm:$0xf]
      %v1155 = vld [vmem:[%s210 + $0x28] sm:$0xf]
      %v1156 = vld [vmem:[%s210 + $0x2c] sm:$0xf]
      %v1157 = vld [vmem:[%s210 + $0x30] sm:$0xf]
      %v1158 = vld [vmem:[%s210 + $0x34] sm:$0xf]
      %v1159 = vld [vmem:[%s210 + $0x38] sm:$0xf]
      %v1160 = vld [vmem:[%s210 + $0x3c] sm:$0xf]
      %v1161 = vld [vmem:[%s210 + $0x40] sm:$0xf]
      %v1162 = vld [vmem:[%s210 + $0x44] sm:$0xf]
      %v1163 = vld [vmem:[%s210 + $0x48] sm:$0xf]
      %v1164 = vld [vmem:[%s210 + $0x4c] sm:$0xf]
      %v1165 = vld [vmem:[%s210 + $0x50] sm:$0xf]
      %v1166 = vld [vmem:[%s210 + $0x54] sm:$0xf]
      %v1167 = vld [vmem:[%s210 + $0x58] sm:$0xf]
      %v1168 = vld [vmem:[%s210 + $0x5c] sm:$0xf]
      %v1169 = vld [vmem:[%s213] sm:$0x1]
      %v1171 = vlaneseq
      %v1172 = vshrl.u32 %v1171, 7
      %v1173 = vsub.s32 0, %v1172
      %v1174 = vrot.slane %v1169, %v1173
      %v1184 = vunpack.c.l.b16 %v1137
      %v1185 = vunpack.c.h.b16 %v1137
      %v1186 = vunpack.c.l.b16 %v1138
      %v1187 = vunpack.c.h.b16 %v1138
      %v1188 = vunpack.c.l.b16 %v1139
      %v1189 = vunpack.c.h.b16 %v1139
      %v1190 = vunpack.c.l.b16 %v1140
      %v1191 = vunpack.c.h.b16 %v1140
      %v1192 = vunpack.c.l.b16 %v1141
      %v1193 = vunpack.c.h.b16 %v1141
      %v1194 = vunpack.c.l.b16 %v1142
      %v1195 = vunpack.c.h.b16 %v1142
      %v1196 = vunpack.c.l.b16 %v1143
      %v1197 = vunpack.c.h.b16 %v1143
      %v1198 = vunpack.c.l.b16 %v1144
      %v1199 = vunpack.c.h.b16 %v1144
      %v1200 = vpack.c.b16 %v1186, %v1184
      %v1201 = vpack.c.b16 %v1187, %v1185
      %v1202 = vpack.c.b16 %v1190, %v1188
      %v1203 = vpack.c.b16 %v1191, %v1189
      %v1204 = vpack.c.b16 %v1194, %v1192
      %v1205 = vpack.c.b16 %v1195, %v1193
      %v1206 = vpack.c.b16 %v1198, %v1196
      %v1207 = vpack.c.b16 %v1199, %v1197
      %v1236 = vunpack.c.l.b16 %v1145
      %v1237 = vunpack.c.l.b16 %v1146
      %v1238 = vunpack.c.l.b16 %v1147
      %v1239 = vunpack.c.l.b16 %v1148
      %v1240 = vunpack.c.l.b16 %v1149
      %v1241 = vunpack.c.l.b16 %v1150
      %v1242 = vunpack.c.l.b16 %v1151
      %v1243 = vunpack.c.l.b16 %v1152
      %v1244 = vunpack.c.l.b16 %v1153
      %v1245 = vunpack.c.l.b16 %v1154
      %v1246 = vunpack.c.l.b16 %v1155
      %v1247 = vunpack.c.l.b16 %v1156
      %v1248 = vunpack.c.l.b16 %v1157
      %v1249 = vunpack.c.l.b16 %v1158
      %v1250 = vunpack.c.l.b16 %v1159
      %v1251 = vunpack.c.l.b16 %v1160
      %v1252 = vunpack.c.l.b16 %v1161
      %v1253 = vunpack.c.l.b16 %v1162
      %v1254 = vunpack.c.l.b16 %v1163
      %v1255 = vunpack.c.l.b16 %v1164
      %v1256 = vunpack.c.l.b16 %v1165
      %v1257 = vunpack.c.l.b16 %v1166
      %v1258 = vunpack.c.l.b16 %v1167
      %v1259 = vunpack.c.l.b16 %v1168
      %v1260 = vpack.c.b16 %v1237, %v1236
      %v1261 = vpack.c.b16 %v1239, %v1238
      %v1262 = vpack.c.b16 %v1241, %v1240
      %v1263 = vpack.c.b16 %v1243, %v1242
      %v1264 = vpack.c.b16 %v1245, %v1244
      %v1265 = vpack.c.b16 %v1247, %v1246
      %v1266 = vpack.c.b16 %v1249, %v1248
      %v1267 = vpack.c.b16 %v1251, %v1250
      %v1268 = vpack.c.b16 %v1253, %v1252
      %v1269 = vpack.c.b16 %v1255, %v1254
      %v1270 = vpack.c.b16 %v1257, %v1256
      %v1271 = vpack.c.b16 %v1259, %v1258
      %v1285 = vsel %vm694, %v1201, 0
      %v1288 = vsel %vm694, %v1203, 0
      %v1291 = vsel %vm694, %v1205, 0
      %v1294 = vsel %vm694, %v1207, 0
      %1296 = vmatprep.subr.bf16.mxu0 0
      %1297 = vmatpush1.bf16.msra.mxu0 %v1260
      %1298 = vmatprep.subr.bf16.mxu0 0
      %1299 = vmatpush1.bf16.msra.mxu0 %v1261
      %1300 = vmatprep.subr.bf16.mxu0 0
      %1301 = vmatpush1.bf16.msra.mxu0 %v1262
      %1302 = vmatprep.subr.bf16.mxu0 0
      %1303 = vmatpush1.bf16.msra.mxu0 %v1263
      %1304 = vmatprep.subr.bf16.mxu0 0
      %1305 = vmatpush1.bf16.msra.mxu0 %v1264
      %1306 = vmatprep.subr.bf16.mxu0 0
      %1307 = vmatpush1.bf16.msra.mxu0 %v1265
      %1308 = vmatprep.subr.bf16.mxu0 0
      %1309 = vmatpush1.bf16.msra.mxu0 %v1266
      %1310 = vmatprep.subr.bf16.mxu0 0
      %1311 = vmatpush1.bf16.msra.mxu0 %v1267
      %1312 = vmatprep.subr.bf16.mxu0 0
      %1313 = vmatpush1.bf16.msra.mxu0 %v1268
      %1314 = vmatprep.subr.bf16.mxu0 0
      %1315 = vmatpush1.bf16.msra.mxu0 %v1269
      %1316 = vmatprep.subr.bf16.mxu0 0
      %1317 = vmatpush1.bf16.msra.mxu0 %v1270
      %1318 = vmatprep.subr.bf16.mxu0 0
      %1319 = vmatpush1.bf16.msra.mxu0 %v1271
      %1320 = vmatprep.subr.bf16.mxu0 0
      %1321 = vmatpush1.bf16.msra.mxu0 0
      %1322 = vmatprep.subr.bf16.mxu0 0
      %1323 = vmatpush1.bf16.msra.mxu0 0
      %1324 = vmatprep.subr.bf16.mxu0 0
      %1325 = vmatpush1.bf16.msra.mxu0 0
      %1326 = vmatprep.subr.bf16.mxu0 0
      %1327 = vmatpush1.bf16.msra.mxu0 0
      %1328 = vmatprep.mubr.bf16.mxu0 %v1285
      %1329 = vmatmul.mubr.bf16.gmra.mrb[0].mxu0 %v1200
      %v1330 = vpop.f32.mrb[0].mxu0
      %v1331 = vadd.f32 %v1174, %v1330
      %v1332 = vpop.f32.mrb[0].mxu0
      %v1333 = vpop.f32.mrb[0].mxu0
      %v1334 = vadd.f32 %v1174, %v1333
      %v1335 = vpop.f32.mrb[0].mxu0
      %1336 = vmatprep.mubr.bf16.mxu0 %v1288
      %1337 = vmatmul.mubr.bf16.gmra.mrb[0].mxu0 %v1202
      %v1338 = vpop.f32.mrb[0].mxu0
      %v1339 = vadd.f32 %v1174, %v1338
      %v1340 = vpop.f32.mrb[0].mxu0
      %v1341 = vpop.f32.mrb[0].mxu0
      %v1342 = vadd.f32 %v1174, %v1341
      %v1343 = vpop.f32.mrb[0].mxu0
      %1344 = vmatprep.mubr.bf16.mxu0 %v1291
      %1345 = vmatmul.mubr.bf16.gmra.mrb[0].mxu0 %v1204
      %v1346 = vpop.f32.mrb[0].mxu0
      %v1347 = vadd.f32 %v1174, %v1346
      %v1348 = vpop.f32.mrb[0].mxu0
      %v1349 = vpop.f32.mrb[0].mxu0
      %v1350 = vadd.f32 %v1174, %v1349
      %v1351 = vpop.f32.mrb[0].mxu0
      %1352 = vmatprep.mubr.bf16.mxu0 %v1294
      %1353 = vmatmul.mubr.bf16.gmra.mrb[0].mxu0 %v1206
      %v1354 = vpop.f32.mrb[0].mxu0
      %v1355 = vadd.f32 %v1174, %v1354
      %v1356 = vpop.f32.mrb[0].mxu0
      %v1357 = vpop.f32.mrb[0].mxu0
      %v1358 = vadd.f32 %v1174, %v1357
      %v1359 = vpop.f32.mrb[0].mxu0
      %1360 = vdwg.mxu0
      %v1361 = vmax.f32 %v1331, 0.0
      %v1362 = vmax.f32 %v1334, 0.0
      %v1363 = vmax.f32 %v1339, 0.0
      %v1364 = vmax.f32 %v1342, 0.0
      %v1365 = vmax.f32 %v1347, 0.0
      %v1366 = vmax.f32 %v1350, 0.0
      %v1367 = vmax.f32 %v1355, 0.0
      %v1368 = vmax.f32 %v1358, 0.0
      %v1369 = vpack.c.bf16 %v1362, %v1361
      %v1370 = vpack.c.bf16 %v1364, %v1363
      %v1371 = vpack.c.bf16 %v1366, %v1365
      %v1372 = vpack.c.bf16 %v1368, %v1367
      %v1377 = vunpack.c.l.b16 %v1369
      %v1378 = vunpack.c.h.b16 %v1369
      %v1379 = vunpack.c.l.b16 %v1370
      %v1380 = vunpack.c.h.b16 %v1370
      %v1381 = vunpack.c.l.b16 %v1371
      %v1382 = vunpack.c.h.b16 %v1371
      %v1383 = vunpack.c.l.b16 %v1372
      %v1384 = vunpack.c.h.b16 %v1372
      %v1385 = vpack.c.b16 %v1377, %v1377
      %v1386 = vpack.c.b16 %v1378, %v1378
      %v1387 = vpack.c.b16 %v1379, %v1379
      %v1388 = vpack.c.b16 %v1380, %v1380
      %v1389 = vpack.c.b16 %v1381, %v1381
      %v1390 = vpack.c.b16 %v1382, %v1382
      %v1391 = vpack.c.b16 %v1383, %v1383
      %v1392 = vpack.c.b16 %v1384, %v1384
      %s1401 = scalar_lea.vmem %s221, 32
      %1402 = vst [vmem:[%s1401] sm:$0xf] %v1385
      %1403 = vst [vmem:[%s1401 + $0x4] sm:$0xf] %v1386
      %1404 = vst [vmem:[%s1401 + $0x8] sm:$0xf] %v1387
      %1405 = vst [vmem:[%s1401 + $0xc] sm:$0xf] %v1388
      %1406 = vst [vmem:[%s1401 + $0x10] sm:$0xf] %v1389
      %1407 = vst [vmem:[%s1401 + $0x14] sm:$0xf] %v1390
      %1408 = vst [vmem:[%s1401 + $0x18] sm:$0xf] %v1391
      %1409 = vst [vmem:[%s1401 + $0x1c] sm:$0xf] %v1392
      %v1410 = vld [vmem:[%s284] sm:$0xff]
      %v1411 = vld [vmem:[%s284 + $0x8] sm:$0x11]
      %v1412 = vld [vmem:[%s284 + $0x10] sm:$0xff]
      %v1413 = vld [vmem:[%s284 + $0x18] sm:$0x11]
      %v1414 = vld [vmem:[%s284 + $0x20] sm:$0xff]
      %v1415 = vld [vmem:[%s284 + $0x28] sm:$0x11]
      %v1416 = vld [vmem:[%s284 + $0x30] sm:$0xff]
      %v1417 = vld [vmem:[%s284 + $0x38] sm:$0x11]
      %v1418 = vld [vmem:[%s284 + $0x40] sm:$0xff]
      %v1419 = vld [vmem:[%s284 + $0x48] sm:$0x11]
      %v1420 = vld [vmem:[%s284 + $0x50] sm:$0xff]
      %v1421 = vld [vmem:[%s284 + $0x58] sm:$0x11]
      %v1422 = vld [vmem:[%s284 + $0x60] sm:$0xff]
      %v1423 = vld [vmem:[%s284 + $0x68] sm:$0x11]
      %v1424 = vld [vmem:[%s284 + $0x70] sm:$0xff]
      %v1425 = vld [vmem:[%s284 + $0x78] sm:$0x11]
      %v1426 = vld [vmem:[%s284 + $0x80] sm:$0xff]
      %v1427 = vld [vmem:[%s284 + $0x88] sm:$0x11]
      %v1428 = vld [vmem:[%s284 + $0x90] sm:$0xff]
      %v1429 = vld [vmem:[%s284 + $0x98] sm:$0x11]
      %v1430 = vld [vmem:[%s880] sm:$0xff]
      %v1431 = vld [vmem:[%s880 + $0x8] sm:$0x11]
      %v1432 = vld [vmem:[%s880 + $0x10] sm:$0xff]
      %v1433 = vld [vmem:[%s880 + $0x18] sm:$0x11]
      %v1434 = vld [vmem:[%s880 + $0x20] sm:$0xff]
      %v1435 = vld [vmem:[%s880 + $0x28] sm:$0x11]
      %v1436 = vld [vmem:[%s880 + $0x30] sm:$0xff]
      %v1437 = vld [vmem:[%s880 + $0x38] sm:$0x11]
      %v1438 = vld [vmem:[%s880 + $0x40] sm:$0xff]
      %v1439 = vld [vmem:[%s880 + $0x48] sm:$0x11]
      %v1440 = vld [vmem:[%s880 + $0x50] sm:$0xff]
      %v1441 = vld [vmem:[%s880 + $0x58] sm:$0x11]
      %v1442 = vld [vmem:[%s880 + $0x60] sm:$0xff]
      %v1443 = vld [vmem:[%s880 + $0x68] sm:$0x11]
      %v1444 = vld [vmem:[%s880 + $0x70] sm:$0xff]
      %v1445 = vld [vmem:[%s880 + $0x78] sm:$0x11]
      %v1446 = vld [vmem:[%s880 + $0x80] sm:$0xff]
      %v1447 = vld [vmem:[%s880 + $0x88] sm:$0x11]
      %v1448 = vld [vmem:[%s880 + $0x90] sm:$0xff]
      %v1449 = vld [vmem:[%s880 + $0x98] sm:$0x11]
      %v1450 = vmax.bf16 %v1410, %v1430
      %v1451 = vmax.bf16 %v1411, %v1431
      %v1452 = vmax.bf16 %v1412, %v1432
      %v1453 = vmax.bf16 %v1413, %v1433
      %v1454 = vmax.bf16 %v1414, %v1434
      %v1455 = vmax.bf16 %v1415, %v1435
      %v1456 = vmax.bf16 %v1416, %v1436
      %v1457 = vmax.bf16 %v1417, %v1437
      %v1458 = vmax.bf16 %v1418, %v1438
      %v1459 = vmax.bf16 %v1419, %v1439
      %v1460 = vmax.bf16 %v1420, %v1440
      %v1461 = vmax.bf16 %v1421, %v1441
      %v1462 = vmax.bf16 %v1422, %v1442
      %v1463 = vmax.bf16 %v1423, %v1443
      %v1464 = vmax.bf16 %v1424, %v1444
      %v1465 = vmax.bf16 %v1425, %v1445
      %v1466 = vmax.bf16 %v1426, %v1446
      %v1467 = vmax.bf16 %v1427, %v1447
      %v1468 = vmax.bf16 %v1428, %v1448
      %v1469 = vmax.bf16 %v1429, %v1449
      %s1470 = scalar_lea.vmem %s206, 640
      %v1471 = vld [vmem:[%s1470] sm:$0xff]
      %v1472 = vld [vmem:[%s1470 + $0x8] sm:$0x11]
      %v1473 = vld [vmem:[%s1470 + $0x10] sm:$0xff]
      %v1474 = vld [vmem:[%s1470 + $0x18] sm:$0x11]
      %v1475 = vld [vmem:[%s1470 + $0x20] sm:$0xff]
      %v1476 = vld [vmem:[%s1470 + $0x28] sm:$0x11]
      %v1477 = vld [vmem:[%s1470 + $0x30] sm:$0xff]
      %v1478 = vld [vmem:[%s1470 + $0x38] sm:$0x11]
      %v1479 = vld [vmem:[%s1470 + $0x40] sm:$0xff]
      %v1480 = vld [vmem:[%s1470 + $0x48] sm:$0x11]
      %v1481 = vld [vmem:[%s1470 + $0x50] sm:$0xff]
      %v1482 = vld [vmem:[%s1470 + $0x58] sm:$0x11]
      %v1483 = vld [vmem:[%s1470 + $0x60] sm:$0xff]
      %v1484 = vld [vmem:[%s1470 + $0x68] sm:$0x11]
      %v1485 = vld [vmem:[%s1470 + $0x70] sm:$0xff]
      %v1486 = vld [vmem:[%s1470 + $0x78] sm:$0x11]
      %v1487 = vld [vmem:[%s1470 + $0x80] sm:$0xff]
      %v1488 = vld [vmem:[%s1470 + $0x88] sm:$0x11]
      %v1489 = vld [vmem:[%s1470 + $0x90] sm:$0xff]
      %v1490 = vld [vmem:[%s1470 + $0x98] sm:$0x11]
      %v1491 = vmax.bf16 %v1450, %v1471
      %v1492 = vmax.bf16 %v1451, %v1472
      %v1493 = vmax.bf16 %v1452, %v1473
      %v1494 = vmax.bf16 %v1453, %v1474
      %v1495 = vmax.bf16 %v1454, %v1475
      %v1496 = vmax.bf16 %v1455, %v1476
      %v1497 = vmax.bf16 %v1456, %v1477
      %v1498 = vmax.bf16 %v1457, %v1478
      %v1499 = vmax.bf16 %v1458, %v1479
      %v1500 = vmax.bf16 %v1459, %v1480
      %v1501 = vmax.bf16 %v1460, %v1481
      %v1502 = vmax.bf16 %v1461, %v1482
      %v1503 = vmax.bf16 %v1462, %v1483
      %v1504 = vmax.bf16 %v1463, %v1484
      %v1505 = vmax.bf16 %v1464, %v1485
      %v1506 = vmax.bf16 %v1465, %v1486
      %v1507 = vmax.bf16 %v1466, %v1487
      %v1508 = vmax.bf16 %v1467, %v1488
      %v1509 = vmax.bf16 %v1468, %v1489
      %v1510 = vmax.bf16 %v1469, %v1490
      %v1511 = vmax.bf16 %v1491, %v1493
      %v1512 = vmax.bf16 %v1492, %v1494
      %v1513 = vmax.bf16 %v1493, %v1495
      %v1514 = vmax.bf16 %v1494, %v1496
      %v1515 = vmax.bf16 %v1495, %v1497
      %v1516 = vmax.bf16 %v1496, %v1498
      %v1517 = vmax.bf16 %v1497, %v1499
      %v1518 = vmax.bf16 %v1498, %v1500
      %v1519 = vmax.bf16 %v1499, %v1501
      %v1520 = vmax.bf16 %v1500, %v1502
      %v1521 = vmax.bf16 %v1501, %v1503
      %v1522 = vmax.bf16 %v1502, %v1504
      %v1523 = vmax.bf16 %v1503, %v1505
      %v1524 = vmax.bf16 %v1504, %v1506
      %v1525 = vmax.bf16 %v1505, %v1507
      %v1526 = vmax.bf16 %v1506, %v1508
      %v1527 = vmax.bf16 %v1511, %v1495
      %v1528 = vmax.bf16 %v1512, %v1496
      %v1529 = vmax.bf16 %v1513, %v1497
      %v1530 = vmax.bf16 %v1514, %v1498
      %v1531 = vmax.bf16 %v1515, %v1499
      %v1532 = vmax.bf16 %v1516, %v1500
      %v1533 = vmax.bf16 %v1517, %v1501
      %v1534 = vmax.bf16 %v1518, %v1502
      %v1535 = vmax.bf16 %v1519, %v1503
      %v1536 = vmax.bf16 %v1520, %v1504
      %v1537 = vmax.bf16 %v1521, %v1505
      %v1538 = vmax.bf16 %v1522, %v1506
      %v1539 = vmax.bf16 %v1523, %v1507
      %v1540 = vmax.bf16 %v1524, %v1508
      %v1541 = vmax.bf16 %v1525, %v1509
      %v1542 = vmax.bf16 %v1526, %v1510
      %v1544 = vshrl.u32 %v1527, 16
      %v1546 = vrot.slane %v1544, 4
      %v1547 = vshll.u32 %v1527, 16
      %v1549 = vrot.slane %v1547, 5
      %v1550 = vor.u32 %v1546, %v1549
      %v1551 = vrot.slane %v1550, 4
      %v1553 = vshll.u32 %v1528, 16
      %v1555 = vrot.slane %v1553, 5
      %v1556 = vsel %vm359, %v1551, %v1555
      %v1558 = vshrl.u32 %v1529, 16
      %v1560 = vrot.slane %v1558, 4
      %v1561 = vshll.u32 %v1529, 16
      %v1563 = vrot.slane %v1561, 5
      %v1564 = vor.u32 %v1560, %v1563
      %v1565 = vrot.slane %v1564, 4
      %v1567 = vshll.u32 %v1530, 16
      %v1569 = vrot.slane %v1567, 5
      %v1570 = vsel %vm359, %v1565, %v1569
      %v1572 = vshrl.u32 %v1531, 16
      %v1574 = vrot.slane %v1572, 4
      %v1575 = vshll.u32 %v1531, 16
      %v1577 = vrot.slane %v1575, 5
      %v1578 = vor.u32 %v1574, %v1577
      %v1579 = vrot.slane %v1578, 4
      %v1581 = vshll.u32 %v1532, 16
      %v1583 = vrot.slane %v1581, 5
      %v1584 = vsel %vm359, %v1579, %v1583
      %v1586 = vshrl.u32 %v1533, 16
      %v1588 = vrot.slane %v1586, 4
      %v1589 = vshll.u32 %v1533, 16
      %v1591 = vrot.slane %v1589, 5
      %v1592 = vor.u32 %v1588, %v1591
      %v1593 = vrot.slane %v1592, 4
      %v1595 = vshll.u32 %v1534, 16
      %v1597 = vrot.slane %v1595, 5
      %v1598 = vsel %vm359, %v1593, %v1597
      %v1600 = vshrl.u32 %v1535, 16
      %v1602 = vrot.slane %v1600, 4
      %v1603 = vshll.u32 %v1535, 16
      %v1605 = vrot.slane %v1603, 5
      %v1606 = vor.u32 %v1602, %v1605
      %v1607 = vrot.slane %v1606, 4
      %v1609 = vshll.u32 %v1536, 16
      %v1611 = vrot.slane %v1609, 5
      %v1612 = vsel %vm359, %v1607, %v1611
      %v1614 = vshrl.u32 %v1537, 16
      %v1616 = vrot.slane %v1614, 4
      %v1617 = vshll.u32 %v1537, 16
      %v1619 = vrot.slane %v1617, 5
      %v1620 = vor.u32 %v1616, %v1619
      %v1621 = vrot.slane %v1620, 4
      %v1623 = vshll.u32 %v1538, 16
      %v1625 = vrot.slane %v1623, 5
      %v1626 = vsel %vm359, %v1621, %v1625
      %v1628 = vshrl.u32 %v1539, 16
      %v1630 = vrot.slane %v1628, 4
      %v1631 = vshll.u32 %v1539, 16
      %v1633 = vrot.slane %v1631, 5
      %v1634 = vor.u32 %v1630, %v1633
      %v1635 = vrot.slane %v1634, 4
      %v1637 = vshll.u32 %v1540, 16
      %v1639 = vrot.slane %v1637, 5
      %v1640 = vsel %vm359, %v1635, %v1639
      %v1642 = vshrl.u32 %v1541, 16
      %v1644 = vrot.slane %v1642, 4
      %v1645 = vshll.u32 %v1541, 16
      %v1647 = vrot.slane %v1645, 5
      %v1648 = vor.u32 %v1644, %v1647
      %v1649 = vrot.slane %v1648, 4
      %v1651 = vshll.u32 %v1542, 16
      %v1653 = vrot.slane %v1651, 5
      %v1654 = vsel %vm359, %v1649, %v1653
      %v1663 = vmax.bf16 %v1527, %v1556
      %v1664 = vmax.bf16 %v1529, %v1570
      %v1665 = vmax.bf16 %v1531, %v1584
      %v1666 = vmax.bf16 %v1533, %v1598
      %v1667 = vmax.bf16 %v1535, %v1612
      %v1668 = vmax.bf16 %v1537, %v1626
      %v1669 = vmax.bf16 %v1539, %v1640
      %v1670 = vmax.bf16 %v1541, %v1654
      %v1687 = vrot.slane %v1527, 5
      %v1688 = vrot.slane %v1687, 4
      %v1689 = vrot.slane %v1528, 5
      %v1690 = vsel %vm506, %v1688, %v1689
      %v1691 = vrot.slane %v1529, 5
      %v1692 = vrot.slane %v1691, 4
      %v1693 = vrot.slane %v1530, 5
      %v1694 = vsel %vm506, %v1692, %v1693
      %v1695 = vrot.slane %v1531, 5
      %v1696 = vrot.slane %v1695, 4
      %v1697 = vrot.slane %v1532, 5
      %v1698 = vsel %vm506, %v1696, %v1697
      %v1699 = vrot.slane %v1533, 5
      %v1700 = vrot.slane %v1699, 4
      %v1701 = vrot.slane %v1534, 5
      %v1702 = vsel %vm506, %v1700, %v1701
      %v1703 = vrot.slane %v1535, 5
      %v1704 = vrot.slane %v1703, 4
      %v1705 = vrot.slane %v1536, 5
      %v1706 = vsel %vm506, %v1704, %v1705
      %v1707 = vrot.slane %v1537, 5
      %v1708 = vrot.slane %v1707, 4
      %v1709 = vrot.slane %v1538, 5
      %v1710 = vsel %vm506, %v1708, %v1709
      %v1711 = vrot.slane %v1539, 5
      %v1712 = vrot.slane %v1711, 4
      %v1713 = vrot.slane %v1540, 5
      %v1714 = vsel %vm506, %v1712, %v1713
      %v1715 = vrot.slane %v1541, 5
      %v1716 = vrot.slane %v1715, 4
      %v1717 = vrot.slane %v1542, 5
      %v1718 = vsel %vm506, %v1716, %v1717
      %v1727 = vmax.bf16 %v1663, %v1690
      %v1728 = vmax.bf16 %v1664, %v1694
      %v1729 = vmax.bf16 %v1665, %v1698
      %v1730 = vmax.bf16 %v1666, %v1702
      %v1731 = vmax.bf16 %v1667, %v1706
      %v1732 = vmax.bf16 %v1668, %v1710
      %v1733 = vmax.bf16 %v1669, %v1714
      %v1734 = vmax.bf16 %v1670, %v1718
      %v1735 = vld [vmem:[%s210] sm:$0xf]
      %v1736 = vld [vmem:[%s210 + $0x4] sm:$0xf]
      %v1737 = vld [vmem:[%s210 + $0x8] sm:$0xf]
      %v1738 = vld [vmem:[%s210 + $0xc] sm:$0xf]
      %v1739 = vld [vmem:[%s210 + $0x10] sm:$0xf]
      %v1740 = vld [vmem:[%s210 + $0x14] sm:$0xf]
      %v1741 = vld [vmem:[%s210 + $0x18] sm:$0xf]
      %v1742 = vld [vmem:[%s210 + $0x1c] sm:$0xf]
      %v1743 = vld [vmem:[%s210 + $0x20] sm:$0xf]
      %v1744 = vld [vmem:[%s210 + $0x24] sm:$0xf]
      %v1745 = vld [vmem:[%s210 + $0x28] sm:$0xf]
      %v1746 = vld [vmem:[%s210 + $0x2c] sm:$0xf]
      %v1747 = vld [vmem:[%s210 + $0x30] sm:$0xf]
      %v1748 = vld [vmem:[%s210 + $0x34] sm:$0xf]
      %v1749 = vld [vmem:[%s210 + $0x38] sm:$0xf]
      %v1750 = vld [vmem:[%s210 + $0x3c] sm:$0xf]
      %v1751 = vld [vmem:[%s210 + $0x40] sm:$0xf]
      %v1752 = vld [vmem:[%s210 + $0x44] sm:$0xf]
      %v1753 = vld [vmem:[%s210 + $0x48] sm:$0xf]
      %v1754 = vld [vmem:[%s210 + $0x4c] sm:$0xf]
      %v1755 = vld [vmem:[%s210 + $0x50] sm:$0xf]
      %v1756 = vld [vmem:[%s210 + $0x54] sm:$0xf]
      %v1757 = vld [vmem:[%s210 + $0x58] sm:$0xf]
      %v1758 = vld [vmem:[%s210 + $0x5c] sm:$0xf]
      %v1759 = vld [vmem:[%s213] sm:$0x1]
      %v1761 = vlaneseq
      %v1762 = vshrl.u32 %v1761, 7
      %v1763 = vsub.s32 0, %v1762
      %v1764 = vrot.slane %v1759, %v1763
      %v1774 = vunpack.c.l.b16 %v1727
      %v1775 = vunpack.c.h.b16 %v1727
      %v1776 = vunpack.c.l.b16 %v1728
      %v1777 = vunpack.c.h.b16 %v1728
      %v1778 = vunpack.c.l.b16 %v1729
      %v1779 = vunpack.c.h.b16 %v1729
      %v1780 = vunpack.c.l.b16 %v1730
      %v1781 = vunpack.c.h.b16 %v1730
      %v1782 = vunpack.c.l.b16 %v1731
      %v1783 = vunpack.c.h.b16 %v1731
      %v1784 = vunpack.c.l.b16 %v1732
      %v1785 = vunpack.c.h.b16 %v1732
      %v1786 = vunpack.c.l.b16 %v1733
      %v1787 = vunpack.c.h.b16 %v1733
      %v1788 = vunpack.c.l.b16 %v1734
      %v1789 = vunpack.c.h.b16 %v1734
      %v1790 = vpack.c.b16 %v1776, %v1774
      %v1791 = vpack.c.b16 %v1777, %v1775
      %v1792 = vpack.c.b16 %v1780, %v1778
      %v1793 = vpack.c.b16 %v1781, %v1779
      %v1794 = vpack.c.b16 %v1784, %v1782
      %v1795 = vpack.c.b16 %v1785, %v1783
      %v1796 = vpack.c.b16 %v1788, %v1786
      %v1797 = vpack.c.b16 %v1789, %v1787
      %v1826 = vunpack.c.l.b16 %v1735
      %v1827 = vunpack.c.l.b16 %v1736
      %v1828 = vunpack.c.l.b16 %v1737
      %v1829 = vunpack.c.l.b16 %v1738
      %v1830 = vunpack.c.l.b16 %v1739
      %v1831 = vunpack.c.l.b16 %v1740
      %v1832 = vunpack.c.l.b16 %v1741
      %v1833 = vunpack.c.l.b16 %v1742
      %v1834 = vunpack.c.l.b16 %v1743
      %v1835 = vunpack.c.l.b16 %v1744
      %v1836 = vunpack.c.l.b16 %v1745
      %v1837 = vunpack.c.l.b16 %v1746
      %v1838 = vunpack.c.l.b16 %v1747
      %v1839 = vunpack.c.l.b16 %v1748
      %v1840 = vunpack.c.l.b16 %v1749
      %v1841 = vunpack.c.l.b16 %v1750
      %v1842 = vunpack.c.l.b16 %v1751
      %v1843 = vunpack.c.l.b16 %v1752
      %v1844 = vunpack.c.l.b16 %v1753
      %v1845 = vunpack.c.l.b16 %v1754
      %v1846 = vunpack.c.l.b16 %v1755
      %v1847 = vunpack.c.l.b16 %v1756
      %v1848 = vunpack.c.l.b16 %v1757
      %v1849 = vunpack.c.l.b16 %v1758
      %v1850 = vpack.c.b16 %v1827, %v1826
      %v1851 = vpack.c.b16 %v1829, %v1828
      %v1852 = vpack.c.b16 %v1831, %v1830
      %v1853 = vpack.c.b16 %v1833, %v1832
      %v1854 = vpack.c.b16 %v1835, %v1834
      %v1855 = vpack.c.b16 %v1837, %v1836
      %v1856 = vpack.c.b16 %v1839, %v1838
      %v1857 = vpack.c.b16 %v1841, %v1840
      %v1858 = vpack.c.b16 %v1843, %v1842
      %v1859 = vpack.c.b16 %v1845, %v1844
      %v1860 = vpack.c.b16 %v1847, %v1846
      %v1861 = vpack.c.b16 %v1849, %v1848
      %v1875 = vsel %vm694, %v1791, 0
      %v1878 = vsel %vm694, %v1793, 0
      %v1881 = vsel %vm694, %v1795, 0
      %v1884 = vsel %vm694, %v1797, 0
      %1886 = vmatprep.subr.bf16.mxu0 0
      %1887 = vmatpush1.bf16.msra.mxu0 %v1850
      %1888 = vmatprep.subr.bf16.mxu0 0
      %1889 = vmatpush1.bf16.msra.mxu0 %v1851
      %1890 = vmatprep.subr.bf16.mxu0 0
      %1891 = vmatpush1.bf16.msra.mxu0 %v1852
      %1892 = vmatprep.subr.bf16.mxu0 0
      %1893 = vmatpush1.bf16.msra.mxu0 %v1853
      %1894 = vmatprep.subr.bf16.mxu0 0
      %1895 = vmatpush1.bf16.msra.mxu0 %v1854
      %1896 = vmatprep.subr.bf16.mxu0 0
      %1897 = vmatpush1.bf16.msra.mxu0 %v1855
      %1898 = vmatprep.subr.bf16.mxu0 0
      %1899 = vmatpush1.bf16.msra.mxu0 %v1856
      %1900 = vmatprep.subr.bf16.mxu0 0
      %1901 = vmatpush1.bf16.msra.mxu0 %v1857
      %1902 = vmatprep.subr.bf16.mxu0 0
      %1903 = vmatpush1.bf16.msra.mxu0 %v1858
      %1904 = vmatprep.subr.bf16.mxu0 0
      %1905 = vmatpush1.bf16.msra.mxu0 %v1859
      %1906 = vmatprep.subr.bf16.mxu0 0
      %1907 = vmatpush1.bf16.msra.mxu0 %v1860
      %1908 = vmatprep.subr.bf16.mxu0 0
      %1909 = vmatpush1.bf16.msra.mxu0 %v1861
      %1910 = vmatprep.subr.bf16.mxu0 0
      %1911 = vmatpush1.bf16.msra.mxu0 0
      %1912 = vmatprep.subr.bf16.mxu0 0
      %1913 = vmatpush1.bf16.msra.mxu0 0
      %1914 = vmatprep.subr.bf16.mxu0 0
      %1915 = vmatpush1.bf16.msra.mxu0 0
      %1916 = vmatprep.subr.bf16.mxu0 0
      %1917 = vmatpush1.bf16.msra.mxu0 0
      %1918 = vmatprep.mubr.bf16.mxu0 %v1875
      %1919 = vmatmul.mubr.bf16.gmra.mrb[0].mxu0 %v1790
      %v1920 = vpop.f32.mrb[0].mxu0
      %v1921 = vadd.f32 %v1764, %v1920
      %v1922 = vpop.f32.mrb[0].mxu0
      %v1923 = vpop.f32.mrb[0].mxu0
      %v1924 = vadd.f32 %v1764, %v1923
      %v1925 = vpop.f32.mrb[0].mxu0
      %1926 = vmatprep.mubr.bf16.mxu0 %v1878
      %1927 = vmatmul.mubr.bf16.gmra.mrb[0].mxu0 %v1792
      %v1928 = vpop.f32.mrb[0].mxu0
      %v1929 = vadd.f32 %v1764, %v1928
      %v1930 = vpop.f32.mrb[0].mxu0
      %v1931 = vpop.f32.mrb[0].mxu0
      %v1932 = vadd.f32 %v1764, %v1931
      %v1933 = vpop.f32.mrb[0].mxu0
      %1934 = vmatprep.mubr.bf16.mxu0 %v1881
      %1935 = vmatmul.mubr.bf16.gmra.mrb[0].mxu0 %v1794
      %v1936 = vpop.f32.mrb[0].mxu0
      %v1937 = vadd.f32 %v1764, %v1936
      %v1938 = vpop.f32.mrb[0].mxu0
      %v1939 = vpop.f32.mrb[0].mxu0
      %v1940 = vadd.f32 %v1764, %v1939
      %v1941 = vpop.f32.mrb[0].mxu0
      %1942 = vmatprep.mubr.bf16.mxu0 %v1884
      %1943 = vmatmul.mubr.bf16.gmra.mrb[0].mxu0 %v1796
      %v1944 = vpop.f32.mrb[0].mxu0
      %v1945 = vadd.f32 %v1764, %v1944
      %v1946 = vpop.f32.mrb[0].mxu0
      %v1947 = vpop.f32.mrb[0].mxu0
      %v1948 = vadd.f32 %v1764, %v1947
      %v1949 = vpop.f32.mrb[0].mxu0
      %1950 = vdwg.mxu0
      %v1951 = vmax.f32 %v1921, 0.0
      %v1952 = vmax.f32 %v1924, 0.0
      %v1953 = vmax.f32 %v1929, 0.0
      %v1954 = vmax.f32 %v1932, 0.0
      %v1955 = vmax.f32 %v1937, 0.0
      %v1956 = vmax.f32 %v1940, 0.0
      %v1957 = vmax.f32 %v1945, 0.0
      %v1958 = vmax.f32 %v1948, 0.0
      %v1959 = vpack.c.bf16 %v1952, %v1951
      %v1960 = vpack.c.bf16 %v1954, %v1953
      %v1961 = vpack.c.bf16 %v1956, %v1955
      %v1962 = vpack.c.bf16 %v1958, %v1957
      %v1967 = vunpack.c.l.b16 %v1959
      %v1968 = vunpack.c.h.b16 %v1959
      %v1969 = vunpack.c.l.b16 %v1960
      %v1970 = vunpack.c.h.b16 %v1960
      %v1971 = vunpack.c.l.b16 %v1961
      %v1972 = vunpack.c.h.b16 %v1961
      %v1973 = vunpack.c.l.b16 %v1962
      %v1974 = vunpack.c.h.b16 %v1962
      %v1975 = vpack.c.b16 %v1967, %v1967
      %v1976 = vpack.c.b16 %v1968, %v1968
      %v1977 = vpack.c.b16 %v1969, %v1969
      %v1978 = vpack.c.b16 %v1970, %v1970
      %v1979 = vpack.c.b16 %v1971, %v1971
      %v1980 = vpack.c.b16 %v1972, %v1972
      %v1981 = vpack.c.b16 %v1973, %v1973
      %v1982 = vpack.c.b16 %v1974, %v1974
      %s1991 = scalar_lea.vmem %s221, 64
      %1992 = vst [vmem:[%s1991] sm:$0xf] %v1975
      %1993 = vst [vmem:[%s1991 + $0x4] sm:$0xf] %v1976
      %1994 = vst [vmem:[%s1991 + $0x8] sm:$0xf] %v1977
      %1995 = vst [vmem:[%s1991 + $0xc] sm:$0xf] %v1978
      %1996 = vst [vmem:[%s1991 + $0x10] sm:$0xf] %v1979
      %1997 = vst [vmem:[%s1991 + $0x14] sm:$0xf] %v1980
      %1998 = vst [vmem:[%s1991 + $0x18] sm:$0xf] %v1981
      %1999 = vst [vmem:[%s1991 + $0x1c] sm:$0xf] %v1982
      %v2000 = vld [vmem:[%s880] sm:$0xff]
      %v2001 = vld [vmem:[%s880 + $0x8] sm:$0x11]
      %v2002 = vld [vmem:[%s880 + $0x10] sm:$0xff]
      %v2003 = vld [vmem:[%s880 + $0x18] sm:$0x11]
      %v2004 = vld [vmem:[%s880 + $0x20] sm:$0xff]
      %v2005 = vld [vmem:[%s880 + $0x28] sm:$0x11]
      %v2006 = vld [vmem:[%s880 + $0x30] sm:$0xff]
      %v2007 = vld [vmem:[%s880 + $0x38] sm:$0x11]
      %v2008 = vld [vmem:[%s880 + $0x40] sm:$0xff]
      %v2009 = vld [vmem:[%s880 + $0x48] sm:$0x11]
      %v2010 = vld [vmem:[%s880 + $0x50] sm:$0xff]
      %v2011 = vld [vmem:[%s880 + $0x58] sm:$0x11]
      %v2012 = vld [vmem:[%s880 + $0x60] sm:$0xff]
      %v2013 = vld [vmem:[%s880 + $0x68] sm:$0x11]
      %v2014 = vld [vmem:[%s880 + $0x70] sm:$0xff]
      %v2015 = vld [vmem:[%s880 + $0x78] sm:$0x11]
      %v2016 = vld [vmem:[%s880 + $0x80] sm:$0xff]
      %v2017 = vld [vmem:[%s880 + $0x88] sm:$0x11]
      %v2018 = vld [vmem:[%s880 + $0x90] sm:$0xff]
      %v2019 = vld [vmem:[%s880 + $0x98] sm:$0x11]
      %v2020 = vld [vmem:[%s1470] sm:$0xff]
      %v2021 = vld [vmem:[%s1470 + $0x8] sm:$0x11]
      %v2022 = vld [vmem:[%s1470 + $0x10] sm:$0xff]
      %v2023 = vld [vmem:[%s1470 + $0x18] sm:$0x11]
      %v2024 = vld [vmem:[%s1470 + $0x20] sm:$0xff]
      %v2025 = vld [vmem:[%s1470 + $0x28] sm:$0x11]
      %v2026 = vld [vmem:[%s1470 + $0x30] sm:$0xff]
      %v2027 = vld [vmem:[%s1470 + $0x38] sm:$0x11]
      %v2028 = vld [vmem:[%s1470 + $0x40] sm:$0xff]
      %v2029 = vld [vmem:[%s1470 + $0x48] sm:$0x11]
      %v2030 = vld [vmem:[%s1470 + $0x50] sm:$0xff]
      %v2031 = vld [vmem:[%s1470 + $0x58] sm:$0x11]
      %v2032 = vld [vmem:[%s1470 + $0x60] sm:$0xff]
      %v2033 = vld [vmem:[%s1470 + $0x68] sm:$0x11]
      %v2034 = vld [vmem:[%s1470 + $0x70] sm:$0xff]
      %v2035 = vld [vmem:[%s1470 + $0x78] sm:$0x11]
      %v2036 = vld [vmem:[%s1470 + $0x80] sm:$0xff]
      %v2037 = vld [vmem:[%s1470 + $0x88] sm:$0x11]
      %v2038 = vld [vmem:[%s1470 + $0x90] sm:$0xff]
      %v2039 = vld [vmem:[%s1470 + $0x98] sm:$0x11]
      %v2040 = vmax.bf16 %v2000, %v2020
      %v2041 = vmax.bf16 %v2001, %v2021
      %v2042 = vmax.bf16 %v2002, %v2022
      %v2043 = vmax.bf16 %v2003, %v2023
      %v2044 = vmax.bf16 %v2004, %v2024
      %v2045 = vmax.bf16 %v2005, %v2025
      %v2046 = vmax.bf16 %v2006, %v2026
      %v2047 = vmax.bf16 %v2007, %v2027
      %v2048 = vmax.bf16 %v2008, %v2028
      %v2049 = vmax.bf16 %v2009, %v2029
      %v2050 = vmax.bf16 %v2010, %v2030
      %v2051 = vmax.bf16 %v2011, %v2031
      %v2052 = vmax.bf16 %v2012, %v2032
      %v2053 = vmax.bf16 %v2013, %v2033
      %v2054 = vmax.bf16 %v2014, %v2034
      %v2055 = vmax.bf16 %v2015, %v2035
      %v2056 = vmax.bf16 %v2016, %v2036
      %v2057 = vmax.bf16 %v2017, %v2037
      %v2058 = vmax.bf16 %v2018, %v2038
      %v2059 = vmax.bf16 %v2019, %v2039
      %s2060 = scalar_lea.vmem %s206, 800
      %v2061 = vld [vmem:[%s2060] sm:$0xff]
      %v2062 = vld [vmem:[%s2060 + $0x8] sm:$0x11]
      %v2063 = vld [vmem:[%s2060 + $0x10] sm:$0xff]
      %v2064 = vld [vmem:[%s2060 + $0x18] sm:$0x11]
      %v2065 = vld [vmem:[%s2060 + $0x20] sm:$0xff]
      %v2066 = vld [vmem:[%s2060 + $0x28] sm:$0x11]
      %v2067 = vld [vmem:[%s2060 + $0x30] sm:$0xff]
      %v2068 = vld [vmem:[%s2060 + $0x38] sm:$0x11]
      %v2069 = vld [vmem:[%s2060 + $0x40] sm:$0xff]
      %v2070 = vld [vmem:[%s2060 + $0x48] sm:$0x11]
      %v2071 = vld [vmem:[%s2060 + $0x50] sm:$0xff]
      %v2072 = vld [vmem:[%s2060 + $0x58] sm:$0x11]
      %v2073 = vld [vmem:[%s2060 + $0x60] sm:$0xff]
      %v2074 = vld [vmem:[%s2060 + $0x68] sm:$0x11]
      %v2075 = vld [vmem:[%s2060 + $0x70] sm:$0xff]
      %v2076 = vld [vmem:[%s2060 + $0x78] sm:$0x11]
      %v2077 = vld [vmem:[%s2060 + $0x80] sm:$0xff]
      %v2078 = vld [vmem:[%s2060 + $0x88] sm:$0x11]
      %v2079 = vld [vmem:[%s2060 + $0x90] sm:$0xff]
      %v2080 = vld [vmem:[%s2060 + $0x98] sm:$0x11]
      %v2081 = vmax.bf16 %v2040, %v2061
      %v2082 = vmax.bf16 %v2041, %v2062
      %v2083 = vmax.bf16 %v2042, %v2063
      %v2084 = vmax.bf16 %v2043, %v2064
      %v2085 = vmax.bf16 %v2044, %v2065
      %v2086 = vmax.bf16 %v2045, %v2066
      %v2087 = vmax.bf16 %v2046, %v2067
      %v2088 = vmax.bf16 %v2047, %v2068
      %v2089 = vmax.bf16 %v2048, %v2069
      %v2090 = vmax.bf16 %v2049, %v2070
      %v2091 = vmax.bf16 %v2050, %v2071
      %v2092 = vmax.bf16 %v2051, %v2072
      %v2093 = vmax.bf16 %v2052, %v2073
      %v2094 = vmax.bf16 %v2053, %v2074
      %v2095 = vmax.bf16 %v2054, %v2075
      %v2096 = vmax.bf16 %v2055, %v2076
      %v2097 = vmax.bf16 %v2056, %v2077
      %v2098 = vmax.bf16 %v2057, %v2078
      %v2099 = vmax.bf16 %v2058, %v2079
      %v2100 = vmax.bf16 %v2059, %v2080
      %v2101 = vmax.bf16 %v2081, %v2083
      %v2102 = vmax.bf16 %v2082, %v2084
      %v2103 = vmax.bf16 %v2083, %v2085
      %v2104 = vmax.bf16 %v2084, %v2086
      %v2105 = vmax.bf16 %v2085, %v2087
      %v2106 = vmax.bf16 %v2086, %v2088
      %v2107 = vmax.bf16 %v2087, %v2089
      %v2108 = vmax.bf16 %v2088, %v2090
      %v2109 = vmax.bf16 %v2089, %v2091
      %v2110 = vmax.bf16 %v2090, %v2092
      %v2111 = vmax.bf16 %v2091, %v2093
      %v2112 = vmax.bf16 %v2092, %v2094
      %v2113 = vmax.bf16 %v2093, %v2095
      %v2114 = vmax.bf16 %v2094, %v2096
      %v2115 = vmax.bf16 %v2095, %v2097
      %v2116 = vmax.bf16 %v2096, %v2098
      %v2117 = vmax.bf16 %v2101, %v2085
      %v2118 = vmax.bf16 %v2102, %v2086
      %v2119 = vmax.bf16 %v2103, %v2087
      %v2120 = vmax.bf16 %v2104, %v2088
      %v2121 = vmax.bf16 %v2105, %v2089
      %v2122 = vmax.bf16 %v2106, %v2090
      %v2123 = vmax.bf16 %v2107, %v2091
      %v2124 = vmax.bf16 %v2108, %v2092
      %v2125 = vmax.bf16 %v2109, %v2093
      %v2126 = vmax.bf16 %v2110, %v2094
      %v2127 = vmax.bf16 %v2111, %v2095
      %v2128 = vmax.bf16 %v2112, %v2096
      %v2129 = vmax.bf16 %v2113, %v2097
      %v2130 = vmax.bf16 %v2114, %v2098
      %v2131 = vmax.bf16 %v2115, %v2099
      %v2132 = vmax.bf16 %v2116, %v2100
      %v2134 = vshrl.u32 %v2117, 16
      %v2136 = vrot.slane %v2134, 4
      %v2137 = vshll.u32 %v2117, 16
      %v2139 = vrot.slane %v2137, 5
      %v2140 = vor.u32 %v2136, %v2139
      %v2141 = vrot.slane %v2140, 4
      %v2143 = vshll.u32 %v2118, 16
      %v2145 = vrot.slane %v2143, 5
      %v2146 = vsel %vm359, %v2141, %v2145
      %v2148 = vshrl.u32 %v2119, 16
      %v2150 = vrot.slane %v2148, 4
      %v2151 = vshll.u32 %v2119, 16
      %v2153 = vrot.slane %v2151, 5
      %v2154 = vor.u32 %v2150, %v2153
      %v2155 = vrot.slane %v2154, 4
      %v2157 = vshll.u32 %v2120, 16
      %v2159 = vrot.slane %v2157, 5
      %v2160 = vsel %vm359, %v2155, %v2159
      %v2162 = vshrl.u32 %v2121, 16
      %v2164 = vrot.slane %v2162, 4
      %v2165 = vshll.u32 %v2121, 16
      %v2167 = vrot.slane %v2165, 5
      %v2168 = vor.u32 %v2164, %v2167
      %v2169 = vrot.slane %v2168, 4
      %v2171 = vshll.u32 %v2122, 16
      %v2173 = vrot.slane %v2171, 5
      %v2174 = vsel %vm359, %v2169, %v2173
      %v2176 = vshrl.u32 %v2123, 16
      %v2178 = vrot.slane %v2176, 4
      %v2179 = vshll.u32 %v2123, 16
      %v2181 = vrot.slane %v2179, 5
      %v2182 = vor.u32 %v2178, %v2181
      %v2183 = vrot.slane %v2182, 4
      %v2185 = vshll.u32 %v2124, 16
      %v2187 = vrot.slane %v2185, 5
      %v2188 = vsel %vm359, %v2183, %v2187
      %v2190 = vshrl.u32 %v2125, 16
      %v2192 = vrot.slane %v2190, 4
      %v2193 = vshll.u32 %v2125, 16
      %v2195 = vrot.slane %v2193, 5
      %v2196 = vor.u32 %v2192, %v2195
      %v2197 = vrot.slane %v2196, 4
      %v2199 = vshll.u32 %v2126, 16
      %v2201 = vrot.slane %v2199, 5
      %v2202 = vsel %vm359, %v2197, %v2201
      %v2204 = vshrl.u32 %v2127, 16
      %v2206 = vrot.slane %v2204, 4
      %v2207 = vshll.u32 %v2127, 16
      %v2209 = vrot.slane %v2207, 5
      %v2210 = vor.u32 %v2206, %v2209
      %v2211 = vrot.slane %v2210, 4
      %v2213 = vshll.u32 %v2128, 16
      %v2215 = vrot.slane %v2213, 5
      %v2216 = vsel %vm359, %v2211, %v2215
      %v2218 = vshrl.u32 %v2129, 16
      %v2220 = vrot.slane %v2218, 4
      %v2221 = vshll.u32 %v2129, 16
      %v2223 = vrot.slane %v2221, 5
      %v2224 = vor.u32 %v2220, %v2223
      %v2225 = vrot.slane %v2224, 4
      %v2227 = vshll.u32 %v2130, 16
      %v2229 = vrot.slane %v2227, 5
      %v2230 = vsel %vm359, %v2225, %v2229
      %v2232 = vshrl.u32 %v2131, 16
      %v2234 = vrot.slane %v2232, 4
      %v2235 = vshll.u32 %v2131, 16
      %v2237 = vrot.slane %v2235, 5
      %v2238 = vor.u32 %v2234, %v2237
      %v2239 = vrot.slane %v2238, 4
      %v2241 = vshll.u32 %v2132, 16
      %v2243 = vrot.slane %v2241, 5
      %v2244 = vsel %vm359, %v2239, %v2243
      %v2253 = vmax.bf16 %v2117, %v2146
      %v2254 = vmax.bf16 %v2119, %v2160
      %v2255 = vmax.bf16 %v2121, %v2174
      %v2256 = vmax.bf16 %v2123, %v2188
      %v2257 = vmax.bf16 %v2125, %v2202
      %v2258 = vmax.bf16 %v2127, %v2216
      %v2259 = vmax.bf16 %v2129, %v2230
      %v2260 = vmax.bf16 %v2131, %v2244
      %v2277 = vrot.slane %v2117, 5
      %v2278 = vrot.slane %v2277, 4
      %v2279 = vrot.slane %v2118, 5
      %v2280 = vsel %vm506, %v2278, %v2279
      %v2281 = vrot.slane %v2119, 5
      %v2282 = vrot.slane %v2281, 4
      %v2283 = vrot.slane %v2120, 5
      %v2284 = vsel %vm506, %v2282, %v2283
      %v2285 = vrot.slane %v2121, 5
      %v2286 = vrot.slane %v2285, 4
      %v2287 = vrot.slane %v2122, 5
      %v2288 = vsel %vm506, %v2286, %v2287
      %v2289 = vrot.slane %v2123, 5
      %v2290 = vrot.slane %v2289, 4
      %v2291 = vrot.slane %v2124, 5
      %v2292 = vsel %vm506, %v2290, %v2291
      %v2293 = vrot.slane %v2125, 5
      %v2294 = vrot.slane %v2293, 4
      %v2295 = vrot.slane %v2126, 5
      %v2296 = vsel %vm506, %v2294, %v2295
      %v2297 = vrot.slane %v2127, 5
      %v2298 = vrot.slane %v2297, 4
      %v2299 = vrot.slane %v2128, 5
      %v2300 = vsel %vm506, %v2298, %v2299
      %v2301 = vrot.slane %v2129, 5
      %v2302 = vrot.slane %v2301, 4
      %v2303 = vrot.slane %v2130, 5
      %v2304 = vsel %vm506, %v2302, %v2303
      %v2305 = vrot.slane %v2131, 5
      %v2306 = vrot.slane %v2305, 4
      %v2307 = vrot.slane %v2132, 5
      %v2308 = vsel %vm506, %v2306, %v2307
      %v2317 = vmax.bf16 %v2253, %v2280
      %v2318 = vmax.bf16 %v2254, %v2284
      %v2319 = vmax.bf16 %v2255, %v2288
      %v2320 = vmax.bf16 %v2256, %v2292
      %v2321 = vmax.bf16 %v2257, %v2296
      %v2322 = vmax.bf16 %v2258, %v2300
      %v2323 = vmax.bf16 %v2259, %v2304
      %v2324 = vmax.bf16 %v2260, %v2308
      %v2325 = vld [vmem:[%s210] sm:$0xf]
      %v2326 = vld [vmem:[%s210 + $0x4] sm:$0xf]
      %v2327 = vld [vmem:[%s210 + $0x8] sm:$0xf]
      %v2328 = vld [vmem:[%s210 + $0xc] sm:$0xf]
      %v2329 = vld [vmem:[%s210 + $0x10] sm:$0xf]
      %v2330 = vld [vmem:[%s210 + $0x14] sm:$0xf]
      %v2331 = vld [vmem:[%s210 + $0x18] sm:$0xf]
      %v2332 = vld [vmem:[%s210 + $0x1c] sm:$0xf]
      %v2333 = vld [vmem:[%s210 + $0x20] sm:$0xf]
      %v2334 = vld [vmem:[%s210 + $0x24] sm:$0xf]
      %v2335 = vld [vmem:[%s210 + $0x28] sm:$0xf]
      %v2336 = vld [vmem:[%s210 + $0x2c] sm:$0xf]
      %v2337 = vld [vmem:[%s210 + $0x30] sm:$0xf]
      %v2338 = vld [vmem:[%s210 + $0x34] sm:$0xf]
      %v2339 = vld [vmem:[%s210 + $0x38] sm:$0xf]
      %v2340 = vld [vmem:[%s210 + $0x3c] sm:$0xf]
      %v2341 = vld [vmem:[%s210 + $0x40] sm:$0xf]
      %v2342 = vld [vmem:[%s210 + $0x44] sm:$0xf]
      %v2343 = vld [vmem:[%s210 + $0x48] sm:$0xf]
      %v2344 = vld [vmem:[%s210 + $0x4c] sm:$0xf]
      %v2345 = vld [vmem:[%s210 + $0x50] sm:$0xf]
      %v2346 = vld [vmem:[%s210 + $0x54] sm:$0xf]
      %v2347 = vld [vmem:[%s210 + $0x58] sm:$0xf]
      %v2348 = vld [vmem:[%s210 + $0x5c] sm:$0xf]
      %v2349 = vld [vmem:[%s213] sm:$0x1]
      %v2351 = vlaneseq
      %v2352 = vshrl.u32 %v2351, 7
      %v2353 = vsub.s32 0, %v2352
      %v2354 = vrot.slane %v2349, %v2353
      %v2364 = vunpack.c.l.b16 %v2317
      %v2365 = vunpack.c.h.b16 %v2317
      %v2366 = vunpack.c.l.b16 %v2318
      %v2367 = vunpack.c.h.b16 %v2318
      %v2368 = vunpack.c.l.b16 %v2319
      %v2369 = vunpack.c.h.b16 %v2319
      %v2370 = vunpack.c.l.b16 %v2320
      %v2371 = vunpack.c.h.b16 %v2320
      %v2372 = vunpack.c.l.b16 %v2321
      %v2373 = vunpack.c.h.b16 %v2321
      %v2374 = vunpack.c.l.b16 %v2322
      %v2375 = vunpack.c.h.b16 %v2322
      %v2376 = vunpack.c.l.b16 %v2323
      %v2377 = vunpack.c.h.b16 %v2323
      %v2378 = vunpack.c.l.b16 %v2324
      %v2379 = vunpack.c.h.b16 %v2324
      %v2380 = vpack.c.b16 %v2366, %v2364
      %v2381 = vpack.c.b16 %v2367, %v2365
      %v2382 = vpack.c.b16 %v2370, %v2368
      %v2383 = vpack.c.b16 %v2371, %v2369
      %v2384 = vpack.c.b16 %v2374, %v2372
      %v2385 = vpack.c.b16 %v2375, %v2373
      %v2386 = vpack.c.b16 %v2378, %v2376
      %v2387 = vpack.c.b16 %v2379, %v2377
      %v2416 = vunpack.c.l.b16 %v2325
      %v2417 = vunpack.c.l.b16 %v2326
      %v2418 = vunpack.c.l.b16 %v2327
      %v2419 = vunpack.c.l.b16 %v2328
      %v2420 = vunpack.c.l.b16 %v2329
      %v2421 = vunpack.c.l.b16 %v2330
      %v2422 = vunpack.c.l.b16 %v2331
      %v2423 = vunpack.c.l.b16 %v2332
      %v2424 = vunpack.c.l.b16 %v2333
      %v2425 = vunpack.c.l.b16 %v2334
      %v2426 = vunpack.c.l.b16 %v2335
      %v2427 = vunpack.c.l.b16 %v2336
      %v2428 = vunpack.c.l.b16 %v2337
      %v2429 = vunpack.c.l.b16 %v2338
      %v2430 = vunpack.c.l.b16 %v2339
      %v2431 = vunpack.c.l.b16 %v2340
      %v2432 = vunpack.c.l.b16 %v2341
      %v2433 = vunpack.c.l.b16 %v2342
      %v2434 = vunpack.c.l.b16 %v2343
      %v2435 = vunpack.c.l.b16 %v2344
      %v2436 = vunpack.c.l.b16 %v2345
      %v2437 = vunpack.c.l.b16 %v2346
      %v2438 = vunpack.c.l.b16 %v2347
      %v2439 = vunpack.c.l.b16 %v2348
      %v2440 = vpack.c.b16 %v2417, %v2416
      %v2441 = vpack.c.b16 %v2419, %v2418
      %v2442 = vpack.c.b16 %v2421, %v2420
      %v2443 = vpack.c.b16 %v2423, %v2422
      %v2444 = vpack.c.b16 %v2425, %v2424
      %v2445 = vpack.c.b16 %v2427, %v2426
      %v2446 = vpack.c.b16 %v2429, %v2428
      %v2447 = vpack.c.b16 %v2431, %v2430
      %v2448 = vpack.c.b16 %v2433, %v2432
      %v2449 = vpack.c.b16 %v2435, %v2434
      %v2450 = vpack.c.b16 %v2437, %v2436
      %v2451 = vpack.c.b16 %v2439, %v2438
      %v2465 = vsel %vm694, %v2381, 0
      %v2468 = vsel %vm694, %v2383, 0
      %v2471 = vsel %vm694, %v2385, 0
      %v2474 = vsel %vm694, %v2387, 0
      %2476 = vmatprep.subr.bf16.mxu0 0
      %2477 = vmatpush1.bf16.msra.mxu0 %v2440
      %2478 = vmatprep.subr.bf16.mxu0 0
      %2479 = vmatpush1.bf16.msra.mxu0 %v2441
      %2480 = vmatprep.subr.bf16.mxu0 0
      %2481 = vmatpush1.bf16.msra.mxu0 %v2442
      %2482 = vmatprep.subr.bf16.mxu0 0
      %2483 = vmatpush1.bf16.msra.mxu0 %v2443
      %2484 = vmatprep.subr.bf16.mxu0 0
      %2485 = vmatpush1.bf16.msra.mxu0 %v2444
      %2486 = vmatprep.subr.bf16.mxu0 0
      %2487 = vmatpush1.bf16.msra.mxu0 %v2445
      %2488 = vmatprep.subr.bf16.mxu0 0
      %2489 = vmatpush1.bf16.msra.mxu0 %v2446
      %2490 = vmatprep.subr.bf16.mxu0 0
      %2491 = vmatpush1.bf16.msra.mxu0 %v2447
      %2492 = vmatprep.subr.bf16.mxu0 0
      %2493 = vmatpush1.bf16.msra.mxu0 %v2448
      %2494 = vmatprep.subr.bf16.mxu0 0
      %2495 = vmatpush1.bf16.msra.mxu0 %v2449
      %2496 = vmatprep.subr.bf16.mxu0 0
      %2497 = vmatpush1.bf16.msra.mxu0 %v2450
      %2498 = vmatprep.subr.bf16.mxu0 0
      %2499 = vmatpush1.bf16.msra.mxu0 %v2451
      %2500 = vmatprep.subr.bf16.mxu0 0
      %2501 = vmatpush1.bf16.msra.mxu0 0
      %2502 = vmatprep.subr.bf16.mxu0 0
      %2503 = vmatpush1.bf16.msra.mxu0 0
      %2504 = vmatprep.subr.bf16.mxu0 0
      %2505 = vmatpush1.bf16.msra.mxu0 0
      %2506 = vmatprep.subr.bf16.mxu0 0
      %2507 = vmatpush1.bf16.msra.mxu0 0
      %2508 = vmatprep.mubr.bf16.mxu0 %v2465
      %2509 = vmatmul.mubr.bf16.gmra.mrb[0].mxu0 %v2380
      %v2510 = vpop.f32.mrb[0].mxu0
      %v2511 = vadd.f32 %v2354, %v2510
      %v2512 = vpop.f32.mrb[0].mxu0
      %v2513 = vpop.f32.mrb[0].mxu0
      %v2514 = vadd.f32 %v2354, %v2513
      %v2515 = vpop.f32.mrb[0].mxu0
      %2516 = vmatprep.mubr.bf16.mxu0 %v2468
      %2517 = vmatmul.mubr.bf16.gmra.mrb[0].mxu0 %v2382
      %v2518 = vpop.f32.mrb[0].mxu0
      %v2519 = vadd.f32 %v2354, %v2518
      %v2520 = vpop.f32.mrb[0].mxu0
      %v2521 = vpop.f32.mrb[0].mxu0
      %v2522 = vadd.f32 %v2354, %v2521
      %v2523 = vpop.f32.mrb[0].mxu0
      %2524 = vmatprep.mubr.bf16.mxu0 %v2471
      %2525 = vmatmul.mubr.bf16.gmra.mrb[0].mxu0 %v2384
      %v2526 = vpop.f32.mrb[0].mxu0
      %v2527 = vadd.f32 %v2354, %v2526
      %v2528 = vpop.f32.mrb[0].mxu0
      %v2529 = vpop.f32.mrb[0].mxu0
      %v2530 = vadd.f32 %v2354, %v2529
      %v2531 = vpop.f32.mrb[0].mxu0
      %2532 = vmatprep.mubr.bf16.mxu0 %v2474
      %2533 = vmatmul.mubr.bf16.gmra.mrb[0].mxu0 %v2386
      %v2534 = vpop.f32.mrb[0].mxu0
      %v2535 = vadd.f32 %v2354, %v2534
      %v2536 = vpop.f32.mrb[0].mxu0
      %v2537 = vpop.f32.mrb[0].mxu0
      %v2538 = vadd.f32 %v2354, %v2537
      %v2539 = vpop.f32.mrb[0].mxu0
      %2540 = vdwg.mxu0
      %v2541 = vmax.f32 %v2511, 0.0
      %v2542 = vmax.f32 %v2514, 0.0
      %v2543 = vmax.f32 %v2519, 0.0
      %v2544 = vmax.f32 %v2522, 0.0
      %v2545 = vmax.f32 %v2527, 0.0
      %v2546 = vmax.f32 %v2530, 0.0
      %v2547 = vmax.f32 %v2535, 0.0
      %v2548 = vmax.f32 %v2538, 0.0
      %v2549 = vpack.c.bf16 %v2542, %v2541
      %v2550 = vpack.c.bf16 %v2544, %v2543
      %v2551 = vpack.c.bf16 %v2546, %v2545
      %v2552 = vpack.c.bf16 %v2548, %v2547
      %v2557 = vunpack.c.l.b16 %v2549
      %v2558 = vunpack.c.h.b16 %v2549
      %v2559 = vunpack.c.l.b16 %v2550
      %v2560 = vunpack.c.h.b16 %v2550
      %v2561 = vunpack.c.l.b16 %v2551
      %v2562 = vunpack.c.h.b16 %v2551
      %v2563 = vunpack.c.l.b16 %v2552
      %v2564 = vunpack.c.h.b16 %v2552
      %v2565 = vpack.c.b16 %v2557, %v2557
      %v2566 = vpack.c.b16 %v2558, %v2558
      %v2567 = vpack.c.b16 %v2559, %v2559
      %v2568 = vpack.c.b16 %v2560, %v2560
      %v2569 = vpack.c.b16 %v2561, %v2561
      %v2570 = vpack.c.b16 %v2562, %v2562
      %v2571 = vpack.c.b16 %v2563, %v2563
      %v2572 = vpack.c.b16 %v2564, %v2564
      %s2581 = scalar_lea.vmem %s221, 96
      %2582 = vst [vmem:[%s2581] sm:$0xf] %v2565
      %2583 = vst [vmem:[%s2581 + $0x4] sm:$0xf] %v2566
      %2584 = vst [vmem:[%s2581 + $0x8] sm:$0xf] %v2567
      %2585 = vst [vmem:[%s2581 + $0xc] sm:$0xf] %v2568
      %2586 = vst [vmem:[%s2581 + $0x10] sm:$0xf] %v2569
      %2587 = vst [vmem:[%s2581 + $0x14] sm:$0xf] %v2570
      %2588 = vst [vmem:[%s2581 + $0x18] sm:$0xf] %v2571
      %2589 = vst [vmem:[%s2581 + $0x1c] sm:$0xf] %v2572
      %p2590 = scmp.lt.s32.totalorder %s18, 1
      %s2591 = scalar_select %p2590, %s18, 1
      %p2592 = scmp.lt.s32.totalorder %s19, 0
      %s2593 = scalar_select %p2592, %s19, 0
      %s2594 = smul.addr %s2591, 32
      %s2595 = sadd.s32 %s2593, %s2594
      %s2596 = smul.addr %s2595, 4
      %s2597 = scalar_lea.vmem %s3, %s2596
      // Predicated region
      $region33: #{mixed_3b.7} parent=31 // pred_check
        %p2598 = pneg %p124
      $region34: #{mixed_3b.7} parent=31 // pred_check_branch
        %2600 = sbr.rel (%p2598) target = $region36
      $region35: #{mixed_3b.7} parent=31 // pred_region
        _
      $region36: #{mixed_3b.7} parent=31 // pred_fallthru
        _
    $region32: #{mixed_3b.7} parent=5 // pred_fallthru
      _
    %p2601 = scmp.le.s32.totalorder 2, %s9
    // Predicated region
    $region37: #{mixed_3b.7} parent=5 // pred_check
      %p2602 = pneg %p2601
    $region38: #{mixed_3b.7} parent=5 // pred_check_branch
      %2604 = sbr.rel (%p2602) target = $region40
    $region39: #{mixed_3b.7} parent=5 // pred_region
      %s2605 = ssub.s32 %s9, 2
      // Predicated region
      $region41: #{mixed_3b.7} parent=39 // pred_check
        %p2606 = pneg %p130
      $region42: #{mixed_3b.7} parent=39 // pred_check_branch
        %2608 = sbr.rel (%p2606) target = $region44
      $region43: #{mixed_3b.7} parent=39 // pred_region
        %p2609 = scmp.lt.s32.totalorder %s20, 1
        %s2610 = scalar_select %p2609, %s20, 1
        %p2611 = scmp.lt.s32.totalorder %s21, 0
        %s2612 = scalar_select %p2611, %s21, 0
        %s2613 = smul.addr %s2610, 32
        %s2614 = sadd.s32 %s2612, %s2613
        %s2615 = smul.addr %s2614, 4
        %s2616 = scalar_lea.vmem %s3, %s2615
      $region44: #{mixed_3b.7} parent=39 // pred_fallthru
        _
    $region40: #{mixed_3b.7} parent=5 // pred_fallthru
      _
  $region6: #{mixed_3b.7} parent=0 // loop_footer
    %s13 = sadd.s32 1, %s9
  $region7: #{mixed_3b.7} parent=0 // loop_footer_branch
    %8 = sbr.rel target = $region3
  $region8: #{mixed_3b.7} parent=0 // loop_exit
    _

</llo_original>
